<compile_context>
chip_gen: v6e
topology: v6e:2x2x1
jax: 0.10.0
libtpu: 0.0.40
codegen_flags: <defaults>
</compile_context>

<pallas_src>
import functools
import math

import numpy as np
import jax
import jax.numpy as jnp
from jax.experimental import pallas as pl
from jax.experimental.pallas import tpu as pltpu

# ------------------------- model hyper-parameters -------------------------
VOCAB = 128
D_MODEL = 32
NHEAD = 4
HEAD_DIM = D_MODEL // NHEAD
N_ENC_LAYERS = 2
N_DEC_LAYERS = 2
DIM_FFN = 64
MAX_SEQ = 100
PAD_ID = 1          # microsoft/codebert-base pad_token_id == 1 (hard-coded; no tokenizer load)
LN_EPS = 1e-5
MASK_NEG = -1e9     # large finite negative (avoids -inf -> NaN on fully-masked rows)


# ------------------------------ fused kernel -------------------------------


def _fused_transformer_kernel(
    src_col_ref,   # (Ls, 1)  int32 : this batch element's source token ids (column layout)
    tgt_col_ref,   # (Lt, 1)  int32
    src_row_ref,   # (1, 1, Ls) int32 : row layout for key-padding masks
    tgt_row_ref,   # (1, 1, Lt) int32
    blob_ref,      # (N, 128) f32   : all packed weights / biases / PE / embedding
    logits_ref,    # (Lt, VOCAB) f32
    *, index, Ls, Lt,
):
    D = D_MODEL
    scale = 1.0 / math.sqrt(HEAD_DIM)

    def P(name):
        off, r, c = index[name]
        return blob_ref[off:off + r, :c]

    def layernorm(x, g, b):
        mean = jnp.mean(x, axis=-1, keepdims=True)
        xc = x - mean
        var = jnp.mean(xc * xc, axis=-1, keepdims=True)
        return xc * jax.lax.rsqrt(var + LN_EPS) * g + b

    def softmax(s):
        s = s - jnp.max(s, axis=-1, keepdims=True)
        p = jnp.exp(s)
        return p * pl.reciprocal(jnp.sum(p, axis=-1, keepdims=True), approx=True)

    def attention(q, k, v, wo, bo, mask):
        """q:(Lq,D), k/v:(Lk,D).  Per-head scores via transpose-free dot_general,
        heads concatenated along lanes, ONE Wo matmul per attention block."""
        heads = []
        for h in range(NHEAD):
            sl = slice(h * HEAD_DIM, (h + 1) * HEAD_DIM)
            s = jax.lax.dot_general(
                q[:, sl], k[:, sl],
                dimension_numbers=(((1,), (1,)), ((), ())),
                preferred_element_type=jnp.float32) * scale
            if mask is not None:
                s = s + mask
            p = softmax(s)
            heads.append(jnp.dot(p, v[:, sl], preferred_element_type=jnp.float32))
        o = jnp.concatenate(heads, axis=-1)                       # (Lq, D)
        return jnp.dot(o, wo, preferred_element_type=jnp.float32) + bo

    def ffn(x, w1, b1, w2, b2):
        h = jnp.dot(x, w1, preferred_element_type=jnp.float32) + b1
        h = jnp.maximum(h, 0.0)
        return jnp.dot(h, w2, preferred_element_type=jnp.float32) + b2

    # ---------------- fused embedding + positional encoding ----------------
    emb = P("embed")                                              # (VOCAB, D)
    src_oh = (jax.lax.broadcasted_iota(jnp.int32, (Ls, VOCAB), 1)
              == src_col_ref[...]).astype(jnp.float32)            # (Ls, 128)
    x = jnp.dot(src_oh, emb, preferred_element_type=jnp.float32) + P("pe_src")
    tgt_oh = (jax.lax.broadcasted_iota(jnp.int32, (Lt, VOCAB), 1)
              == tgt_col_ref[...]).astype(jnp.float32)            # (Lt, 128)
    y = jnp.dot(tgt_oh, emb, preferred_element_type=jnp.float32) + P("pe_tgt")

    # -------------------------- fused masks --------------------------------
    enc_mask = jnp.where(src_row_ref[0] == PAD_ID, MASK_NEG, 0.0)  # (1, Ls)
    ri = jax.lax.broadcasted_iota(jnp.int32, (Lt, Lt), 0)
    ci = jax.lax.broadcasted_iota(jnp.int32, (Lt, Lt), 1)
    # TODO(synk): the reference's `mask == 0` bool conversion inverts the causal
    # mask (source bug yielding NaN rows in PyTorch); we implement the intended mask.
    dec_mask = (jnp.where(ci > ri, MASK_NEG, 0.0)
                + jnp.where(tgt_row_ref[0] == PAD_ID, MASK_NEG, 0.0))  # (Lt, Lt)

    # ------------------------------ encoder -------------------------------
    for l in range(N_ENC_LAYERS):
        qkv = jnp.dot(x, P(f"e{l}_wqkv"),
                      preferred_element_type=jnp.float32) + P(f"e{l}_bqkv")
        q, k, v = qkv[:, :D], qkv[:, D:2 * D], qkv[:, 2 * D:]
        a = attention(q, k, v, P(f"e{l}_wo"), P(f"e{l}_bo"), enc_mask)
        x = layernorm(x + a, P(f"e{l}_n1g"), P(f"e{l}_n1b"))
        x = layernorm(x + ffn(x, P(f"e{l}_w1"), P(f"e{l}_b1"),
                              P(f"e{l}_w2"), P(f"e{l}_b2")),
                      P(f"e{l}_n2g"), P(f"e{l}_n2b"))
    memory = layernorm(x, P("enc_ng"), P("enc_nb"))

    # ------------------------------ decoder -------------------------------
    for l in range(N_DEC_LAYERS):
        # masked self-attention (fused QKV)
        qkv = jnp.dot(y, P(f"d{l}_sa_wqkv"),
                      preferred_element_type=jnp.float32) + P(f"d{l}_sa_bqkv")
        q, k, v = qkv[:, :D], qkv[:, D:2 * D], qkv[:, 2 * D:]
        a = attention(q, k, v, P(f"d{l}_sa_wo"), P(f"d{l}_sa_bo"), dec_mask)
        y = layernorm(y + a, P(f"d{l}_n1g"), P(f"d{l}_n1b"))

        # cross-attention (reference passes no memory_key_padding_mask -> unmasked)
        q = jnp.dot(y, P(f"d{l}_ca_wq"),
                    preferred_element_type=jnp.float32) + P(f"d{l}_ca_bq")
        kv = jnp.dot(memory, P(f"d{l}_ca_wkv"),
                     preferred_element_type=jnp.float32) + P(f"d{l}_ca_bkv")
        k, v = kv[:, :D], kv[:, D:]
        a = attention(q, k, v, P(f"d{l}_ca_wo"), P(f"d{l}_ca_bo"), None)
        y = layernorm(y + a, P(f"d{l}_n2g"), P(f"d{l}_n2b"))

        y = layernorm(y + ffn(y, P(f"d{l}_w1"), P(f"d{l}_b1"),
                              P(f"d{l}_w2"), P(f"d{l}_b2")),
                      P(f"d{l}_n3g"), P(f"d{l}_n3b"))
    y = layernorm(y, P("dec_ng"), P("dec_nb"))

    # ---------------------- lane-dense vocab projection --------------------
    logits_ref[...] = (jnp.dot(y, P("out_w"), preferred_element_type=jnp.float32)
                       + P("out_b"))


# ------------------------- host-side weight packing -------------------------


def _pack_params(params, Ls, Lt):
    """Pack all parameters into one (N, 128) f32 blob with 8-row-aligned slots."""
    entries = []

    def add(name, a):
        entries.append((name, np.asarray(a, np.float32)))

    add("embed", params["embedding"])          # (VOCAB, D)
    add("pe_src", params["pe"][:Ls])           # (Ls, D)
    add("pe_tgt", params["pe"][:Lt])           # (Lt, D)

    e, d = params["enc"], params["dec"]
    enc_names = ["wqkv", "bqkv", "wo", "bo", "n1g", "n1b",
                 "w1", "b1", "w2", "b2", "n2g", "n2b"]
    dec_names = ["sa_wqkv", "sa_bqkv", "sa_wo", "sa_bo", "n1g", "n1b",
                 "ca_wq", "ca_bq", "ca_wkv", "ca_bkv", "ca_wo", "ca_bo",
                 "n2g", "n2b", "w1", "b1", "w2", "b2", "n3g", "n3b"]
    for l in range(N_ENC_LAYERS):
        for nm in enc_names:
            add(f"e{l}_{nm}", e[nm][l])
    for l in range(N_DEC_LAYERS):
        for nm in dec_names:
            add(f"d{l}_{nm}", d[nm][l])
    for nm in ["enc_ng", "enc_nb", "dec_ng", "dec_nb", "out_w", "out_b"]:
        add(nm, params[nm])

    index, rows, off = {}, [], 0
    for name, a in entries:
        r, c = a.shape
        rp = ((r + 7) // 8) * 8          # 8-sublane aligned slot
        pad = np.zeros((rp, 128), np.float32)
        pad[:r, :c] = a
        rows.append(pad)
        index[name] = (off, int(r), int(c))
        off += rp
    blob = jnp.asarray(np.concatenate(rows, axis=0))
    return blob, index


# ------------------------------ host wrapper --------------------------------


def make_forward_fn(params, B, Ls, Lt):
    blob, index = _pack_params(params, Ls, Lt)
    nrows = int(blob.shape[0])
    kernel = functools.partial(_fused_transformer_kernel, index=index, Ls=Ls, Lt=Lt)

    call = pl.pallas_call(
        kernel,
        out_shape=jax.ShapeDtypeStruct((B * Lt, VOCAB), jnp.float32),
        grid=(B,),
        in_specs=[
            pl.BlockSpec((Ls, 1), lambda b: (b, 0)),         # src ids (column)
            pl.BlockSpec((Lt, 1), lambda b: (b, 0)),         # tgt ids (column)
            pl.BlockSpec((1, 1, Ls), lambda b: (b, 0, 0)),   # src ids (row)
            pl.BlockSpec((1, 1, Lt), lambda b: (b, 0, 0)),   # tgt ids (row)
            pl.BlockSpec((nrows, 128), lambda b: (0, 0)),    # weight blob (resident)
        ],
        out_specs=pl.BlockSpec((Lt, VOCAB), lambda b: (b, 0)),
        compiler_params=pltpu.CompilerParams(
            dimension_semantics=("parallel",)),               # batch over TensorCores on v7x
    )

    def forward(blob_, src, tgt):
        # pure bitcast reshapes (row-major), no extra data movement
        src_col = src.reshape(B * Ls, 1)
        tgt_col = tgt.reshape(B * Lt, 1)
        src_row = src.reshape(B, 1, Ls)
        tgt_row = tgt.reshape(B, 1, Lt)
        logits = call(src_col, tgt_col, src_row, tgt_row, blob_)
        return logits.reshape(B, Lt, VOCAB)

    fwd = jax.jit(forward)
    return lambda src, tgt: fwd(blob, src, tgt)


# ---------------------------- parameter creation ----------------------------


def positional_encoding(max_len, d_model):
    position = jnp.arange(max_len, dtype=jnp.float32)[:, None]
    div_term = jnp.exp(jnp.arange(0, d_model, 2, dtype=jnp.float32)
                       * (-math.log(10000.0) / d_model))
    pe = jnp.zeros((max_len, d_model), jnp.float32)
    pe = pe.at[:, 0::2].set(jnp.sin(position * div_term))
    pe = pe.at[:, 1::2].set(jnp.cos(position * div_term))
    return pe


def init_params(key):
    keys = iter(jax.random.split(key, 64))

    def w(shape, scale=0.02):
        return (scale * jax.random.normal(next(keys), shape)).astype(jnp.float32)

    ones = lambda s: jnp.ones(s, jnp.float32)
    zeros = lambda s: jnp.zeros(s, jnp.float32)

    D, F, V = D_MODEL, DIM_FFN, VOCAB
    NE, ND = N_ENC_LAYERS, N_DEC_LAYERS

    enc = dict(
        wqkv=w((NE, D, 3 * D)), bqkv=w((NE, 1, 3 * D)),
        wo=w((NE, D, D)), bo=w((NE, 1, D)),
        n1g=ones((NE, 1, D)), n1b=zeros((NE, 1, D)),
        w1=w((NE, D, F)), b1=w((NE, 1, F)),
        w2=w((NE, F, D)), b2=w((NE, 1, D)),
        n2g=ones((NE, 1, D)), n2b=zeros((NE, 1, D)),
    )
    dec = dict(
        sa_wqkv=w((ND, D, 3 * D)), sa_bqkv=w((ND, 1, 3 * D)),
        sa_wo=w((ND, D, D)), sa_bo=w((ND, 1, D)),
        n1g=ones((ND, 1, D)), n1b=zeros((ND, 1, D)),
        ca_wq=w((ND, D, D)), ca_bq=w((ND, 1, D)),
        ca_wkv=w((ND, D, 2 * D)), ca_bkv=w((ND, 1, 2 * D)),
        ca_wo=w((ND, D, D)), ca_bo=w((ND, 1, D)),
        n2g=ones((ND, 1, D)), n2b=zeros((ND, 1, D)),
        w1=w((ND, D, F)), b1=w((ND, 1, F)),
        w2=w((ND, F, D)), b2=w((ND, 1, D)),
        n3g=ones((ND, 1, D)), n3b=zeros((ND, 1, D)),
    )
    return dict(
        embedding=w((V, D), scale=1.0),
        pe=positional_encoding(MAX_SEQ, D),
        enc=enc, dec=dec,
        enc_ng=ones((1, D)), enc_nb=zeros((1, D)),
        dec_ng=ones((1, D)), dec_nb=zeros((1, D)),
        out_w=w((D, V)), out_b=w((1, V)),
    )


# ---------------------------------- main ------------------------------------

if __name__ == "__main__":
    B, L_SRC, L_TGT = 2, 8, 8
    key = jax.random.PRNGKey(0)
    pkey, skey, tkey = jax.random.split(key, 3)

    params = init_params(pkey)

    src = jax.random.randint(skey, (B, L_SRC), 2, VOCAB, dtype=jnp.int32)
    tgt = jax.random.randint(tkey, (B, L_TGT), 2, VOCAB, dtype=jnp.int32)
    # introduce some padding tokens (pad id = 1), like padded batches in training
    src = src.at[0, -2:].set(PAD_ID)
    tgt = tgt.at[1, -1:].set(PAD_ID)

    fwd = make_forward_fn(params, B, L_SRC, L_TGT)
    logits = jax.block_until_ready(fwd(src, tgt))

    assert logits.shape == (B, L_TGT, VOCAB)
    assert bool(jnp.isfinite(logits).all())
    print("KERNEL_OK")
</pallas_src>

<mosaic_0001>
module attributes {stable_mosaic.version = 11 : i64} {
  func.func @_fused_transformer_kernel(%arg0: i32, %arg1: memref<8x1xi32, #tpu.memory_space<vmem>>, %arg2: memref<8x1xi32, #tpu.memory_space<vmem>>, %arg3: memref<1x1x8xi32, #tpu.memory_space<vmem>>, %arg4: memref<1x1x8xi32, #tpu.memory_space<vmem>>, %arg5: memref<1384x128xf32, #tpu.memory_space<vmem>>, %arg6: memref<8x128xf32, #tpu.memory_space<vmem>>) attributes {dimension_semantics = [#tpu.dimension_semantics<parallel>], iteration_bounds = array<i64: 2>, scalar_prefetch = 0 : i64, scratch_operands = 0 : i64, tpu.core_type = #tpu.core_type<tc>, window_params = [{transform_indices = @transform_0, window_bounds = array<i64: 8, 1>}, {transform_indices = @transform_1, window_bounds = array<i64: 8, 1>}, {transform_indices = @transform_2, window_bounds = array<i64: 1, 1, 8>}, {transform_indices = @transform_3, window_bounds = array<i64: 1, 1, 8>}, {pipeline_mode = #tpu.pipeline_mode<synchronous>, transform_indices = @transform_4, window_bounds = array<i64: 1384, 128>}, {transform_indices = @transform_5, window_bounds = array<i64: 8, 128>}]} {
    %c0 = arith.constant 0 : index
    %c0_0 = arith.constant 0 : index
    %0 = vector.load %arg5[%c0, %c0_0] : memref<1384x128xf32, #tpu.memory_space<vmem>>, vector<128x32xf32>
    %1 = tpu.iota {dimensions = array<i32: 1>} : vector<8x128xi32>
    %c0_1 = arith.constant 0 : index
    %c0_2 = arith.constant 0 : index
    %2 = vector.load %arg1[%c0_1, %c0_2] : memref<8x1xi32, #tpu.memory_space<vmem>>, vector<8x1xi32>
    %3 = vector.broadcast %2 : vector<8x1xi32> to vector<8x128xi32>
    %4 = arith.cmpi eq, %1, %3 : vector<8x128xi32>
    %5 = arith.extui %4 : vector<8x128xi1> to vector<8x128xi32>
    %6 = arith.sitofp %5 : vector<8x128xi32> to vector<8x128xf32>
    %cst = arith.constant dense<0.000000e+00> : vector<8x32xf32>
    %7 = tpu.matmul %6, %0, %cst {dimension_numbers = #tpu.dot_dimension_numbers<[1], [0], [0], [1], [0, 0, 1, 1], [], []>} : vector<8x128xf32>, vector<128x32xf32>, vector<8x32xf32> -> vector<8x32xf32>
    %c128 = arith.constant 128 : index
    %c0_3 = arith.constant 0 : index
    %8 = vector.load %arg5[%c128, %c0_3] : memref<1384x128xf32, #tpu.memory_space<vmem>>, vector<8x32xf32>
    %9 = arith.addf %7, %8 : vector<8x32xf32>
    %10 = tpu.iota {dimensions = array<i32: 1>} : vector<8x128xi32>
    %c0_4 = arith.constant 0 : index
    %c0_5 = arith.constant 0 : index
    %11 = vector.load %arg2[%c0_4, %c0_5] : memref<8x1xi32, #tpu.memory_space<vmem>>, vector<8x1xi32>
    %12 = vector.broadcast %11 : vector<8x1xi32> to vector<8x128xi32>
    %13 = arith.cmpi eq, %10, %12 : vector<8x128xi32>
    %14 = arith.extui %13 : vector<8x128xi1> to vector<8x128xi32>
    %15 = arith.sitofp %14 : vector<8x128xi32> to vector<8x128xf32>
    %cst_6 = arith.constant dense<0.000000e+00> : vector<8x32xf32>
    %16 = tpu.matmul %15, %0, %cst_6 {dimension_numbers = #tpu.dot_dimension_numbers<[1], [0], [0], [1], [0, 0, 1, 1], [], []>} : vector<8x128xf32>, vector<128x32xf32>, vector<8x32xf32> -> vector<8x32xf32>
    %c136 = arith.constant 136 : index
    %c0_7 = arith.constant 0 : index
    %17 = vector.load %arg5[%c136, %c0_7] : memref<1384x128xf32, #tpu.memory_space<vmem>>, vector<8x32xf32>
    %18 = arith.addf %16, %17 : vector<8x32xf32>
    %c0_8 = arith.constant 0 : index
    %c0_9 = arith.constant 0 : index
    %c0_10 = arith.constant 0 : index
    %19 = vector.load %arg3[%c0_8, %c0_9, %c0_10] : memref<1x1x8xi32, #tpu.memory_space<vmem>>, vector<1x1x8xi32>
    %20 = vector.shape_cast %19 : vector<1x1x8xi32> to vector<1x8xi32>
    %c1_i32 = arith.constant 1 : i32
    %21 = vector.broadcast %c1_i32 : i32 to vector<1x8xi32>
    %22 = arith.cmpi eq, %20, %21 : vector<1x8xi32>
    %cst_11 = arith.constant -1.000000e+09 : f32
    %cst_12 = arith.constant 0.000000e+00 : f32
    %23 = vector.broadcast %cst_11 : f32 to vector<1x8xf32>
    %24 = vector.broadcast %cst_12 : f32 to vector<1x8xf32>
    %25 = arith.select %22, %23, %24 : vector<1x8xi1>, vector<1x8xf32>
    %26 = tpu.iota {dimensions = array<i32: 0>} : vector<8x8xi32>
    %27 = tpu.iota {dimensions = array<i32: 1>} : vector<8x8xi32>
    %28 = arith.cmpi sgt, %27, %26 : vector<8x8xi32>
    %cst_13 = arith.constant -1.000000e+09 : f32
    %cst_14 = arith.constant 0.000000e+00 : f32
    %29 = vector.broadcast %cst_13 : f32 to vector<8x8xf32>
    %30 = vector.broadcast %cst_14 : f32 to vector<8x8xf32>
    %31 = arith.select %28, %29, %30 : vector<8x8xi1>, vector<8x8xf32>
    %c0_15 = arith.constant 0 : index
    %c0_16 = arith.constant 0 : index
    %c0_17 = arith.constant 0 : index
    %32 = vector.load %arg4[%c0_15, %c0_16, %c0_17] : memref<1x1x8xi32, #tpu.memory_space<vmem>>, vector<1x1x8xi32>
    %33 = vector.shape_cast %32 : vector<1x1x8xi32> to vector<1x8xi32>
    %c1_i32_18 = arith.constant 1 : i32
    %34 = vector.broadcast %c1_i32_18 : i32 to vector<1x8xi32>
    %35 = arith.cmpi eq, %33, %34 : vector<1x8xi32>
    %cst_19 = arith.constant -1.000000e+09 : f32
    %cst_20 = arith.constant 0.000000e+00 : f32
    %36 = vector.broadcast %cst_19 : f32 to vector<1x8xf32>
    %37 = vector.broadcast %cst_20 : f32 to vector<1x8xf32>
    %38 = arith.select %35, %36, %37 : vector<1x8xi1>, vector<1x8xf32>
    %39 = vector.broadcast %38 : vector<1x8xf32> to vector<8x8xf32>
    %40 = arith.addf %31, %39 : vector<8x8xf32>
    %c144 = arith.constant 144 : index
    %c0_21 = arith.constant 0 : index
    %41 = vector.load %arg5[%c144, %c0_21] : memref<1384x128xf32, #tpu.memory_space<vmem>>, vector<32x96xf32>
    %cst_22 = arith.constant dense<0.000000e+00> : vector<8x96xf32>
    %42 = tpu.matmul %9, %41, %cst_22 {dimension_numbers = #tpu.dot_dimension_numbers<[1], [0], [0], [1], [0, 0, 1, 1], [], []>} : vector<8x32xf32>, vector<32x96xf32>, vector<8x96xf32> -> vector<8x96xf32>
    %c176 = arith.constant 176 : index
    %c0_23 = arith.constant 0 : index
    %43 = vector.load %arg5[%c176, %c0_23] : memref<1384x128xf32, #tpu.memory_space<vmem>>, vector<1x96xf32>
    %44 = vector.broadcast %43 : vector<1x96xf32> to vector<8x96xf32>
    %45 = arith.addf %42, %44 : vector<8x96xf32>
    %46 = vector.extract_strided_slice %45 {offsets = [0, 0], sizes = [8, 32], strides = [1, 1]} : vector<8x96xf32> to vector<8x32xf32>
    %47 = vector.extract_strided_slice %45 {offsets = [0, 32], sizes = [8, 32], strides = [1, 1]} : vector<8x96xf32> to vector<8x32xf32>
    %48 = vector.extract_strided_slice %45 {offsets = [0, 64], sizes = [8, 32], strides = [1, 1]} : vector<8x96xf32> to vector<8x32xf32>
    %c184 = arith.constant 184 : index
    %c0_24 = arith.constant 0 : index
    %49 = vector.load %arg5[%c184, %c0_24] : memref<1384x128xf32, #tpu.memory_space<vmem>>, vector<32x32xf32>
    %c216 = arith.constant 216 : index
    %c0_25 = arith.constant 0 : index
    %50 = vector.load %arg5[%c216, %c0_25] : memref<1384x128xf32, #tpu.memory_space<vmem>>, vector<1x32xf32>
    %51 = vector.extract_strided_slice %46 {offsets = [0, 0], sizes = [8, 8], strides = [1, 1]} : vector<8x32xf32> to vector<8x8xf32>
    %52 = vector.extract_strided_slice %47 {offsets = [0, 0], sizes = [8, 8], strides = [1, 1]} : vector<8x32xf32> to vector<8x8xf32>
    %cst_26 = arith.constant dense<0.000000e+00> : vector<8x8xf32>
    %53 = tpu.matmul %51, %52, %cst_26 {dimension_numbers = #tpu.dot_dimension_numbers<[1], [1], [0], [0], [0, 0, 1, 0], [], []>} : vector<8x8xf32>, vector<8x8xf32>, vector<8x8xf32> -> vector<8x8xf32>
    %cst_27 = arith.constant 0.353553385 : f32
    %54 = vector.broadcast %cst_27 : f32 to vector<8x8xf32>
    %55 = arith.mulf %53, %54 : vector<8x8xf32>
    %56 = vector.broadcast %25 : vector<1x8xf32> to vector<8x8xf32>
    %57 = arith.addf %55, %56 : vector<8x8xf32>
    %cst_28 = arith.constant dense<0xFF800000> : vector<8xf32>
    %58 = vector.multi_reduction <maximumf>, %57, %cst_28 [1] : vector<8x8xf32> to vector<8xf32>
    %59 = vector.shape_cast %58 : vector<8xf32> to vector<8x1xf32>
    %60 = vector.broadcast %59 : vector<8x1xf32> to vector<8x8xf32>
    %61 = arith.subf %57, %60 : vector<8x8xf32>
    %62 = math.exp %61 : vector<8x8xf32>
    %cst_29 = arith.constant dense<0.000000e+00> : vector<8xf32>
    %63 = vector.multi_reduction <add>, %62, %cst_29 [1] : vector<8x8xf32> to vector<8xf32>
    %64 = vector.shape_cast %63 : vector<8xf32> to vector<8x1xf32>
    %65 = tpu.reciprocal %64 {approx = true} : vector<8x1xf32> -> vector<8x1xf32>
    %66 = vector.broadcast %65 : vector<8x1xf32> to vector<8x8xf32>
    %67 = arith.mulf %62, %66 : vector<8x8xf32>
    %68 = vector.extract_strided_slice %48 {offsets = [0, 0], sizes = [8, 8], strides = [1, 1]} : vector<8x32xf32> to vector<8x8xf32>
    %cst_30 = arith.constant dense<0.000000e+00> : vector<8x8xf32>
    %69 = tpu.matmul %67, %68, %cst_30 {dimension_numbers = #tpu.dot_dimension_numbers<[1], [0], [0], [1], [0, 0, 1, 1], [], []>} : vector<8x8xf32>, vector<8x8xf32>, vector<8x8xf32> -> vector<8x8xf32>
    %70 = vector.extract_strided_slice %46 {offsets = [0, 8], sizes = [8, 8], strides = [1, 1]} : vector<8x32xf32> to vector<8x8xf32>
    %71 = vector.extract_strided_slice %47 {offsets = [0, 8], sizes = [8, 8], strides = [1, 1]} : vector<8x32xf32> to vector<8x8xf32>
    %cst_31 = arith.constant dense<0.000000e+00> : vector<8x8xf32>
    %72 = tpu.matmul %70, %71, %cst_31 {dimension_numbers = #tpu.dot_dimension_numbers<[1], [1], [0], [0], [0, 0, 1, 0], [], []>} : vector<8x8xf32>, vector<8x8xf32>, vector<8x8xf32> -> vector<8x8xf32>
    %cst_32 = arith.constant 0.353553385 : f32
    %73 = vector.broadcast %cst_32 : f32 to vector<8x8xf32>
    %74 = arith.mulf %72, %73 : vector<8x8xf32>
    %75 = vector.broadcast %25 : vector<1x8xf32> to vector<8x8xf32>
    %76 = arith.addf %74, %75 : vector<8x8xf32>
    %cst_33 = arith.constant dense<0xFF800000> : vector<8xf32>
    %77 = vector.multi_reduction <maximumf>, %76, %cst_33 [1] : vector<8x8xf32> to vector<8xf32>
    %78 = vector.shape_cast %77 : vector<8xf32> to vector<8x1xf32>
    %79 = vector.broadcast %78 : vector<8x1xf32> to vector<8x8xf32>
    %80 = arith.subf %76, %79 : vector<8x8xf32>
    %81 = math.exp %80 : vector<8x8xf32>
    %cst_34 = arith.constant dense<0.000000e+00> : vector<8xf32>
    %82 = vector.multi_reduction <add>, %81, %cst_34 [1] : vector<8x8xf32> to vector<8xf32>
    %83 = vector.shape_cast %82 : vector<8xf32> to vector<8x1xf32>
    %84 = tpu.reciprocal %83 {approx = true} : vector<8x1xf32> -> vector<8x1xf32>
    %85 = vector.broadcast %84 : vector<8x1xf32> to vector<8x8xf32>
    %86 = arith.mulf %81, %85 : vector<8x8xf32>
    %87 = vector.extract_strided_slice %48 {offsets = [0, 8], sizes = [8, 8], strides = [1, 1]} : vector<8x32xf32> to vector<8x8xf32>
    %cst_35 = arith.constant dense<0.000000e+00> : vector<8x8xf32>
    %88 = tpu.matmul %86, %87, %cst_35 {dimension_numbers = #tpu.dot_dimension_numbers<[1], [0], [0], [1], [0, 0, 1, 1], [], []>} : vector<8x8xf32>, vector<8x8xf32>, vector<8x8xf32> -> vector<8x8xf32>
    %89 = vector.extract_strided_slice %46 {offsets = [0, 16], sizes = [8, 8], strides = [1, 1]} : vector<8x32xf32> to vector<8x8xf32>
    %90 = vector.extract_strided_slice %47 {offsets = [0, 16], sizes = [8, 8], strides = [1, 1]} : vector<8x32xf32> to vector<8x8xf32>
    %cst_36 = arith.constant dense<0.000000e+00> : vector<8x8xf32>
    %91 = tpu.matmul %89, %90, %cst_36 {dimension_numbers = #tpu.dot_dimension_numbers<[1], [1], [0], [0], [0, 0, 1, 0], [], []>} : vector<8x8xf32>, vector<8x8xf32>, vector<8x8xf32> -> vector<8x8xf32>
    %cst_37 = arith.constant 0.353553385 : f32
    %92 = vector.broadcast %cst_37 : f32 to vector<8x8xf32>
    %93 = arith.mulf %91, %92 : vector<8x8xf32>
    %94 = vector.broadcast %25 : vector<1x8xf32> to vector<8x8xf32>
    %95 = arith.addf %93, %94 : vector<8x8xf32>
    %cst_38 = arith.constant dense<0xFF800000> : vector<8xf32>
    %96 = vector.multi_reduction <maximumf>, %95, %cst_38 [1] : vector<8x8xf32> to vector<8xf32>
    %97 = vector.shape_cast %96 : vector<8xf32> to vector<8x1xf32>
    %98 = vector.broadcast %97 : vector<8x1xf32> to vector<8x8xf32>
    %99 = arith.subf %95, %98 : vector<8x8xf32>
    %100 = math.exp %99 : vector<8x8xf32>
    %cst_39 = arith.constant dense<0.000000e+00> : vector<8xf32>
    %101 = vector.multi_reduction <add>, %100, %cst_39 [1] : vector<8x8xf32> to vector<8xf32>
    %102 = vector.shape_cast %101 : vector<8xf32> to vector<8x1xf32>
    %103 = tpu.reciprocal %102 {approx = true} : vector<8x1xf32> -> vector<8x1xf32>
    %104 = vector.broadcast %103 : vector<8x1xf32> to vector<8x8xf32>
    %105 = arith.mulf %100, %104 : vector<8x8xf32>
    %106 = vector.extract_strided_slice %48 {offsets = [0, 16], sizes = [8, 8], strides = [1, 1]} : vector<8x32xf32> to vector<8x8xf32>
    %cst_40 = arith.constant dense<0.000000e+00> : vector<8x8xf32>
    %107 = tpu.matmul %105, %106, %cst_40 {dimension_numbers = #tpu.dot_dimension_numbers<[1], [0], [0], [1], [0, 0, 1, 1], [], []>} : vector<8x8xf32>, vector<8x8xf32>, vector<8x8xf32> -> vector<8x8xf32>
    %108 = vector.extract_strided_slice %46 {offsets = [0, 24], sizes = [8, 8], strides = [1, 1]} : vector<8x32xf32> to vector<8x8xf32>
    %109 = vector.extract_strided_slice %47 {offsets = [0, 24], sizes = [8, 8], strides = [1, 1]} : vector<8x32xf32> to vector<8x8xf32>
    %cst_41 = arith.constant dense<0.000000e+00> : vector<8x8xf32>
    %110 = tpu.matmul %108, %109, %cst_41 {dimension_numbers = #tpu.dot_dimension_numbers<[1], [1], [0], [0], [0, 0, 1, 0], [], []>} : vector<8x8xf32>, vector<8x8xf32>, vector<8x8xf32> -> vector<8x8xf32>
    %cst_42 = arith.constant 0.353553385 : f32
    %111 = vector.broadcast %cst_42 : f32 to vector<8x8xf32>
    %112 = arith.mulf %110, %111 : vector<8x8xf32>
    %113 = vector.broadcast %25 : vector<1x8xf32> to vector<8x8xf32>
    %114 = arith.addf %112, %113 : vector<8x8xf32>
    %cst_43 = arith.constant dense<0xFF800000> : vector<8xf32>
    %115 = vector.multi_reduction <maximumf>, %114, %cst_43 [1] : vector<8x8xf32> to vector<8xf32>
    %116 = vector.shape_cast %115 : vector<8xf32> to vector<8x1xf32>
    %117 = vector.broadcast %116 : vector<8x1xf32> to vector<8x8xf32>
    %118 = arith.subf %114, %117 : vector<8x8xf32>
    %119 = math.exp %118 : vector<8x8xf32>
    %cst_44 = arith.constant dense<0.000000e+00> : vector<8xf32>
    %120 = vector.multi_reduction <add>, %119, %cst_44 [1] : vector<8x8xf32> to vector<8xf32>
    %121 = vector.shape_cast %120 : vector<8xf32> to vector<8x1xf32>
    %122 = tpu.reciprocal %121 {approx = true} : vector<8x1xf32> -> vector<8x1xf32>
    %123 = vector.broadcast %122 : vector<8x1xf32> to vector<8x8xf32>
    %124 = arith.mulf %119, %123 : vector<8x8xf32>
    %125 = vector.extract_strided_slice %48 {offsets = [0, 24], sizes = [8, 8], strides = [1, 1]} : vector<8x32xf32> to vector<8x8xf32>
    %cst_45 = arith.constant dense<0.000000e+00> : vector<8x8xf32>
    %126 = tpu.matmul %124, %125, %cst_45 {dimension_numbers = #tpu.dot_dimension_numbers<[1], [0], [0], [1], [0, 0, 1, 1], [], []>} : vector<8x8xf32>, vector<8x8xf32>, vector<8x8xf32> -> vector<8x8xf32>
    %127 = tpu.concatenate %69, %88, %107, %126 in 1 : vector<8x8xf32>, vector<8x8xf32>, vector<8x8xf32>, vector<8x8xf32> -> vector<8x32xf32>
    %cst_46 = arith.constant dense<0.000000e+00> : vector<8x32xf32>
    %128 = tpu.matmul %127, %49, %cst_46 {dimension_numbers = #tpu.dot_dimension_numbers<[1], [0], [0], [1], [0, 0, 1, 1], [], []>} : vector<8x32xf32>, vector<32x32xf32>, vector<8x32xf32> -> vector<8x32xf32>
    %129 = vector.broadcast %50 : vector<1x32xf32> to vector<8x32xf32>
    %130 = arith.addf %128, %129 : vector<8x32xf32>
    %131 = arith.addf %9, %130 : vector<8x32xf32>
    %c224 = arith.constant 224 : index
    %c0_47 = arith.constant 0 : index
    %132 = vector.load %arg5[%c224, %c0_47] : memref<1384x128xf32, #tpu.memory_space<vmem>>, vector<1x32xf32>
    %c232 = arith.constant 232 : index
    %c0_48 = arith.constant 0 : index
    %133 = vector.load %arg5[%c232, %c0_48] : memref<1384x128xf32, #tpu.memory_space<vmem>>, vector<1x32xf32>
    %cst_49 = arith.constant dense<0.000000e+00> : vector<8xf32>
    %134 = vector.multi_reduction <add>, %131, %cst_49 [1] : vector<8x32xf32> to vector<8xf32>
    %135 = vector.shape_cast %134 : vector<8xf32> to vector<8x1xf32>
    %cst_50 = arith.constant 3.200000e+01 : f32
    %136 = vector.broadcast %cst_50 : f32 to vector<8x1xf32>
    %137 = arith.divf %135, %136 : vector<8x1xf32>
    %138 = vector.broadcast %137 : vector<8x1xf32> to vector<8x32xf32>
    %139 = arith.subf %131, %138 : vector<8x32xf32>
    %140 = arith.mulf %139, %139 : vector<8x32xf32>
    %cst_51 = arith.constant dense<0.000000e+00> : vector<8xf32>
    %141 = vector.multi_reduction <add>, %140, %cst_51 [1] : vector<8x32xf32> to vector<8xf32>
    %142 = vector.shape_cast %141 : vector<8xf32> to vector<8x1xf32>
    %cst_52 = arith.constant 3.200000e+01 : f32
    %143 = vector.broadcast %cst_52 : f32 to vector<8x1xf32>
    %144 = arith.divf %142, %143 : vector<8x1xf32>
    %cst_53 = arith.constant 9.99999974E-6 : f32
    %145 = vector.broadcast %cst_53 : f32 to vector<8x1xf32>
    %146 = arith.addf %144, %145 : vector<8x1xf32>
    %147 = math.rsqrt %146 : vector<8x1xf32>
    %148 = vector.broadcast %147 : vector<8x1xf32> to vector<8x32xf32>
    %149 = arith.mulf %139, %148 : vector<8x32xf32>
    %150 = vector.broadcast %132 : vector<1x32xf32> to vector<8x32xf32>
    %151 = arith.mulf %149, %150 : vector<8x32xf32>
    %152 = vector.broadcast %133 : vector<1x32xf32> to vector<8x32xf32>
    %153 = arith.addf %151, %152 : vector<8x32xf32>
    %c240 = arith.constant 240 : index
    %c0_54 = arith.constant 0 : index
    %154 = vector.load %arg5[%c240, %c0_54] : memref<1384x128xf32, #tpu.memory_space<vmem>>, vector<32x64xf32>
    %c272 = arith.constant 272 : index
    %c0_55 = arith.constant 0 : index
    %155 = vector.load %arg5[%c272, %c0_55] : memref<1384x128xf32, #tpu.memory_space<vmem>>, vector<1x64xf32>
    %c280 = arith.constant 280 : index
    %c0_56 = arith.constant 0 : index
    %156 = vector.load %arg5[%c280, %c0_56] : memref<1384x128xf32, #tpu.memory_space<vmem>>, vector<64x32xf32>
    %c344 = arith.constant 344 : index
    %c0_57 = arith.constant 0 : index
    %157 = vector.load %arg5[%c344, %c0_57] : memref<1384x128xf32, #tpu.memory_space<vmem>>, vector<1x32xf32>
    %cst_58 = arith.constant dense<0.000000e+00> : vector<8x64xf32>
    %158 = tpu.matmul %153, %154, %cst_58 {dimension_numbers = #tpu.dot_dimension_numbers<[1], [0], [0], [1], [0, 0, 1, 1], [], []>} : vector<8x32xf32>, vector<32x64xf32>, vector<8x64xf32> -> vector<8x64xf32>
    %159 = vector.broadcast %155 : vector<1x64xf32> to vector<8x64xf32>
    %160 = arith.addf %158, %159 : vector<8x64xf32>
    %cst_59 = arith.constant 0.000000e+00 : f32
    %161 = vector.broadcast %cst_59 : f32 to vector<8x64xf32>
    %162 = arith.maximumf %160, %161 : vector<8x64xf32>
    %cst_60 = arith.constant dense<0.000000e+00> : vector<8x32xf32>
    %163 = tpu.matmul %162, %156, %cst_60 {dimension_numbers = #tpu.dot_dimension_numbers<[1], [0], [0], [1], [0, 0, 1, 1], [], []>} : vector<8x64xf32>, vector<64x32xf32>, vector<8x32xf32> -> vector<8x32xf32>
    %164 = vector.broadcast %157 : vector<1x32xf32> to vector<8x32xf32>
    %165 = arith.addf %163, %164 : vector<8x32xf32>
    %166 = arith.addf %153, %165 : vector<8x32xf32>
    %c352 = arith.constant 352 : index
    %c0_61 = arith.constant 0 : index
    %167 = vector.load %arg5[%c352, %c0_61] : memref<1384x128xf32, #tpu.memory_space<vmem>>, vector<1x32xf32>
    %c360 = arith.constant 360 : index
    %c0_62 = arith.constant 0 : index
    %168 = vector.load %arg5[%c360, %c0_62] : memref<1384x128xf32, #tpu.memory_space<vmem>>, vector<1x32xf32>
    %cst_63 = arith.constant dense<0.000000e+00> : vector<8xf32>
    %169 = vector.multi_reduction <add>, %166, %cst_63 [1] : vector<8x32xf32> to vector<8xf32>
    %170 = vector.shape_cast %169 : vector<8xf32> to vector<8x1xf32>
    %cst_64 = arith.constant 3.200000e+01 : f32
    %171 = vector.broadcast %cst_64 : f32 to vector<8x1xf32>
    %172 = arith.divf %170, %171 : vector<8x1xf32>
    %173 = vector.broadcast %172 : vector<8x1xf32> to vector<8x32xf32>
    %174 = arith.subf %166, %173 : vector<8x32xf32>
    %175 = arith.mulf %174, %174 : vector<8x32xf32>
    %cst_65 = arith.constant dense<0.000000e+00> : vector<8xf32>
    %176 = vector.multi_reduction <add>, %175, %cst_65 [1] : vector<8x32xf32> to vector<8xf32>
    %177 = vector.shape_cast %176 : vector<8xf32> to vector<8x1xf32>
    %cst_66 = arith.constant 3.200000e+01 : f32
    %178 = vector.broadcast %cst_66 : f32 to vector<8x1xf32>
    %179 = arith.divf %177, %178 : vector<8x1xf32>
    %cst_67 = arith.constant 9.99999974E-6 : f32
    %180 = vector.broadcast %cst_67 : f32 to vector<8x1xf32>
    %181 = arith.addf %179, %180 : vector<8x1xf32>
    %182 = math.rsqrt %181 : vector<8x1xf32>
    %183 = vector.broadcast %182 : vector<8x1xf32> to vector<8x32xf32>
    %184 = arith.mulf %174, %183 : vector<8x32xf32>
    %185 = vector.broadcast %167 : vector<1x32xf32> to vector<8x32xf32>
    %186 = arith.mulf %184, %185 : vector<8x32xf32>
    %187 = vector.broadcast %168 : vector<1x32xf32> to vector<8x32xf32>
    %188 = arith.addf %186, %187 : vector<8x32xf32>
    %c368 = arith.constant 368 : index
    %c0_68 = arith.constant 0 : index
    %189 = vector.load %arg5[%c368, %c0_68] : memref<1384x128xf32, #tpu.memory_space<vmem>>, vector<32x96xf32>
    %cst_69 = arith.constant dense<0.000000e+00> : vector<8x96xf32>
    %190 = tpu.matmul %188, %189, %cst_69 {dimension_numbers = #tpu.dot_dimension_numbers<[1], [0], [0], [1], [0, 0, 1, 1], [], []>} : vector<8x32xf32>, vector<32x96xf32>, vector<8x96xf32> -> vector<8x96xf32>
    %c400 = arith.constant 400 : index
    %c0_70 = arith.constant 0 : index
    %191 = vector.load %arg5[%c400, %c0_70] : memref<1384x128xf32, #tpu.memory_space<vmem>>, vector<1x96xf32>
    %192 = vector.broadcast %191 : vector<1x96xf32> to vector<8x96xf32>
    %193 = arith.addf %190, %192 : vector<8x96xf32>
    %194 = vector.extract_strided_slice %193 {offsets = [0, 0], sizes = [8, 32], strides = [1, 1]} : vector<8x96xf32> to vector<8x32xf32>
    %195 = vector.extract_strided_slice %193 {offsets = [0, 32], sizes = [8, 32], strides = [1, 1]} : vector<8x96xf32> to vector<8x32xf32>
    %196 = vector.extract_strided_slice %193 {offsets = [0, 64], sizes = [8, 32], strides = [1, 1]} : vector<8x96xf32> to vector<8x32xf32>
    %c408 = arith.constant 408 : index
    %c0_71 = arith.constant 0 : index
    %197 = vector.load %arg5[%c408, %c0_71] : memref<1384x128xf32, #tpu.memory_space<vmem>>, vector<32x32xf32>
    %c440 = arith.constant 440 : index
    %c0_72 = arith.constant 0 : index
    %198 = vector.load %arg5[%c440, %c0_72] : memref<1384x128xf32, #tpu.memory_space<vmem>>, vector<1x32xf32>
    %199 = vector.extract_strided_slice %194 {offsets = [0, 0], sizes = [8, 8], strides = [1, 1]} : vector<8x32xf32> to vector<8x8xf32>
    %200 = vector.extract_strided_slice %195 {offsets = [0, 0], sizes = [8, 8], strides = [1, 1]} : vector<8x32xf32> to vector<8x8xf32>
    %cst_73 = arith.constant dense<0.000000e+00> : vector<8x8xf32>
    %201 = tpu.matmul %199, %200, %cst_73 {dimension_numbers = #tpu.dot_dimension_numbers<[1], [1], [0], [0], [0, 0, 1, 0], [], []>} : vector<8x8xf32>, vector<8x8xf32>, vector<8x8xf32> -> vector<8x8xf32>
    %cst_74 = arith.constant 0.353553385 : f32
    %202 = vector.broadcast %cst_74 : f32 to vector<8x8xf32>
    %203 = arith.mulf %201, %202 : vector<8x8xf32>
    %204 = vector.broadcast %25 : vector<1x8xf32> to vector<8x8xf32>
    %205 = arith.addf %203, %204 : vector<8x8xf32>
    %cst_75 = arith.constant dense<0xFF800000> : vector<8xf32>
    %206 = vector.multi_reduction <maximumf>, %205, %cst_75 [1] : vector<8x8xf32> to vector<8xf32>
    %207 = vector.shape_cast %206 : vector<8xf32> to vector<8x1xf32>
    %208 = vector.broadcast %207 : vector<8x1xf32> to vector<8x8xf32>
    %209 = arith.subf %205, %208 : vector<8x8xf32>
    %210 = math.exp %209 : vector<8x8xf32>
    %cst_76 = arith.constant dense<0.000000e+00> : vector<8xf32>
    %211 = vector.multi_reduction <add>, %210, %cst_76 [1] : vector<8x8xf32> to vector<8xf32>
    %212 = vector.shape_cast %211 : vector<8xf32> to vector<8x1xf32>
    %213 = tpu.reciprocal %212 {approx = true} : vector<8x1xf32> -> vector<8x1xf32>
    %214 = vector.broadcast %213 : vector<8x1xf32> to vector<8x8xf32>
    %215 = arith.mulf %210, %214 : vector<8x8xf32>
    %216 = vector.extract_strided_slice %196 {offsets = [0, 0], sizes = [8, 8], strides = [1, 1]} : vector<8x32xf32> to vector<8x8xf32>
    %cst_77 = arith.constant dense<0.000000e+00> : vector<8x8xf32>
    %217 = tpu.matmul %215, %216, %cst_77 {dimension_numbers = #tpu.dot_dimension_numbers<[1], [0], [0], [1], [0, 0, 1, 1], [], []>} : vector<8x8xf32>, vector<8x8xf32>, vector<8x8xf32> -> vector<8x8xf32>
    %218 = vector.extract_strided_slice %194 {offsets = [0, 8], sizes = [8, 8], strides = [1, 1]} : vector<8x32xf32> to vector<8x8xf32>
    %219 = vector.extract_strided_slice %195 {offsets = [0, 8], sizes = [8, 8], strides = [1, 1]} : vector<8x32xf32> to vector<8x8xf32>
    %cst_78 = arith.constant dense<0.000000e+00> : vector<8x8xf32>
    %220 = tpu.matmul %218, %219, %cst_78 {dimension_numbers = #tpu.dot_dimension_numbers<[1], [1], [0], [0], [0, 0, 1, 0], [], []>} : vector<8x8xf32>, vector<8x8xf32>, vector<8x8xf32> -> vector<8x8xf32>
    %cst_79 = arith.constant 0.353553385 : f32
    %221 = vector.broadcast %cst_79 : f32 to vector<8x8xf32>
    %222 = arith.mulf %220, %221 : vector<8x8xf32>
    %223 = vector.broadcast %25 : vector<1x8xf32> to vector<8x8xf32>
    %224 = arith.addf %222, %223 : vector<8x8xf32>
    %cst_80 = arith.constant dense<0xFF800000> : vector<8xf32>
    %225 = vector.multi_reduction <maximumf>, %224, %cst_80 [1] : vector<8x8xf32> to vector<8xf32>
    %226 = vector.shape_cast %225 : vector<8xf32> to vector<8x1xf32>
    %227 = vector.broadcast %226 : vector<8x1xf32> to vector<8x8xf32>
    %228 = arith.subf %224, %227 : vector<8x8xf32>
    %229 = math.exp %228 : vector<8x8xf32>
    %cst_81 = arith.constant dense<0.000000e+00> : vector<8xf32>
    %230 = vector.multi_reduction <add>, %229, %cst_81 [1] : vector<8x8xf32> to vector<8xf32>
    %231 = vector.shape_cast %230 : vector<8xf32> to vector<8x1xf32>
    %232 = tpu.reciprocal %231 {approx = true} : vector<8x1xf32> -> vector<8x1xf32>
    %233 = vector.broadcast %232 : vector<8x1xf32> to vector<8x8xf32>
    %234 = arith.mulf %229, %233 : vector<8x8xf32>
    %235 = vector.extract_strided_slice %196 {offsets = [0, 8], sizes = [8, 8], strides = [1, 1]} : vector<8x32xf32> to vector<8x8xf32>
    %cst_82 = arith.constant dense<0.000000e+00> : vector<8x8xf32>
    %236 = tpu.matmul %234, %235, %cst_82 {dimension_numbers = #tpu.dot_dimension_numbers<[1], [0], [0], [1], [0, 0, 1, 1], [], []>} : vector<8x8xf32>, vector<8x8xf32>, vector<8x8xf32> -> vector<8x8xf32>
    %237 = vector.extract_strided_slice %194 {offsets = [0, 16], sizes = [8, 8], strides = [1, 1]} : vector<8x32xf32> to vector<8x8xf32>
    %238 = vector.extract_strided_slice %195 {offsets = [0, 16], sizes = [8, 8], strides = [1, 1]} : vector<8x32xf32> to vector<8x8xf32>
    %cst_83 = arith.constant dense<0.000000e+00> : vector<8x8xf32>
    %239 = tpu.matmul %237, %238, %cst_83 {dimension_numbers = #tpu.dot_dimension_numbers<[1], [1], [0], [0], [0, 0, 1, 0], [], []>} : vector<8x8xf32>, vector<8x8xf32>, vector<8x8xf32> -> vector<8x8xf32>
    %cst_84 = arith.constant 0.353553385 : f32
    %240 = vector.broadcast %cst_84 : f32 to vector<8x8xf32>
    %241 = arith.mulf %239, %240 : vector<8x8xf32>
    %242 = vector.broadcast %25 : vector<1x8xf32> to vector<8x8xf32>
    %243 = arith.addf %241, %242 : vector<8x8xf32>
    %cst_85 = arith.constant dense<0xFF800000> : vector<8xf32>
    %244 = vector.multi_reduction <maximumf>, %243, %cst_85 [1] : vector<8x8xf32> to vector<8xf32>
    %245 = vector.shape_cast %244 : vector<8xf32> to vector<8x1xf32>
    %246 = vector.broadcast %245 : vector<8x1xf32> to vector<8x8xf32>
    %247 = arith.subf %243, %246 : vector<8x8xf32>
    %248 = math.exp %247 : vector<8x8xf32>
    %cst_86 = arith.constant dense<0.000000e+00> : vector<8xf32>
    %249 = vector.multi_reduction <add>, %248, %cst_86 [1] : vector<8x8xf32> to vector<8xf32>
    %250 = vector.shape_cast %249 : vector<8xf32> to vector<8x1xf32>
    %251 = tpu.reciprocal %250 {approx = true} : vector<8x1xf32> -> vector<8x1xf32>
    %252 = vector.broadcast %251 : vector<8x1xf32> to vector<8x8xf32>
    %253 = arith.mulf %248, %252 : vector<8x8xf32>
    %254 = vector.extract_strided_slice %196 {offsets = [0, 16], sizes = [8, 8], strides = [1, 1]} : vector<8x32xf32> to vector<8x8xf32>
    %cst_87 = arith.constant dense<0.000000e+00> : vector<8x8xf32>
    %255 = tpu.matmul %253, %254, %cst_87 {dimension_numbers = #tpu.dot_dimension_numbers<[1], [0], [0], [1], [0, 0, 1, 1], [], []>} : vector<8x8xf32>, vector<8x8xf32>, vector<8x8xf32> -> vector<8x8xf32>
    %256 = vector.extract_strided_slice %194 {offsets = [0, 24], sizes = [8, 8], strides = [1, 1]} : vector<8x32xf32> to vector<8x8xf32>
    %257 = vector.extract_strided_slice %195 {offsets = [0, 24], sizes = [8, 8], strides = [1, 1]} : vector<8x32xf32> to vector<8x8xf32>
    %cst_88 = arith.constant dense<0.000000e+00> : vector<8x8xf32>
    %258 = tpu.matmul %256, %257, %cst_88 {dimension_numbers = #tpu.dot_dimension_numbers<[1], [1], [0], [0], [0, 0, 1, 0], [], []>} : vector<8x8xf32>, vector<8x8xf32>, vector<8x8xf32> -> vector<8x8xf32>
    %cst_89 = arith.constant 0.353553385 : f32
    %259 = vector.broadcast %cst_89 : f32 to vector<8x8xf32>
    %260 = arith.mulf %258, %259 : vector<8x8xf32>
    %261 = vector.broadcast %25 : vector<1x8xf32> to vector<8x8xf32>
    %262 = arith.addf %260, %261 : vector<8x8xf32>
    %cst_90 = arith.constant dense<0xFF800000> : vector<8xf32>
    %263 = vector.multi_reduction <maximumf>, %262, %cst_90 [1] : vector<8x8xf32> to vector<8xf32>
    %264 = vector.shape_cast %263 : vector<8xf32> to vector<8x1xf32>
    %265 = vector.broadcast %264 : vector<8x1xf32> to vector<8x8xf32>
    %266 = arith.subf %262, %265 : vector<8x8xf32>
    %267 = math.exp %266 : vector<8x8xf32>
    %cst_91 = arith.constant dense<0.000000e+00> : vector<8xf32>
    %268 = vector.multi_reduction <add>, %267, %cst_91 [1] : vector<8x8xf32> to vector<8xf32>
    %269 = vector.shape_cast %268 : vector<8xf32> to vector<8x1xf32>
    %270 = tpu.reciprocal %269 {approx = true} : vector<8x1xf32> -> vector<8x1xf32>
    %271 = vector.broadcast %270 : vector<8x1xf32> to vector<8x8xf32>
    %272 = arith.mulf %267, %271 : vector<8x8xf32>
    %273 = vector.extract_strided_slice %196 {offsets = [0, 24], sizes = [8, 8], strides = [1, 1]} : vector<8x32xf32> to vector<8x8xf32>
    %cst_92 = arith.constant dense<0.000000e+00> : vector<8x8xf32>
    %274 = tpu.matmul %272, %273, %cst_92 {dimension_numbers = #tpu.dot_dimension_numbers<[1], [0], [0], [1], [0, 0, 1, 1], [], []>} : vector<8x8xf32>, vector<8x8xf32>, vector<8x8xf32> -> vector<8x8xf32>
    %275 = tpu.concatenate %217, %236, %255, %274 in 1 : vector<8x8xf32>, vector<8x8xf32>, vector<8x8xf32>, vector<8x8xf32> -> vector<8x32xf32>
    %cst_93 = arith.constant dense<0.000000e+00> : vector<8x32xf32>
    %276 = tpu.matmul %275, %197, %cst_93 {dimension_numbers = #tpu.dot_dimension_numbers<[1], [0], [0], [1], [0, 0, 1, 1], [], []>} : vector<8x32xf32>, vector<32x32xf32>, vector<8x32xf32> -> vector<8x32xf32>
    %277 = vector.broadcast %198 : vector<1x32xf32> to vector<8x32xf32>
    %278 = arith.addf %276, %277 : vector<8x32xf32>
    %279 = arith.addf %188, %278 : vector<8x32xf32>
    %c448 = arith.constant 448 : index
    %c0_94 = arith.constant 0 : index
    %280 = vector.load %arg5[%c448, %c0_94] : memref<1384x128xf32, #tpu.memory_space<vmem>>, vector<1x32xf32>
    %c456 = arith.constant 456 : index
    %c0_95 = arith.constant 0 : index
    %281 = vector.load %arg5[%c456, %c0_95] : memref<1384x128xf32, #tpu.memory_space<vmem>>, vector<1x32xf32>
    %cst_96 = arith.constant dense<0.000000e+00> : vector<8xf32>
    %282 = vector.multi_reduction <add>, %279, %cst_96 [1] : vector<8x32xf32> to vector<8xf32>
    %283 = vector.shape_cast %282 : vector<8xf32> to vector<8x1xf32>
    %cst_97 = arith.constant 3.200000e+01 : f32
    %284 = vector.broadcast %cst_97 : f32 to vector<8x1xf32>
    %285 = arith.divf %283, %284 : vector<8x1xf32>
    %286 = vector.broadcast %285 : vector<8x1xf32> to vector<8x32xf32>
    %287 = arith.subf %279, %286 : vector<8x32xf32>
    %288 = arith.mulf %287, %287 : vector<8x32xf32>
    %cst_98 = arith.constant dense<0.000000e+00> : vector<8xf32>
    %289 = vector.multi_reduction <add>, %288, %cst_98 [1] : vector<8x32xf32> to vector<8xf32>
    %290 = vector.shape_cast %289 : vector<8xf32> to vector<8x1xf32>
    %cst_99 = arith.constant 3.200000e+01 : f32
    %291 = vector.broadcast %cst_99 : f32 to vector<8x1xf32>
    %292 = arith.divf %290, %291 : vector<8x1xf32>
    %cst_100 = arith.constant 9.99999974E-6 : f32
    %293 = vector.broadcast %cst_100 : f32 to vector<8x1xf32>
    %294 = arith.addf %292, %293 : vector<8x1xf32>
    %295 = math.rsqrt %294 : vector<8x1xf32>
    %296 = vector.broadcast %295 : vector<8x1xf32> to vector<8x32xf32>
    %297 = arith.mulf %287, %296 : vector<8x32xf32>
    %298 = vector.broadcast %280 : vector<1x32xf32> to vector<8x32xf32>
    %299 = arith.mulf %297, %298 : vector<8x32xf32>
    %300 = vector.broadcast %281 : vector<1x32xf32> to vector<8x32xf32>
    %301 = arith.addf %299, %300 : vector<8x32xf32>
    %c464 = arith.constant 464 : index
    %c0_101 = arith.constant 0 : index
    %302 = vector.load %arg5[%c464, %c0_101] : memref<1384x128xf32, #tpu.memory_space<vmem>>, vector<32x64xf32>
    %c496 = arith.constant 496 : index
    %c0_102 = arith.constant 0 : index
    %303 = vector.load %arg5[%c496, %c0_102] : memref<1384x128xf32, #tpu.memory_space<vmem>>, vector<1x64xf32>
    %c504 = arith.constant 504 : index
    %c0_103 = arith.constant 0 : index
    %304 = vector.load %arg5[%c504, %c0_103] : memref<1384x128xf32, #tpu.memory_space<vmem>>, vector<64x32xf32>
    %c568 = arith.constant 568 : index
    %c0_104 = arith.constant 0 : index
    %305 = vector.load %arg5[%c568, %c0_104] : memref<1384x128xf32, #tpu.memory_space<vmem>>, vector<1x32xf32>
    %cst_105 = arith.constant dense<0.000000e+00> : vector<8x64xf32>
    %306 = tpu.matmul %301, %302, %cst_105 {dimension_numbers = #tpu.dot_dimension_numbers<[1], [0], [0], [1], [0, 0, 1, 1], [], []>} : vector<8x32xf32>, vector<32x64xf32>, vector<8x64xf32> -> vector<8x64xf32>
    %307 = vector.broadcast %303 : vector<1x64xf32> to vector<8x64xf32>
    %308 = arith.addf %306, %307 : vector<8x64xf32>
    %cst_106 = arith.constant 0.000000e+00 : f32
    %309 = vector.broadcast %cst_106 : f32 to vector<8x64xf32>
    %310 = arith.maximumf %308, %309 : vector<8x64xf32>
    %cst_107 = arith.constant dense<0.000000e+00> : vector<8x32xf32>
    %311 = tpu.matmul %310, %304, %cst_107 {dimension_numbers = #tpu.dot_dimension_numbers<[1], [0], [0], [1], [0, 0, 1, 1], [], []>} : vector<8x64xf32>, vector<64x32xf32>, vector<8x32xf32> -> vector<8x32xf32>
    %312 = vector.broadcast %305 : vector<1x32xf32> to vector<8x32xf32>
    %313 = arith.addf %311, %312 : vector<8x32xf32>
    %314 = arith.addf %301, %313 : vector<8x32xf32>
    %c576 = arith.constant 576 : index
    %c0_108 = arith.constant 0 : index
    %315 = vector.load %arg5[%c576, %c0_108] : memref<1384x128xf32, #tpu.memory_space<vmem>>, vector<1x32xf32>
    %c584 = arith.constant 584 : index
    %c0_109 = arith.constant 0 : index
    %316 = vector.load %arg5[%c584, %c0_109] : memref<1384x128xf32, #tpu.memory_space<vmem>>, vector<1x32xf32>
    %cst_110 = arith.constant dense<0.000000e+00> : vector<8xf32>
    %317 = vector.multi_reduction <add>, %314, %cst_110 [1] : vector<8x32xf32> to vector<8xf32>
    %318 = vector.shape_cast %317 : vector<8xf32> to vector<8x1xf32>
    %cst_111 = arith.constant 3.200000e+01 : f32
    %319 = vector.broadcast %cst_111 : f32 to vector<8x1xf32>
    %320 = arith.divf %318, %319 : vector<8x1xf32>
    %321 = vector.broadcast %320 : vector<8x1xf32> to vector<8x32xf32>
    %322 = arith.subf %314, %321 : vector<8x32xf32>
    %323 = arith.mulf %322, %322 : vector<8x32xf32>
    %cst_112 = arith.constant dense<0.000000e+00> : vector<8xf32>
    %324 = vector.multi_reduction <add>, %323, %cst_112 [1] : vector<8x32xf32> to vector<8xf32>
    %325 = vector.shape_cast %324 : vector<8xf32> to vector<8x1xf32>
    %cst_113 = arith.constant 3.200000e+01 : f32
    %326 = vector.broadcast %cst_113 : f32 to vector<8x1xf32>
    %327 = arith.divf %325, %326 : vector<8x1xf32>
    %cst_114 = arith.constant 9.99999974E-6 : f32
    %328 = vector.broadcast %cst_114 : f32 to vector<8x1xf32>
    %329 = arith.addf %327, %328 : vector<8x1xf32>
    %330 = math.rsqrt %329 : vector<8x1xf32>
    %331 = vector.broadcast %330 : vector<8x1xf32> to vector<8x32xf32>
    %332 = arith.mulf %322, %331 : vector<8x32xf32>
    %333 = vector.broadcast %315 : vector<1x32xf32> to vector<8x32xf32>
    %334 = arith.mulf %332, %333 : vector<8x32xf32>
    %335 = vector.broadcast %316 : vector<1x32xf32> to vector<8x32xf32>
    %336 = arith.addf %334, %335 : vector<8x32xf32>
    %c1312 = arith.constant 1312 : index
    %c0_115 = arith.constant 0 : index
    %337 = vector.load %arg5[%c1312, %c0_115] : memref<1384x128xf32, #tpu.memory_space<vmem>>, vector<1x32xf32>
    %c1320 = arith.constant 1320 : index
    %c0_116 = arith.constant 0 : index
    %338 = vector.load %arg5[%c1320, %c0_116] : memref<1384x128xf32, #tpu.memory_space<vmem>>, vector<1x32xf32>
    %cst_117 = arith.constant dense<0.000000e+00> : vector<8xf32>
    %339 = vector.multi_reduction <add>, %336, %cst_117 [1] : vector<8x32xf32> to vector<8xf32>
    %340 = vector.shape_cast %339 : vector<8xf32> to vector<8x1xf32>
    %cst_118 = arith.constant 3.200000e+01 : f32
    %341 = vector.broadcast %cst_118 : f32 to vector<8x1xf32>
    %342 = arith.divf %340, %341 : vector<8x1xf32>
    %343 = vector.broadcast %342 : vector<8x1xf32> to vector<8x32xf32>
    %344 = arith.subf %336, %343 : vector<8x32xf32>
    %345 = arith.mulf %344, %344 : vector<8x32xf32>
    %cst_119 = arith.constant dense<0.000000e+00> : vector<8xf32>
    %346 = vector.multi_reduction <add>, %345, %cst_119 [1] : vector<8x32xf32> to vector<8xf32>
    %347 = vector.shape_cast %346 : vector<8xf32> to vector<8x1xf32>
    %cst_120 = arith.constant 3.200000e+01 : f32
    %348 = vector.broadcast %cst_120 : f32 to vector<8x1xf32>
    %349 = arith.divf %347, %348 : vector<8x1xf32>
    %cst_121 = arith.constant 9.99999974E-6 : f32
    %350 = vector.broadcast %cst_121 : f32 to vector<8x1xf32>
    %351 = arith.addf %349, %350 : vector<8x1xf32>
    %352 = math.rsqrt %351 : vector<8x1xf32>
    %353 = vector.broadcast %352 : vector<8x1xf32> to vector<8x32xf32>
    %354 = arith.mulf %344, %353 : vector<8x32xf32>
    %355 = vector.broadcast %337 : vector<1x32xf32> to vector<8x32xf32>
    %356 = arith.mulf %354, %355 : vector<8x32xf32>
    %357 = vector.broadcast %338 : vector<1x32xf32> to vector<8x32xf32>
    %358 = arith.addf %356, %357 : vector<8x32xf32>
    %c592 = arith.constant 592 : index
    %c0_122 = arith.constant 0 : index
    %359 = vector.load %arg5[%c592, %c0_122] : memref<1384x128xf32, #tpu.memory_space<vmem>>, vector<32x96xf32>
    %cst_123 = arith.constant dense<0.000000e+00> : vector<8x96xf32>
    %360 = tpu.matmul %18, %359, %cst_123 {dimension_numbers = #tpu.dot_dimension_numbers<[1], [0], [0], [1], [0, 0, 1, 1], [], []>} : vector<8x32xf32>, vector<32x96xf32>, vector<8x96xf32> -> vector<8x96xf32>
    %c624 = arith.constant 624 : index
    %c0_124 = arith.constant 0 : index
    %361 = vector.load %arg5[%c624, %c0_124] : memref<1384x128xf32, #tpu.memory_space<vmem>>, vector<1x96xf32>
    %362 = vector.broadcast %361 : vector<1x96xf32> to vector<8x96xf32>
    %363 = arith.addf %360, %362 : vector<8x96xf32>
    %364 = vector.extract_strided_slice %363 {offsets = [0, 0], sizes = [8, 32], strides = [1, 1]} : vector<8x96xf32> to vector<8x32xf32>
    %365 = vector.extract_strided_slice %363 {offsets = [0, 32], sizes = [8, 32], strides = [1, 1]} : vector<8x96xf32> to vector<8x32xf32>
    %366 = vector.extract_strided_slice %363 {offsets = [0, 64], sizes = [8, 32], strides = [1, 1]} : vector<8x96xf32> to vector<8x32xf32>
    %c632 = arith.constant 632 : index
    %c0_125 = arith.constant 0 : index
    %367 = vector.load %arg5[%c632, %c0_125] : memref<1384x128xf32, #tpu.memory_space<vmem>>, vector<32x32xf32>
    %c664 = arith.constant 664 : index
    %c0_126 = arith.constant 0 : index
    %368 = vector.load %arg5[%c664, %c0_126] : memref<1384x128xf32, #tpu.memory_space<vmem>>, vector<1x32xf32>
    %369 = vector.extract_strided_slice %364 {offsets = [0, 0], sizes = [8, 8], strides = [1, 1]} : vector<8x32xf32> to vector<8x8xf32>
    %370 = vector.extract_strided_slice %365 {offsets = [0, 0], sizes = [8, 8], strides = [1, 1]} : vector<8x32xf32> to vector<8x8xf32>
    %cst_127 = arith.constant dense<0.000000e+00> : vector<8x8xf32>
    %371 = tpu.matmul %369, %370, %cst_127 {dimension_numbers = #tpu.dot_dimension_numbers<[1], [1], [0], [0], [0, 0, 1, 0], [], []>} : vector<8x8xf32>, vector<8x8xf32>, vector<8x8xf32> -> vector<8x8xf32>
    %cst_128 = arith.constant 0.353553385 : f32
    %372 = vector.broadcast %cst_128 : f32 to vector<8x8xf32>
    %373 = arith.mulf %371, %372 : vector<8x8xf32>
    %374 = arith.addf %373, %40 : vector<8x8xf32>
    %cst_129 = arith.constant dense<0xFF800000> : vector<8xf32>
    %375 = vector.multi_reduction <maximumf>, %374, %cst_129 [1] : vector<8x8xf32> to vector<8xf32>
    %376 = vector.shape_cast %375 : vector<8xf32> to vector<8x1xf32>
    %377 = vector.broadcast %376 : vector<8x1xf32> to vector<8x8xf32>
    %378 = arith.subf %374, %377 : vector<8x8xf32>
    %379 = math.exp %378 : vector<8x8xf32>
    %cst_130 = arith.constant dense<0.000000e+00> : vector<8xf32>
    %380 = vector.multi_reduction <add>, %379, %cst_130 [1] : vector<8x8xf32> to vector<8xf32>
    %381 = vector.shape_cast %380 : vector<8xf32> to vector<8x1xf32>
    %382 = tpu.reciprocal %381 {approx = true} : vector<8x1xf32> -> vector<8x1xf32>
    %383 = vector.broadcast %382 : vector<8x1xf32> to vector<8x8xf32>
    %384 = arith.mulf %379, %383 : vector<8x8xf32>
    %385 = vector.extract_strided_slice %366 {offsets = [0, 0], sizes = [8, 8], strides = [1, 1]} : vector<8x32xf32> to vector<8x8xf32>
    %cst_131 = arith.constant dense<0.000000e+00> : vector<8x8xf32>
    %386 = tpu.matmul %384, %385, %cst_131 {dimension_numbers = #tpu.dot_dimension_numbers<[1], [0], [0], [1], [0, 0, 1, 1], [], []>} : vector<8x8xf32>, vector<8x8xf32>, vector<8x8xf32> -> vector<8x8xf32>
    %387 = vector.extract_strided_slice %364 {offsets = [0, 8], sizes = [8, 8], strides = [1, 1]} : vector<8x32xf32> to vector<8x8xf32>
    %388 = vector.extract_strided_slice %365 {offsets = [0, 8], sizes = [8, 8], strides = [1, 1]} : vector<8x32xf32> to vector<8x8xf32>
    %cst_132 = arith.constant dense<0.000000e+00> : vector<8x8xf32>
    %389 = tpu.matmul %387, %388, %cst_132 {dimension_numbers = #tpu.dot_dimension_numbers<[1], [1], [0], [0], [0, 0, 1, 0], [], []>} : vector<8x8xf32>, vector<8x8xf32>, vector<8x8xf32> -> vector<8x8xf32>
    %cst_133 = arith.constant 0.353553385 : f32
    %390 = vector.broadcast %cst_133 : f32 to vector<8x8xf32>
    %391 = arith.mulf %389, %390 : vector<8x8xf32>
    %392 = arith.addf %391, %40 : vector<8x8xf32>
    %cst_134 = arith.constant dense<0xFF800000> : vector<8xf32>
    %393 = vector.multi_reduction <maximumf>, %392, %cst_134 [1] : vector<8x8xf32> to vector<8xf32>
    %394 = vector.shape_cast %393 : vector<8xf32> to vector<8x1xf32>
    %395 = vector.broadcast %394 : vector<8x1xf32> to vector<8x8xf32>
    %396 = arith.subf %392, %395 : vector<8x8xf32>
    %397 = math.exp %396 : vector<8x8xf32>
    %cst_135 = arith.constant dense<0.000000e+00> : vector<8xf32>
    %398 = vector.multi_reduction <add>, %397, %cst_135 [1] : vector<8x8xf32> to vector<8xf32>
    %399 = vector.shape_cast %398 : vector<8xf32> to vector<8x1xf32>
    %400 = tpu.reciprocal %399 {approx = true} : vector<8x1xf32> -> vector<8x1xf32>
    %401 = vector.broadcast %400 : vector<8x1xf32> to vector<8x8xf32>
    %402 = arith.mulf %397, %401 : vector<8x8xf32>
    %403 = vector.extract_strided_slice %366 {offsets = [0, 8], sizes = [8, 8], strides = [1, 1]} : vector<8x32xf32> to vector<8x8xf32>
    %cst_136 = arith.constant dense<0.000000e+00> : vector<8x8xf32>
    %404 = tpu.matmul %402, %403, %cst_136 {dimension_numbers = #tpu.dot_dimension_numbers<[1], [0], [0], [1], [0, 0, 1, 1], [], []>} : vector<8x8xf32>, vector<8x8xf32>, vector<8x8xf32> -> vector<8x8xf32>
    %405 = vector.extract_strided_slice %364 {offsets = [0, 16], sizes = [8, 8], strides = [1, 1]} : vector<8x32xf32> to vector<8x8xf32>
    %406 = vector.extract_strided_slice %365 {offsets = [0, 16], sizes = [8, 8], strides = [1, 1]} : vector<8x32xf32> to vector<8x8xf32>
    %cst_137 = arith.constant dense<0.000000e+00> : vector<8x8xf32>
    %407 = tpu.matmul %405, %406, %cst_137 {dimension_numbers = #tpu.dot_dimension_numbers<[1], [1], [0], [0], [0, 0, 1, 0], [], []>} : vector<8x8xf32>, vector<8x8xf32>, vector<8x8xf32> -> vector<8x8xf32>
    %cst_138 = arith.constant 0.353553385 : f32
    %408 = vector.broadcast %cst_138 : f32 to vector<8x8xf32>
    %409 = arith.mulf %407, %408 : vector<8x8xf32>
    %410 = arith.addf %409, %40 : vector<8x8xf32>
    %cst_139 = arith.constant dense<0xFF800000> : vector<8xf32>
    %411 = vector.multi_reduction <maximumf>, %410, %cst_139 [1] : vector<8x8xf32> to vector<8xf32>
    %412 = vector.shape_cast %411 : vector<8xf32> to vector<8x1xf32>
    %413 = vector.broadcast %412 : vector<8x1xf32> to vector<8x8xf32>
    %414 = arith.subf %410, %413 : vector<8x8xf32>
    %415 = math.exp %414 : vector<8x8xf32>
    %cst_140 = arith.constant dense<0.000000e+00> : vector<8xf32>
    %416 = vector.multi_reduction <add>, %415, %cst_140 [1] : vector<8x8xf32> to vector<8xf32>
    %417 = vector.shape_cast %416 : vector<8xf32> to vector<8x1xf32>
    %418 = tpu.reciprocal %417 {approx = true} : vector<8x1xf32> -> vector<8x1xf32>
    %419 = vector.broadcast %418 : vector<8x1xf32> to vector<8x8xf32>
    %420 = arith.mulf %415, %419 : vector<8x8xf32>
    %421 = vector.extract_strided_slice %366 {offsets = [0, 16], sizes = [8, 8], strides = [1, 1]} : vector<8x32xf32> to vector<8x8xf32>
    %cst_141 = arith.constant dense<0.000000e+00> : vector<8x8xf32>
    %422 = tpu.matmul %420, %421, %cst_141 {dimension_numbers = #tpu.dot_dimension_numbers<[1], [0], [0], [1], [0, 0, 1, 1], [], []>} : vector<8x8xf32>, vector<8x8xf32>, vector<8x8xf32> -> vector<8x8xf32>
    %423 = vector.extract_strided_slice %364 {offsets = [0, 24], sizes = [8, 8], strides = [1, 1]} : vector<8x32xf32> to vector<8x8xf32>
    %424 = vector.extract_strided_slice %365 {offsets = [0, 24], sizes = [8, 8], strides = [1, 1]} : vector<8x32xf32> to vector<8x8xf32>
    %cst_142 = arith.constant dense<0.000000e+00> : vector<8x8xf32>
    %425 = tpu.matmul %423, %424, %cst_142 {dimension_numbers = #tpu.dot_dimension_numbers<[1], [1], [0], [0], [0, 0, 1, 0], [], []>} : vector<8x8xf32>, vector<8x8xf32>, vector<8x8xf32> -> vector<8x8xf32>
    %cst_143 = arith.constant 0.353553385 : f32
    %426 = vector.broadcast %cst_143 : f32 to vector<8x8xf32>
    %427 = arith.mulf %425, %426 : vector<8x8xf32>
    %428 = arith.addf %427, %40 : vector<8x8xf32>
    %cst_144 = arith.constant dense<0xFF800000> : vector<8xf32>
    %429 = vector.multi_reduction <maximumf>, %428, %cst_144 [1] : vector<8x8xf32> to vector<8xf32>
    %430 = vector.shape_cast %429 : vector<8xf32> to vector<8x1xf32>
    %431 = vector.broadcast %430 : vector<8x1xf32> to vector<8x8xf32>
    %432 = arith.subf %428, %431 : vector<8x8xf32>
    %433 = math.exp %432 : vector<8x8xf32>
    %cst_145 = arith.constant dense<0.000000e+00> : vector<8xf32>
    %434 = vector.multi_reduction <add>, %433, %cst_145 [1] : vector<8x8xf32> to vector<8xf32>
    %435 = vector.shape_cast %434 : vector<8xf32> to vector<8x1xf32>
    %436 = tpu.reciprocal %435 {approx = true} : vector<8x1xf32> -> vector<8x1xf32>
    %437 = vector.broadcast %436 : vector<8x1xf32> to vector<8x8xf32>
    %438 = arith.mulf %433, %437 : vector<8x8xf32>
    %439 = vector.extract_strided_slice %366 {offsets = [0, 24], sizes = [8, 8], strides = [1, 1]} : vector<8x32xf32> to vector<8x8xf32>
    %cst_146 = arith.constant dense<0.000000e+00> : vector<8x8xf32>
    %440 = tpu.matmul %438, %439, %cst_146 {dimension_numbers = #tpu.dot_dimension_numbers<[1], [0], [0], [1], [0, 0, 1, 1], [], []>} : vector<8x8xf32>, vector<8x8xf32>, vector<8x8xf32> -> vector<8x8xf32>
    %441 = tpu.concatenate %386, %404, %422, %440 in 1 : vector<8x8xf32>, vector<8x8xf32>, vector<8x8xf32>, vector<8x8xf32> -> vector<8x32xf32>
    %cst_147 = arith.constant dense<0.000000e+00> : vector<8x32xf32>
    %442 = tpu.matmul %441, %367, %cst_147 {dimension_numbers = #tpu.dot_dimension_numbers<[1], [0], [0], [1], [0, 0, 1, 1], [], []>} : vector<8x32xf32>, vector<32x32xf32>, vector<8x32xf32> -> vector<8x32xf32>
    %443 = vector.broadcast %368 : vector<1x32xf32> to vector<8x32xf32>
    %444 = arith.addf %442, %443 : vector<8x32xf32>
    %445 = arith.addf %18, %444 : vector<8x32xf32>
    %c672 = arith.constant 672 : index
    %c0_148 = arith.constant 0 : index
    %446 = vector.load %arg5[%c672, %c0_148] : memref<1384x128xf32, #tpu.memory_space<vmem>>, vector<1x32xf32>
    %c680 = arith.constant 680 : index
    %c0_149 = arith.constant 0 : index
    %447 = vector.load %arg5[%c680, %c0_149] : memref<1384x128xf32, #tpu.memory_space<vmem>>, vector<1x32xf32>
    %cst_150 = arith.constant dense<0.000000e+00> : vector<8xf32>
    %448 = vector.multi_reduction <add>, %445, %cst_150 [1] : vector<8x32xf32> to vector<8xf32>
    %449 = vector.shape_cast %448 : vector<8xf32> to vector<8x1xf32>
    %cst_151 = arith.constant 3.200000e+01 : f32
    %450 = vector.broadcast %cst_151 : f32 to vector<8x1xf32>
    %451 = arith.divf %449, %450 : vector<8x1xf32>
    %452 = vector.broadcast %451 : vector<8x1xf32> to vector<8x32xf32>
    %453 = arith.subf %445, %452 : vector<8x32xf32>
    %454 = arith.mulf %453, %453 : vector<8x32xf32>
    %cst_152 = arith.constant dense<0.000000e+00> : vector<8xf32>
    %455 = vector.multi_reduction <add>, %454, %cst_152 [1] : vector<8x32xf32> to vector<8xf32>
    %456 = vector.shape_cast %455 : vector<8xf32> to vector<8x1xf32>
    %cst_153 = arith.constant 3.200000e+01 : f32
    %457 = vector.broadcast %cst_153 : f32 to vector<8x1xf32>
    %458 = arith.divf %456, %457 : vector<8x1xf32>
    %cst_154 = arith.constant 9.99999974E-6 : f32
    %459 = vector.broadcast %cst_154 : f32 to vector<8x1xf32>
    %460 = arith.addf %458, %459 : vector<8x1xf32>
    %461 = math.rsqrt %460 : vector<8x1xf32>
    %462 = vector.broadcast %461 : vector<8x1xf32> to vector<8x32xf32>
    %463 = arith.mulf %453, %462 : vector<8x32xf32>
    %464 = vector.broadcast %446 : vector<1x32xf32> to vector<8x32xf32>
    %465 = arith.mulf %463, %464 : vector<8x32xf32>
    %466 = vector.broadcast %447 : vector<1x32xf32> to vector<8x32xf32>
    %467 = arith.addf %465, %466 : vector<8x32xf32>
    %c688 = arith.constant 688 : index
    %c0_155 = arith.constant 0 : index
    %468 = vector.load %arg5[%c688, %c0_155] : memref<1384x128xf32, #tpu.memory_space<vmem>>, vector<32x32xf32>
    %cst_156 = arith.constant dense<0.000000e+00> : vector<8x32xf32>
    %469 = tpu.matmul %467, %468, %cst_156 {dimension_numbers = #tpu.dot_dimension_numbers<[1], [0], [0], [1], [0, 0, 1, 1], [], []>} : vector<8x32xf32>, vector<32x32xf32>, vector<8x32xf32> -> vector<8x32xf32>
    %c720 = arith.constant 720 : index
    %c0_157 = arith.constant 0 : index
    %470 = vector.load %arg5[%c720, %c0_157] : memref<1384x128xf32, #tpu.memory_space<vmem>>, vector<1x32xf32>
    %471 = vector.broadcast %470 : vector<1x32xf32> to vector<8x32xf32>
    %472 = arith.addf %469, %471 : vector<8x32xf32>
    %c728 = arith.constant 728 : index
    %c0_158 = arith.constant 0 : index
    %473 = vector.load %arg5[%c728, %c0_158] : memref<1384x128xf32, #tpu.memory_space<vmem>>, vector<32x64xf32>
    %cst_159 = arith.constant dense<0.000000e+00> : vector<8x64xf32>
    %474 = tpu.matmul %358, %473, %cst_159 {dimension_numbers = #tpu.dot_dimension_numbers<[1], [0], [0], [1], [0, 0, 1, 1], [], []>} : vector<8x32xf32>, vector<32x64xf32>, vector<8x64xf32> -> vector<8x64xf32>
    %c760 = arith.constant 760 : index
    %c0_160 = arith.constant 0 : index
    %475 = vector.load %arg5[%c760, %c0_160] : memref<1384x128xf32, #tpu.memory_space<vmem>>, vector<1x64xf32>
    %476 = vector.broadcast %475 : vector<1x64xf32> to vector<8x64xf32>
    %477 = arith.addf %474, %476 : vector<8x64xf32>
    %478 = vector.extract_strided_slice %477 {offsets = [0, 0], sizes = [8, 32], strides = [1, 1]} : vector<8x64xf32> to vector<8x32xf32>
    %479 = vector.extract_strided_slice %477 {offsets = [0, 32], sizes = [8, 32], strides = [1, 1]} : vector<8x64xf32> to vector<8x32xf32>
    %c768 = arith.constant 768 : index
    %c0_161 = arith.constant 0 : index
    %480 = vector.load %arg5[%c768, %c0_161] : memref<1384x128xf32, #tpu.memory_space<vmem>>, vector<32x32xf32>
    %c800 = arith.constant 800 : index
    %c0_162 = arith.constant 0 : index
    %481 = vector.load %arg5[%c800, %c0_162] : memref<1384x128xf32, #tpu.memory_space<vmem>>, vector<1x32xf32>
    %482 = vector.extract_strided_slice %472 {offsets = [0, 0], sizes = [8, 8], strides = [1, 1]} : vector<8x32xf32> to vector<8x8xf32>
    %483 = vector.extract_strided_slice %478 {offsets = [0, 0], sizes = [8, 8], strides = [1, 1]} : vector<8x32xf32> to vector<8x8xf32>
    %cst_163 = arith.constant dense<0.000000e+00> : vector<8x8xf32>
    %484 = tpu.matmul %482, %483, %cst_163 {dimension_numbers = #tpu.dot_dimension_numbers<[1], [1], [0], [0], [0, 0, 1, 0], [], []>} : vector<8x8xf32>, vector<8x8xf32>, vector<8x8xf32> -> vector<8x8xf32>
    %cst_164 = arith.constant 0.353553385 : f32
    %485 = vector.broadcast %cst_164 : f32 to vector<8x8xf32>
    %486 = arith.mulf %484, %485 : vector<8x8xf32>
    %cst_165 = arith.constant dense<0xFF800000> : vector<8xf32>
    %487 = vector.multi_reduction <maximumf>, %486, %cst_165 [1] : vector<8x8xf32> to vector<8xf32>
    %488 = vector.shape_cast %487 : vector<8xf32> to vector<8x1xf32>
    %489 = vector.broadcast %488 : vector<8x1xf32> to vector<8x8xf32>
    %490 = arith.subf %486, %489 : vector<8x8xf32>
    %491 = math.exp %490 : vector<8x8xf32>
    %cst_166 = arith.constant dense<0.000000e+00> : vector<8xf32>
    %492 = vector.multi_reduction <add>, %491, %cst_166 [1] : vector<8x8xf32> to vector<8xf32>
    %493 = vector.shape_cast %492 : vector<8xf32> to vector<8x1xf32>
    %494 = tpu.reciprocal %493 {approx = true} : vector<8x1xf32> -> vector<8x1xf32>
    %495 = vector.broadcast %494 : vector<8x1xf32> to vector<8x8xf32>
    %496 = arith.mulf %491, %495 : vector<8x8xf32>
    %497 = vector.extract_strided_slice %479 {offsets = [0, 0], sizes = [8, 8], strides = [1, 1]} : vector<8x32xf32> to vector<8x8xf32>
    %cst_167 = arith.constant dense<0.000000e+00> : vector<8x8xf32>
    %498 = tpu.matmul %496, %497, %cst_167 {dimension_numbers = #tpu.dot_dimension_numbers<[1], [0], [0], [1], [0, 0, 1, 1], [], []>} : vector<8x8xf32>, vector<8x8xf32>, vector<8x8xf32> -> vector<8x8xf32>
    %499 = vector.extract_strided_slice %472 {offsets = [0, 8], sizes = [8, 8], strides = [1, 1]} : vector<8x32xf32> to vector<8x8xf32>
    %500 = vector.extract_strided_slice %478 {offsets = [0, 8], sizes = [8, 8], strides = [1, 1]} : vector<8x32xf32> to vector<8x8xf32>
    %cst_168 = arith.constant dense<0.000000e+00> : vector<8x8xf32>
    %501 = tpu.matmul %499, %500, %cst_168 {dimension_numbers = #tpu.dot_dimension_numbers<[1], [1], [0], [0], [0, 0, 1, 0], [], []>} : vector<8x8xf32>, vector<8x8xf32>, vector<8x8xf32> -> vector<8x8xf32>
    %cst_169 = arith.constant 0.353553385 : f32
    %502 = vector.broadcast %cst_169 : f32 to vector<8x8xf32>
    %503 = arith.mulf %501, %502 : vector<8x8xf32>
    %cst_170 = arith.constant dense<0xFF800000> : vector<8xf32>
    %504 = vector.multi_reduction <maximumf>, %503, %cst_170 [1] : vector<8x8xf32> to vector<8xf32>
    %505 = vector.shape_cast %504 : vector<8xf32> to vector<8x1xf32>
    %506 = vector.broadcast %505 : vector<8x1xf32> to vector<8x8xf32>
    %507 = arith.subf %503, %506 : vector<8x8xf32>
    %508 = math.exp %507 : vector<8x8xf32>
    %cst_171 = arith.constant dense<0.000000e+00> : vector<8xf32>
    %509 = vector.multi_reduction <add>, %508, %cst_171 [1] : vector<8x8xf32> to vector<8xf32>
    %510 = vector.shape_cast %509 : vector<8xf32> to vector<8x1xf32>
    %511 = tpu.reciprocal %510 {approx = true} : vector<8x1xf32> -> vector<8x1xf32>
    %512 = vector.broadcast %511 : vector<8x1xf32> to vector<8x8xf32>
    %513 = arith.mulf %508, %512 : vector<8x8xf32>
    %514 = vector.extract_strided_slice %479 {offsets = [0, 8], sizes = [8, 8], strides = [1, 1]} : vector<8x32xf32> to vector<8x8xf32>
    %cst_172 = arith.constant dense<0.000000e+00> : vector<8x8xf32>
    %515 = tpu.matmul %513, %514, %cst_172 {dimension_numbers = #tpu.dot_dimension_numbers<[1], [0], [0], [1], [0, 0, 1, 1], [], []>} : vector<8x8xf32>, vector<8x8xf32>, vector<8x8xf32> -> vector<8x8xf32>
    %516 = vector.extract_strided_slice %472 {offsets = [0, 16], sizes = [8, 8], strides = [1, 1]} : vector<8x32xf32> to vector<8x8xf32>
    %517 = vector.extract_strided_slice %478 {offsets = [0, 16], sizes = [8, 8], strides = [1, 1]} : vector<8x32xf32> to vector<8x8xf32>
    %cst_173 = arith.constant dense<0.000000e+00> : vector<8x8xf32>
    %518 = tpu.matmul %516, %517, %cst_173 {dimension_numbers = #tpu.dot_dimension_numbers<[1], [1], [0], [0], [0, 0, 1, 0], [], []>} : vector<8x8xf32>, vector<8x8xf32>, vector<8x8xf32> -> vector<8x8xf32>
    %cst_174 = arith.constant 0.353553385 : f32
    %519 = vector.broadcast %cst_174 : f32 to vector<8x8xf32>
    %520 = arith.mulf %518, %519 : vector<8x8xf32>
    %cst_175 = arith.constant dense<0xFF800000> : vector<8xf32>
    %521 = vector.multi_reduction <maximumf>, %520, %cst_175 [1] : vector<8x8xf32> to vector<8xf32>
    %522 = vector.shape_cast %521 : vector<8xf32> to vector<8x1xf32>
    %523 = vector.broadcast %522 : vector<8x1xf32> to vector<8x8xf32>
    %524 = arith.subf %520, %523 : vector<8x8xf32>
    %525 = math.exp %524 : vector<8x8xf32>
    %cst_176 = arith.constant dense<0.000000e+00> : vector<8xf32>
    %526 = vector.multi_reduction <add>, %525, %cst_176 [1] : vector<8x8xf32> to vector<8xf32>
    %527 = vector.shape_cast %526 : vector<8xf32> to vector<8x1xf32>
    %528 = tpu.reciprocal %527 {approx = true} : vector<8x1xf32> -> vector<8x1xf32>
    %529 = vector.broadcast %528 : vector<8x1xf32> to vector<8x8xf32>
    %530 = arith.mulf %525, %529 : vector<8x8xf32>
    %531 = vector.extract_strided_slice %479 {offsets = [0, 16], sizes = [8, 8], strides = [1, 1]} : vector<8x32xf32> to vector<8x8xf32>
    %cst_177 = arith.constant dense<0.000000e+00> : vector<8x8xf32>
    %532 = tpu.matmul %530, %531, %cst_177 {dimension_numbers = #tpu.dot_dimension_numbers<[1], [0], [0], [1], [0, 0, 1, 1], [], []>} : vector<8x8xf32>, vector<8x8xf32>, vector<8x8xf32> -> vector<8x8xf32>
    %533 = vector.extract_strided_slice %472 {offsets = [0, 24], sizes = [8, 8], strides = [1, 1]} : vector<8x32xf32> to vector<8x8xf32>
    %534 = vector.extract_strided_slice %478 {offsets = [0, 24], sizes = [8, 8], strides = [1, 1]} : vector<8x32xf32> to vector<8x8xf32>
    %cst_178 = arith.constant dense<0.000000e+00> : vector<8x8xf32>
    %535 = tpu.matmul %533, %534, %cst_178 {dimension_numbers = #tpu.dot_dimension_numbers<[1], [1], [0], [0], [0, 0, 1, 0], [], []>} : vector<8x8xf32>, vector<8x8xf32>, vector<8x8xf32> -> vector<8x8xf32>
    %cst_179 = arith.constant 0.353553385 : f32
    %536 = vector.broadcast %cst_179 : f32 to vector<8x8xf32>
    %537 = arith.mulf %535, %536 : vector<8x8xf32>
    %cst_180 = arith.constant dense<0xFF800000> : vector<8xf32>
    %538 = vector.multi_reduction <maximumf>, %537, %cst_180 [1] : vector<8x8xf32> to vector<8xf32>
    %539 = vector.shape_cast %538 : vector<8xf32> to vector<8x1xf32>
    %540 = vector.broadcast %539 : vector<8x1xf32> to vector<8x8xf32>
    %541 = arith.subf %537, %540 : vector<8x8xf32>
    %542 = math.exp %541 : vector<8x8xf32>
    %cst_181 = arith.constant dense<0.000000e+00> : vector<8xf32>
    %543 = vector.multi_reduction <add>, %542, %cst_181 [1] : vector<8x8xf32> to vector<8xf32>
    %544 = vector.shape_cast %543 : vector<8xf32> to vector<8x1xf32>
    %545 = tpu.reciprocal %544 {approx = true} : vector<8x1xf32> -> vector<8x1xf32>
    %546 = vector.broadcast %545 : vector<8x1xf32> to vector<8x8xf32>
    %547 = arith.mulf %542, %546 : vector<8x8xf32>
    %548 = vector.extract_strided_slice %479 {offsets = [0, 24], sizes = [8, 8], strides = [1, 1]} : vector<8x32xf32> to vector<8x8xf32>
    %cst_182 = arith.constant dense<0.000000e+00> : vector<8x8xf32>
    %549 = tpu.matmul %547, %548, %cst_182 {dimension_numbers = #tpu.dot_dimension_numbers<[1], [0], [0], [1], [0, 0, 1, 1], [], []>} : vector<8x8xf32>, vector<8x8xf32>, vector<8x8xf32> -> vector<8x8xf32>
    %550 = tpu.concatenate %498, %515, %532, %549 in 1 : vector<8x8xf32>, vector<8x8xf32>, vector<8x8xf32>, vector<8x8xf32> -> vector<8x32xf32>
    %cst_183 = arith.constant dense<0.000000e+00> : vector<8x32xf32>
    %551 = tpu.matmul %550, %480, %cst_183 {dimension_numbers = #tpu.dot_dimension_numbers<[1], [0], [0], [1], [0, 0, 1, 1], [], []>} : vector<8x32xf32>, vector<32x32xf32>, vector<8x32xf32> -> vector<8x32xf32>
    %552 = vector.broadcast %481 : vector<1x32xf32> to vector<8x32xf32>
    %553 = arith.addf %551, %552 : vector<8x32xf32>
    %554 = arith.addf %467, %553 : vector<8x32xf32>
    %c808 = arith.constant 808 : index
    %c0_184 = arith.constant 0 : index
    %555 = vector.load %arg5[%c808, %c0_184] : memref<1384x128xf32, #tpu.memory_space<vmem>>, vector<1x32xf32>
    %c816 = arith.constant 816 : index
    %c0_185 = arith.constant 0 : index
    %556 = vector.load %arg5[%c816, %c0_185] : memref<1384x128xf32, #tpu.memory_space<vmem>>, vector<1x32xf32>
    %cst_186 = arith.constant dense<0.000000e+00> : vector<8xf32>
    %557 = vector.multi_reduction <add>, %554, %cst_186 [1] : vector<8x32xf32> to vector<8xf32>
    %558 = vector.shape_cast %557 : vector<8xf32> to vector<8x1xf32>
    %cst_187 = arith.constant 3.200000e+01 : f32
    %559 = vector.broadcast %cst_187 : f32 to vector<8x1xf32>
    %560 = arith.divf %558, %559 : vector<8x1xf32>
    %561 = vector.broadcast %560 : vector<8x1xf32> to vector<8x32xf32>
    %562 = arith.subf %554, %561 : vector<8x32xf32>
    %563 = arith.mulf %562, %562 : vector<8x32xf32>
    %cst_188 = arith.constant dense<0.000000e+00> : vector<8xf32>
    %564 = vector.multi_reduction <add>, %563, %cst_188 [1] : vector<8x32xf32> to vector<8xf32>
    %565 = vector.shape_cast %564 : vector<8xf32> to vector<8x1xf32>
    %cst_189 = arith.constant 3.200000e+01 : f32
    %566 = vector.broadcast %cst_189 : f32 to vector<8x1xf32>
    %567 = arith.divf %565, %566 : vector<8x1xf32>
    %cst_190 = arith.constant 9.99999974E-6 : f32
    %568 = vector.broadcast %cst_190 : f32 to vector<8x1xf32>
    %569 = arith.addf %567, %568 : vector<8x1xf32>
    %570 = math.rsqrt %569 : vector<8x1xf32>
    %571 = vector.broadcast %570 : vector<8x1xf32> to vector<8x32xf32>
    %572 = arith.mulf %562, %571 : vector<8x32xf32>
    %573 = vector.broadcast %555 : vector<1x32xf32> to vector<8x32xf32>
    %574 = arith.mulf %572, %573 : vector<8x32xf32>
    %575 = vector.broadcast %556 : vector<1x32xf32> to vector<8x32xf32>
    %576 = arith.addf %574, %575 : vector<8x32xf32>
    %c824 = arith.constant 824 : index
    %c0_191 = arith.constant 0 : index
    %577 = vector.load %arg5[%c824, %c0_191] : memref<1384x128xf32, #tpu.memory_space<vmem>>, vector<32x64xf32>
    %c856 = arith.constant 856 : index
    %c0_192 = arith.constant 0 : index
    %578 = vector.load %arg5[%c856, %c0_192] : memref<1384x128xf32, #tpu.memory_space<vmem>>, vector<1x64xf32>
    %c864 = arith.constant 864 : index
    %c0_193 = arith.constant 0 : index
    %579 = vector.load %arg5[%c864, %c0_193] : memref<1384x128xf32, #tpu.memory_space<vmem>>, vector<64x32xf32>
    %c928 = arith.constant 928 : index
    %c0_194 = arith.constant 0 : index
    %580 = vector.load %arg5[%c928, %c0_194] : memref<1384x128xf32, #tpu.memory_space<vmem>>, vector<1x32xf32>
    %cst_195 = arith.constant dense<0.000000e+00> : vector<8x64xf32>
    %581 = tpu.matmul %576, %577, %cst_195 {dimension_numbers = #tpu.dot_dimension_numbers<[1], [0], [0], [1], [0, 0, 1, 1], [], []>} : vector<8x32xf32>, vector<32x64xf32>, vector<8x64xf32> -> vector<8x64xf32>
    %582 = vector.broadcast %578 : vector<1x64xf32> to vector<8x64xf32>
    %583 = arith.addf %581, %582 : vector<8x64xf32>
    %cst_196 = arith.constant 0.000000e+00 : f32
    %584 = vector.broadcast %cst_196 : f32 to vector<8x64xf32>
    %585 = arith.maximumf %583, %584 : vector<8x64xf32>
    %cst_197 = arith.constant dense<0.000000e+00> : vector<8x32xf32>
    %586 = tpu.matmul %585, %579, %cst_197 {dimension_numbers = #tpu.dot_dimension_numbers<[1], [0], [0], [1], [0, 0, 1, 1], [], []>} : vector<8x64xf32>, vector<64x32xf32>, vector<8x32xf32> -> vector<8x32xf32>
    %587 = vector.broadcast %580 : vector<1x32xf32> to vector<8x32xf32>
    %588 = arith.addf %586, %587 : vector<8x32xf32>
    %589 = arith.addf %576, %588 : vector<8x32xf32>
    %c936 = arith.constant 936 : index
    %c0_198 = arith.constant 0 : index
    %590 = vector.load %arg5[%c936, %c0_198] : memref<1384x128xf32, #tpu.memory_space<vmem>>, vector<1x32xf32>
    %c944 = arith.constant 944 : index
    %c0_199 = arith.constant 0 : index
    %591 = vector.load %arg5[%c944, %c0_199] : memref<1384x128xf32, #tpu.memory_space<vmem>>, vector<1x32xf32>
    %cst_200 = arith.constant dense<0.000000e+00> : vector<8xf32>
    %592 = vector.multi_reduction <add>, %589, %cst_200 [1] : vector<8x32xf32> to vector<8xf32>
    %593 = vector.shape_cast %592 : vector<8xf32> to vector<8x1xf32>
    %cst_201 = arith.constant 3.200000e+01 : f32
    %594 = vector.broadcast %cst_201 : f32 to vector<8x1xf32>
    %595 = arith.divf %593, %594 : vector<8x1xf32>
    %596 = vector.broadcast %595 : vector<8x1xf32> to vector<8x32xf32>
    %597 = arith.subf %589, %596 : vector<8x32xf32>
    %598 = arith.mulf %597, %597 : vector<8x32xf32>
    %cst_202 = arith.constant dense<0.000000e+00> : vector<8xf32>
    %599 = vector.multi_reduction <add>, %598, %cst_202 [1] : vector<8x32xf32> to vector<8xf32>
    %600 = vector.shape_cast %599 : vector<8xf32> to vector<8x1xf32>
    %cst_203 = arith.constant 3.200000e+01 : f32
    %601 = vector.broadcast %cst_203 : f32 to vector<8x1xf32>
    %602 = arith.divf %600, %601 : vector<8x1xf32>
    %cst_204 = arith.constant 9.99999974E-6 : f32
    %603 = vector.broadcast %cst_204 : f32 to vector<8x1xf32>
    %604 = arith.addf %602, %603 : vector<8x1xf32>
    %605 = math.rsqrt %604 : vector<8x1xf32>
    %606 = vector.broadcast %605 : vector<8x1xf32> to vector<8x32xf32>
    %607 = arith.mulf %597, %606 : vector<8x32xf32>
    %608 = vector.broadcast %590 : vector<1x32xf32> to vector<8x32xf32>
    %609 = arith.mulf %607, %608 : vector<8x32xf32>
    %610 = vector.broadcast %591 : vector<1x32xf32> to vector<8x32xf32>
    %611 = arith.addf %609, %610 : vector<8x32xf32>
    %c952 = arith.constant 952 : index
    %c0_205 = arith.constant 0 : index
    %612 = vector.load %arg5[%c952, %c0_205] : memref<1384x128xf32, #tpu.memory_space<vmem>>, vector<32x96xf32>
    %cst_206 = arith.constant dense<0.000000e+00> : vector<8x96xf32>
    %613 = tpu.matmul %611, %612, %cst_206 {dimension_numbers = #tpu.dot_dimension_numbers<[1], [0], [0], [1], [0, 0, 1, 1], [], []>} : vector<8x32xf32>, vector<32x96xf32>, vector<8x96xf32> -> vector<8x96xf32>
    %c984 = arith.constant 984 : index
    %c0_207 = arith.constant 0 : index
    %614 = vector.load %arg5[%c984, %c0_207] : memref<1384x128xf32, #tpu.memory_space<vmem>>, vector<1x96xf32>
    %615 = vector.broadcast %614 : vector<1x96xf32> to vector<8x96xf32>
    %616 = arith.addf %613, %615 : vector<8x96xf32>
    %617 = vector.extract_strided_slice %616 {offsets = [0, 0], sizes = [8, 32], strides = [1, 1]} : vector<8x96xf32> to vector<8x32xf32>
    %618 = vector.extract_strided_slice %616 {offsets = [0, 32], sizes = [8, 32], strides = [1, 1]} : vector<8x96xf32> to vector<8x32xf32>
    %619 = vector.extract_strided_slice %616 {offsets = [0, 64], sizes = [8, 32], strides = [1, 1]} : vector<8x96xf32> to vector<8x32xf32>
    %c992 = arith.constant 992 : index
    %c0_208 = arith.constant 0 : index
    %620 = vector.load %arg5[%c992, %c0_208] : memref<1384x128xf32, #tpu.memory_space<vmem>>, vector<32x32xf32>
    %c1024 = arith.constant 1024 : index
    %c0_209 = arith.constant 0 : index
    %621 = vector.load %arg5[%c1024, %c0_209] : memref<1384x128xf32, #tpu.memory_space<vmem>>, vector<1x32xf32>
    %622 = vector.extract_strided_slice %617 {offsets = [0, 0], sizes = [8, 8], strides = [1, 1]} : vector<8x32xf32> to vector<8x8xf32>
    %623 = vector.extract_strided_slice %618 {offsets = [0, 0], sizes = [8, 8], strides = [1, 1]} : vector<8x32xf32> to vector<8x8xf32>
    %cst_210 = arith.constant dense<0.000000e+00> : vector<8x8xf32>
    %624 = tpu.matmul %622, %623, %cst_210 {dimension_numbers = #tpu.dot_dimension_numbers<[1], [1], [0], [0], [0, 0, 1, 0], [], []>} : vector<8x8xf32>, vector<8x8xf32>, vector<8x8xf32> -> vector<8x8xf32>
    %cst_211 = arith.constant 0.353553385 : f32
    %625 = vector.broadcast %cst_211 : f32 to vector<8x8xf32>
    %626 = arith.mulf %624, %625 : vector<8x8xf32>
    %627 = arith.addf %626, %40 : vector<8x8xf32>
    %cst_212 = arith.constant dense<0xFF800000> : vector<8xf32>
    %628 = vector.multi_reduction <maximumf>, %627, %cst_212 [1] : vector<8x8xf32> to vector<8xf32>
    %629 = vector.shape_cast %628 : vector<8xf32> to vector<8x1xf32>
    %630 = vector.broadcast %629 : vector<8x1xf32> to vector<8x8xf32>
    %631 = arith.subf %627, %630 : vector<8x8xf32>
    %632 = math.exp %631 : vector<8x8xf32>
    %cst_213 = arith.constant dense<0.000000e+00> : vector<8xf32>
    %633 = vector.multi_reduction <add>, %632, %cst_213 [1] : vector<8x8xf32> to vector<8xf32>
    %634 = vector.shape_cast %633 : vector<8xf32> to vector<8x1xf32>
    %635 = tpu.reciprocal %634 {approx = true} : vector<8x1xf32> -> vector<8x1xf32>
    %636 = vector.broadcast %635 : vector<8x1xf32> to vector<8x8xf32>
    %637 = arith.mulf %632, %636 : vector<8x8xf32>
    %638 = vector.extract_strided_slice %619 {offsets = [0, 0], sizes = [8, 8], strides = [1, 1]} : vector<8x32xf32> to vector<8x8xf32>
    %cst_214 = arith.constant dense<0.000000e+00> : vector<8x8xf32>
    %639 = tpu.matmul %637, %638, %cst_214 {dimension_numbers = #tpu.dot_dimension_numbers<[1], [0], [0], [1], [0, 0, 1, 1], [], []>} : vector<8x8xf32>, vector<8x8xf32>, vector<8x8xf32> -> vector<8x8xf32>
    %640 = vector.extract_strided_slice %617 {offsets = [0, 8], sizes = [8, 8], strides = [1, 1]} : vector<8x32xf32> to vector<8x8xf32>
    %641 = vector.extract_strided_slice %618 {offsets = [0, 8], sizes = [8, 8], strides = [1, 1]} : vector<8x32xf32> to vector<8x8xf32>
    %cst_215 = arith.constant dense<0.000000e+00> : vector<8x8xf32>
    %642 = tpu.matmul %640, %641, %cst_215 {dimension_numbers = #tpu.dot_dimension_numbers<[1], [1], [0], [0], [0, 0, 1, 0], [], []>} : vector<8x8xf32>, vector<8x8xf32>, vector<8x8xf32> -> vector<8x8xf32>
    %cst_216 = arith.constant 0.353553385 : f32
    %643 = vector.broadcast %cst_216 : f32 to vector<8x8xf32>
    %644 = arith.mulf %642, %643 : vector<8x8xf32>
    %645 = arith.addf %644, %40 : vector<8x8xf32>
    %cst_217 = arith.constant dense<0xFF800000> : vector<8xf32>
    %646 = vector.multi_reduction <maximumf>, %645, %cst_217 [1] : vector<8x8xf32> to vector<8xf32>
    %647 = vector.shape_cast %646 : vector<8xf32> to vector<8x1xf32>
    %648 = vector.broadcast %647 : vector<8x1xf32> to vector<8x8xf32>
    %649 = arith.subf %645, %648 : vector<8x8xf32>
    %650 = math.exp %649 : vector<8x8xf32>
    %cst_218 = arith.constant dense<0.000000e+00> : vector<8xf32>
    %651 = vector.multi_reduction <add>, %650, %cst_218 [1] : vector<8x8xf32> to vector<8xf32>
    %652 = vector.shape_cast %651 : vector<8xf32> to vector<8x1xf32>
    %653 = tpu.reciprocal %652 {approx = true} : vector<8x1xf32> -> vector<8x1xf32>
    %654 = vector.broadcast %653 : vector<8x1xf32> to vector<8x8xf32>
    %655 = arith.mulf %650, %654 : vector<8x8xf32>
    %656 = vector.extract_strided_slice %619 {offsets = [0, 8], sizes = [8, 8], strides = [1, 1]} : vector<8x32xf32> to vector<8x8xf32>
    %cst_219 = arith.constant dense<0.000000e+00> : vector<8x8xf32>
    %657 = tpu.matmul %655, %656, %cst_219 {dimension_numbers = #tpu.dot_dimension_numbers<[1], [0], [0], [1], [0, 0, 1, 1], [], []>} : vector<8x8xf32>, vector<8x8xf32>, vector<8x8xf32> -> vector<8x8xf32>
    %658 = vector.extract_strided_slice %617 {offsets = [0, 16], sizes = [8, 8], strides = [1, 1]} : vector<8x32xf32> to vector<8x8xf32>
    %659 = vector.extract_strided_slice %618 {offsets = [0, 16], sizes = [8, 8], strides = [1, 1]} : vector<8x32xf32> to vector<8x8xf32>
    %cst_220 = arith.constant dense<0.000000e+00> : vector<8x8xf32>
    %660 = tpu.matmul %658, %659, %cst_220 {dimension_numbers = #tpu.dot_dimension_numbers<[1], [1], [0], [0], [0, 0, 1, 0], [], []>} : vector<8x8xf32>, vector<8x8xf32>, vector<8x8xf32> -> vector<8x8xf32>
    %cst_221 = arith.constant 0.353553385 : f32
    %661 = vector.broadcast %cst_221 : f32 to vector<8x8xf32>
    %662 = arith.mulf %660, %661 : vector<8x8xf32>
    %663 = arith.addf %662, %40 : vector<8x8xf32>
    %cst_222 = arith.constant dense<0xFF800000> : vector<8xf32>
    %664 = vector.multi_reduction <maximumf>, %663, %cst_222 [1] : vector<8x8xf32> to vector<8xf32>
    %665 = vector.shape_cast %664 : vector<8xf32> to vector<8x1xf32>
    %666 = vector.broadcast %665 : vector<8x1xf32> to vector<8x8xf32>
    %667 = arith.subf %663, %666 : vector<8x8xf32>
    %668 = math.exp %667 : vector<8x8xf32>
    %cst_223 = arith.constant dense<0.000000e+00> : vector<8xf32>
    %669 = vector.multi_reduction <add>, %668, %cst_223 [1] : vector<8x8xf32> to vector<8xf32>
    %670 = vector.shape_cast %669 : vector<8xf32> to vector<8x1xf32>
    %671 = tpu.reciprocal %670 {approx = true} : vector<8x1xf32> -> vector<8x1xf32>
    %672 = vector.broadcast %671 : vector<8x1xf32> to vector<8x8xf32>
    %673 = arith.mulf %668, %672 : vector<8x8xf32>
    %674 = vector.extract_strided_slice %619 {offsets = [0, 16], sizes = [8, 8], strides = [1, 1]} : vector<8x32xf32> to vector<8x8xf32>
    %cst_224 = arith.constant dense<0.000000e+00> : vector<8x8xf32>
    %675 = tpu.matmul %673, %674, %cst_224 {dimension_numbers = #tpu.dot_dimension_numbers<[1], [0], [0], [1], [0, 0, 1, 1], [], []>} : vector<8x8xf32>, vector<8x8xf32>, vector<8x8xf32> -> vector<8x8xf32>
    %676 = vector.extract_strided_slice %617 {offsets = [0, 24], sizes = [8, 8], strides = [1, 1]} : vector<8x32xf32> to vector<8x8xf32>
    %677 = vector.extract_strided_slice %618 {offsets = [0, 24], sizes = [8, 8], strides = [1, 1]} : vector<8x32xf32> to vector<8x8xf32>
    %cst_225 = arith.constant dense<0.000000e+00> : vector<8x8xf32>
    %678 = tpu.matmul %676, %677, %cst_225 {dimension_numbers = #tpu.dot_dimension_numbers<[1], [1], [0], [0], [0, 0, 1, 0], [], []>} : vector<8x8xf32>, vector<8x8xf32>, vector<8x8xf32> -> vector<8x8xf32>
    %cst_226 = arith.constant 0.353553385 : f32
    %679 = vector.broadcast %cst_226 : f32 to vector<8x8xf32>
    %680 = arith.mulf %678, %679 : vector<8x8xf32>
    %681 = arith.addf %680, %40 : vector<8x8xf32>
    %cst_227 = arith.constant dense<0xFF800000> : vector<8xf32>
    %682 = vector.multi_reduction <maximumf>, %681, %cst_227 [1] : vector<8x8xf32> to vector<8xf32>
    %683 = vector.shape_cast %682 : vector<8xf32> to vector<8x1xf32>
    %684 = vector.broadcast %683 : vector<8x1xf32> to vector<8x8xf32>
    %685 = arith.subf %681, %684 : vector<8x8xf32>
    %686 = math.exp %685 : vector<8x8xf32>
    %cst_228 = arith.constant dense<0.000000e+00> : vector<8xf32>
    %687 = vector.multi_reduction <add>, %686, %cst_228 [1] : vector<8x8xf32> to vector<8xf32>
    %688 = vector.shape_cast %687 : vector<8xf32> to vector<8x1xf32>
    %689 = tpu.reciprocal %688 {approx = true} : vector<8x1xf32> -> vector<8x1xf32>
    %690 = vector.broadcast %689 : vector<8x1xf32> to vector<8x8xf32>
    %691 = arith.mulf %686, %690 : vector<8x8xf32>
    %692 = vector.extract_strided_slice %619 {offsets = [0, 24], sizes = [8, 8], strides = [1, 1]} : vector<8x32xf32> to vector<8x8xf32>
    %cst_229 = arith.constant dense<0.000000e+00> : vector<8x8xf32>
    %693 = tpu.matmul %691, %692, %cst_229 {dimension_numbers = #tpu.dot_dimension_numbers<[1], [0], [0], [1], [0, 0, 1, 1], [], []>} : vector<8x8xf32>, vector<8x8xf32>, vector<8x8xf32> -> vector<8x8xf32>
    %694 = tpu.concatenate %639, %657, %675, %693 in 1 : vector<8x8xf32>, vector<8x8xf32>, vector<8x8xf32>, vector<8x8xf32> -> vector<8x32xf32>
    %cst_230 = arith.constant dense<0.000000e+00> : vector<8x32xf32>
    %695 = tpu.matmul %694, %620, %cst_230 {dimension_numbers = #tpu.dot_dimension_numbers<[1], [0], [0], [1], [0, 0, 1, 1], [], []>} : vector<8x32xf32>, vector<32x32xf32>, vector<8x32xf32> -> vector<8x32xf32>
    %696 = vector.broadcast %621 : vector<1x32xf32> to vector<8x32xf32>
    %697 = arith.addf %695, %696 : vector<8x32xf32>
    %698 = arith.addf %611, %697 : vector<8x32xf32>
    %c1032 = arith.constant 1032 : index
    %c0_231 = arith.constant 0 : index
    %699 = vector.load %arg5[%c1032, %c0_231] : memref<1384x128xf32, #tpu.memory_space<vmem>>, vector<1x32xf32>
    %c1040 = arith.constant 1040 : index
    %c0_232 = arith.constant 0 : index
    %700 = vector.load %arg5[%c1040, %c0_232] : memref<1384x128xf32, #tpu.memory_space<vmem>>, vector<1x32xf32>
    %cst_233 = arith.constant dense<0.000000e+00> : vector<8xf32>
    %701 = vector.multi_reduction <add>, %698, %cst_233 [1] : vector<8x32xf32> to vector<8xf32>
    %702 = vector.shape_cast %701 : vector<8xf32> to vector<8x1xf32>
    %cst_234 = arith.constant 3.200000e+01 : f32
    %703 = vector.broadcast %cst_234 : f32 to vector<8x1xf32>
    %704 = arith.divf %702, %703 : vector<8x1xf32>
    %705 = vector.broadcast %704 : vector<8x1xf32> to vector<8x32xf32>
    %706 = arith.subf %698, %705 : vector<8x32xf32>
    %707 = arith.mulf %706, %706 : vector<8x32xf32>
    %cst_235 = arith.constant dense<0.000000e+00> : vector<8xf32>
    %708 = vector.multi_reduction <add>, %707, %cst_235 [1] : vector<8x32xf32> to vector<8xf32>
    %709 = vector.shape_cast %708 : vector<8xf32> to vector<8x1xf32>
    %cst_236 = arith.constant 3.200000e+01 : f32
    %710 = vector.broadcast %cst_236 : f32 to vector<8x1xf32>
    %711 = arith.divf %709, %710 : vector<8x1xf32>
    %cst_237 = arith.constant 9.99999974E-6 : f32
    %712 = vector.broadcast %cst_237 : f32 to vector<8x1xf32>
    %713 = arith.addf %711, %712 : vector<8x1xf32>
    %714 = math.rsqrt %713 : vector<8x1xf32>
    %715 = vector.broadcast %714 : vector<8x1xf32> to vector<8x32xf32>
    %716 = arith.mulf %706, %715 : vector<8x32xf32>
    %717 = vector.broadcast %699 : vector<1x32xf32> to vector<8x32xf32>
    %718 = arith.mulf %716, %717 : vector<8x32xf32>
    %719 = vector.broadcast %700 : vector<1x32xf32> to vector<8x32xf32>
    %720 = arith.addf %718, %719 : vector<8x32xf32>
    %c1048 = arith.constant 1048 : index
    %c0_238 = arith.constant 0 : index
    %721 = vector.load %arg5[%c1048, %c0_238] : memref<1384x128xf32, #tpu.memory_space<vmem>>, vector<32x32xf32>
    %cst_239 = arith.constant dense<0.000000e+00> : vector<8x32xf32>
    %722 = tpu.matmul %720, %721, %cst_239 {dimension_numbers = #tpu.dot_dimension_numbers<[1], [0], [0], [1], [0, 0, 1, 1], [], []>} : vector<8x32xf32>, vector<32x32xf32>, vector<8x32xf32> -> vector<8x32xf32>
    %c1080 = arith.constant 1080 : index
    %c0_240 = arith.constant 0 : index
    %723 = vector.load %arg5[%c1080, %c0_240] : memref<1384x128xf32, #tpu.memory_space<vmem>>, vector<1x32xf32>
    %724 = vector.broadcast %723 : vector<1x32xf32> to vector<8x32xf32>
    %725 = arith.addf %722, %724 : vector<8x32xf32>
    %c1088 = arith.constant 1088 : index
    %c0_241 = arith.constant 0 : index
    %726 = vector.load %arg5[%c1088, %c0_241] : memref<1384x128xf32, #tpu.memory_space<vmem>>, vector<32x64xf32>
    %cst_242 = arith.constant dense<0.000000e+00> : vector<8x64xf32>
    %727 = tpu.matmul %358, %726, %cst_242 {dimension_numbers = #tpu.dot_dimension_numbers<[1], [0], [0], [1], [0, 0, 1, 1], [], []>} : vector<8x32xf32>, vector<32x64xf32>, vector<8x64xf32> -> vector<8x64xf32>
    %c1120 = arith.constant 1120 : index
    %c0_243 = arith.constant 0 : index
    %728 = vector.load %arg5[%c1120, %c0_243] : memref<1384x128xf32, #tpu.memory_space<vmem>>, vector<1x64xf32>
    %729 = vector.broadcast %728 : vector<1x64xf32> to vector<8x64xf32>
    %730 = arith.addf %727, %729 : vector<8x64xf32>
    %731 = vector.extract_strided_slice %730 {offsets = [0, 0], sizes = [8, 32], strides = [1, 1]} : vector<8x64xf32> to vector<8x32xf32>
    %732 = vector.extract_strided_slice %730 {offsets = [0, 32], sizes = [8, 32], strides = [1, 1]} : vector<8x64xf32> to vector<8x32xf32>
    %c1128 = arith.constant 1128 : index
    %c0_244 = arith.constant 0 : index
    %733 = vector.load %arg5[%c1128, %c0_244] : memref<1384x128xf32, #tpu.memory_space<vmem>>, vector<32x32xf32>
    %c1160 = arith.constant 1160 : index
    %c0_245 = arith.constant 0 : index
    %734 = vector.load %arg5[%c1160, %c0_245] : memref<1384x128xf32, #tpu.memory_space<vmem>>, vector<1x32xf32>
    %735 = vector.extract_strided_slice %725 {offsets = [0, 0], sizes = [8, 8], strides = [1, 1]} : vector<8x32xf32> to vector<8x8xf32>
    %736 = vector.extract_strided_slice %731 {offsets = [0, 0], sizes = [8, 8], strides = [1, 1]} : vector<8x32xf32> to vector<8x8xf32>
    %cst_246 = arith.constant dense<0.000000e+00> : vector<8x8xf32>
    %737 = tpu.matmul %735, %736, %cst_246 {dimension_numbers = #tpu.dot_dimension_numbers<[1], [1], [0], [0], [0, 0, 1, 0], [], []>} : vector<8x8xf32>, vector<8x8xf32>, vector<8x8xf32> -> vector<8x8xf32>
    %cst_247 = arith.constant 0.353553385 : f32
    %738 = vector.broadcast %cst_247 : f32 to vector<8x8xf32>
    %739 = arith.mulf %737, %738 : vector<8x8xf32>
    %cst_248 = arith.constant dense<0xFF800000> : vector<8xf32>
    %740 = vector.multi_reduction <maximumf>, %739, %cst_248 [1] : vector<8x8xf32> to vector<8xf32>
    %741 = vector.shape_cast %740 : vector<8xf32> to vector<8x1xf32>
    %742 = vector.broadcast %741 : vector<8x1xf32> to vector<8x8xf32>
    %743 = arith.subf %739, %742 : vector<8x8xf32>
    %744 = math.exp %743 : vector<8x8xf32>
    %cst_249 = arith.constant dense<0.000000e+00> : vector<8xf32>
    %745 = vector.multi_reduction <add>, %744, %cst_249 [1] : vector<8x8xf32> to vector<8xf32>
    %746 = vector.shape_cast %745 : vector<8xf32> to vector<8x1xf32>
    %747 = tpu.reciprocal %746 {approx = true} : vector<8x1xf32> -> vector<8x1xf32>
    %748 = vector.broadcast %747 : vector<8x1xf32> to vector<8x8xf32>
    %749 = arith.mulf %744, %748 : vector<8x8xf32>
    %750 = vector.extract_strided_slice %732 {offsets = [0, 0], sizes = [8, 8], strides = [1, 1]} : vector<8x32xf32> to vector<8x8xf32>
    %cst_250 = arith.constant dense<0.000000e+00> : vector<8x8xf32>
    %751 = tpu.matmul %749, %750, %cst_250 {dimension_numbers = #tpu.dot_dimension_numbers<[1], [0], [0], [1], [0, 0, 1, 1], [], []>} : vector<8x8xf32>, vector<8x8xf32>, vector<8x8xf32> -> vector<8x8xf32>
    %752 = vector.extract_strided_slice %725 {offsets = [0, 8], sizes = [8, 8], strides = [1, 1]} : vector<8x32xf32> to vector<8x8xf32>
    %753 = vector.extract_strided_slice %731 {offsets = [0, 8], sizes = [8, 8], strides = [1, 1]} : vector<8x32xf32> to vector<8x8xf32>
    %cst_251 = arith.constant dense<0.000000e+00> : vector<8x8xf32>
    %754 = tpu.matmul %752, %753, %cst_251 {dimension_numbers = #tpu.dot_dimension_numbers<[1], [1], [0], [0], [0, 0, 1, 0], [], []>} : vector<8x8xf32>, vector<8x8xf32>, vector<8x8xf32> -> vector<8x8xf32>
    %cst_252 = arith.constant 0.353553385 : f32
    %755 = vector.broadcast %cst_252 : f32 to vector<8x8xf32>
    %756 = arith.mulf %754, %755 : vector<8x8xf32>
    %cst_253 = arith.constant dense<0xFF800000> : vector<8xf32>
    %757 = vector.multi_reduction <maximumf>, %756, %cst_253 [1] : vector<8x8xf32> to vector<8xf32>
    %758 = vector.shape_cast %757 : vector<8xf32> to vector<8x1xf32>
    %759 = vector.broadcast %758 : vector<8x1xf32> to vector<8x8xf32>
    %760 = arith.subf %756, %759 : vector<8x8xf32>
    %761 = math.exp %760 : vector<8x8xf32>
    %cst_254 = arith.constant dense<0.000000e+00> : vector<8xf32>
    %762 = vector.multi_reduction <add>, %761, %cst_254 [1] : vector<8x8xf32> to vector<8xf32>
    %763 = vector.shape_cast %762 : vector<8xf32> to vector<8x1xf32>
    %764 = tpu.reciprocal %763 {approx = true} : vector<8x1xf32> -> vector<8x1xf32>
    %765 = vector.broadcast %764 : vector<8x1xf32> to vector<8x8xf32>
    %766 = arith.mulf %761, %765 : vector<8x8xf32>
    %767 = vector.extract_strided_slice %732 {offsets = [0, 8], sizes = [8, 8], strides = [1, 1]} : vector<8x32xf32> to vector<8x8xf32>
    %cst_255 = arith.constant dense<0.000000e+00> : vector<8x8xf32>
    %768 = tpu.matmul %766, %767, %cst_255 {dimension_numbers = #tpu.dot_dimension_numbers<[1], [0], [0], [1], [0, 0, 1, 1], [], []>} : vector<8x8xf32>, vector<8x8xf32>, vector<8x8xf32> -> vector<8x8xf32>
    %769 = vector.extract_strided_slice %725 {offsets = [0, 16], sizes = [8, 8], strides = [1, 1]} : vector<8x32xf32> to vector<8x8xf32>
    %770 = vector.extract_strided_slice %731 {offsets = [0, 16], sizes = [8, 8], strides = [1, 1]} : vector<8x32xf32> to vector<8x8xf32>
    %cst_256 = arith.constant dense<0.000000e+00> : vector<8x8xf32>
    %771 = tpu.matmul %769, %770, %cst_256 {dimension_numbers = #tpu.dot_dimension_numbers<[1], [1], [0], [0], [0, 0, 1, 0], [], []>} : vector<8x8xf32>, vector<8x8xf32>, vector<8x8xf32> -> vector<8x8xf32>
    %cst_257 = arith.constant 0.353553385 : f32
    %772 = vector.broadcast %cst_257 : f32 to vector<8x8xf32>
    %773 = arith.mulf %771, %772 : vector<8x8xf32>
    %cst_258 = arith.constant dense<0xFF800000> : vector<8xf32>
    %774 = vector.multi_reduction <maximumf>, %773, %cst_258 [1] : vector<8x8xf32> to vector<8xf32>
    %775 = vector.shape_cast %774 : vector<8xf32> to vector<8x1xf32>
    %776 = vector.broadcast %775 : vector<8x1xf32> to vector<8x8xf32>
    %777 = arith.subf %773, %776 : vector<8x8xf32>
    %778 = math.exp %777 : vector<8x8xf32>
    %cst_259 = arith.constant dense<0.000000e+00> : vector<8xf32>
    %779 = vector.multi_reduction <add>, %778, %cst_259 [1] : vector<8x8xf32> to vector<8xf32>
    %780 = vector.shape_cast %779 : vector<8xf32> to vector<8x1xf32>
    %781 = tpu.reciprocal %780 {approx = true} : vector<8x1xf32> -> vector<8x1xf32>
    %782 = vector.broadcast %781 : vector<8x1xf32> to vector<8x8xf32>
    %783 = arith.mulf %778, %782 : vector<8x8xf32>
    %784 = vector.extract_strided_slice %732 {offsets = [0, 16], sizes = [8, 8], strides = [1, 1]} : vector<8x32xf32> to vector<8x8xf32>
    %cst_260 = arith.constant dense<0.000000e+00> : vector<8x8xf32>
    %785 = tpu.matmul %783, %784, %cst_260 {dimension_numbers = #tpu.dot_dimension_numbers<[1], [0], [0], [1], [0, 0, 1, 1], [], []>} : vector<8x8xf32>, vector<8x8xf32>, vector<8x8xf32> -> vector<8x8xf32>
    %786 = vector.extract_strided_slice %725 {offsets = [0, 24], sizes = [8, 8], strides = [1, 1]} : vector<8x32xf32> to vector<8x8xf32>
    %787 = vector.extract_strided_slice %731 {offsets = [0, 24], sizes = [8, 8], strides = [1, 1]} : vector<8x32xf32> to vector<8x8xf32>
    %cst_261 = arith.constant dense<0.000000e+00> : vector<8x8xf32>
    %788 = tpu.matmul %786, %787, %cst_261 {dimension_numbers = #tpu.dot_dimension_numbers<[1], [1], [0], [0], [0, 0, 1, 0], [], []>} : vector<8x8xf32>, vector<8x8xf32>, vector<8x8xf32> -> vector<8x8xf32>
    %cst_262 = arith.constant 0.353553385 : f32
    %789 = vector.broadcast %cst_262 : f32 to vector<8x8xf32>
    %790 = arith.mulf %788, %789 : vector<8x8xf32>
    %cst_263 = arith.constant dense<0xFF800000> : vector<8xf32>
    %791 = vector.multi_reduction <maximumf>, %790, %cst_263 [1] : vector<8x8xf32> to vector<8xf32>
    %792 = vector.shape_cast %791 : vector<8xf32> to vector<8x1xf32>
    %793 = vector.broadcast %792 : vector<8x1xf32> to vector<8x8xf32>
    %794 = arith.subf %790, %793 : vector<8x8xf32>
    %795 = math.exp %794 : vector<8x8xf32>
    %cst_264 = arith.constant dense<0.000000e+00> : vector<8xf32>
    %796 = vector.multi_reduction <add>, %795, %cst_264 [1] : vector<8x8xf32> to vector<8xf32>
    %797 = vector.shape_cast %796 : vector<8xf32> to vector<8x1xf32>
    %798 = tpu.reciprocal %797 {approx = true} : vector<8x1xf32> -> vector<8x1xf32>
    %799 = vector.broadcast %798 : vector<8x1xf32> to vector<8x8xf32>
    %800 = arith.mulf %795, %799 : vector<8x8xf32>
    %801 = vector.extract_strided_slice %732 {offsets = [0, 24], sizes = [8, 8], strides = [1, 1]} : vector<8x32xf32> to vector<8x8xf32>
    %cst_265 = arith.constant dense<0.000000e+00> : vector<8x8xf32>
    %802 = tpu.matmul %800, %801, %cst_265 {dimension_numbers = #tpu.dot_dimension_numbers<[1], [0], [0], [1], [0, 0, 1, 1], [], []>} : vector<8x8xf32>, vector<8x8xf32>, vector<8x8xf32> -> vector<8x8xf32>
    %803 = tpu.concatenate %751, %768, %785, %802 in 1 : vector<8x8xf32>, vector<8x8xf32>, vector<8x8xf32>, vector<8x8xf32> -> vector<8x32xf32>
    %cst_266 = arith.constant dense<0.000000e+00> : vector<8x32xf32>
    %804 = tpu.matmul %803, %733, %cst_266 {dimension_numbers = #tpu.dot_dimension_numbers<[1], [0], [0], [1], [0, 0, 1, 1], [], []>} : vector<8x32xf32>, vector<32x32xf32>, vector<8x32xf32> -> vector<8x32xf32>
    %805 = vector.broadcast %734 : vector<1x32xf32> to vector<8x32xf32>
    %806 = arith.addf %804, %805 : vector<8x32xf32>
    %807 = arith.addf %720, %806 : vector<8x32xf32>
    %c1168 = arith.constant 1168 : index
    %c0_267 = arith.constant 0 : index
    %808 = vector.load %arg5[%c1168, %c0_267] : memref<1384x128xf32, #tpu.memory_space<vmem>>, vector<1x32xf32>
    %c1176 = arith.constant 1176 : index
    %c0_268 = arith.constant 0 : index
    %809 = vector.load %arg5[%c1176, %c0_268] : memref<1384x128xf32, #tpu.memory_space<vmem>>, vector<1x32xf32>
    %cst_269 = arith.constant dense<0.000000e+00> : vector<8xf32>
    %810 = vector.multi_reduction <add>, %807, %cst_269 [1] : vector<8x32xf32> to vector<8xf32>
    %811 = vector.shape_cast %810 : vector<8xf32> to vector<8x1xf32>
    %cst_270 = arith.constant 3.200000e+01 : f32
    %812 = vector.broadcast %cst_270 : f32 to vector<8x1xf32>
    %813 = arith.divf %811, %812 : vector<8x1xf32>
    %814 = vector.broadcast %813 : vector<8x1xf32> to vector<8x32xf32>
    %815 = arith.subf %807, %814 : vector<8x32xf32>
    %816 = arith.mulf %815, %815 : vector<8x32xf32>
    %cst_271 = arith.constant dense<0.000000e+00> : vector<8xf32>
    %817 = vector.multi_reduction <add>, %816, %cst_271 [1] : vector<8x32xf32> to vector<8xf32>
    %818 = vector.shape_cast %817 : vector<8xf32> to vector<8x1xf32>
    %cst_272 = arith.constant 3.200000e+01 : f32
    %819 = vector.broadcast %cst_272 : f32 to vector<8x1xf32>
    %820 = arith.divf %818, %819 : vector<8x1xf32>
    %cst_273 = arith.constant 9.99999974E-6 : f32
    %821 = vector.broadcast %cst_273 : f32 to vector<8x1xf32>
    %822 = arith.addf %820, %821 : vector<8x1xf32>
    %823 = math.rsqrt %822 : vector<8x1xf32>
    %824 = vector.broadcast %823 : vector<8x1xf32> to vector<8x32xf32>
    %825 = arith.mulf %815, %824 : vector<8x32xf32>
    %826 = vector.broadcast %808 : vector<1x32xf32> to vector<8x32xf32>
    %827 = arith.mulf %825, %826 : vector<8x32xf32>
    %828 = vector.broadcast %809 : vector<1x32xf32> to vector<8x32xf32>
    %829 = arith.addf %827, %828 : vector<8x32xf32>
    %c1184 = arith.constant 1184 : index
    %c0_274 = arith.constant 0 : index
    %830 = vector.load %arg5[%c1184, %c0_274] : memref<1384x128xf32, #tpu.memory_space<vmem>>, vector<32x64xf32>
    %c1216 = arith.constant 1216 : index
    %c0_275 = arith.constant 0 : index
    %831 = vector.load %arg5[%c1216, %c0_275] : memref<1384x128xf32, #tpu.memory_space<vmem>>, vector<1x64xf32>
    %c1224 = arith.constant 1224 : index
    %c0_276 = arith.constant 0 : index
    %832 = vector.load %arg5[%c1224, %c0_276] : memref<1384x128xf32, #tpu.memory_space<vmem>>, vector<64x32xf32>
    %c1288 = arith.constant 1288 : index
    %c0_277 = arith.constant 0 : index
    %833 = vector.load %arg5[%c1288, %c0_277] : memref<1384x128xf32, #tpu.memory_space<vmem>>, vector<1x32xf32>
    %cst_278 = arith.constant dense<0.000000e+00> : vector<8x64xf32>
    %834 = tpu.matmul %829, %830, %cst_278 {dimension_numbers = #tpu.dot_dimension_numbers<[1], [0], [0], [1], [0, 0, 1, 1], [], []>} : vector<8x32xf32>, vector<32x64xf32>, vector<8x64xf32> -> vector<8x64xf32>
    %835 = vector.broadcast %831 : vector<1x64xf32> to vector<8x64xf32>
    %836 = arith.addf %834, %835 : vector<8x64xf32>
    %cst_279 = arith.constant 0.000000e+00 : f32
    %837 = vector.broadcast %cst_279 : f32 to vector<8x64xf32>
    %838 = arith.maximumf %836, %837 : vector<8x64xf32>
    %cst_280 = arith.constant dense<0.000000e+00> : vector<8x32xf32>
    %839 = tpu.matmul %838, %832, %cst_280 {dimension_numbers = #tpu.dot_dimension_numbers<[1], [0], [0], [1], [0, 0, 1, 1], [], []>} : vector<8x64xf32>, vector<64x32xf32>, vector<8x32xf32> -> vector<8x32xf32>
    %840 = vector.broadcast %833 : vector<1x32xf32> to vector<8x32xf32>
    %841 = arith.addf %839, %840 : vector<8x32xf32>
    %842 = arith.addf %829, %841 : vector<8x32xf32>
    %c1296 = arith.constant 1296 : index
    %c0_281 = arith.constant 0 : index
    %843 = vector.load %arg5[%c1296, %c0_281] : memref<1384x128xf32, #tpu.memory_space<vmem>>, vector<1x32xf32>
    %c1304 = arith.constant 1304 : index
    %c0_282 = arith.constant 0 : index
    %844 = vector.load %arg5[%c1304, %c0_282] : memref<1384x128xf32, #tpu.memory_space<vmem>>, vector<1x32xf32>
    %cst_283 = arith.constant dense<0.000000e+00> : vector<8xf32>
    %845 = vector.multi_reduction <add>, %842, %cst_283 [1] : vector<8x32xf32> to vector<8xf32>
    %846 = vector.shape_cast %845 : vector<8xf32> to vector<8x1xf32>
    %cst_284 = arith.constant 3.200000e+01 : f32
    %847 = vector.broadcast %cst_284 : f32 to vector<8x1xf32>
    %848 = arith.divf %846, %847 : vector<8x1xf32>
    %849 = vector.broadcast %848 : vector<8x1xf32> to vector<8x32xf32>
    %850 = arith.subf %842, %849 : vector<8x32xf32>
    %851 = arith.mulf %850, %850 : vector<8x32xf32>
    %cst_285 = arith.constant dense<0.000000e+00> : vector<8xf32>
    %852 = vector.multi_reduction <add>, %851, %cst_285 [1] : vector<8x32xf32> to vector<8xf32>
    %853 = vector.shape_cast %852 : vector<8xf32> to vector<8x1xf32>
    %cst_286 = arith.constant 3.200000e+01 : f32
    %854 = vector.broadcast %cst_286 : f32 to vector<8x1xf32>
    %855 = arith.divf %853, %854 : vector<8x1xf32>
    %cst_287 = arith.constant 9.99999974E-6 : f32
    %856 = vector.broadcast %cst_287 : f32 to vector<8x1xf32>
    %857 = arith.addf %855, %856 : vector<8x1xf32>
    %858 = math.rsqrt %857 : vector<8x1xf32>
    %859 = vector.broadcast %858 : vector<8x1xf32> to vector<8x32xf32>
    %860 = arith.mulf %850, %859 : vector<8x32xf32>
    %861 = vector.broadcast %843 : vector<1x32xf32> to vector<8x32xf32>
    %862 = arith.mulf %860, %861 : vector<8x32xf32>
    %863 = vector.broadcast %844 : vector<1x32xf32> to vector<8x32xf32>
    %864 = arith.addf %862, %863 : vector<8x32xf32>
    %c1328 = arith.constant 1328 : index
    %c0_288 = arith.constant 0 : index
    %865 = vector.load %arg5[%c1328, %c0_288] : memref<1384x128xf32, #tpu.memory_space<vmem>>, vector<1x32xf32>
    %c1336 = arith.constant 1336 : index
    %c0_289 = arith.constant 0 : index
    %866 = vector.load %arg5[%c1336, %c0_289] : memref<1384x128xf32, #tpu.memory_space<vmem>>, vector<1x32xf32>
    %cst_290 = arith.constant dense<0.000000e+00> : vector<8xf32>
    %867 = vector.multi_reduction <add>, %864, %cst_290 [1] : vector<8x32xf32> to vector<8xf32>
    %868 = vector.shape_cast %867 : vector<8xf32> to vector<8x1xf32>
    %cst_291 = arith.constant 3.200000e+01 : f32
    %869 = vector.broadcast %cst_291 : f32 to vector<8x1xf32>
    %870 = arith.divf %868, %869 : vector<8x1xf32>
    %871 = vector.broadcast %870 : vector<8x1xf32> to vector<8x32xf32>
    %872 = arith.subf %864, %871 : vector<8x32xf32>
    %873 = arith.mulf %872, %872 : vector<8x32xf32>
    %cst_292 = arith.constant dense<0.000000e+00> : vector<8xf32>
    %874 = vector.multi_reduction <add>, %873, %cst_292 [1] : vector<8x32xf32> to vector<8xf32>
    %875 = vector.shape_cast %874 : vector<8xf32> to vector<8x1xf32>
    %cst_293 = arith.constant 3.200000e+01 : f32
    %876 = vector.broadcast %cst_293 : f32 to vector<8x1xf32>
    %877 = arith.divf %875, %876 : vector<8x1xf32>
    %cst_294 = arith.constant 9.99999974E-6 : f32
    %878 = vector.broadcast %cst_294 : f32 to vector<8x1xf32>
    %879 = arith.addf %877, %878 : vector<8x1xf32>
    %880 = math.rsqrt %879 : vector<8x1xf32>
    %881 = vector.broadcast %880 : vector<8x1xf32> to vector<8x32xf32>
    %882 = arith.mulf %872, %881 : vector<8x32xf32>
    %883 = vector.broadcast %865 : vector<1x32xf32> to vector<8x32xf32>
    %884 = arith.mulf %882, %883 : vector<8x32xf32>
    %885 = vector.broadcast %866 : vector<1x32xf32> to vector<8x32xf32>
    %886 = arith.addf %884, %885 : vector<8x32xf32>
    %c1344 = arith.constant 1344 : index
    %c0_295 = arith.constant 0 : index
    %887 = vector.load %arg5[%c1344, %c0_295] : memref<1384x128xf32, #tpu.memory_space<vmem>>, vector<32x128xf32>
    %cst_296 = arith.constant dense<0.000000e+00> : vector<8x128xf32>
    %888 = tpu.matmul %886, %887, %cst_296 {dimension_numbers = #tpu.dot_dimension_numbers<[1], [0], [0], [1], [0, 0, 1, 1], [], []>} : vector<8x32xf32>, vector<32x128xf32>, vector<8x128xf32> -> vector<8x128xf32>
    %c1376 = arith.constant 1376 : index
    %c0_297 = arith.constant 0 : index
    %889 = vector.load %arg5[%c1376, %c0_297] : memref<1384x128xf32, #tpu.memory_space<vmem>>, vector<1x128xf32>
    %890 = vector.broadcast %889 : vector<1x128xf32> to vector<8x128xf32>
    %891 = arith.addf %888, %890 : vector<8x128xf32>
    %c0_298 = arith.constant 0 : index
    %c0_299 = arith.constant 0 : index
    %892 = vector.load %arg6[%c0_298, %c0_299] : memref<8x128xf32, #tpu.memory_space<vmem>>, vector<8x128xf32>
    tpu.vector_store %arg6[%c0_298, %c0_299], %891 {strides = array<i32>} : memref<8x128xf32, #tpu.memory_space<vmem>>, vector<8x128xf32>,
    return
  }
  func.func @transform_0(%arg0: i32) -> (i32, i32) {
    %c0_i32 = arith.constant 0 : i32
    %c0_i32_0 = arith.constant 0 : i32
    return %arg0, %c0_i32 : i32, i32
  }
  func.func @transform_1(%arg0: i32) -> (i32, i32) {
    %c0_i32 = arith.constant 0 : i32
    %c0_i32_0 = arith.constant 0 : i32
    return %arg0, %c0_i32 : i32, i32
  }
  func.func @transform_2(%arg0: i32) -> (i32, i32, i32) {
    %c0_i32 = arith.constant 0 : i32
    %c0_i32_0 = arith.constant 0 : i32
    %c0_i32_1 = arith.constant 0 : i32
    return %arg0, %c0_i32, %c0_i32_0 : i32, i32, i32
  }
  func.func @transform_3(%arg0: i32) -> (i32, i32, i32) {
    %c0_i32 = arith.constant 0 : i32
    %c0_i32_0 = arith.constant 0 : i32
    %c0_i32_1 = arith.constant 0 : i32
    return %arg0, %c0_i32, %c0_i32_0 : i32, i32, i32
  }
  func.func @transform_4(%arg0: i32) -> (i32, i32) {
    %c0_i32 = arith.constant 0 : i32
    %c0_i32_0 = arith.constant 0 : i32
    %c0_i32_1 = arith.constant 0 : i32
    return %c0_i32, %c0_i32_0 : i32, i32
  }
  func.func @transform_5(%arg0: i32) -> (i32, i32) {
    %c0_i32 = arith.constant 0 : i32
    %c0_i32_0 = arith.constant 0 : i32
    return %arg0, %c0_i32 : i32, i32
  }
}

</mosaic_0001>

<llo_original>
// kernel: forward.1
$region0: #{forward.1}
  #allocation0 [shape = 'u32[]', space=smem, size = 0x4, offset = 0x4, fixed_abs, tag = 'smem constant byte address 0x4 - core index']
  #allocation1 [shape = 'u32[144,128]{1,0:T(1,128)}', space=vmem, size = 0x12000, scoped, tag = 'internal scratch']
  %s0 = inlined_call_operand.vmem [shape: s32[16,1], index: 0, kind: input, shape index: {}]
  %s1 = inlined_call_operand.vmem [shape: s32[16,1], index: 1, kind: input, shape index: {}]
  %s2 = inlined_call_operand.vmem [shape: s32[2,1,8], index: 2, kind: input, shape index: {}]
  %s3 = inlined_call_operand.vmem [shape: s32[2,1,8], index: 3, kind: input, shape index: {}]
  %s4 = inlined_call_operand.hbm [shape: f32[1384,128], index: 4, kind: input, shape index: {}]
  %s5 = inlined_call_operand.hbm [shape: f32[16,128], index: 5, kind: output, shape index: {}]
  %s6 = sld [smem:[#allocation0]]
  $region57: #{forward.1} parent=0
    _
  %s8 = ssub.s32 1, %s6
  %s9 = scalar_select 0, %s8, %s6
  $region1: #{forward.1} parent=0
    #allocation2 [shape = 'u8[708608]{0}', space=vmem, size = 0xad000, scoped, tag = 'input window, operand 4, single buffered']
    #allocation3 [shape = 's32[2]{0}', space=sflag, size = 0x8, scoped, tag = 'scoped memory for forward.1']
    #allocation4 [shape = 's32[2]{0}', space=sflag, size = 0x8, scoped, tag = 'scoped memory for forward.1']
    #allocation5 [shape = 'u8[8192]{0}', space=vmem, size = 0x2000, scoped, tag = 'output window, operand 0']
    %10 = vsyncpa [#allocation3], 0
    %11 = vsyncpa [#allocation4], 0
    %s12 = scalar_lea.sflag [#allocation4], 1
    %13 = vsyncpa %s12, 0
    loop: start=0, step=1, limit=4
    $region2: #{forward.1} parent=1 // loop_pre_header
      _
    $region3: #{forward.1} parent=1 // loop_header
      %s15 = sphi 0, %s19
      %p16 = scmp.ge.s32.totalorder %s15, 4
      %s25 = sphi 0, %s27
      %s28 = sphi 0, %s25
      %s29 = sphi 0, %s28
      %s45 = sphi 0, %s29
      %s51 = sphi 0, %s53
      %s54 = sphi 0, %s51
      %s55 = sphi 0, %s54
      %s71 = sphi 0, %s55
      %s77 = sphi 0, %s79
      %s80 = sphi 0, %s77
      %s81 = sphi 0, %s80
      %s97 = sphi 0, %s81
      %s103 = sphi 0, %s105
      %s106 = sphi 0, %s103
      %s107 = sphi 0, %s106
      %s123 = sphi 0, %s107
      %s127 = sphi 0, %s127
      %s129 = sphi 0, %s127
      %s130 = sphi 0, %s129
      %s144 = sphi 0, %s130
      %s150 = sphi 0, %s152
      %s153 = sphi 0, %s150
      %s154 = sphi 0, %s153
      %s170 = sphi 0, %s154
    $region4: #{forward.1} parent=1 // loop_header_branch
      %18 = sbr.rel (%p16) target = $region8
    $region5: #{forward.1} parent=1 // loop_body
      %s20 = ssub.s32 %s15, 1
      %s21 = ssub.s32 %s15, 2
      %s22 = sadd.s32 %s15, 1
      %s23 = ssub.s32 %s15, %s22
      %p24 = scmp.eq.s32.totalorder %s23, 0
      %s26 = sadd.s32 %s25, 1
      %s27 = scalar_select %p24, %s25, %s26
      %p30 = pneg %p24
      %p31 = scmp.eq.s32.totalorder %s15, 1
      %p32 = por %p30, %p31
      %p33 = scmp.ne.s32.totalorder %s25, %s28
      %p34 = scmp.eq.s32.totalorder %s15, 0
      %p35 = por %p33, %p34
      %p36 = scmp.ne.s32.totalorder %s25, %s28
      %p37 = scmp.eq.s32.totalorder %s20, 1
      %p38 = por %p36, %p37
      %p39 = scmp.ne.s32.totalorder %s28, %s29
      %p40 = scmp.eq.s32.totalorder %s20, 0
      %p41 = por %p39, %p40
      %p42 = scmp.ne.s32.totalorder %s28, %s29
      %p43 = scmp.eq.s32.totalorder %s21, 1
      %p44 = por %p42, %p43
      %p46 = scmp.ne.s32.totalorder %s29, %s45
      %p47 = scmp.eq.s32.totalorder %s21, 0
      %p48 = por %p46, %p47
      %s49 = ssub.s32 %s15, %s22
      %p50 = scmp.eq.s32.totalorder %s49, 0
      %s52 = sadd.s32 %s51, 1
      %s53 = scalar_select %p50, %s51, %s52
      %p56 = pneg %p50
      %p57 = scmp.eq.s32.totalorder %s15, 1
      %p58 = por %p56, %p57
      %p59 = scmp.ne.s32.totalorder %s51, %s54
      %p60 = scmp.eq.s32.totalorder %s15, 0
      %p61 = por %p59, %p60
      %p62 = scmp.ne.s32.totalorder %s51, %s54
      %p63 = scmp.eq.s32.totalorder %s20, 1
      %p64 = por %p62, %p63
      %p65 = scmp.ne.s32.totalorder %s54, %s55
      %p66 = scmp.eq.s32.totalorder %s20, 0
      %p67 = por %p65, %p66
      %p68 = scmp.ne.s32.totalorder %s54, %s55
      %p69 = scmp.eq.s32.totalorder %s21, 1
      %p70 = por %p68, %p69
      %p72 = scmp.ne.s32.totalorder %s55, %s71
      %p73 = scmp.eq.s32.totalorder %s21, 0
      %p74 = por %p72, %p73
      %s75 = ssub.s32 %s15, %s22
      %p76 = scmp.eq.s32.totalorder %s75, 0
      %s78 = sadd.s32 %s77, 1
      %s79 = scalar_select %p76, %s77, %s78
      %p82 = pneg %p76
      %p83 = scmp.eq.s32.totalorder %s15, 1
      %p84 = por %p82, %p83
      %p85 = scmp.ne.s32.totalorder %s77, %s80
      %p86 = scmp.eq.s32.totalorder %s15, 0
      %p87 = por %p85, %p86
      %p88 = scmp.ne.s32.totalorder %s77, %s80
      %p89 = scmp.eq.s32.totalorder %s20, 1
      %p90 = por %p88, %p89
      %p91 = scmp.ne.s32.totalorder %s80, %s81
      %p92 = scmp.eq.s32.totalorder %s20, 0
      %p93 = por %p91, %p92
      %p94 = scmp.ne.s32.totalorder %s80, %s81
      %p95 = scmp.eq.s32.totalorder %s21, 1
      %p96 = por %p94, %p95
      %p98 = scmp.ne.s32.totalorder %s81, %s97
      %p99 = scmp.eq.s32.totalorder %s21, 0
      %p100 = por %p98, %p99
      %s101 = ssub.s32 %s15, %s22
      %p102 = scmp.eq.s32.totalorder %s101, 0
      %s104 = sadd.s32 %s103, 1
      %s105 = scalar_select %p102, %s103, %s104
      %p108 = pneg %p102
      %p109 = scmp.eq.s32.totalorder %s15, 1
      %p110 = por %p108, %p109
      %p111 = scmp.ne.s32.totalorder %s103, %s106
      %p112 = scmp.eq.s32.totalorder %s15, 0
      %p113 = por %p111, %p112
      %p114 = scmp.ne.s32.totalorder %s103, %s106
      %p115 = scmp.eq.s32.totalorder %s20, 1
      %p116 = por %p114, %p115
      %p117 = scmp.ne.s32.totalorder %s106, %s107
      %p118 = scmp.eq.s32.totalorder %s20, 0
      %p119 = por %p117, %p118
      %p120 = scmp.ne.s32.totalorder %s106, %s107
      %p121 = scmp.eq.s32.totalorder %s21, 1
      %p122 = por %p120, %p121
      %p124 = scmp.ne.s32.totalorder %s107, %s123
      %p125 = scmp.eq.s32.totalorder %s21, 0
      %p126 = por %p124, %p125
      %s128 = sadd.s32 %s127, 1
      %p131 = scmp.eq.s32.totalorder %s15, 1
      %p132 = scmp.ne.s32.totalorder %s127, %s129
      %p133 = scmp.eq.s32.totalorder %s15, 0
      %p134 = por %p132, %p133
      %p135 = scmp.ne.s32.totalorder %s127, %s129
      %p136 = scmp.eq.s32.totalorder %s20, 1
      %p137 = por %p135, %p136
      %p138 = scmp.ne.s32.totalorder %s129, %s130
      %p139 = scmp.eq.s32.totalorder %s20, 0
      %p140 = por %p138, %p139
      %p141 = scmp.ne.s32.totalorder %s129, %s130
      %p142 = scmp.eq.s32.totalorder %s21, 1
      %p143 = por %p141, %p142
      %p145 = scmp.ne.s32.totalorder %s130, %s144
      %p146 = scmp.eq.s32.totalorder %s21, 0
      %p147 = por %p145, %p146
      %s148 = ssub.s32 %s15, %s22
      %p149 = scmp.eq.s32.totalorder %s148, 0
      %s151 = sadd.s32 %s150, 1
      %s152 = scalar_select %p149, %s150, %s151
      %p155 = pneg %p149
      %p156 = scmp.eq.s32.totalorder %s15, 1
      %p157 = por %p155, %p156
      %p158 = scmp.ne.s32.totalorder %s150, %s153
      %p159 = scmp.eq.s32.totalorder %s15, 0
      %p160 = por %p158, %p159
      %p161 = scmp.ne.s32.totalorder %s150, %s153
      %p162 = scmp.eq.s32.totalorder %s20, 1
      %p163 = por %p161, %p162
      %p164 = scmp.ne.s32.totalorder %s153, %s154
      %p165 = scmp.eq.s32.totalorder %s20, 0
      %p166 = por %p164, %p165
      %p167 = scmp.ne.s32.totalorder %s153, %s154
      %p168 = scmp.eq.s32.totalorder %s21, 1
      %p169 = por %p167, %p168
      %p171 = scmp.ne.s32.totalorder %s154, %s170
      %p172 = scmp.eq.s32.totalorder %s21, 0
      %p173 = por %p171, %p172
      %p174 = scmp.le.s32.totalorder 1, %s15
      %p175 = scmp.lt.s32.totalorder %s15, 3
      %p176 = pnand %p174, %p175
      %p177 = pneg %p176
      // Predicated region
      $region9: #{forward.1} parent=5 // pred_check
        _
      $region10: #{forward.1} parent=5 // pred_check_branch
        %179 = sbr.rel (%p176) target = $region12
      $region11: #{forward.1} parent=5 // pred_region
        %s180 = ssub.s32 %s15, 1
        // Predicated region
        $region13: #{forward.1} parent=11 // pred_check
          %p181 = pneg %p140
        $region14: #{forward.1} parent=11 // pred_check_branch
          %183 = sbr.rel (%p181) target = $region16
        $region15: #{forward.1} parent=11 // pred_region
          %s185 = ssub.s32 22144, 22144
          %186 = vsyncadd [#allocation3], %s185
          %s187 = sshll.u32 [#allocation2], 4
          %s188 = int_to_ptr.vmem [resolvable:$true] %s187
          %193 = dma.hbm_to_vmem [thread:$0]  %s4, 22144, %s188, [#allocation3], 128, 128, 8
        $region16: #{forward.1} parent=11 // pred_fallthru
          _
      $region12: #{forward.1} parent=5 // pred_fallthru
        _
      %p194 = scmp.lt.s32.totalorder %s15, 2
      // Predicated region
      $region17: #{forward.1} parent=5 // pred_check
        %p195 = pneg %p194
      $region18: #{forward.1} parent=5 // pred_check_branch
        %197 = sbr.rel (%p195) target = $region20
      $region19: #{forward.1} parent=5 // pred_region
        // Predicated region
        $region21: #{forward.1} parent=19 // pred_check
          %p198 = pneg %p35
        $region22: #{forward.1} parent=19 // pred_check_branch
          %200 = sbr.rel (%p198) target = $region24
        $region23: #{forward.1} parent=19 // pred_region
          %p201 = scmp.lt.s32.totalorder %s15, 1
          %s202 = scalar_select %p201, %s15, 1
          %s203 = smul.addr %s202, 8
          %s204 = scalar_lea.vmem %s0, %s203
        $region24: #{forward.1} parent=19 // pred_fallthru
          _
        // Predicated region
        $region25: #{forward.1} parent=19 // pred_check
          %p205 = pneg %p61
        $region26: #{forward.1} parent=19 // pred_check_branch
          %207 = sbr.rel (%p205) target = $region28
        $region27: #{forward.1} parent=19 // pred_region
          %p208 = scmp.lt.s32.totalorder %s15, 1
          %s209 = scalar_select %p208, %s15, 1
          %s210 = smul.addr %s209, 8
          %s211 = scalar_lea.vmem %s1, %s210
        $region28: #{forward.1} parent=19 // pred_fallthru
          _
        // Predicated region
        $region29: #{forward.1} parent=19 // pred_check
          %p212 = pneg %p87
        $region30: #{forward.1} parent=19 // pred_check_branch
          %214 = sbr.rel (%p212) target = $region32
        $region31: #{forward.1} parent=19 // pred_region
          %p215 = scmp.lt.s32.totalorder %s15, 1
          %s216 = scalar_select %p215, %s15, 1
          %s217 = scalar_lea.vmem %s2, %s216
        $region32: #{forward.1} parent=19 // pred_fallthru
          _
        // Predicated region
        $region33: #{forward.1} parent=19 // pred_check
          %p218 = pneg %p113
        $region34: #{forward.1} parent=19 // pred_check_branch
          %220 = sbr.rel (%p218) target = $region36
        $region35: #{forward.1} parent=19 // pred_region
          %p221 = scmp.lt.s32.totalorder %s15, 1
          %s222 = scalar_select %p221, %s15, 1
          %s223 = scalar_lea.vmem %s3, %s222
        $region36: #{forward.1} parent=19 // pred_fallthru
          _
      $region20: #{forward.1} parent=5 // pred_fallthru
        _
      %p224 = scmp.le.s32.totalorder 1, %s15
      %p225 = scmp.lt.s32.totalorder %s15, 3
      %p226 = pnand %p224, %p225
      %p227 = pneg %p226
      // Predicated region
      $region37: #{forward.1} parent=5 // pred_check
        _
      $region38: #{forward.1} parent=5 // pred_check_branch
        %229 = sbr.rel (%p226) target = $region40
      $region39: #{forward.1} parent=5 // pred_region
        %s230 = ssub.s32 %s15, 1
        // Predicated region
        $region41: #{forward.1} parent=39 // pred_check
          %p231 = pneg %p140
        $region42: #{forward.1} parent=39 // pred_check_branch
          %233 = sbr.rel (%p231) target = $region44
        $region43: #{forward.1} parent=39 // pred_region
          %234 = dma.done [#allocation3], 22144
        $region44: #{forward.1} parent=39 // pred_fallthru
          _
        %p235 = scmp.lt.s32.totalorder %s20, 1
        %s236 = scalar_select %p235, %s20, 1
        %s237 = smul.addr %s236, 8
        %s238 = scalar_lea.vmem %s0, %s237
        %p239 = pneg %p41
        %p240 = pneg %p38
        %p241 = scmp.lt.s32.totalorder %s20, 1
        %s242 = scalar_select %p241, %s20, 1
        %s243 = smul.addr %s242, 8
        %s244 = scalar_lea.vmem %s1, %s243
        %p245 = pneg %p67
        %p246 = pneg %p64
        %p247 = scmp.lt.s32.totalorder %s20, 1
        %s248 = scalar_select %p247, %s20, 1
        %s249 = scalar_lea.vmem %s2, %s248
        %p250 = pneg %p93
        %p251 = pneg %p90
        %p252 = scmp.lt.s32.totalorder %s20, 1
        %s253 = scalar_select %p252, %s20, 1
        %s254 = scalar_lea.vmem %s3, %s253
        %p255 = pneg %p119
        %p256 = pneg %p116
        %p257 = pneg %p140
        %p258 = pneg %p137
        %p259 = pneg %p166
        %p260 = pneg %p163
        %s261 = sand.u32 %s153, 1
        %s262 = scalar_lea.sflag [#allocation4], %s261
        %s263 = sand.u32 %s153, 1
        %s264 = smul.addr %s263, 8
        %s265 = scalar_lea.vmem [#allocation5], %s264
        %p266 = scmp.lt.s32.totalorder %s20, 1
        %s267 = scalar_select %p266, %s20, 1
        %s268 = smul.addr %s267, 8
        %s269 = scalar_lea.vmem %s0, %s268
        %p270 = scmp.lt.s32.totalorder %s20, 1
        %s271 = scalar_select %p270, %s20, 1
        %s272 = smul.addr %s271, 8
        %s273 = scalar_lea.vmem %s1, %s272
        %p274 = scmp.lt.s32.totalorder %s20, 1
        %s275 = scalar_select %p274, %s20, 1
        %s276 = scalar_lea.vmem %s2, %s275
        %p277 = scmp.lt.s32.totalorder %s20, 1
        %s278 = scalar_select %p277, %s20, 1
        %s279 = scalar_lea.vmem %s3, %s278
        %v280 = vld [vmem:[#allocation2] sm:$0xff]
        %v281 = vld [vmem:[#allocation2 + $0x8] sm:$0xff]
        %v282 = vld [vmem:[#allocation2 + $0x10] sm:$0xff]
        %v283 = vld [vmem:[#allocation2 + $0x18] sm:$0xff]
        %v284 = vld [vmem:[#allocation2 + $0x20] sm:$0xff]
        %v285 = vld [vmem:[#allocation2 + $0x28] sm:$0xff]
        %v286 = vld [vmem:[#allocation2 + $0x30] sm:$0xff]
        %v287 = vld [vmem:[#allocation2 + $0x38] sm:$0xff]
        %v288 = vld [vmem:[#allocation2 + $0x40] sm:$0xff]
        %v289 = vld [vmem:[#allocation2 + $0x48] sm:$0xff]
        %v290 = vld [vmem:[#allocation2 + $0x50] sm:$0xff]
        %v291 = vld [vmem:[#allocation2 + $0x58] sm:$0xff]
        %v292 = vld [vmem:[#allocation2 + $0x60] sm:$0xff]
        %v293 = vld [vmem:[#allocation2 + $0x68] sm:$0xff]
        %v294 = vld [vmem:[#allocation2 + $0x70] sm:$0xff]
        %v295 = vld [vmem:[#allocation2 + $0x78] sm:$0xff]
        %v296 = vlaneseq
        %v297 = vand.u32 %v296, 127
        %v298 = vld [vmem:[%s269] sm:$0xff]
        %299 = vset.pattern.permute.xlu0 0
        %300 = vperm.xlu0 %299, %v298
        %v301 = vpop.permute.xlu0 %300
        %vm302 = vcmp.eq.s32.totalorder %v297, %v301
        %v303 = vsel %vm302, 1, 0
        %v304 = vcvt.s32.f32 %v303
        %v305 = vld [vmem:[#allocation2 + $0x80] sm:$0xff]
        %306 = vmatprep.subr.mxu0 0.0
        %307 = vmatpush1.msra.mxu0 %v295
        %308 = vmatprep.subr.mxu0 0.0
        %309 = vmatpush1.msra.mxu0 %v294
        %310 = vmatprep.subr.mxu0 0.0
        %311 = vmatpush1.msra.mxu0 %v293
        %312 = vmatprep.subr.mxu0 0.0
        %313 = vmatpush1.msra.mxu0 %v292
        %314 = vmatprep.subr.mxu0 0.0
        %315 = vmatpush1.msra.mxu0 %v291
        %316 = vmatprep.subr.mxu0 0.0
        %317 = vmatpush1.msra.mxu0 %v290
        %318 = vmatprep.subr.mxu0 0.0
        %319 = vmatpush1.msra.mxu0 %v289
        %320 = vmatprep.subr.mxu0 0.0
        %321 = vmatpush1.msra.mxu0 %v288
        %322 = vmatprep.subr.mxu0 0.0
        %323 = vmatpush1.msra.mxu0 %v287
        %324 = vmatprep.subr.mxu0 0.0
        %325 = vmatpush1.msra.mxu0 %v286
        %326 = vmatprep.subr.mxu0 0.0
        %327 = vmatpush1.msra.mxu0 %v285
        %328 = vmatprep.subr.mxu0 0.0
        %329 = vmatpush1.msra.mxu0 %v284
        %330 = vmatprep.subr.mxu0 0.0
        %331 = vmatpush1.msra.mxu0 %v283
        %332 = vmatprep.subr.mxu0 0.0
        %333 = vmatpush1.msra.mxu0 %v282
        %334 = vmatprep.subr.mxu0 0.0
        %335 = vmatpush1.msra.mxu0 %v281
        %336 = vmatprep.subr.mxu0 0.0
        %337 = vmatpush1.msra.mxu0 %v280
        %338 = vmatprep.subr.mxu0 0.0
        %339 = vmatpush2.msra.mxu0 0.0
        %340 = vmatprep.subr.mxu0 0.0
        %341 = vmatpush2.msra.mxu0 0.0
        %342 = vmatprep.subr.mxu0 0.0
        %343 = vmatpush2.msra.mxu0 0.0
        %344 = vmatprep.subr.mxu0 0.0
        %345 = vmatpush2.msra.mxu0 0.0
        %346 = vmatprep.subr.mxu0 0.0
        %347 = vmatpush2.msra.mxu0 0.0
        %348 = vmatprep.subr.mxu0 0.0
        %349 = vmatpush2.msra.mxu0 0.0
        %350 = vmatprep.subr.mxu0 0.0
        %351 = vmatpush2.msra.mxu0 0.0
        %352 = vmatprep.subr.mxu0 0.0
        %353 = vmatpush2.msra.mxu0 0.0
        %354 = vmatprep.subr.mxu0 0.0
        %355 = vmatpush2.msra.mxu0 0.0
        %356 = vmatprep.subr.mxu0 0.0
        %357 = vmatpush2.msra.mxu0 0.0
        %358 = vmatprep.subr.mxu0 0.0
        %359 = vmatpush2.msra.mxu0 0.0
        %360 = vmatprep.subr.mxu0 0.0
        %361 = vmatpush2.msra.mxu0 0.0
        %362 = vmatprep.subr.mxu0 0.0
        %363 = vmatpush2.msra.mxu0 0.0
        %364 = vmatprep.subr.mxu0 0.0
        %365 = vmatpush2.msra.mxu0 0.0
        %366 = vmatprep.subr.mxu0 0.0
        %367 = vmatpush2.msra.mxu0 0.0
        %368 = vmatprep.subr.mxu0 0.0
        %369 = vmatpush2.msra.mxu0 0.0
        %370 = vmatprep.mubr.f32.mxu0 0.0
        %371 = vmatmul.mubr.f32.gmra.mxu0 %v304
        %v372 = vpop.f32.mrf.mxu0
        %v373 = vadd.f32 %v305, %v372
        %v374 = vpop.f32.mrf.mxu0
        %375 = vdwg.mxu0
        %v376 = vld [vmem:[%s273] sm:$0xff]
        %377 = vset.pattern.permute.xlu0 0
        %378 = vperm.xlu0 %377, %v376
        %v379 = vpop.permute.xlu0 %378
        %vm380 = vcmp.eq.s32.totalorder %v297, %v379
        %v381 = vsel %vm380, 1, 0
        %v382 = vcvt.s32.f32 %v381
        %v383 = vld [vmem:[#allocation2 + $0x88] sm:$0xff]
        %384 = vmatprep.subr.mxu0 0.0
        %385 = vmatpush1.msra.mxu0 %v295
        %386 = vmatprep.subr.mxu0 0.0
        %387 = vmatpush1.msra.mxu0 %v294
        %388 = vmatprep.subr.mxu0 0.0
        %389 = vmatpush1.msra.mxu0 %v293
        %390 = vmatprep.subr.mxu0 0.0
        %391 = vmatpush1.msra.mxu0 %v292
        %392 = vmatprep.subr.mxu0 0.0
        %393 = vmatpush1.msra.mxu0 %v291
        %394 = vmatprep.subr.mxu0 0.0
        %395 = vmatpush1.msra.mxu0 %v290
        %396 = vmatprep.subr.mxu0 0.0
        %397 = vmatpush1.msra.mxu0 %v289
        %398 = vmatprep.subr.mxu0 0.0
        %399 = vmatpush1.msra.mxu0 %v288
        %400 = vmatprep.subr.mxu0 0.0
        %401 = vmatpush1.msra.mxu0 %v287
        %402 = vmatprep.subr.mxu0 0.0
        %403 = vmatpush1.msra.mxu0 %v286
        %404 = vmatprep.subr.mxu0 0.0
        %405 = vmatpush1.msra.mxu0 %v285
        %406 = vmatprep.subr.mxu0 0.0
        %407 = vmatpush1.msra.mxu0 %v284
        %408 = vmatprep.subr.mxu0 0.0
        %409 = vmatpush1.msra.mxu0 %v283
        %410 = vmatprep.subr.mxu0 0.0
        %411 = vmatpush1.msra.mxu0 %v282
        %412 = vmatprep.subr.mxu0 0.0
        %413 = vmatpush1.msra.mxu0 %v281
        %414 = vmatprep.subr.mxu0 0.0
        %415 = vmatpush1.msra.mxu0 %v280
        %416 = vmatprep.subr.mxu0 0.0
        %417 = vmatpush2.msra.mxu0 0.0
        %418 = vmatprep.subr.mxu0 0.0
        %419 = vmatpush2.msra.mxu0 0.0
        %420 = vmatprep.subr.mxu0 0.0
        %421 = vmatpush2.msra.mxu0 0.0
        %422 = vmatprep.subr.mxu0 0.0
        %423 = vmatpush2.msra.mxu0 0.0
        %424 = vmatprep.subr.mxu0 0.0
        %425 = vmatpush2.msra.mxu0 0.0
        %426 = vmatprep.subr.mxu0 0.0
        %427 = vmatpush2.msra.mxu0 0.0
        %428 = vmatprep.subr.mxu0 0.0
        %429 = vmatpush2.msra.mxu0 0.0
        %430 = vmatprep.subr.mxu0 0.0
        %431 = vmatpush2.msra.mxu0 0.0
        %432 = vmatprep.subr.mxu0 0.0
        %433 = vmatpush2.msra.mxu0 0.0
        %434 = vmatprep.subr.mxu0 0.0
        %435 = vmatpush2.msra.mxu0 0.0
        %436 = vmatprep.subr.mxu0 0.0
        %437 = vmatpush2.msra.mxu0 0.0
        %438 = vmatprep.subr.mxu0 0.0
        %439 = vmatpush2.msra.mxu0 0.0
        %440 = vmatprep.subr.mxu0 0.0
        %441 = vmatpush2.msra.mxu0 0.0
        %442 = vmatprep.subr.mxu0 0.0
        %443 = vmatpush2.msra.mxu0 0.0
        %444 = vmatprep.subr.mxu0 0.0
        %445 = vmatpush2.msra.mxu0 0.0
        %446 = vmatprep.subr.mxu0 0.0
        %447 = vmatpush2.msra.mxu0 0.0
        %448 = vmatprep.mubr.f32.mxu0 0.0
        %449 = vmatmul.mubr.f32.gmra.mxu0 %v382
        %v450 = vpop.f32.mrf.mxu0
        %v451 = vadd.f32 %v383, %v450
        %v452 = vpop.f32.mrf.mxu0
        %453 = vdwg.mxu0
        %v454 = vld [vmem:[%s276] sm:$0x1]
        %vm455 = vcmp.eq.s32.totalorder %v454, 1
        %v456 = vsel %vm455, -1e+09, 0.0
        %v457 = vlaneseq
        %v458 = vshrl.u32 %v457, 7
        %vm459 = vcmp.gt.s32.totalorder %v297, %v458
        %v460 = vsel %vm459, -1e+09, 0.0
        %v461 = vld [vmem:[%s279] sm:$0x1]
        %vm462 = vcmp.eq.s32.totalorder %v461, 1
        %v463 = vsel %vm462, -1e+09, 0.0
        %v465 = vlaneseq
        %v466 = vshrl.u32 %v465, 7
        %v467 = vsub.s32 0, %v466
        %v468 = vrot.slane %v463, %v467
        %v470 = vadd.f32 %v460, %v468
        %v471 = vld [vmem:[#allocation2 + $0x90] sm:$0xff]
        %v472 = vld [vmem:[#allocation2 + $0x98] sm:$0xff]
        %v473 = vld [vmem:[#allocation2 + $0xa0] sm:$0xff]
        %v474 = vld [vmem:[#allocation2 + $0xa8] sm:$0xff]
        %v475 = vld [vmem:[#allocation2 + $0xb0] sm:$0x1]
        %v476 = vlaneseq
        %v477 = vshrl.u32 %v476, 7
        %v478 = vsub.s32 0, %v477
        %v479 = vrot.slane %v475, %v478
        %vm480 = vcmask 261120
        %v482 = vsel %vm480, %v373, 0
        %484 = vmatprep.subr.mxu0 0.0
        %485 = vmatpush1.msra.mxu0 0.0
        %486 = vmatprep.subr.mxu0 0.0
        %487 = vmatpush1.msra.mxu0 0.0
        %488 = vmatprep.subr.mxu0 0.0
        %489 = vmatpush1.msra.mxu0 0.0
        %490 = vmatprep.subr.mxu0 0.0
        %491 = vmatpush1.msra.mxu0 0.0
        %492 = vmatprep.subr.mxu0 0.0
        %493 = vmatpush1.msra.mxu0 0.0
        %494 = vmatprep.subr.mxu0 0.0
        %495 = vmatpush1.msra.mxu0 0.0
        %496 = vmatprep.subr.mxu0 0.0
        %497 = vmatpush1.msra.mxu0 0.0
        %498 = vmatprep.subr.mxu0 0.0
        %499 = vmatpush1.msra.mxu0 0.0
        %500 = vmatprep.subr.mxu0 0.0
        %501 = vmatpush1.msra.mxu0 0.0
        %502 = vmatprep.subr.mxu0 0.0
        %503 = vmatpush1.msra.mxu0 0.0
        %504 = vmatprep.subr.mxu0 0.0
        %505 = vmatpush1.msra.mxu0 0.0
        %506 = vmatprep.subr.mxu0 0.0
        %507 = vmatpush1.msra.mxu0 0.0
        %508 = vmatprep.subr.mxu0 0.0
        %509 = vmatpush1.msra.mxu0 %v474
        %510 = vmatprep.subr.mxu0 0.0
        %511 = vmatpush1.msra.mxu0 %v473
        %512 = vmatprep.subr.mxu0 0.0
        %513 = vmatpush1.msra.mxu0 %v472
        %514 = vmatprep.subr.mxu0 0.0
        %515 = vmatpush1.msra.mxu0 %v471
        %516 = vmatprep.subr.mxu0 0.0
        %517 = vmatpush2.msra.mxu0 0.0
        %518 = vmatprep.subr.mxu0 0.0
        %519 = vmatpush2.msra.mxu0 0.0
        %520 = vmatprep.subr.mxu0 0.0
        %521 = vmatpush2.msra.mxu0 0.0
        %522 = vmatprep.subr.mxu0 0.0
        %523 = vmatpush2.msra.mxu0 0.0
        %524 = vmatprep.subr.mxu0 0.0
        %525 = vmatpush2.msra.mxu0 0.0
        %526 = vmatprep.subr.mxu0 0.0
        %527 = vmatpush2.msra.mxu0 0.0
        %528 = vmatprep.subr.mxu0 0.0
        %529 = vmatpush2.msra.mxu0 0.0
        %530 = vmatprep.subr.mxu0 0.0
        %531 = vmatpush2.msra.mxu0 0.0
        %532 = vmatprep.subr.mxu0 0.0
        %533 = vmatpush2.msra.mxu0 0.0
        %534 = vmatprep.subr.mxu0 0.0
        %535 = vmatpush2.msra.mxu0 0.0
        %536 = vmatprep.subr.mxu0 0.0
        %537 = vmatpush2.msra.mxu0 0.0
        %538 = vmatprep.subr.mxu0 0.0
        %539 = vmatpush2.msra.mxu0 0.0
        %540 = vmatprep.subr.mxu0 0.0
        %541 = vmatpush2.msra.mxu0 0.0
        %542 = vmatprep.subr.mxu0 0.0
        %543 = vmatpush2.msra.mxu0 0.0
        %544 = vmatprep.subr.mxu0 0.0
        %545 = vmatpush2.msra.mxu0 0.0
        %546 = vmatprep.subr.mxu0 0.0
        %547 = vmatpush2.msra.mxu0 0.0
        %548 = vmatprep.mubr.f32.mxu0 0.0
        %549 = vmatmul.mubr.f32.gmra.mxu0 %v482
        %v550 = vpop.f32.mrf.mxu0
        %v551 = vadd.f32 %v479, %v550
        %v552 = vpop.f32.mrf.mxu0
        %553 = vdwg.mxu0
        %v554 = vld [vmem:[#allocation2 + $0xb8] sm:$0xff]
        %v555 = vld [vmem:[#allocation2 + $0xc0] sm:$0xff]
        %v556 = vld [vmem:[#allocation2 + $0xc8] sm:$0xff]
        %v557 = vld [vmem:[#allocation2 + $0xd0] sm:$0xff]
        %v558 = vld [vmem:[#allocation2 + $0xd8] sm:$0x1]
        %560 = vrot.lane.b32.xlu0 %v551, 96
        %v561 = vpop.permute.xlu0 %560
        %vm562 = vcmask 64512
        %v563 = vsel %vm562, %v551, 0
        %v565 = vsel %vm562, %v561, 0
        %567 = vmatprep.subr.mxu0 0.0
        %568 = vmatpush1.xpose.msra.mxu0 0.0
        %569 = vmatprep.subr.mxu0 0.0
        %570 = vmatpush1.xpose.msra.mxu0 0.0
        %571 = vmatprep.subr.mxu0 0.0
        %572 = vmatpush1.xpose.msra.mxu0 0.0
        %573 = vmatprep.subr.mxu0 0.0
        %574 = vmatpush1.xpose.msra.mxu0 0.0
        %575 = vmatprep.subr.mxu0 0.0
        %576 = vmatpush1.xpose.msra.mxu0 0.0
        %577 = vmatprep.subr.mxu0 0.0
        %578 = vmatpush1.xpose.msra.mxu0 0.0
        %579 = vmatprep.subr.mxu0 0.0
        %580 = vmatpush1.xpose.msra.mxu0 0.0
        %581 = vmatprep.subr.mxu0 0.0
        %582 = vmatpush1.xpose.msra.mxu0 0.0
        %583 = vmatprep.subr.mxu0 0.0
        %584 = vmatpush1.xpose.msra.mxu0 0.0
        %585 = vmatprep.subr.mxu0 0.0
        %586 = vmatpush1.xpose.msra.mxu0 0.0
        %587 = vmatprep.subr.mxu0 0.0
        %588 = vmatpush1.xpose.msra.mxu0 0.0
        %589 = vmatprep.subr.mxu0 0.0
        %590 = vmatpush1.xpose.msra.mxu0 0.0
        %591 = vmatprep.subr.mxu0 0.0
        %592 = vmatpush1.xpose.msra.mxu0 0.0
        %593 = vmatprep.subr.mxu0 0.0
        %594 = vmatpush1.xpose.msra.mxu0 0.0
        %595 = vmatprep.subr.mxu0 0.0
        %596 = vmatpush1.xpose.msra.mxu0 0.0
        %597 = vmatprep.subr.mxu0 0.0
        %598 = vmatpush1.xpose.msra.mxu0 %v565
        %599 = vmatprep.subr.mxu0 0.0
        %600 = vmatpush2.xpose.msra.mxu0 0.0
        %601 = vmatprep.subr.mxu0 0.0
        %602 = vmatpush2.xpose.msra.mxu0 0.0
        %603 = vmatprep.subr.mxu0 0.0
        %604 = vmatpush2.xpose.msra.mxu0 0.0
        %605 = vmatprep.subr.mxu0 0.0
        %606 = vmatpush2.xpose.msra.mxu0 0.0
        %607 = vmatprep.subr.mxu0 0.0
        %608 = vmatpush2.xpose.msra.mxu0 0.0
        %609 = vmatprep.subr.mxu0 0.0
        %610 = vmatpush2.xpose.msra.mxu0 0.0
        %611 = vmatprep.subr.mxu0 0.0
        %612 = vmatpush2.xpose.msra.mxu0 0.0
        %613 = vmatprep.subr.mxu0 0.0
        %614 = vmatpush2.xpose.msra.mxu0 0.0
        %615 = vmatprep.subr.mxu0 0.0
        %616 = vmatpush2.xpose.msra.mxu0 0.0
        %617 = vmatprep.subr.mxu0 0.0
        %618 = vmatpush2.xpose.msra.mxu0 0.0
        %619 = vmatprep.subr.mxu0 0.0
        %620 = vmatpush2.xpose.msra.mxu0 0.0
        %621 = vmatprep.subr.mxu0 0.0
        %622 = vmatpush2.xpose.msra.mxu0 0.0
        %623 = vmatprep.subr.mxu0 0.0
        %624 = vmatpush2.xpose.msra.mxu0 0.0
        %625 = vmatprep.subr.mxu0 0.0
        %626 = vmatpush2.xpose.msra.mxu0 0.0
        %627 = vmatprep.subr.mxu0 0.0
        %628 = vmatpush2.xpose.msra.mxu0 0.0
        %629 = vmatprep.subr.mxu0 0.0
        %630 = vmatpush2.xpose.msra.mxu0 0.0
        %631 = vmatprep.mubr.f32.mxu0 0.0
        %632 = vmatmul.mubr.f32.gmra.mxu0 %v563
        %v633 = vpop.f32.mrf.mxu0
        %v634 = vadd.f32 0.0, %v633
        %v635 = vpop.f32.mrf.mxu0
        %636 = vdwg.mxu0
        %v637 = vmul.f32 %v634, 0.35355338
        %v639 = vlaneseq
        %v640 = vshrl.u32 %v639, 7
        %v641 = vsub.s32 0, %v640
        %v642 = vrot.slane %v456, %v641
        %v644 = vadd.f32 %v637, %v642
        %v645 = vsel %vm562, %v644, -inf
        %646 = vmax.xlane.f32.xlu0 %v645
        %v647 = vpop.xlane.xlu0 %646
        %v648 = vsub.f32 %v644, %v647
        %v649 = vmul.f32 %v648, 1.442695
        %v650 = vpow.pop %v649
        %v651 = vsel %vm562, %v650, 0.0
        %652 = vadd.xlane.f32.xlu0 %v651
        %v653 = vpop.xlane.xlu0 %652
        %v654 = vrcp.pop %v653
        %v655 = vmul.f32 %v650, %v654
        %656 = vrot.lane.b32.xlu0 %v551, 64
        %v657 = vpop.permute.xlu0 %656
        %v660 = vsel %vm562, %v655, 0
        %662 = vmatprep.subr.mxu0 0.0
        %663 = vmatpush1.msra.mxu0 0.0
        %664 = vmatprep.subr.mxu0 0.0
        %665 = vmatpush1.msra.mxu0 0.0
        %666 = vmatprep.subr.mxu0 0.0
        %667 = vmatpush1.msra.mxu0 0.0
        %668 = vmatprep.subr.mxu0 0.0
        %669 = vmatpush1.msra.mxu0 0.0
        %670 = vmatprep.subr.mxu0 0.0
        %671 = vmatpush1.msra.mxu0 0.0
        %672 = vmatprep.subr.mxu0 0.0
        %673 = vmatpush1.msra.mxu0 0.0
        %674 = vmatprep.subr.mxu0 0.0
        %675 = vmatpush1.msra.mxu0 0.0
        %676 = vmatprep.subr.mxu0 0.0
        %677 = vmatpush1.msra.mxu0 0.0
        %678 = vmatprep.subr.mxu0 0.0
        %679 = vmatpush1.msra.mxu0 0.0
        %680 = vmatprep.subr.mxu0 0.0
        %681 = vmatpush1.msra.mxu0 0.0
        %682 = vmatprep.subr.mxu0 0.0
        %683 = vmatpush1.msra.mxu0 0.0
        %684 = vmatprep.subr.mxu0 0.0
        %685 = vmatpush1.msra.mxu0 0.0
        %686 = vmatprep.subr.mxu0 0.0
        %687 = vmatpush1.msra.mxu0 0.0
        %688 = vmatprep.subr.mxu0 0.0
        %689 = vmatpush1.msra.mxu0 0.0
        %690 = vmatprep.subr.mxu0 0.0
        %691 = vmatpush1.msra.mxu0 0.0
        %692 = vmatprep.subr.mxu0 0.0
        %693 = vmatpush1.msra.mxu0 %v657
        %694 = vmatprep.subr.mxu0 0.0
        %695 = vmatpush2.msra.mxu0 0.0
        %696 = vmatprep.subr.mxu0 0.0
        %697 = vmatpush2.msra.mxu0 0.0
        %698 = vmatprep.subr.mxu0 0.0
        %699 = vmatpush2.msra.mxu0 0.0
        %700 = vmatprep.subr.mxu0 0.0
        %701 = vmatpush2.msra.mxu0 0.0
        %702 = vmatprep.subr.mxu0 0.0
        %703 = vmatpush2.msra.mxu0 0.0
        %704 = vmatprep.subr.mxu0 0.0
        %705 = vmatpush2.msra.mxu0 0.0
        %706 = vmatprep.subr.mxu0 0.0
        %707 = vmatpush2.msra.mxu0 0.0
        %708 = vmatprep.subr.mxu0 0.0
        %709 = vmatpush2.msra.mxu0 0.0
        %710 = vmatprep.subr.mxu0 0.0
        %711 = vmatpush2.msra.mxu0 0.0
        %712 = vmatprep.subr.mxu0 0.0
        %713 = vmatpush2.msra.mxu0 0.0
        %714 = vmatprep.subr.mxu0 0.0
        %715 = vmatpush2.msra.mxu0 0.0
        %716 = vmatprep.subr.mxu0 0.0
        %717 = vmatpush2.msra.mxu0 0.0
        %718 = vmatprep.subr.mxu0 0.0
        %719 = vmatpush2.msra.mxu0 0.0
        %720 = vmatprep.subr.mxu0 0.0
        %721 = vmatpush2.msra.mxu0 0.0
        %722 = vmatprep.subr.mxu0 0.0
        %723 = vmatpush2.msra.mxu0 0.0
        %724 = vmatprep.subr.mxu0 0.0
        %725 = vmatpush2.msra.mxu0 0.0
        %726 = vmatprep.mubr.f32.mxu0 0.0
        %727 = vmatmul.mubr.f32.gmra.mxu0 %v660
        %v728 = vpop.f32.mrf.mxu0
        %v729 = vadd.f32 0.0, %v728
        %v730 = vpop.f32.mrf.mxu0
        %731 = vdwg.mxu0
        %732 = vrot.lane.b32.xlu0 %v551, 120
        %v733 = vpop.permute.xlu0 %732
        %734 = vrot.lane.b32.xlu0 %v551, 88
        %v735 = vpop.permute.xlu0 %734
        %v736 = vsel %vm562, %v733, 0
        %v738 = vsel %vm562, %v735, 0
        %740 = vmatprep.subr.mxu0 0.0
        %741 = vmatpush1.xpose.msra.mxu0 0.0
        %742 = vmatprep.subr.mxu0 0.0
        %743 = vmatpush1.xpose.msra.mxu0 0.0
        %744 = vmatprep.subr.mxu0 0.0
        %745 = vmatpush1.xpose.msra.mxu0 0.0
        %746 = vmatprep.subr.mxu0 0.0
        %747 = vmatpush1.xpose.msra.mxu0 0.0
        %748 = vmatprep.subr.mxu0 0.0
        %749 = vmatpush1.xpose.msra.mxu0 0.0
        %750 = vmatprep.subr.mxu0 0.0
        %751 = vmatpush1.xpose.msra.mxu0 0.0
        %752 = vmatprep.subr.mxu0 0.0
        %753 = vmatpush1.xpose.msra.mxu0 0.0
        %754 = vmatprep.subr.mxu0 0.0
        %755 = vmatpush1.xpose.msra.mxu0 0.0
        %756 = vmatprep.subr.mxu0 0.0
        %757 = vmatpush1.xpose.msra.mxu0 0.0
        %758 = vmatprep.subr.mxu0 0.0
        %759 = vmatpush1.xpose.msra.mxu0 0.0
        %760 = vmatprep.subr.mxu0 0.0
        %761 = vmatpush1.xpose.msra.mxu0 0.0
        %762 = vmatprep.subr.mxu0 0.0
        %763 = vmatpush1.xpose.msra.mxu0 0.0
        %764 = vmatprep.subr.mxu0 0.0
        %765 = vmatpush1.xpose.msra.mxu0 0.0
        %766 = vmatprep.subr.mxu0 0.0
        %767 = vmatpush1.xpose.msra.mxu0 0.0
        %768 = vmatprep.subr.mxu0 0.0
        %769 = vmatpush1.xpose.msra.mxu0 0.0
        %770 = vmatprep.subr.mxu0 0.0
        %771 = vmatpush1.xpose.msra.mxu0 %v738
        %772 = vmatprep.subr.mxu0 0.0
        %773 = vmatpush2.xpose.msra.mxu0 0.0
        %774 = vmatprep.subr.mxu0 0.0
        %775 = vmatpush2.xpose.msra.mxu0 0.0
        %776 = vmatprep.subr.mxu0 0.0
        %777 = vmatpush2.xpose.msra.mxu0 0.0
        %778 = vmatprep.subr.mxu0 0.0
        %779 = vmatpush2.xpose.msra.mxu0 0.0
        %780 = vmatprep.subr.mxu0 0.0
        %781 = vmatpush2.xpose.msra.mxu0 0.0
        %782 = vmatprep.subr.mxu0 0.0
        %783 = vmatpush2.xpose.msra.mxu0 0.0
        %784 = vmatprep.subr.mxu0 0.0
        %785 = vmatpush2.xpose.msra.mxu0 0.0
        %786 = vmatprep.subr.mxu0 0.0
        %787 = vmatpush2.xpose.msra.mxu0 0.0
        %788 = vmatprep.subr.mxu0 0.0
        %789 = vmatpush2.xpose.msra.mxu0 0.0
        %790 = vmatprep.subr.mxu0 0.0
        %791 = vmatpush2.xpose.msra.mxu0 0.0
        %792 = vmatprep.subr.mxu0 0.0
        %793 = vmatpush2.xpose.msra.mxu0 0.0
        %794 = vmatprep.subr.mxu0 0.0
        %795 = vmatpush2.xpose.msra.mxu0 0.0
        %796 = vmatprep.subr.mxu0 0.0
        %797 = vmatpush2.xpose.msra.mxu0 0.0
        %798 = vmatprep.subr.mxu0 0.0
        %799 = vmatpush2.xpose.msra.mxu0 0.0
        %800 = vmatprep.subr.mxu0 0.0
        %801 = vmatpush2.xpose.msra.mxu0 0.0
        %802 = vmatprep.subr.mxu0 0.0
        %803 = vmatpush2.xpose.msra.mxu0 0.0
        %804 = vmatprep.mubr.f32.mxu0 0.0
        %805 = vmatmul.mubr.f32.gmra.mxu0 %v736
        %v806 = vpop.f32.mrf.mxu0
        %v807 = vadd.f32 0.0, %v806
        %v808 = vpop.f32.mrf.mxu0
        %809 = vdwg.mxu0
        %v810 = vmul.f32 %v807, 0.35355338
        %v811 = vadd.f32 %v810, %v642
        %v812 = vsel %vm562, %v811, -inf
        %813 = vmax.xlane.f32.xlu0 %v812
        %v814 = vpop.xlane.xlu0 %813
        %v815 = vsub.f32 %v811, %v814
        %v816 = vmul.f32 %v815, 1.442695
        %v817 = vpow.pop %v816
        %v818 = vsel %vm562, %v817, 0.0
        %819 = vadd.xlane.f32.xlu0 %v818
        %v820 = vpop.xlane.xlu0 %819
        %v821 = vrcp.pop %v820
        %v822 = vmul.f32 %v817, %v821
        %823 = vrot.lane.b32.xlu0 %v551, 56
        %v824 = vpop.permute.xlu0 %823
        %v827 = vsel %vm562, %v822, 0
        %829 = vmatprep.subr.mxu0 0.0
        %830 = vmatpush1.msra.mxu0 0.0
        %831 = vmatprep.subr.mxu0 0.0
        %832 = vmatpush1.msra.mxu0 0.0
        %833 = vmatprep.subr.mxu0 0.0
        %834 = vmatpush1.msra.mxu0 0.0
        %835 = vmatprep.subr.mxu0 0.0
        %836 = vmatpush1.msra.mxu0 0.0
        %837 = vmatprep.subr.mxu0 0.0
        %838 = vmatpush1.msra.mxu0 0.0
        %839 = vmatprep.subr.mxu0 0.0
        %840 = vmatpush1.msra.mxu0 0.0
        %841 = vmatprep.subr.mxu0 0.0
        %842 = vmatpush1.msra.mxu0 0.0
        %843 = vmatprep.subr.mxu0 0.0
        %844 = vmatpush1.msra.mxu0 0.0
        %845 = vmatprep.subr.mxu0 0.0
        %846 = vmatpush1.msra.mxu0 0.0
        %847 = vmatprep.subr.mxu0 0.0
        %848 = vmatpush1.msra.mxu0 0.0
        %849 = vmatprep.subr.mxu0 0.0
        %850 = vmatpush1.msra.mxu0 0.0
        %851 = vmatprep.subr.mxu0 0.0
        %852 = vmatpush1.msra.mxu0 0.0
        %853 = vmatprep.subr.mxu0 0.0
        %854 = vmatpush1.msra.mxu0 0.0
        %855 = vmatprep.subr.mxu0 0.0
        %856 = vmatpush1.msra.mxu0 0.0
        %857 = vmatprep.subr.mxu0 0.0
        %858 = vmatpush1.msra.mxu0 0.0
        %859 = vmatprep.subr.mxu0 0.0
        %860 = vmatpush1.msra.mxu0 %v824
        %861 = vmatprep.subr.mxu0 0.0
        %862 = vmatpush2.msra.mxu0 0.0
        %863 = vmatprep.subr.mxu0 0.0
        %864 = vmatpush2.msra.mxu0 0.0
        %865 = vmatprep.subr.mxu0 0.0
        %866 = vmatpush2.msra.mxu0 0.0
        %867 = vmatprep.subr.mxu0 0.0
        %868 = vmatpush2.msra.mxu0 0.0
        %869 = vmatprep.subr.mxu0 0.0
        %870 = vmatpush2.msra.mxu0 0.0
        %871 = vmatprep.subr.mxu0 0.0
        %872 = vmatpush2.msra.mxu0 0.0
        %873 = vmatprep.subr.mxu0 0.0
        %874 = vmatpush2.msra.mxu0 0.0
        %875 = vmatprep.subr.mxu0 0.0
        %876 = vmatpush2.msra.mxu0 0.0
        %877 = vmatprep.subr.mxu0 0.0
        %878 = vmatpush2.msra.mxu0 0.0
        %879 = vmatprep.subr.mxu0 0.0
        %880 = vmatpush2.msra.mxu0 0.0
        %881 = vmatprep.subr.mxu0 0.0
        %882 = vmatpush2.msra.mxu0 0.0
        %883 = vmatprep.subr.mxu0 0.0
        %884 = vmatpush2.msra.mxu0 0.0
        %885 = vmatprep.subr.mxu0 0.0
        %886 = vmatpush2.msra.mxu0 0.0
        %887 = vmatprep.subr.mxu0 0.0
        %888 = vmatpush2.msra.mxu0 0.0
        %889 = vmatprep.subr.mxu0 0.0
        %890 = vmatpush2.msra.mxu0 0.0
        %891 = vmatprep.subr.mxu0 0.0
        %892 = vmatpush2.msra.mxu0 0.0
        %893 = vmatprep.mubr.f32.mxu0 0.0
        %894 = vmatmul.mubr.f32.gmra.mxu0 %v827
        %v895 = vpop.f32.mrf.mxu0
        %v896 = vadd.f32 0.0, %v895
        %v897 = vpop.f32.mrf.mxu0
        %898 = vdwg.mxu0
        %899 = vrot.lane.b32.xlu0 %v551, 112
        %v900 = vpop.permute.xlu0 %899
        %901 = vrot.lane.b32.xlu0 %v551, 80
        %v902 = vpop.permute.xlu0 %901
        %v903 = vsel %vm562, %v900, 0
        %v905 = vsel %vm562, %v902, 0
        %907 = vmatprep.subr.mxu0 0.0
        %908 = vmatpush1.xpose.msra.mxu0 0.0
        %909 = vmatprep.subr.mxu0 0.0
        %910 = vmatpush1.xpose.msra.mxu0 0.0
        %911 = vmatprep.subr.mxu0 0.0
        %912 = vmatpush1.xpose.msra.mxu0 0.0
        %913 = vmatprep.subr.mxu0 0.0
        %914 = vmatpush1.xpose.msra.mxu0 0.0
        %915 = vmatprep.subr.mxu0 0.0
        %916 = vmatpush1.xpose.msra.mxu0 0.0
        %917 = vmatprep.subr.mxu0 0.0
        %918 = vmatpush1.xpose.msra.mxu0 0.0
        %919 = vmatprep.subr.mxu0 0.0
        %920 = vmatpush1.xpose.msra.mxu0 0.0
        %921 = vmatprep.subr.mxu0 0.0
        %922 = vmatpush1.xpose.msra.mxu0 0.0
        %923 = vmatprep.subr.mxu0 0.0
        %924 = vmatpush1.xpose.msra.mxu0 0.0
        %925 = vmatprep.subr.mxu0 0.0
        %926 = vmatpush1.xpose.msra.mxu0 0.0
        %927 = vmatprep.subr.mxu0 0.0
        %928 = vmatpush1.xpose.msra.mxu0 0.0
        %929 = vmatprep.subr.mxu0 0.0
        %930 = vmatpush1.xpose.msra.mxu0 0.0
        %931 = vmatprep.subr.mxu0 0.0
        %932 = vmatpush1.xpose.msra.mxu0 0.0
        %933 = vmatprep.subr.mxu0 0.0
        %934 = vmatpush1.xpose.msra.mxu0 0.0
        %935 = vmatprep.subr.mxu0 0.0
        %936 = vmatpush1.xpose.msra.mxu0 0.0
        %937 = vmatprep.subr.mxu0 0.0
        %938 = vmatpush1.xpose.msra.mxu0 %v905
        %939 = vmatprep.subr.mxu0 0.0
        %940 = vmatpush2.xpose.msra.mxu0 0.0
        %941 = vmatprep.subr.mxu0 0.0
        %942 = vmatpush2.xpose.msra.mxu0 0.0
        %943 = vmatprep.subr.mxu0 0.0
        %944 = vmatpush2.xpose.msra.mxu0 0.0
        %945 = vmatprep.subr.mxu0 0.0
        %946 = vmatpush2.xpose.msra.mxu0 0.0
        %947 = vmatprep.subr.mxu0 0.0
        %948 = vmatpush2.xpose.msra.mxu0 0.0
        %949 = vmatprep.subr.mxu0 0.0
        %950 = vmatpush2.xpose.msra.mxu0 0.0
        %951 = vmatprep.subr.mxu0 0.0
        %952 = vmatpush2.xpose.msra.mxu0 0.0
        %953 = vmatprep.subr.mxu0 0.0
        %954 = vmatpush2.xpose.msra.mxu0 0.0
        %955 = vmatprep.subr.mxu0 0.0
        %956 = vmatpush2.xpose.msra.mxu0 0.0
        %957 = vmatprep.subr.mxu0 0.0
        %958 = vmatpush2.xpose.msra.mxu0 0.0
        %959 = vmatprep.subr.mxu0 0.0
        %960 = vmatpush2.xpose.msra.mxu0 0.0
        %961 = vmatprep.subr.mxu0 0.0
        %962 = vmatpush2.xpose.msra.mxu0 0.0
        %963 = vmatprep.subr.mxu0 0.0
        %964 = vmatpush2.xpose.msra.mxu0 0.0
        %965 = vmatprep.subr.mxu0 0.0
        %966 = vmatpush2.xpose.msra.mxu0 0.0
        %967 = vmatprep.subr.mxu0 0.0
        %968 = vmatpush2.xpose.msra.mxu0 0.0
        %969 = vmatprep.subr.mxu0 0.0
        %970 = vmatpush2.xpose.msra.mxu0 0.0
        %971 = vmatprep.mubr.f32.mxu0 0.0
        %972 = vmatmul.mubr.f32.gmra.mxu0 %v903
        %v973 = vpop.f32.mrf.mxu0
        %v974 = vadd.f32 0.0, %v973
        %v975 = vpop.f32.mrf.mxu0
        %976 = vdwg.mxu0
        %v977 = vmul.f32 %v974, 0.35355338
        %v978 = vadd.f32 %v977, %v642
        %v979 = vsel %vm562, %v978, -inf
        %980 = vmax.xlane.f32.xlu0 %v979
        %v981 = vpop.xlane.xlu0 %980
        %v982 = vsub.f32 %v978, %v981
        %v983 = vmul.f32 %v982, 1.442695
        %v984 = vpow.pop %v983
        %v985 = vsel %vm562, %v984, 0.0
        %986 = vadd.xlane.f32.xlu0 %v985
        %v987 = vpop.xlane.xlu0 %986
        %v988 = vrcp.pop %v987
        %v989 = vmul.f32 %v984, %v988
        %990 = vrot.lane.b32.xlu0 %v551, 48
        %v991 = vpop.permute.xlu0 %990
        %v994 = vsel %vm562, %v989, 0
        %996 = vmatprep.subr.mxu0 0.0
        %997 = vmatpush1.msra.mxu0 0.0
        %998 = vmatprep.subr.mxu0 0.0
        %999 = vmatpush1.msra.mxu0 0.0
        %1000 = vmatprep.subr.mxu0 0.0
        %1001 = vmatpush1.msra.mxu0 0.0
        %1002 = vmatprep.subr.mxu0 0.0
        %1003 = vmatpush1.msra.mxu0 0.0
        %1004 = vmatprep.subr.mxu0 0.0
        %1005 = vmatpush1.msra.mxu0 0.0
        %1006 = vmatprep.subr.mxu0 0.0
        %1007 = vmatpush1.msra.mxu0 0.0
        %1008 = vmatprep.subr.mxu0 0.0
        %1009 = vmatpush1.msra.mxu0 0.0
        %1010 = vmatprep.subr.mxu0 0.0
        %1011 = vmatpush1.msra.mxu0 0.0
        %1012 = vmatprep.subr.mxu0 0.0
        %1013 = vmatpush1.msra.mxu0 0.0
        %1014 = vmatprep.subr.mxu0 0.0
        %1015 = vmatpush1.msra.mxu0 0.0
        %1016 = vmatprep.subr.mxu0 0.0
        %1017 = vmatpush1.msra.mxu0 0.0
        %1018 = vmatprep.subr.mxu0 0.0
        %1019 = vmatpush1.msra.mxu0 0.0
        %1020 = vmatprep.subr.mxu0 0.0
        %1021 = vmatpush1.msra.mxu0 0.0
        %1022 = vmatprep.subr.mxu0 0.0
        %1023 = vmatpush1.msra.mxu0 0.0
        %1024 = vmatprep.subr.mxu0 0.0
        %1025 = vmatpush1.msra.mxu0 0.0
        %1026 = vmatprep.subr.mxu0 0.0
        %1027 = vmatpush1.msra.mxu0 %v991
        %1028 = vmatprep.subr.mxu0 0.0
        %1029 = vmatpush2.msra.mxu0 0.0
        %1030 = vmatprep.subr.mxu0 0.0
        %1031 = vmatpush2.msra.mxu0 0.0
        %1032 = vmatprep.subr.mxu0 0.0
        %1033 = vmatpush2.msra.mxu0 0.0
        %1034 = vmatprep.subr.mxu0 0.0
        %1035 = vmatpush2.msra.mxu0 0.0
        %1036 = vmatprep.subr.mxu0 0.0
        %1037 = vmatpush2.msra.mxu0 0.0
        %1038 = vmatprep.subr.mxu0 0.0
        %1039 = vmatpush2.msra.mxu0 0.0
        %1040 = vmatprep.subr.mxu0 0.0
        %1041 = vmatpush2.msra.mxu0 0.0
        %1042 = vmatprep.subr.mxu0 0.0
        %1043 = vmatpush2.msra.mxu0 0.0
        %1044 = vmatprep.subr.mxu0 0.0
        %1045 = vmatpush2.msra.mxu0 0.0
        %1046 = vmatprep.subr.mxu0 0.0
        %1047 = vmatpush2.msra.mxu0 0.0
        %1048 = vmatprep.subr.mxu0 0.0
        %1049 = vmatpush2.msra.mxu0 0.0
        %1050 = vmatprep.subr.mxu0 0.0
        %1051 = vmatpush2.msra.mxu0 0.0
        %1052 = vmatprep.subr.mxu0 0.0
        %1053 = vmatpush2.msra.mxu0 0.0
        %1054 = vmatprep.subr.mxu0 0.0
        %1055 = vmatpush2.msra.mxu0 0.0
        %1056 = vmatprep.subr.mxu0 0.0
        %1057 = vmatpush2.msra.mxu0 0.0
        %1058 = vmatprep.subr.mxu0 0.0
        %1059 = vmatpush2.msra.mxu0 0.0
        %1060 = vmatprep.mubr.f32.mxu0 0.0
        %1061 = vmatmul.mubr.f32.gmra.mxu0 %v994
        %v1062 = vpop.f32.mrf.mxu0
        %v1063 = vadd.f32 0.0, %v1062
        %v1064 = vpop.f32.mrf.mxu0
        %1065 = vdwg.mxu0
        %1066 = vrot.lane.b32.xlu0 %v551, 104
        %v1067 = vpop.permute.xlu0 %1066
        %1068 = vrot.lane.b32.xlu0 %v551, 72
        %v1069 = vpop.permute.xlu0 %1068
        %v1070 = vsel %vm562, %v1067, 0
        %v1072 = vsel %vm562, %v1069, 0
        %1074 = vmatprep.subr.mxu0 0.0
        %1075 = vmatpush1.xpose.msra.mxu0 0.0
        %1076 = vmatprep.subr.mxu0 0.0
        %1077 = vmatpush1.xpose.msra.mxu0 0.0
        %1078 = vmatprep.subr.mxu0 0.0
        %1079 = vmatpush1.xpose.msra.mxu0 0.0
        %1080 = vmatprep.subr.mxu0 0.0
        %1081 = vmatpush1.xpose.msra.mxu0 0.0
        %1082 = vmatprep.subr.mxu0 0.0
        %1083 = vmatpush1.xpose.msra.mxu0 0.0
        %1084 = vmatprep.subr.mxu0 0.0
        %1085 = vmatpush1.xpose.msra.mxu0 0.0
        %1086 = vmatprep.subr.mxu0 0.0
        %1087 = vmatpush1.xpose.msra.mxu0 0.0
        %1088 = vmatprep.subr.mxu0 0.0
        %1089 = vmatpush1.xpose.msra.mxu0 0.0
        %1090 = vmatprep.subr.mxu0 0.0
        %1091 = vmatpush1.xpose.msra.mxu0 0.0
        %1092 = vmatprep.subr.mxu0 0.0
        %1093 = vmatpush1.xpose.msra.mxu0 0.0
        %1094 = vmatprep.subr.mxu0 0.0
        %1095 = vmatpush1.xpose.msra.mxu0 0.0
        %1096 = vmatprep.subr.mxu0 0.0
        %1097 = vmatpush1.xpose.msra.mxu0 0.0
        %1098 = vmatprep.subr.mxu0 0.0
        %1099 = vmatpush1.xpose.msra.mxu0 0.0
        %1100 = vmatprep.subr.mxu0 0.0
        %1101 = vmatpush1.xpose.msra.mxu0 0.0
        %1102 = vmatprep.subr.mxu0 0.0
        %1103 = vmatpush1.xpose.msra.mxu0 0.0
        %1104 = vmatprep.subr.mxu0 0.0
        %1105 = vmatpush1.xpose.msra.mxu0 %v1072
        %1106 = vmatprep.subr.mxu0 0.0
        %1107 = vmatpush2.xpose.msra.mxu0 0.0
        %1108 = vmatprep.subr.mxu0 0.0
        %1109 = vmatpush2.xpose.msra.mxu0 0.0
        %1110 = vmatprep.subr.mxu0 0.0
        %1111 = vmatpush2.xpose.msra.mxu0 0.0
        %1112 = vmatprep.subr.mxu0 0.0
        %1113 = vmatpush2.xpose.msra.mxu0 0.0
        %1114 = vmatprep.subr.mxu0 0.0
        %1115 = vmatpush2.xpose.msra.mxu0 0.0
        %1116 = vmatprep.subr.mxu0 0.0
        %1117 = vmatpush2.xpose.msra.mxu0 0.0
        %1118 = vmatprep.subr.mxu0 0.0
        %1119 = vmatpush2.xpose.msra.mxu0 0.0
        %1120 = vmatprep.subr.mxu0 0.0
        %1121 = vmatpush2.xpose.msra.mxu0 0.0
        %1122 = vmatprep.subr.mxu0 0.0
        %1123 = vmatpush2.xpose.msra.mxu0 0.0
        %1124 = vmatprep.subr.mxu0 0.0
        %1125 = vmatpush2.xpose.msra.mxu0 0.0
        %1126 = vmatprep.subr.mxu0 0.0
        %1127 = vmatpush2.xpose.msra.mxu0 0.0
        %1128 = vmatprep.subr.mxu0 0.0
        %1129 = vmatpush2.xpose.msra.mxu0 0.0
        %1130 = vmatprep.subr.mxu0 0.0
        %1131 = vmatpush2.xpose.msra.mxu0 0.0
        %1132 = vmatprep.subr.mxu0 0.0
        %1133 = vmatpush2.xpose.msra.mxu0 0.0
        %1134 = vmatprep.subr.mxu0 0.0
        %1135 = vmatpush2.xpose.msra.mxu0 0.0
        %1136 = vmatprep.subr.mxu0 0.0
        %1137 = vmatpush2.xpose.msra.mxu0 0.0
        %1138 = vmatprep.mubr.f32.mxu0 0.0
        %1139 = vmatmul.mubr.f32.gmra.mxu0 %v1070
        %v1140 = vpop.f32.mrf.mxu0
        %v1141 = vadd.f32 0.0, %v1140
        %v1142 = vpop.f32.mrf.mxu0
        %1143 = vdwg.mxu0
        %v1144 = vmul.f32 %v1141, 0.35355338
        %v1145 = vadd.f32 %v1144, %v642
        %v1146 = vsel %vm562, %v1145, -inf
        %1147 = vmax.xlane.f32.xlu0 %v1146
        %v1148 = vpop.xlane.xlu0 %1147
        %v1149 = vsub.f32 %v1145, %v1148
        %v1150 = vmul.f32 %v1149, 1.442695
        %v1151 = vpow.pop %v1150
        %v1152 = vsel %vm562, %v1151, 0.0
        %1153 = vadd.xlane.f32.xlu0 %v1152
        %v1154 = vpop.xlane.xlu0 %1153
        %v1155 = vrcp.pop %v1154
        %v1156 = vmul.f32 %v1151, %v1155
        %1157 = vrot.lane.b32.xlu0 %v551, 40
        %v1158 = vpop.permute.xlu0 %1157
        %v1161 = vsel %vm562, %v1156, 0
        %1163 = vmatprep.subr.mxu0 0.0
        %1164 = vmatpush1.msra.mxu0 0.0
        %1165 = vmatprep.subr.mxu0 0.0
        %1166 = vmatpush1.msra.mxu0 0.0
        %1167 = vmatprep.subr.mxu0 0.0
        %1168 = vmatpush1.msra.mxu0 0.0
        %1169 = vmatprep.subr.mxu0 0.0
        %1170 = vmatpush1.msra.mxu0 0.0
        %1171 = vmatprep.subr.mxu0 0.0
        %1172 = vmatpush1.msra.mxu0 0.0
        %1173 = vmatprep.subr.mxu0 0.0
        %1174 = vmatpush1.msra.mxu0 0.0
        %1175 = vmatprep.subr.mxu0 0.0
        %1176 = vmatpush1.msra.mxu0 0.0
        %1177 = vmatprep.subr.mxu0 0.0
        %1178 = vmatpush1.msra.mxu0 0.0
        %1179 = vmatprep.subr.mxu0 0.0
        %1180 = vmatpush1.msra.mxu0 0.0
        %1181 = vmatprep.subr.mxu0 0.0
        %1182 = vmatpush1.msra.mxu0 0.0
        %1183 = vmatprep.subr.mxu0 0.0
        %1184 = vmatpush1.msra.mxu0 0.0
        %1185 = vmatprep.subr.mxu0 0.0
        %1186 = vmatpush1.msra.mxu0 0.0
        %1187 = vmatprep.subr.mxu0 0.0
        %1188 = vmatpush1.msra.mxu0 0.0
        %1189 = vmatprep.subr.mxu0 0.0
        %1190 = vmatpush1.msra.mxu0 0.0
        %1191 = vmatprep.subr.mxu0 0.0
        %1192 = vmatpush1.msra.mxu0 0.0
        %1193 = vmatprep.subr.mxu0 0.0
        %1194 = vmatpush1.msra.mxu0 %v1158
        %1195 = vmatprep.subr.mxu0 0.0
        %1196 = vmatpush2.msra.mxu0 0.0
        %1197 = vmatprep.subr.mxu0 0.0
        %1198 = vmatpush2.msra.mxu0 0.0
        %1199 = vmatprep.subr.mxu0 0.0
        %1200 = vmatpush2.msra.mxu0 0.0
        %1201 = vmatprep.subr.mxu0 0.0
        %1202 = vmatpush2.msra.mxu0 0.0
        %1203 = vmatprep.subr.mxu0 0.0
        %1204 = vmatpush2.msra.mxu0 0.0
        %1205 = vmatprep.subr.mxu0 0.0
        %1206 = vmatpush2.msra.mxu0 0.0
        %1207 = vmatprep.subr.mxu0 0.0
        %1208 = vmatpush2.msra.mxu0 0.0
        %1209 = vmatprep.subr.mxu0 0.0
        %1210 = vmatpush2.msra.mxu0 0.0
        %1211 = vmatprep.subr.mxu0 0.0
        %1212 = vmatpush2.msra.mxu0 0.0
        %1213 = vmatprep.subr.mxu0 0.0
        %1214 = vmatpush2.msra.mxu0 0.0
        %1215 = vmatprep.subr.mxu0 0.0
        %1216 = vmatpush2.msra.mxu0 0.0
        %1217 = vmatprep.subr.mxu0 0.0
        %1218 = vmatpush2.msra.mxu0 0.0
        %1219 = vmatprep.subr.mxu0 0.0
        %1220 = vmatpush2.msra.mxu0 0.0
        %1221 = vmatprep.subr.mxu0 0.0
        %1222 = vmatpush2.msra.mxu0 0.0
        %1223 = vmatprep.subr.mxu0 0.0
        %1224 = vmatpush2.msra.mxu0 0.0
        %1225 = vmatprep.subr.mxu0 0.0
        %1226 = vmatpush2.msra.mxu0 0.0
        %1227 = vmatprep.mubr.f32.mxu0 0.0
        %1228 = vmatmul.mubr.f32.gmra.mxu0 %v1161
        %v1229 = vpop.f32.mrf.mxu0
        %v1230 = vadd.f32 0.0, %v1229
        %v1231 = vpop.f32.mrf.mxu0
        %1232 = vdwg.mxu0
        %1234 = vrot.lane.b32.xlu0 %v896, 8
        %v1235 = vpop.permute.xlu0 %1234
        %1238 = vrot.lane.b32.xlu0 %v1063, 16
        %v1239 = vpop.permute.xlu0 %1238
        %1242 = vrot.lane.b32.xlu0 %v1230, 24
        %v1243 = vpop.permute.xlu0 %1242
        %v1245 = vsel %vm562, %v729, %v1235
        %vm1246 = vcmask 130048
        %v1247 = vsel %vm1246, %v1245, %v1239
        %vm1248 = vcmask 195584
        %v1249 = vsel %vm1248, %v1247, %v1243
        %v1250 = vlaneseq
        %v1251 = vshrl.u32 %v1250, 7
        %v1252 = vsub.s32 0, %v1251
        %v1253 = vrot.slane %v558, %v1252
        %v1255 = vsel %vm480, %v1249, 0
        %1257 = vmatprep.subr.mxu0 0.0
        %1258 = vmatpush1.msra.mxu0 0.0
        %1259 = vmatprep.subr.mxu0 0.0
        %1260 = vmatpush1.msra.mxu0 0.0
        %1261 = vmatprep.subr.mxu0 0.0
        %1262 = vmatpush1.msra.mxu0 0.0
        %1263 = vmatprep.subr.mxu0 0.0
        %1264 = vmatpush1.msra.mxu0 0.0
        %1265 = vmatprep.subr.mxu0 0.0
        %1266 = vmatpush1.msra.mxu0 0.0
        %1267 = vmatprep.subr.mxu0 0.0
        %1268 = vmatpush1.msra.mxu0 0.0
        %1269 = vmatprep.subr.mxu0 0.0
        %1270 = vmatpush1.msra.mxu0 0.0
        %1271 = vmatprep.subr.mxu0 0.0
        %1272 = vmatpush1.msra.mxu0 0.0
        %1273 = vmatprep.subr.mxu0 0.0
        %1274 = vmatpush1.msra.mxu0 0.0
        %1275 = vmatprep.subr.mxu0 0.0
        %1276 = vmatpush1.msra.mxu0 0.0
        %1277 = vmatprep.subr.mxu0 0.0
        %1278 = vmatpush1.msra.mxu0 0.0
        %1279 = vmatprep.subr.mxu0 0.0
        %1280 = vmatpush1.msra.mxu0 0.0
        %1281 = vmatprep.subr.mxu0 0.0
        %1282 = vmatpush1.msra.mxu0 %v557
        %1283 = vmatprep.subr.mxu0 0.0
        %1284 = vmatpush1.msra.mxu0 %v556
        %1285 = vmatprep.subr.mxu0 0.0
        %1286 = vmatpush1.msra.mxu0 %v555
        %1287 = vmatprep.subr.mxu0 0.0
        %1288 = vmatpush1.msra.mxu0 %v554
        %1289 = vmatprep.subr.mxu0 0.0
        %1290 = vmatpush2.msra.mxu0 0.0
        %1291 = vmatprep.subr.mxu0 0.0
        %1292 = vmatpush2.msra.mxu0 0.0
        %1293 = vmatprep.subr.mxu0 0.0
        %1294 = vmatpush2.msra.mxu0 0.0
        %1295 = vmatprep.subr.mxu0 0.0
        %1296 = vmatpush2.msra.mxu0 0.0
        %1297 = vmatprep.subr.mxu0 0.0
        %1298 = vmatpush2.msra.mxu0 0.0
        %1299 = vmatprep.subr.mxu0 0.0
        %1300 = vmatpush2.msra.mxu0 0.0
        %1301 = vmatprep.subr.mxu0 0.0
        %1302 = vmatpush2.msra.mxu0 0.0
        %1303 = vmatprep.subr.mxu0 0.0
        %1304 = vmatpush2.msra.mxu0 0.0
        %1305 = vmatprep.subr.mxu0 0.0
        %1306 = vmatpush2.msra.mxu0 0.0
        %1307 = vmatprep.subr.mxu0 0.0
        %1308 = vmatpush2.msra.mxu0 0.0
        %1309 = vmatprep.subr.mxu0 0.0
        %1310 = vmatpush2.msra.mxu0 0.0
        %1311 = vmatprep.subr.mxu0 0.0
        %1312 = vmatpush2.msra.mxu0 0.0
        %1313 = vmatprep.subr.mxu0 0.0
        %1314 = vmatpush2.msra.mxu0 0.0
        %1315 = vmatprep.subr.mxu0 0.0
        %1316 = vmatpush2.msra.mxu0 0.0
        %1317 = vmatprep.subr.mxu0 0.0
        %1318 = vmatpush2.msra.mxu0 0.0
        %1319 = vmatprep.subr.mxu0 0.0
        %1320 = vmatpush2.msra.mxu0 0.0
        %1321 = vmatprep.mubr.f32.mxu0 0.0
        %1322 = vmatmul.mubr.f32.gmra.mxu0 %v1255
        %v1323 = vpop.f32.mrf.mxu0
        %v1324 = vadd.f32 %v1253, %v1323
        %v1325 = vpop.f32.mrf.mxu0
        %1326 = vdwg.mxu0
        %v1327 = vadd.f32 %v373, %v1324
        %v1328 = vld [vmem:[#allocation2 + $0xe0] sm:$0x1]
        %v1329 = vld [vmem:[#allocation2 + $0xe8] sm:$0x1]
        %v1330 = vsel %vm480, %v1327, 0.0
        %1331 = vadd.xlane.f32.xlu0 %v1330
        %v1332 = vpop.xlane.xlu0 %1331
        %v1333 = vrcp.pop 32.0
        %v1334 = vmul.f32 %v1332, %v1333
        %v1335 = vsub.f32 %v1327, %v1334
        %v1336 = vmul.f32 %v1335, %v1335
        %v1337 = vsel %vm480, %v1336, 0.0
        %1338 = vadd.xlane.f32.xlu0 %v1337
        %v1339 = vpop.xlane.xlu0 %1338
        %v1340 = vmul.f32 %v1339, %v1333
        %v1341 = vadd.f32 %v1340, 1e-05
        %v1342 = vrsqrt.pop %v1341
        %v1343 = vmul.f32 %v1335, %v1342
        %v1344 = vlaneseq
        %v1345 = vshrl.u32 %v1344, 7
        %v1346 = vsub.s32 0, %v1345
        %v1347 = vrot.slane %v1328, %v1346
        %v1348 = vmul.f32 %v1343, %v1347
        %v1349 = vlaneseq
        %v1350 = vshrl.u32 %v1349, 7
        %v1351 = vsub.s32 0, %v1350
        %v1352 = vrot.slane %v1329, %v1351
        %v1353 = vadd.f32 %v1348, %v1352
        %v1354 = vld [vmem:[#allocation2 + $0xf0] sm:$0xff]
        %v1355 = vld [vmem:[#allocation2 + $0xf8] sm:$0xff]
        %v1356 = vld [vmem:[#allocation2 + $0x100] sm:$0xff]
        %v1357 = vld [vmem:[#allocation2 + $0x108] sm:$0xff]
        %v1358 = vld [vmem:[#allocation2 + $0x110] sm:$0x1]
        %v1359 = vld [vmem:[#allocation2 + $0x118] sm:$0xff]
        %v1360 = vld [vmem:[#allocation2 + $0x120] sm:$0xff]
        %v1361 = vld [vmem:[#allocation2 + $0x128] sm:$0xff]
        %v1362 = vld [vmem:[#allocation2 + $0x130] sm:$0xff]
        %v1363 = vld [vmem:[#allocation2 + $0x138] sm:$0xff]
        %v1364 = vld [vmem:[#allocation2 + $0x140] sm:$0xff]
        %v1365 = vld [vmem:[#allocation2 + $0x148] sm:$0xff]
        %v1366 = vld [vmem:[#allocation2 + $0x150] sm:$0xff]
        %v1367 = vld [vmem:[#allocation2 + $0x158] sm:$0x1]
        %v1368 = vlaneseq
        %v1369 = vshrl.u32 %v1368, 7
        %v1370 = vsub.s32 0, %v1369
        %v1371 = vrot.slane %v1358, %v1370
        %v1373 = vsel %vm480, %v1353, 0
        %1375 = vmatprep.subr.mxu0 0.0
        %1376 = vmatpush1.msra.mxu0 0.0
        %1377 = vmatprep.subr.mxu0 0.0
        %1378 = vmatpush1.msra.mxu0 0.0
        %1379 = vmatprep.subr.mxu0 0.0
        %1380 = vmatpush1.msra.mxu0 0.0
        %1381 = vmatprep.subr.mxu0 0.0
        %1382 = vmatpush1.msra.mxu0 0.0
        %1383 = vmatprep.subr.mxu0 0.0
        %1384 = vmatpush1.msra.mxu0 0.0
        %1385 = vmatprep.subr.mxu0 0.0
        %1386 = vmatpush1.msra.mxu0 0.0
        %1387 = vmatprep.subr.mxu0 0.0
        %1388 = vmatpush1.msra.mxu0 0.0
        %1389 = vmatprep.subr.mxu0 0.0
        %1390 = vmatpush1.msra.mxu0 0.0
        %1391 = vmatprep.subr.mxu0 0.0
        %1392 = vmatpush1.msra.mxu0 0.0
        %1393 = vmatprep.subr.mxu0 0.0
        %1394 = vmatpush1.msra.mxu0 0.0
        %1395 = vmatprep.subr.mxu0 0.0
        %1396 = vmatpush1.msra.mxu0 0.0
        %1397 = vmatprep.subr.mxu0 0.0
        %1398 = vmatpush1.msra.mxu0 0.0
        %1399 = vmatprep.subr.mxu0 0.0
        %1400 = vmatpush1.msra.mxu0 %v1357
        %1401 = vmatprep.subr.mxu0 0.0
        %1402 = vmatpush1.msra.mxu0 %v1356
        %1403 = vmatprep.subr.mxu0 0.0
        %1404 = vmatpush1.msra.mxu0 %v1355
        %1405 = vmatprep.subr.mxu0 0.0
        %1406 = vmatpush1.msra.mxu0 %v1354
        %1407 = vmatprep.subr.mxu0 0.0
        %1408 = vmatpush2.msra.mxu0 0.0
        %1409 = vmatprep.subr.mxu0 0.0
        %1410 = vmatpush2.msra.mxu0 0.0
        %1411 = vmatprep.subr.mxu0 0.0
        %1412 = vmatpush2.msra.mxu0 0.0
        %1413 = vmatprep.subr.mxu0 0.0
        %1414 = vmatpush2.msra.mxu0 0.0
        %1415 = vmatprep.subr.mxu0 0.0
        %1416 = vmatpush2.msra.mxu0 0.0
        %1417 = vmatprep.subr.mxu0 0.0
        %1418 = vmatpush2.msra.mxu0 0.0
        %1419 = vmatprep.subr.mxu0 0.0
        %1420 = vmatpush2.msra.mxu0 0.0
        %1421 = vmatprep.subr.mxu0 0.0
        %1422 = vmatpush2.msra.mxu0 0.0
        %1423 = vmatprep.subr.mxu0 0.0
        %1424 = vmatpush2.msra.mxu0 0.0
        %1425 = vmatprep.subr.mxu0 0.0
        %1426 = vmatpush2.msra.mxu0 0.0
        %1427 = vmatprep.subr.mxu0 0.0
        %1428 = vmatpush2.msra.mxu0 0.0
        %1429 = vmatprep.subr.mxu0 0.0
        %1430 = vmatpush2.msra.mxu0 0.0
        %1431 = vmatprep.subr.mxu0 0.0
        %1432 = vmatpush2.msra.mxu0 0.0
        %1433 = vmatprep.subr.mxu0 0.0
        %1434 = vmatpush2.msra.mxu0 0.0
        %1435 = vmatprep.subr.mxu0 0.0
        %1436 = vmatpush2.msra.mxu0 0.0
        %1437 = vmatprep.subr.mxu0 0.0
        %1438 = vmatpush2.msra.mxu0 0.0
        %1439 = vmatprep.mubr.f32.mxu0 0.0
        %1440 = vmatmul.mubr.f32.gmra.mxu0 %v1373
        %v1441 = vpop.f32.mrf.mxu0
        %v1442 = vadd.f32 %v1371, %v1441
        %v1443 = vpop.f32.mrf.mxu0
        %1444 = vdwg.mxu0
        %v1445 = vmax.f32 %v1442, 0.0
        %v1446 = vlaneseq
        %v1447 = vshrl.u32 %v1446, 7
        %v1448 = vsub.s32 0, %v1447
        %v1449 = vrot.slane %v1367, %v1448
        %vm1450 = vcmask 523264
        %v1452 = vsel %vm1450, %v1445, 0
        %1454 = vmatprep.subr.mxu0 0.0
        %1455 = vmatpush1.msra.mxu0 0.0
        %1456 = vmatprep.subr.mxu0 0.0
        %1457 = vmatpush1.msra.mxu0 0.0
        %1458 = vmatprep.subr.mxu0 0.0
        %1459 = vmatpush1.msra.mxu0 0.0
        %1460 = vmatprep.subr.mxu0 0.0
        %1461 = vmatpush1.msra.mxu0 0.0
        %1462 = vmatprep.subr.mxu0 0.0
        %1463 = vmatpush1.msra.mxu0 0.0
        %1464 = vmatprep.subr.mxu0 0.0
        %1465 = vmatpush1.msra.mxu0 0.0
        %1466 = vmatprep.subr.mxu0 0.0
        %1467 = vmatpush1.msra.mxu0 0.0
        %1468 = vmatprep.subr.mxu0 0.0
        %1469 = vmatpush1.msra.mxu0 0.0
        %1470 = vmatprep.subr.mxu0 0.0
        %1471 = vmatpush1.msra.mxu0 %v1366
        %1472 = vmatprep.subr.mxu0 0.0
        %1473 = vmatpush1.msra.mxu0 %v1365
        %1474 = vmatprep.subr.mxu0 0.0
        %1475 = vmatpush1.msra.mxu0 %v1364
        %1476 = vmatprep.subr.mxu0 0.0
        %1477 = vmatpush1.msra.mxu0 %v1363
        %1478 = vmatprep.subr.mxu0 0.0
        %1479 = vmatpush1.msra.mxu0 %v1362
        %1480 = vmatprep.subr.mxu0 0.0
        %1481 = vmatpush1.msra.mxu0 %v1361
        %1482 = vmatprep.subr.mxu0 0.0
        %1483 = vmatpush1.msra.mxu0 %v1360
        %1484 = vmatprep.subr.mxu0 0.0
        %1485 = vmatpush1.msra.mxu0 %v1359
        %1486 = vmatprep.subr.mxu0 0.0
        %1487 = vmatpush2.msra.mxu0 0.0
        %1488 = vmatprep.subr.mxu0 0.0
        %1489 = vmatpush2.msra.mxu0 0.0
        %1490 = vmatprep.subr.mxu0 0.0
        %1491 = vmatpush2.msra.mxu0 0.0
        %1492 = vmatprep.subr.mxu0 0.0
        %1493 = vmatpush2.msra.mxu0 0.0
        %1494 = vmatprep.subr.mxu0 0.0
        %1495 = vmatpush2.msra.mxu0 0.0
        %1496 = vmatprep.subr.mxu0 0.0
        %1497 = vmatpush2.msra.mxu0 0.0
        %1498 = vmatprep.subr.mxu0 0.0
        %1499 = vmatpush2.msra.mxu0 0.0
        %1500 = vmatprep.subr.mxu0 0.0
        %1501 = vmatpush2.msra.mxu0 0.0
        %1502 = vmatprep.subr.mxu0 0.0
        %1503 = vmatpush2.msra.mxu0 0.0
        %1504 = vmatprep.subr.mxu0 0.0
        %1505 = vmatpush2.msra.mxu0 0.0
        %1506 = vmatprep.subr.mxu0 0.0
        %1507 = vmatpush2.msra.mxu0 0.0
        %1508 = vmatprep.subr.mxu0 0.0
        %1509 = vmatpush2.msra.mxu0 0.0
        %1510 = vmatprep.subr.mxu0 0.0
        %1511 = vmatpush2.msra.mxu0 0.0
        %1512 = vmatprep.subr.mxu0 0.0
        %1513 = vmatpush2.msra.mxu0 0.0
        %1514 = vmatprep.subr.mxu0 0.0
        %1515 = vmatpush2.msra.mxu0 0.0
        %1516 = vmatprep.subr.mxu0 0.0
        %1517 = vmatpush2.msra.mxu0 0.0
        %1518 = vmatprep.mubr.f32.mxu0 0.0
        %1519 = vmatmul.mubr.f32.gmra.mxu0 %v1452
        %v1520 = vpop.f32.mrf.mxu0
        %v1521 = vadd.f32 %v1449, %v1520
        %v1522 = vpop.f32.mrf.mxu0
        %1523 = vdwg.mxu0
        %v1524 = vadd.f32 %v1353, %v1521
        %v1525 = vld [vmem:[#allocation2 + $0x160] sm:$0x1]
        %v1526 = vld [vmem:[#allocation2 + $0x168] sm:$0x1]
        %v1527 = vsel %vm480, %v1524, 0.0
        %1528 = vadd.xlane.f32.xlu0 %v1527
        %v1529 = vpop.xlane.xlu0 %1528
        %v1530 = vmul.f32 %v1529, %v1333
        %v1531 = vsub.f32 %v1524, %v1530
        %v1532 = vmul.f32 %v1531, %v1531
        %v1533 = vsel %vm480, %v1532, 0.0
        %1534 = vadd.xlane.f32.xlu0 %v1533
        %v1535 = vpop.xlane.xlu0 %1534
        %v1536 = vmul.f32 %v1535, %v1333
        %v1537 = vadd.f32 %v1536, 1e-05
        %v1538 = vrsqrt.pop %v1537
        %v1539 = vmul.f32 %v1531, %v1538
        %v1540 = vlaneseq
        %v1541 = vshrl.u32 %v1540, 7
        %v1542 = vsub.s32 0, %v1541
        %v1543 = vrot.slane %v1525, %v1542
        %v1544 = vmul.f32 %v1539, %v1543
        %v1545 = vlaneseq
        %v1546 = vshrl.u32 %v1545, 7
        %v1547 = vsub.s32 0, %v1546
        %v1548 = vrot.slane %v1526, %v1547
        %v1549 = vadd.f32 %v1544, %v1548
        %v1550 = vld [vmem:[#allocation2 + $0x170] sm:$0xff]
        %v1551 = vld [vmem:[#allocation2 + $0x178] sm:$0xff]
        %v1552 = vld [vmem:[#allocation2 + $0x180] sm:$0xff]
        %v1553 = vld [vmem:[#allocation2 + $0x188] sm:$0xff]
        %v1554 = vld [vmem:[#allocation2 + $0x190] sm:$0x1]
        %v1555 = vlaneseq
        %v1556 = vshrl.u32 %v1555, 7
        %v1557 = vsub.s32 0, %v1556
        %v1558 = vrot.slane %v1554, %v1557
        %v1560 = vsel %vm480, %v1549, 0
        %1562 = vmatprep.subr.mxu0 0.0
        %1563 = vmatpush1.msra.mxu0 0.0
        %1564 = vmatprep.subr.mxu0 0.0
        %1565 = vmatpush1.msra.mxu0 0.0
        %1566 = vmatprep.subr.mxu0 0.0
        %1567 = vmatpush1.msra.mxu0 0.0
        %1568 = vmatprep.subr.mxu0 0.0
        %1569 = vmatpush1.msra.mxu0 0.0
        %1570 = vmatprep.subr.mxu0 0.0
        %1571 = vmatpush1.msra.mxu0 0.0
        %1572 = vmatprep.subr.mxu0 0.0
        %1573 = vmatpush1.msra.mxu0 0.0
        %1574 = vmatprep.subr.mxu0 0.0
        %1575 = vmatpush1.msra.mxu0 0.0
        %1576 = vmatprep.subr.mxu0 0.0
        %1577 = vmatpush1.msra.mxu0 0.0
        %1578 = vmatprep.subr.mxu0 0.0
        %1579 = vmatpush1.msra.mxu0 0.0
        %1580 = vmatprep.subr.mxu0 0.0
        %1581 = vmatpush1.msra.mxu0 0.0
        %1582 = vmatprep.subr.mxu0 0.0
        %1583 = vmatpush1.msra.mxu0 0.0
        %1584 = vmatprep.subr.mxu0 0.0
        %1585 = vmatpush1.msra.mxu0 0.0
        %1586 = vmatprep.subr.mxu0 0.0
        %1587 = vmatpush1.msra.mxu0 %v1553
        %1588 = vmatprep.subr.mxu0 0.0
        %1589 = vmatpush1.msra.mxu0 %v1552
        %1590 = vmatprep.subr.mxu0 0.0
        %1591 = vmatpush1.msra.mxu0 %v1551
        %1592 = vmatprep.subr.mxu0 0.0
        %1593 = vmatpush1.msra.mxu0 %v1550
        %1594 = vmatprep.subr.mxu0 0.0
        %1595 = vmatpush2.msra.mxu0 0.0
        %1596 = vmatprep.subr.mxu0 0.0
        %1597 = vmatpush2.msra.mxu0 0.0
        %1598 = vmatprep.subr.mxu0 0.0
        %1599 = vmatpush2.msra.mxu0 0.0
        %1600 = vmatprep.subr.mxu0 0.0
        %1601 = vmatpush2.msra.mxu0 0.0
        %1602 = vmatprep.subr.mxu0 0.0
        %1603 = vmatpush2.msra.mxu0 0.0
        %1604 = vmatprep.subr.mxu0 0.0
        %1605 = vmatpush2.msra.mxu0 0.0
        %1606 = vmatprep.subr.mxu0 0.0
        %1607 = vmatpush2.msra.mxu0 0.0
        %1608 = vmatprep.subr.mxu0 0.0
        %1609 = vmatpush2.msra.mxu0 0.0
        %1610 = vmatprep.subr.mxu0 0.0
        %1611 = vmatpush2.msra.mxu0 0.0
        %1612 = vmatprep.subr.mxu0 0.0
        %1613 = vmatpush2.msra.mxu0 0.0
        %1614 = vmatprep.subr.mxu0 0.0
        %1615 = vmatpush2.msra.mxu0 0.0
        %1616 = vmatprep.subr.mxu0 0.0
        %1617 = vmatpush2.msra.mxu0 0.0
        %1618 = vmatprep.subr.mxu0 0.0
        %1619 = vmatpush2.msra.mxu0 0.0
        %1620 = vmatprep.subr.mxu0 0.0
        %1621 = vmatpush2.msra.mxu0 0.0
        %1622 = vmatprep.subr.mxu0 0.0
        %1623 = vmatpush2.msra.mxu0 0.0
        %1624 = vmatprep.subr.mxu0 0.0
        %1625 = vmatpush2.msra.mxu0 0.0
        %1626 = vmatprep.mubr.f32.mxu0 0.0
        %1627 = vmatmul.mubr.f32.gmra.mxu0 %v1560
        %v1628 = vpop.f32.mrf.mxu0
        %v1629 = vadd.f32 %v1558, %v1628
        %v1630 = vpop.f32.mrf.mxu0
        %1631 = vdwg.mxu0
        %v1632 = vld [vmem:[#allocation2 + $0x198] sm:$0xff]
        %v1633 = vld [vmem:[#allocation2 + $0x1a0] sm:$0xff]
        %v1634 = vld [vmem:[#allocation2 + $0x1a8] sm:$0xff]
        %v1635 = vld [vmem:[#allocation2 + $0x1b0] sm:$0xff]
        %v1636 = vld [vmem:[#allocation2 + $0x1b8] sm:$0x1]
        %1638 = vrot.lane.b32.xlu0 %v1629, 96
        %v1639 = vpop.permute.xlu0 %1638
        %v1640 = vsel %vm562, %v1629, 0
        %v1642 = vsel %vm562, %v1639, 0
        %1644 = vmatprep.subr.mxu0 0.0
        %1645 = vmatpush1.xpose.msra.mxu0 0.0
        %1646 = vmatprep.subr.mxu0 0.0
        %1647 = vmatpush1.xpose.msra.mxu0 0.0
        %1648 = vmatprep.subr.mxu0 0.0
        %1649 = vmatpush1.xpose.msra.mxu0 0.0
        %1650 = vmatprep.subr.mxu0 0.0
        %1651 = vmatpush1.xpose.msra.mxu0 0.0
        %1652 = vmatprep.subr.mxu0 0.0
        %1653 = vmatpush1.xpose.msra.mxu0 0.0
        %1654 = vmatprep.subr.mxu0 0.0
        %1655 = vmatpush1.xpose.msra.mxu0 0.0
        %1656 = vmatprep.subr.mxu0 0.0
        %1657 = vmatpush1.xpose.msra.mxu0 0.0
        %1658 = vmatprep.subr.mxu0 0.0
        %1659 = vmatpush1.xpose.msra.mxu0 0.0
        %1660 = vmatprep.subr.mxu0 0.0
        %1661 = vmatpush1.xpose.msra.mxu0 0.0
        %1662 = vmatprep.subr.mxu0 0.0
        %1663 = vmatpush1.xpose.msra.mxu0 0.0
        %1664 = vmatprep.subr.mxu0 0.0
        %1665 = vmatpush1.xpose.msra.mxu0 0.0
        %1666 = vmatprep.subr.mxu0 0.0
        %1667 = vmatpush1.xpose.msra.mxu0 0.0
        %1668 = vmatprep.subr.mxu0 0.0
        %1669 = vmatpush1.xpose.msra.mxu0 0.0
        %1670 = vmatprep.subr.mxu0 0.0
        %1671 = vmatpush1.xpose.msra.mxu0 0.0
        %1672 = vmatprep.subr.mxu0 0.0
        %1673 = vmatpush1.xpose.msra.mxu0 0.0
        %1674 = vmatprep.subr.mxu0 0.0
        %1675 = vmatpush1.xpose.msra.mxu0 %v1642
        %1676 = vmatprep.subr.mxu0 0.0
        %1677 = vmatpush2.xpose.msra.mxu0 0.0
        %1678 = vmatprep.subr.mxu0 0.0
        %1679 = vmatpush2.xpose.msra.mxu0 0.0
        %1680 = vmatprep.subr.mxu0 0.0
        %1681 = vmatpush2.xpose.msra.mxu0 0.0
        %1682 = vmatprep.subr.mxu0 0.0
        %1683 = vmatpush2.xpose.msra.mxu0 0.0
        %1684 = vmatprep.subr.mxu0 0.0
        %1685 = vmatpush2.xpose.msra.mxu0 0.0
        %1686 = vmatprep.subr.mxu0 0.0
        %1687 = vmatpush2.xpose.msra.mxu0 0.0
        %1688 = vmatprep.subr.mxu0 0.0
        %1689 = vmatpush2.xpose.msra.mxu0 0.0
        %1690 = vmatprep.subr.mxu0 0.0
        %1691 = vmatpush2.xpose.msra.mxu0 0.0
        %1692 = vmatprep.subr.mxu0 0.0
        %1693 = vmatpush2.xpose.msra.mxu0 0.0
        %1694 = vmatprep.subr.mxu0 0.0
        %1695 = vmatpush2.xpose.msra.mxu0 0.0
        %1696 = vmatprep.subr.mxu0 0.0
        %1697 = vmatpush2.xpose.msra.mxu0 0.0
        %1698 = vmatprep.subr.mxu0 0.0
        %1699 = vmatpush2.xpose.msra.mxu0 0.0
        %1700 = vmatprep.subr.mxu0 0.0
        %1701 = vmatpush2.xpose.msra.mxu0 0.0
        %1702 = vmatprep.subr.mxu0 0.0
        %1703 = vmatpush2.xpose.msra.mxu0 0.0
        %1704 = vmatprep.subr.mxu0 0.0
        %1705 = vmatpush2.xpose.msra.mxu0 0.0
        %1706 = vmatprep.subr.mxu0 0.0
        %1707 = vmatpush2.xpose.msra.mxu0 0.0
        %1708 = vmatprep.mubr.f32.mxu0 0.0
        %1709 = vmatmul.mubr.f32.gmra.mxu0 %v1640
        %v1710 = vpop.f32.mrf.mxu0
        %v1711 = vadd.f32 0.0, %v1710
        %v1712 = vpop.f32.mrf.mxu0
        %1713 = vdwg.mxu0
        %v1714 = vmul.f32 %v1711, 0.35355338
        %v1715 = vadd.f32 %v1714, %v642
        %v1716 = vsel %vm562, %v1715, -inf
        %1717 = vmax.xlane.f32.xlu0 %v1716
        %v1718 = vpop.xlane.xlu0 %1717
        %v1719 = vsub.f32 %v1715, %v1718
        %v1720 = vmul.f32 %v1719, 1.442695
        %v1721 = vpow.pop %v1720
        %v1722 = vsel %vm562, %v1721, 0.0
        %1723 = vadd.xlane.f32.xlu0 %v1722
        %v1724 = vpop.xlane.xlu0 %1723
        %v1725 = vrcp.pop %v1724
        %v1726 = vmul.f32 %v1721, %v1725
        %1727 = vrot.lane.b32.xlu0 %v1629, 64
        %v1728 = vpop.permute.xlu0 %1727
        %v1731 = vsel %vm562, %v1726, 0
        %1733 = vmatprep.subr.mxu0 0.0
        %1734 = vmatpush1.msra.mxu0 0.0
        %1735 = vmatprep.subr.mxu0 0.0
        %1736 = vmatpush1.msra.mxu0 0.0
        %1737 = vmatprep.subr.mxu0 0.0
        %1738 = vmatpush1.msra.mxu0 0.0
        %1739 = vmatprep.subr.mxu0 0.0
        %1740 = vmatpush1.msra.mxu0 0.0
        %1741 = vmatprep.subr.mxu0 0.0
        %1742 = vmatpush1.msra.mxu0 0.0
        %1743 = vmatprep.subr.mxu0 0.0
        %1744 = vmatpush1.msra.mxu0 0.0
        %1745 = vmatprep.subr.mxu0 0.0
        %1746 = vmatpush1.msra.mxu0 0.0
        %1747 = vmatprep.subr.mxu0 0.0
        %1748 = vmatpush1.msra.mxu0 0.0
        %1749 = vmatprep.subr.mxu0 0.0
        %1750 = vmatpush1.msra.mxu0 0.0
        %1751 = vmatprep.subr.mxu0 0.0
        %1752 = vmatpush1.msra.mxu0 0.0
        %1753 = vmatprep.subr.mxu0 0.0
        %1754 = vmatpush1.msra.mxu0 0.0
        %1755 = vmatprep.subr.mxu0 0.0
        %1756 = vmatpush1.msra.mxu0 0.0
        %1757 = vmatprep.subr.mxu0 0.0
        %1758 = vmatpush1.msra.mxu0 0.0
        %1759 = vmatprep.subr.mxu0 0.0
        %1760 = vmatpush1.msra.mxu0 0.0
        %1761 = vmatprep.subr.mxu0 0.0
        %1762 = vmatpush1.msra.mxu0 0.0
        %1763 = vmatprep.subr.mxu0 0.0
        %1764 = vmatpush1.msra.mxu0 %v1728
        %1765 = vmatprep.subr.mxu0 0.0
        %1766 = vmatpush2.msra.mxu0 0.0
        %1767 = vmatprep.subr.mxu0 0.0
        %1768 = vmatpush2.msra.mxu0 0.0
        %1769 = vmatprep.subr.mxu0 0.0
        %1770 = vmatpush2.msra.mxu0 0.0
        %1771 = vmatprep.subr.mxu0 0.0
        %1772 = vmatpush2.msra.mxu0 0.0
        %1773 = vmatprep.subr.mxu0 0.0
        %1774 = vmatpush2.msra.mxu0 0.0
        %1775 = vmatprep.subr.mxu0 0.0
        %1776 = vmatpush2.msra.mxu0 0.0
        %1777 = vmatprep.subr.mxu0 0.0
        %1778 = vmatpush2.msra.mxu0 0.0
        %1779 = vmatprep.subr.mxu0 0.0
        %1780 = vmatpush2.msra.mxu0 0.0
        %1781 = vmatprep.subr.mxu0 0.0
        %1782 = vmatpush2.msra.mxu0 0.0
        %1783 = vmatprep.subr.mxu0 0.0
        %1784 = vmatpush2.msra.mxu0 0.0
        %1785 = vmatprep.subr.mxu0 0.0
        %1786 = vmatpush2.msra.mxu0 0.0
        %1787 = vmatprep.subr.mxu0 0.0
        %1788 = vmatpush2.msra.mxu0 0.0
        %1789 = vmatprep.subr.mxu0 0.0
        %1790 = vmatpush2.msra.mxu0 0.0
        %1791 = vmatprep.subr.mxu0 0.0
        %1792 = vmatpush2.msra.mxu0 0.0
        %1793 = vmatprep.subr.mxu0 0.0
        %1794 = vmatpush2.msra.mxu0 0.0
        %1795 = vmatprep.subr.mxu0 0.0
        %1796 = vmatpush2.msra.mxu0 0.0
        %1797 = vmatprep.mubr.f32.mxu0 0.0
        %1798 = vmatmul.mubr.f32.gmra.mxu0 %v1731
        %v1799 = vpop.f32.mrf.mxu0
        %v1800 = vadd.f32 0.0, %v1799
        %v1801 = vpop.f32.mrf.mxu0
        %1802 = vdwg.mxu0
        %1803 = vrot.lane.b32.xlu0 %v1629, 120
        %v1804 = vpop.permute.xlu0 %1803
        %1805 = vrot.lane.b32.xlu0 %v1629, 88
        %v1806 = vpop.permute.xlu0 %1805
        %v1807 = vsel %vm562, %v1804, 0
        %v1809 = vsel %vm562, %v1806, 0
        %1811 = vmatprep.subr.mxu0 0.0
        %1812 = vmatpush1.xpose.msra.mxu0 0.0
        %1813 = vmatprep.subr.mxu0 0.0
        %1814 = vmatpush1.xpose.msra.mxu0 0.0
        %1815 = vmatprep.subr.mxu0 0.0
        %1816 = vmatpush1.xpose.msra.mxu0 0.0
        %1817 = vmatprep.subr.mxu0 0.0
        %1818 = vmatpush1.xpose.msra.mxu0 0.0
        %1819 = vmatprep.subr.mxu0 0.0
        %1820 = vmatpush1.xpose.msra.mxu0 0.0
        %1821 = vmatprep.subr.mxu0 0.0
        %1822 = vmatpush1.xpose.msra.mxu0 0.0
        %1823 = vmatprep.subr.mxu0 0.0
        %1824 = vmatpush1.xpose.msra.mxu0 0.0
        %1825 = vmatprep.subr.mxu0 0.0
        %1826 = vmatpush1.xpose.msra.mxu0 0.0
        %1827 = vmatprep.subr.mxu0 0.0
        %1828 = vmatpush1.xpose.msra.mxu0 0.0
        %1829 = vmatprep.subr.mxu0 0.0
        %1830 = vmatpush1.xpose.msra.mxu0 0.0
        %1831 = vmatprep.subr.mxu0 0.0
        %1832 = vmatpush1.xpose.msra.mxu0 0.0
        %1833 = vmatprep.subr.mxu0 0.0
        %1834 = vmatpush1.xpose.msra.mxu0 0.0
        %1835 = vmatprep.subr.mxu0 0.0
        %1836 = vmatpush1.xpose.msra.mxu0 0.0
        %1837 = vmatprep.subr.mxu0 0.0
        %1838 = vmatpush1.xpose.msra.mxu0 0.0
        %1839 = vmatprep.subr.mxu0 0.0
        %1840 = vmatpush1.xpose.msra.mxu0 0.0
        %1841 = vmatprep.subr.mxu0 0.0
        %1842 = vmatpush1.xpose.msra.mxu0 %v1809
        %1843 = vmatprep.subr.mxu0 0.0
        %1844 = vmatpush2.xpose.msra.mxu0 0.0
        %1845 = vmatprep.subr.mxu0 0.0
        %1846 = vmatpush2.xpose.msra.mxu0 0.0
        %1847 = vmatprep.subr.mxu0 0.0
        %1848 = vmatpush2.xpose.msra.mxu0 0.0
        %1849 = vmatprep.subr.mxu0 0.0
        %1850 = vmatpush2.xpose.msra.mxu0 0.0
        %1851 = vmatprep.subr.mxu0 0.0
        %1852 = vmatpush2.xpose.msra.mxu0 0.0
        %1853 = vmatprep.subr.mxu0 0.0
        %1854 = vmatpush2.xpose.msra.mxu0 0.0
        %1855 = vmatprep.subr.mxu0 0.0
        %1856 = vmatpush2.xpose.msra.mxu0 0.0
        %1857 = vmatprep.subr.mxu0 0.0
        %1858 = vmatpush2.xpose.msra.mxu0 0.0
        %1859 = vmatprep.subr.mxu0 0.0
        %1860 = vmatpush2.xpose.msra.mxu0 0.0
        %1861 = vmatprep.subr.mxu0 0.0
        %1862 = vmatpush2.xpose.msra.mxu0 0.0
        %1863 = vmatprep.subr.mxu0 0.0
        %1864 = vmatpush2.xpose.msra.mxu0 0.0
        %1865 = vmatprep.subr.mxu0 0.0
        %1866 = vmatpush2.xpose.msra.mxu0 0.0
        %1867 = vmatprep.subr.mxu0 0.0
        %1868 = vmatpush2.xpose.msra.mxu0 0.0
        %1869 = vmatprep.subr.mxu0 0.0
        %1870 = vmatpush2.xpose.msra.mxu0 0.0
        %1871 = vmatprep.subr.mxu0 0.0
        %1872 = vmatpush2.xpose.msra.mxu0 0.0
        %1873 = vmatprep.subr.mxu0 0.0
        %1874 = vmatpush2.xpose.msra.mxu0 0.0
        %1875 = vmatprep.mubr.f32.mxu0 0.0
        %1876 = vmatmul.mubr.f32.gmra.mxu0 %v1807
        %v1877 = vpop.f32.mrf.mxu0
        %v1878 = vadd.f32 0.0, %v1877
        %v1879 = vpop.f32.mrf.mxu0
        %1880 = vdwg.mxu0
        %v1881 = vmul.f32 %v1878, 0.35355338
        %v1882 = vadd.f32 %v1881, %v642
        %v1883 = vsel %vm562, %v1882, -inf
        %1884 = vmax.xlane.f32.xlu0 %v1883
        %v1885 = vpop.xlane.xlu0 %1884
        %v1886 = vsub.f32 %v1882, %v1885
        %v1887 = vmul.f32 %v1886, 1.442695
        %v1888 = vpow.pop %v1887
        %v1889 = vsel %vm562, %v1888, 0.0
        %1890 = vadd.xlane.f32.xlu0 %v1889
        %v1891 = vpop.xlane.xlu0 %1890
        %v1892 = vrcp.pop %v1891
        %v1893 = vmul.f32 %v1888, %v1892
        %1894 = vrot.lane.b32.xlu0 %v1629, 56
        %v1895 = vpop.permute.xlu0 %1894
        %v1898 = vsel %vm562, %v1893, 0
        %1900 = vmatprep.subr.mxu0 0.0
        %1901 = vmatpush1.msra.mxu0 0.0
        %1902 = vmatprep.subr.mxu0 0.0
        %1903 = vmatpush1.msra.mxu0 0.0
        %1904 = vmatprep.subr.mxu0 0.0
        %1905 = vmatpush1.msra.mxu0 0.0
        %1906 = vmatprep.subr.mxu0 0.0
        %1907 = vmatpush1.msra.mxu0 0.0
        %1908 = vmatprep.subr.mxu0 0.0
        %1909 = vmatpush1.msra.mxu0 0.0
        %1910 = vmatprep.subr.mxu0 0.0
        %1911 = vmatpush1.msra.mxu0 0.0
        %1912 = vmatprep.subr.mxu0 0.0
        %1913 = vmatpush1.msra.mxu0 0.0
        %1914 = vmatprep.subr.mxu0 0.0
        %1915 = vmatpush1.msra.mxu0 0.0
        %1916 = vmatprep.subr.mxu0 0.0
        %1917 = vmatpush1.msra.mxu0 0.0
        %1918 = vmatprep.subr.mxu0 0.0
        %1919 = vmatpush1.msra.mxu0 0.0
        %1920 = vmatprep.subr.mxu0 0.0
        %1921 = vmatpush1.msra.mxu0 0.0
        %1922 = vmatprep.subr.mxu0 0.0
        %1923 = vmatpush1.msra.mxu0 0.0
        %1924 = vmatprep.subr.mxu0 0.0
        %1925 = vmatpush1.msra.mxu0 0.0
        %1926 = vmatprep.subr.mxu0 0.0
        %1927 = vmatpush1.msra.mxu0 0.0
        %1928 = vmatprep.subr.mxu0 0.0
        %1929 = vmatpush1.msra.mxu0 0.0
        %1930 = vmatprep.subr.mxu0 0.0
        %1931 = vmatpush1.msra.mxu0 %v1895
        %1932 = vmatprep.subr.mxu0 0.0
        %1933 = vmatpush2.msra.mxu0 0.0
        %1934 = vmatprep.subr.mxu0 0.0
        %1935 = vmatpush2.msra.mxu0 0.0
        %1936 = vmatprep.subr.mxu0 0.0
        %1937 = vmatpush2.msra.mxu0 0.0
        %1938 = vmatprep.subr.mxu0 0.0
        %1939 = vmatpush2.msra.mxu0 0.0
        %1940 = vmatprep.subr.mxu0 0.0
        %1941 = vmatpush2.msra.mxu0 0.0
        %1942 = vmatprep.subr.mxu0 0.0
        %1943 = vmatpush2.msra.mxu0 0.0
        %1944 = vmatprep.subr.mxu0 0.0
        %1945 = vmatpush2.msra.mxu0 0.0
        %1946 = vmatprep.subr.mxu0 0.0
        %1947 = vmatpush2.msra.mxu0 0.0
        %1948 = vmatprep.subr.mxu0 0.0
        %1949 = vmatpush2.msra.mxu0 0.0
        %1950 = vmatprep.subr.mxu0 0.0
        %1951 = vmatpush2.msra.mxu0 0.0
        %1952 = vmatprep.subr.mxu0 0.0
        %1953 = vmatpush2.msra.mxu0 0.0
        %1954 = vmatprep.subr.mxu0 0.0
        %1955 = vmatpush2.msra.mxu0 0.0
        %1956 = vmatprep.subr.mxu0 0.0
        %1957 = vmatpush2.msra.mxu0 0.0
        %1958 = vmatprep.subr.mxu0 0.0
        %1959 = vmatpush2.msra.mxu0 0.0
        %1960 = vmatprep.subr.mxu0 0.0
        %1961 = vmatpush2.msra.mxu0 0.0
        %1962 = vmatprep.subr.mxu0 0.0
        %1963 = vmatpush2.msra.mxu0 0.0
        %1964 = vmatprep.mubr.f32.mxu0 0.0
        %1965 = vmatmul.mubr.f32.gmra.mxu0 %v1898
        %v1966 = vpop.f32.mrf.mxu0
        %v1967 = vadd.f32 0.0, %v1966
        %v1968 = vpop.f32.mrf.mxu0
        %1969 = vdwg.mxu0
        %1970 = vrot.lane.b32.xlu0 %v1629, 112
        %v1971 = vpop.permute.xlu0 %1970
        %1972 = vrot.lane.b32.xlu0 %v1629, 80
        %v1973 = vpop.permute.xlu0 %1972
        %v1974 = vsel %vm562, %v1971, 0
        %v1976 = vsel %vm562, %v1973, 0
        %1978 = vmatprep.subr.mxu0 0.0
        %1979 = vmatpush1.xpose.msra.mxu0 0.0
        %1980 = vmatprep.subr.mxu0 0.0
        %1981 = vmatpush1.xpose.msra.mxu0 0.0
        %1982 = vmatprep.subr.mxu0 0.0
        %1983 = vmatpush1.xpose.msra.mxu0 0.0
        %1984 = vmatprep.subr.mxu0 0.0
        %1985 = vmatpush1.xpose.msra.mxu0 0.0
        %1986 = vmatprep.subr.mxu0 0.0
        %1987 = vmatpush1.xpose.msra.mxu0 0.0
        %1988 = vmatprep.subr.mxu0 0.0
        %1989 = vmatpush1.xpose.msra.mxu0 0.0
        %1990 = vmatprep.subr.mxu0 0.0
        %1991 = vmatpush1.xpose.msra.mxu0 0.0
        %1992 = vmatprep.subr.mxu0 0.0
        %1993 = vmatpush1.xpose.msra.mxu0 0.0
        %1994 = vmatprep.subr.mxu0 0.0
        %1995 = vmatpush1.xpose.msra.mxu0 0.0
        %1996 = vmatprep.subr.mxu0 0.0
        %1997 = vmatpush1.xpose.msra.mxu0 0.0
        %1998 = vmatprep.subr.mxu0 0.0
        %1999 = vmatpush1.xpose.msra.mxu0 0.0
        %2000 = vmatprep.subr.mxu0 0.0
        %2001 = vmatpush1.xpose.msra.mxu0 0.0
        %2002 = vmatprep.subr.mxu0 0.0
        %2003 = vmatpush1.xpose.msra.mxu0 0.0
        %2004 = vmatprep.subr.mxu0 0.0
        %2005 = vmatpush1.xpose.msra.mxu0 0.0
        %2006 = vmatprep.subr.mxu0 0.0
        %2007 = vmatpush1.xpose.msra.mxu0 0.0
        %2008 = vmatprep.subr.mxu0 0.0
        %2009 = vmatpush1.xpose.msra.mxu0 %v1976
        %2010 = vmatprep.subr.mxu0 0.0
        %2011 = vmatpush2.xpose.msra.mxu0 0.0
        %2012 = vmatprep.subr.mxu0 0.0
        %2013 = vmatpush2.xpose.msra.mxu0 0.0
        %2014 = vmatprep.subr.mxu0 0.0
        %2015 = vmatpush2.xpose.msra.mxu0 0.0
        %2016 = vmatprep.subr.mxu0 0.0
        %2017 = vmatpush2.xpose.msra.mxu0 0.0
        %2018 = vmatprep.subr.mxu0 0.0
        %2019 = vmatpush2.xpose.msra.mxu0 0.0
        %2020 = vmatprep.subr.mxu0 0.0
        %2021 = vmatpush2.xpose.msra.mxu0 0.0
        %2022 = vmatprep.subr.mxu0 0.0
        %2023 = vmatpush2.xpose.msra.mxu0 0.0
        %2024 = vmatprep.subr.mxu0 0.0
        %2025 = vmatpush2.xpose.msra.mxu0 0.0
        %2026 = vmatprep.subr.mxu0 0.0
        %2027 = vmatpush2.xpose.msra.mxu0 0.0
        %2028 = vmatprep.subr.mxu0 0.0
        %2029 = vmatpush2.xpose.msra.mxu0 0.0
        %2030 = vmatprep.subr.mxu0 0.0
        %2031 = vmatpush2.xpose.msra.mxu0 0.0
        %2032 = vmatprep.subr.mxu0 0.0
        %2033 = vmatpush2.xpose.msra.mxu0 0.0
        %2034 = vmatprep.subr.mxu0 0.0
        %2035 = vmatpush2.xpose.msra.mxu0 0.0
        %2036 = vmatprep.subr.mxu0 0.0
        %2037 = vmatpush2.xpose.msra.mxu0 0.0
        %2038 = vmatprep.subr.mxu0 0.0
        %2039 = vmatpush2.xpose.msra.mxu0 0.0
        %2040 = vmatprep.subr.mxu0 0.0
        %2041 = vmatpush2.xpose.msra.mxu0 0.0
        %2042 = vmatprep.mubr.f32.mxu0 0.0
        %2043 = vmatmul.mubr.f32.gmra.mxu0 %v1974
        %v2044 = vpop.f32.mrf.mxu0
        %v2045 = vadd.f32 0.0, %v2044
        %v2046 = vpop.f32.mrf.mxu0
        %2047 = vdwg.mxu0
        %v2048 = vmul.f32 %v2045, 0.35355338
        %v2049 = vadd.f32 %v2048, %v642
        %v2050 = vsel %vm562, %v2049, -inf
        %2051 = vmax.xlane.f32.xlu0 %v2050
        %v2052 = vpop.xlane.xlu0 %2051
        %v2053 = vsub.f32 %v2049, %v2052
        %v2054 = vmul.f32 %v2053, 1.442695
        %v2055 = vpow.pop %v2054
        %v2056 = vsel %vm562, %v2055, 0.0
        %2057 = vadd.xlane.f32.xlu0 %v2056
        %v2058 = vpop.xlane.xlu0 %2057
        %v2059 = vrcp.pop %v2058
        %v2060 = vmul.f32 %v2055, %v2059
        %2061 = vrot.lane.b32.xlu0 %v1629, 48
        %v2062 = vpop.permute.xlu0 %2061
        %v2065 = vsel %vm562, %v2060, 0
        %2067 = vmatprep.subr.mxu0 0.0
        %2068 = vmatpush1.msra.mxu0 0.0
        %2069 = vmatprep.subr.mxu0 0.0
        %2070 = vmatpush1.msra.mxu0 0.0
        %2071 = vmatprep.subr.mxu0 0.0
        %2072 = vmatpush1.msra.mxu0 0.0
        %2073 = vmatprep.subr.mxu0 0.0
        %2074 = vmatpush1.msra.mxu0 0.0
        %2075 = vmatprep.subr.mxu0 0.0
        %2076 = vmatpush1.msra.mxu0 0.0
        %2077 = vmatprep.subr.mxu0 0.0
        %2078 = vmatpush1.msra.mxu0 0.0
        %2079 = vmatprep.subr.mxu0 0.0
        %2080 = vmatpush1.msra.mxu0 0.0
        %2081 = vmatprep.subr.mxu0 0.0
        %2082 = vmatpush1.msra.mxu0 0.0
        %2083 = vmatprep.subr.mxu0 0.0
        %2084 = vmatpush1.msra.mxu0 0.0
        %2085 = vmatprep.subr.mxu0 0.0
        %2086 = vmatpush1.msra.mxu0 0.0
        %2087 = vmatprep.subr.mxu0 0.0
        %2088 = vmatpush1.msra.mxu0 0.0
        %2089 = vmatprep.subr.mxu0 0.0
        %2090 = vmatpush1.msra.mxu0 0.0
        %2091 = vmatprep.subr.mxu0 0.0
        %2092 = vmatpush1.msra.mxu0 0.0
        %2093 = vmatprep.subr.mxu0 0.0
        %2094 = vmatpush1.msra.mxu0 0.0
        %2095 = vmatprep.subr.mxu0 0.0
        %2096 = vmatpush1.msra.mxu0 0.0
        %2097 = vmatprep.subr.mxu0 0.0
        %2098 = vmatpush1.msra.mxu0 %v2062
        %2099 = vmatprep.subr.mxu0 0.0
        %2100 = vmatpush2.msra.mxu0 0.0
        %2101 = vmatprep.subr.mxu0 0.0
        %2102 = vmatpush2.msra.mxu0 0.0
        %2103 = vmatprep.subr.mxu0 0.0
        %2104 = vmatpush2.msra.mxu0 0.0
        %2105 = vmatprep.subr.mxu0 0.0
        %2106 = vmatpush2.msra.mxu0 0.0
        %2107 = vmatprep.subr.mxu0 0.0
        %2108 = vmatpush2.msra.mxu0 0.0
        %2109 = vmatprep.subr.mxu0 0.0
        %2110 = vmatpush2.msra.mxu0 0.0
        %2111 = vmatprep.subr.mxu0 0.0
        %2112 = vmatpush2.msra.mxu0 0.0
        %2113 = vmatprep.subr.mxu0 0.0
        %2114 = vmatpush2.msra.mxu0 0.0
        %2115 = vmatprep.subr.mxu0 0.0
        %2116 = vmatpush2.msra.mxu0 0.0
        %2117 = vmatprep.subr.mxu0 0.0
        %2118 = vmatpush2.msra.mxu0 0.0
        %2119 = vmatprep.subr.mxu0 0.0
        %2120 = vmatpush2.msra.mxu0 0.0
        %2121 = vmatprep.subr.mxu0 0.0
        %2122 = vmatpush2.msra.mxu0 0.0
        %2123 = vmatprep.subr.mxu0 0.0
        %2124 = vmatpush2.msra.mxu0 0.0
        %2125 = vmatprep.subr.mxu0 0.0
        %2126 = vmatpush2.msra.mxu0 0.0
        %2127 = vmatprep.subr.mxu0 0.0
        %2128 = vmatpush2.msra.mxu0 0.0
        %2129 = vmatprep.subr.mxu0 0.0
        %2130 = vmatpush2.msra.mxu0 0.0
        %2131 = vmatprep.mubr.f32.mxu0 0.0
        %2132 = vmatmul.mubr.f32.gmra.mxu0 %v2065
        %v2133 = vpop.f32.mrf.mxu0
        %v2134 = vadd.f32 0.0, %v2133
        %v2135 = vpop.f32.mrf.mxu0
        %2136 = vdwg.mxu0
        %2137 = vrot.lane.b32.xlu0 %v1629, 104
        %v2138 = vpop.permute.xlu0 %2137
        %2139 = vrot.lane.b32.xlu0 %v1629, 72
        %v2140 = vpop.permute.xlu0 %2139
        %v2141 = vsel %vm562, %v2138, 0
        %v2143 = vsel %vm562, %v2140, 0
        %2145 = vmatprep.subr.mxu0 0.0
        %2146 = vmatpush1.xpose.msra.mxu0 0.0
        %2147 = vmatprep.subr.mxu0 0.0
        %2148 = vmatpush1.xpose.msra.mxu0 0.0
        %2149 = vmatprep.subr.mxu0 0.0
        %2150 = vmatpush1.xpose.msra.mxu0 0.0
        %2151 = vmatprep.subr.mxu0 0.0
        %2152 = vmatpush1.xpose.msra.mxu0 0.0
        %2153 = vmatprep.subr.mxu0 0.0
        %2154 = vmatpush1.xpose.msra.mxu0 0.0
        %2155 = vmatprep.subr.mxu0 0.0
        %2156 = vmatpush1.xpose.msra.mxu0 0.0
        %2157 = vmatprep.subr.mxu0 0.0
        %2158 = vmatpush1.xpose.msra.mxu0 0.0
        %2159 = vmatprep.subr.mxu0 0.0
        %2160 = vmatpush1.xpose.msra.mxu0 0.0
        %2161 = vmatprep.subr.mxu0 0.0
        %2162 = vmatpush1.xpose.msra.mxu0 0.0
        %2163 = vmatprep.subr.mxu0 0.0
        %2164 = vmatpush1.xpose.msra.mxu0 0.0
        %2165 = vmatprep.subr.mxu0 0.0
        %2166 = vmatpush1.xpose.msra.mxu0 0.0
        %2167 = vmatprep.subr.mxu0 0.0
        %2168 = vmatpush1.xpose.msra.mxu0 0.0
        %2169 = vmatprep.subr.mxu0 0.0
        %2170 = vmatpush1.xpose.msra.mxu0 0.0
        %2171 = vmatprep.subr.mxu0 0.0
        %2172 = vmatpush1.xpose.msra.mxu0 0.0
        %2173 = vmatprep.subr.mxu0 0.0
        %2174 = vmatpush1.xpose.msra.mxu0 0.0
        %2175 = vmatprep.subr.mxu0 0.0
        %2176 = vmatpush1.xpose.msra.mxu0 %v2143
        %2177 = vmatprep.subr.mxu0 0.0
        %2178 = vmatpush2.xpose.msra.mxu0 0.0
        %2179 = vmatprep.subr.mxu0 0.0
        %2180 = vmatpush2.xpose.msra.mxu0 0.0
        %2181 = vmatprep.subr.mxu0 0.0
        %2182 = vmatpush2.xpose.msra.mxu0 0.0
        %2183 = vmatprep.subr.mxu0 0.0
        %2184 = vmatpush2.xpose.msra.mxu0 0.0
        %2185 = vmatprep.subr.mxu0 0.0
        %2186 = vmatpush2.xpose.msra.mxu0 0.0
        %2187 = vmatprep.subr.mxu0 0.0
        %2188 = vmatpush2.xpose.msra.mxu0 0.0
        %2189 = vmatprep.subr.mxu0 0.0
        %2190 = vmatpush2.xpose.msra.mxu0 0.0
        %2191 = vmatprep.subr.mxu0 0.0
        %2192 = vmatpush2.xpose.msra.mxu0 0.0
        %2193 = vmatprep.subr.mxu0 0.0
        %2194 = vmatpush2.xpose.msra.mxu0 0.0
        %2195 = vmatprep.subr.mxu0 0.0
        %2196 = vmatpush2.xpose.msra.mxu0 0.0
        %2197 = vmatprep.subr.mxu0 0.0
        %2198 = vmatpush2.xpose.msra.mxu0 0.0
        %2199 = vmatprep.subr.mxu0 0.0
        %2200 = vmatpush2.xpose.msra.mxu0 0.0
        %2201 = vmatprep.subr.mxu0 0.0
        %2202 = vmatpush2.xpose.msra.mxu0 0.0
        %2203 = vmatprep.subr.mxu0 0.0
        %2204 = vmatpush2.xpose.msra.mxu0 0.0
        %2205 = vmatprep.subr.mxu0 0.0
        %2206 = vmatpush2.xpose.msra.mxu0 0.0
        %2207 = vmatprep.subr.mxu0 0.0
        %2208 = vmatpush2.xpose.msra.mxu0 0.0
        %2209 = vmatprep.mubr.f32.mxu0 0.0
        %2210 = vmatmul.mubr.f32.gmra.mxu0 %v2141
        %v2211 = vpop.f32.mrf.mxu0
        %v2212 = vadd.f32 0.0, %v2211
        %v2213 = vpop.f32.mrf.mxu0
        %2214 = vdwg.mxu0
        %v2215 = vmul.f32 %v2212, 0.35355338
        %v2216 = vadd.f32 %v2215, %v642
        %v2217 = vsel %vm562, %v2216, -inf
        %2218 = vmax.xlane.f32.xlu0 %v2217
        %v2219 = vpop.xlane.xlu0 %2218
        %v2220 = vsub.f32 %v2216, %v2219
        %v2221 = vmul.f32 %v2220, 1.442695
        %v2222 = vpow.pop %v2221
        %v2223 = vsel %vm562, %v2222, 0.0
        %2224 = vadd.xlane.f32.xlu0 %v2223
        %v2225 = vpop.xlane.xlu0 %2224
        %v2226 = vrcp.pop %v2225
        %v2227 = vmul.f32 %v2222, %v2226
        %2228 = vrot.lane.b32.xlu0 %v1629, 40
        %v2229 = vpop.permute.xlu0 %2228
        %v2232 = vsel %vm562, %v2227, 0
        %2234 = vmatprep.subr.mxu0 0.0
        %2235 = vmatpush1.msra.mxu0 0.0
        %2236 = vmatprep.subr.mxu0 0.0
        %2237 = vmatpush1.msra.mxu0 0.0
        %2238 = vmatprep.subr.mxu0 0.0
        %2239 = vmatpush1.msra.mxu0 0.0
        %2240 = vmatprep.subr.mxu0 0.0
        %2241 = vmatpush1.msra.mxu0 0.0
        %2242 = vmatprep.subr.mxu0 0.0
        %2243 = vmatpush1.msra.mxu0 0.0
        %2244 = vmatprep.subr.mxu0 0.0
        %2245 = vmatpush1.msra.mxu0 0.0
        %2246 = vmatprep.subr.mxu0 0.0
        %2247 = vmatpush1.msra.mxu0 0.0
        %2248 = vmatprep.subr.mxu0 0.0
        %2249 = vmatpush1.msra.mxu0 0.0
        %2250 = vmatprep.subr.mxu0 0.0
        %2251 = vmatpush1.msra.mxu0 0.0
        %2252 = vmatprep.subr.mxu0 0.0
        %2253 = vmatpush1.msra.mxu0 0.0
        %2254 = vmatprep.subr.mxu0 0.0
        %2255 = vmatpush1.msra.mxu0 0.0
        %2256 = vmatprep.subr.mxu0 0.0
        %2257 = vmatpush1.msra.mxu0 0.0
        %2258 = vmatprep.subr.mxu0 0.0
        %2259 = vmatpush1.msra.mxu0 0.0
        %2260 = vmatprep.subr.mxu0 0.0
        %2261 = vmatpush1.msra.mxu0 0.0
        %2262 = vmatprep.subr.mxu0 0.0
        %2263 = vmatpush1.msra.mxu0 0.0
        %2264 = vmatprep.subr.mxu0 0.0
        %2265 = vmatpush1.msra.mxu0 %v2229
        %2266 = vmatprep.subr.mxu0 0.0
        %2267 = vmatpush2.msra.mxu0 0.0
        %2268 = vmatprep.subr.mxu0 0.0
        %2269 = vmatpush2.msra.mxu0 0.0
        %2270 = vmatprep.subr.mxu0 0.0
        %2271 = vmatpush2.msra.mxu0 0.0
        %2272 = vmatprep.subr.mxu0 0.0
        %2273 = vmatpush2.msra.mxu0 0.0
        %2274 = vmatprep.subr.mxu0 0.0
        %2275 = vmatpush2.msra.mxu0 0.0
        %2276 = vmatprep.subr.mxu0 0.0
        %2277 = vmatpush2.msra.mxu0 0.0
        %2278 = vmatprep.subr.mxu0 0.0
        %2279 = vmatpush2.msra.mxu0 0.0
        %2280 = vmatprep.subr.mxu0 0.0
        %2281 = vmatpush2.msra.mxu0 0.0
        %2282 = vmatprep.subr.mxu0 0.0
        %2283 = vmatpush2.msra.mxu0 0.0
        %2284 = vmatprep.subr.mxu0 0.0
        %2285 = vmatpush2.msra.mxu0 0.0
        %2286 = vmatprep.subr.mxu0 0.0
        %2287 = vmatpush2.msra.mxu0 0.0
        %2288 = vmatprep.subr.mxu0 0.0
        %2289 = vmatpush2.msra.mxu0 0.0
        %2290 = vmatprep.subr.mxu0 0.0
        %2291 = vmatpush2.msra.mxu0 0.0
        %2292 = vmatprep.subr.mxu0 0.0
        %2293 = vmatpush2.msra.mxu0 0.0
        %2294 = vmatprep.subr.mxu0 0.0
        %2295 = vmatpush2.msra.mxu0 0.0
        %2296 = vmatprep.subr.mxu0 0.0
        %2297 = vmatpush2.msra.mxu0 0.0
        %2298 = vmatprep.mubr.f32.mxu0 0.0
        %2299 = vmatmul.mubr.f32.gmra.mxu0 %v2232
        %v2300 = vpop.f32.mrf.mxu0
        %v2301 = vadd.f32 0.0, %v2300
        %v2302 = vpop.f32.mrf.mxu0
        %2303 = vdwg.mxu0
        %2305 = vrot.lane.b32.xlu0 %v1967, 8
        %v2306 = vpop.permute.xlu0 %2305
        %2309 = vrot.lane.b32.xlu0 %v2134, 16
        %v2310 = vpop.permute.xlu0 %2309
        %2313 = vrot.lane.b32.xlu0 %v2301, 24
        %v2314 = vpop.permute.xlu0 %2313
        %v2316 = vsel %vm562, %v1800, %v2306
        %v2317 = vsel %vm1246, %v2316, %v2310
        %v2318 = vsel %vm1248, %v2317, %v2314
        %v2319 = vlaneseq
        %v2320 = vshrl.u32 %v2319, 7
        %v2321 = vsub.s32 0, %v2320
        %v2322 = vrot.slane %v1636, %v2321
        %v2324 = vsel %vm480, %v2318, 0
        %2326 = vmatprep.subr.mxu0 0.0
        %2327 = vmatpush1.msra.mxu0 0.0
        %2328 = vmatprep.subr.mxu0 0.0
        %2329 = vmatpush1.msra.mxu0 0.0
        %2330 = vmatprep.subr.mxu0 0.0
        %2331 = vmatpush1.msra.mxu0 0.0
        %2332 = vmatprep.subr.mxu0 0.0
        %2333 = vmatpush1.msra.mxu0 0.0
        %2334 = vmatprep.subr.mxu0 0.0
        %2335 = vmatpush1.msra.mxu0 0.0
        %2336 = vmatprep.subr.mxu0 0.0
        %2337 = vmatpush1.msra.mxu0 0.0
        %2338 = vmatprep.subr.mxu0 0.0
        %2339 = vmatpush1.msra.mxu0 0.0
        %2340 = vmatprep.subr.mxu0 0.0
        %2341 = vmatpush1.msra.mxu0 0.0
        %2342 = vmatprep.subr.mxu0 0.0
        %2343 = vmatpush1.msra.mxu0 0.0
        %2344 = vmatprep.subr.mxu0 0.0
        %2345 = vmatpush1.msra.mxu0 0.0
        %2346 = vmatprep.subr.mxu0 0.0
        %2347 = vmatpush1.msra.mxu0 0.0
        %2348 = vmatprep.subr.mxu0 0.0
        %2349 = vmatpush1.msra.mxu0 0.0
        %2350 = vmatprep.subr.mxu0 0.0
        %2351 = vmatpush1.msra.mxu0 %v1635
        %2352 = vmatprep.subr.mxu0 0.0
        %2353 = vmatpush1.msra.mxu0 %v1634
        %2354 = vmatprep.subr.mxu0 0.0
        %2355 = vmatpush1.msra.mxu0 %v1633
        %2356 = vmatprep.subr.mxu0 0.0
        %2357 = vmatpush1.msra.mxu0 %v1632
        %2358 = vmatprep.subr.mxu0 0.0
        %2359 = vmatpush2.msra.mxu0 0.0
        %2360 = vmatprep.subr.mxu0 0.0
        %2361 = vmatpush2.msra.mxu0 0.0
        %2362 = vmatprep.subr.mxu0 0.0
        %2363 = vmatpush2.msra.mxu0 0.0
        %2364 = vmatprep.subr.mxu0 0.0
        %2365 = vmatpush2.msra.mxu0 0.0
        %2366 = vmatprep.subr.mxu0 0.0
        %2367 = vmatpush2.msra.mxu0 0.0
        %2368 = vmatprep.subr.mxu0 0.0
        %2369 = vmatpush2.msra.mxu0 0.0
        %2370 = vmatprep.subr.mxu0 0.0
        %2371 = vmatpush2.msra.mxu0 0.0
        %2372 = vmatprep.subr.mxu0 0.0
        %2373 = vmatpush2.msra.mxu0 0.0
        %2374 = vmatprep.subr.mxu0 0.0
        %2375 = vmatpush2.msra.mxu0 0.0
        %2376 = vmatprep.subr.mxu0 0.0
        %2377 = vmatpush2.msra.mxu0 0.0
        %2378 = vmatprep.subr.mxu0 0.0
        %2379 = vmatpush2.msra.mxu0 0.0
        %2380 = vmatprep.subr.mxu0 0.0
        %2381 = vmatpush2.msra.mxu0 0.0
        %2382 = vmatprep.subr.mxu0 0.0
        %2383 = vmatpush2.msra.mxu0 0.0
        %2384 = vmatprep.subr.mxu0 0.0
        %2385 = vmatpush2.msra.mxu0 0.0
        %2386 = vmatprep.subr.mxu0 0.0
        %2387 = vmatpush2.msra.mxu0 0.0
        %2388 = vmatprep.subr.mxu0 0.0
        %2389 = vmatpush2.msra.mxu0 0.0
        %2390 = vmatprep.mubr.f32.mxu0 0.0
        %2391 = vmatmul.mubr.f32.gmra.mxu0 %v2324
        %v2392 = vpop.f32.mrf.mxu0
        %v2393 = vadd.f32 %v2322, %v2392
        %v2394 = vpop.f32.mrf.mxu0
        %2395 = vdwg.mxu0
        %v2396 = vadd.f32 %v1549, %v2393
        %v2397 = vld [vmem:[#allocation2 + $0x1c0] sm:$0x1]
        %v2398 = vld [vmem:[#allocation2 + $0x1c8] sm:$0x1]
        %v2399 = vsel %vm480, %v2396, 0.0
        %2400 = vadd.xlane.f32.xlu0 %v2399
        %v2401 = vpop.xlane.xlu0 %2400
        %v2402 = vmul.f32 %v2401, %v1333
        %v2403 = vsub.f32 %v2396, %v2402
        %v2404 = vmul.f32 %v2403, %v2403
        %v2405 = vsel %vm480, %v2404, 0.0
        %2406 = vadd.xlane.f32.xlu0 %v2405
        %v2407 = vpop.xlane.xlu0 %2406
        %v2408 = vmul.f32 %v2407, %v1333
        %v2409 = vadd.f32 %v2408, 1e-05
        %v2410 = vrsqrt.pop %v2409
        %v2411 = vmul.f32 %v2403, %v2410
        %v2412 = vlaneseq
        %v2413 = vshrl.u32 %v2412, 7
        %v2414 = vsub.s32 0, %v2413
        %v2415 = vrot.slane %v2397, %v2414
        %v2416 = vmul.f32 %v2411, %v2415
        %v2417 = vlaneseq
        %v2418 = vshrl.u32 %v2417, 7
        %v2419 = vsub.s32 0, %v2418
        %v2420 = vrot.slane %v2398, %v2419
        %v2421 = vadd.f32 %v2416, %v2420
        %v2422 = vld [vmem:[#allocation2 + $0x1d0] sm:$0xff]
        %v2423 = vld [vmem:[#allocation2 + $0x1d8] sm:$0xff]
        %v2424 = vld [vmem:[#allocation2 + $0x1e0] sm:$0xff]
        %v2425 = vld [vmem:[#allocation2 + $0x1e8] sm:$0xff]
        %v2426 = vld [vmem:[#allocation2 + $0x1f0] sm:$0x1]
        %v2427 = vld [vmem:[#allocation2 + $0x1f8] sm:$0xff]
        %v2428 = vld [vmem:[#allocation2 + $0x200] sm:$0xff]
        %v2429 = vld [vmem:[#allocation2 + $0x208] sm:$0xff]
        %v2430 = vld [vmem:[#allocation2 + $0x210] sm:$0xff]
        %v2431 = vld [vmem:[#allocation2 + $0x218] sm:$0xff]
        %v2432 = vld [vmem:[#allocation2 + $0x220] sm:$0xff]
        %v2433 = vld [vmem:[#allocation2 + $0x228] sm:$0xff]
        %v2434 = vld [vmem:[#allocation2 + $0x230] sm:$0xff]
        %v2435 = vld [vmem:[#allocation2 + $0x238] sm:$0x1]
        %v2436 = vlaneseq
        %v2437 = vshrl.u32 %v2436, 7
        %v2438 = vsub.s32 0, %v2437
        %v2439 = vrot.slane %v2426, %v2438
        %v2441 = vsel %vm480, %v2421, 0
        %2443 = vmatprep.subr.mxu0 0.0
        %2444 = vmatpush1.msra.mxu0 0.0
        %2445 = vmatprep.subr.mxu0 0.0
        %2446 = vmatpush1.msra.mxu0 0.0
        %2447 = vmatprep.subr.mxu0 0.0
        %2448 = vmatpush1.msra.mxu0 0.0
        %2449 = vmatprep.subr.mxu0 0.0
        %2450 = vmatpush1.msra.mxu0 0.0
        %2451 = vmatprep.subr.mxu0 0.0
        %2452 = vmatpush1.msra.mxu0 0.0
        %2453 = vmatprep.subr.mxu0 0.0
        %2454 = vmatpush1.msra.mxu0 0.0
        %2455 = vmatprep.subr.mxu0 0.0
        %2456 = vmatpush1.msra.mxu0 0.0
        %2457 = vmatprep.subr.mxu0 0.0
        %2458 = vmatpush1.msra.mxu0 0.0
        %2459 = vmatprep.subr.mxu0 0.0
        %2460 = vmatpush1.msra.mxu0 0.0
        %2461 = vmatprep.subr.mxu0 0.0
        %2462 = vmatpush1.msra.mxu0 0.0
        %2463 = vmatprep.subr.mxu0 0.0
        %2464 = vmatpush1.msra.mxu0 0.0
        %2465 = vmatprep.subr.mxu0 0.0
        %2466 = vmatpush1.msra.mxu0 0.0
        %2467 = vmatprep.subr.mxu0 0.0
        %2468 = vmatpush1.msra.mxu0 %v2425
        %2469 = vmatprep.subr.mxu0 0.0
        %2470 = vmatpush1.msra.mxu0 %v2424
        %2471 = vmatprep.subr.mxu0 0.0
        %2472 = vmatpush1.msra.mxu0 %v2423
        %2473 = vmatprep.subr.mxu0 0.0
        %2474 = vmatpush1.msra.mxu0 %v2422
        %2475 = vmatprep.subr.mxu0 0.0
        %2476 = vmatpush2.msra.mxu0 0.0
        %2477 = vmatprep.subr.mxu0 0.0
        %2478 = vmatpush2.msra.mxu0 0.0
        %2479 = vmatprep.subr.mxu0 0.0
        %2480 = vmatpush2.msra.mxu0 0.0
        %2481 = vmatprep.subr.mxu0 0.0
        %2482 = vmatpush2.msra.mxu0 0.0
        %2483 = vmatprep.subr.mxu0 0.0
        %2484 = vmatpush2.msra.mxu0 0.0
        %2485 = vmatprep.subr.mxu0 0.0
        %2486 = vmatpush2.msra.mxu0 0.0
        %2487 = vmatprep.subr.mxu0 0.0
        %2488 = vmatpush2.msra.mxu0 0.0
        %2489 = vmatprep.subr.mxu0 0.0
        %2490 = vmatpush2.msra.mxu0 0.0
        %2491 = vmatprep.subr.mxu0 0.0
        %2492 = vmatpush2.msra.mxu0 0.0
        %2493 = vmatprep.subr.mxu0 0.0
        %2494 = vmatpush2.msra.mxu0 0.0
        %2495 = vmatprep.subr.mxu0 0.0
        %2496 = vmatpush2.msra.mxu0 0.0
        %2497 = vmatprep.subr.mxu0 0.0
        %2498 = vmatpush2.msra.mxu0 0.0
        %2499 = vmatprep.subr.mxu0 0.0
        %2500 = vmatpush2.msra.mxu0 0.0
        %2501 = vmatprep.subr.mxu0 0.0
        %2502 = vmatpush2.msra.mxu0 0.0
        %2503 = vmatprep.subr.mxu0 0.0
        %2504 = vmatpush2.msra.mxu0 0.0
        %2505 = vmatprep.subr.mxu0 0.0
        %2506 = vmatpush2.msra.mxu0 0.0
        %2507 = vmatprep.mubr.f32.mxu0 0.0
        %2508 = vmatmul.mubr.f32.gmra.mxu0 %v2441
        %v2509 = vpop.f32.mrf.mxu0
        %v2510 = vadd.f32 %v2439, %v2509
        %v2511 = vpop.f32.mrf.mxu0
        %2512 = vdwg.mxu0
        %v2513 = vmax.f32 %v2510, 0.0
        %v2514 = vlaneseq
        %v2515 = vshrl.u32 %v2514, 7
        %v2516 = vsub.s32 0, %v2515
        %v2517 = vrot.slane %v2435, %v2516
        %v2519 = vsel %vm1450, %v2513, 0
        %2521 = vmatprep.subr.mxu0 0.0
        %2522 = vmatpush1.msra.mxu0 0.0
        %2523 = vmatprep.subr.mxu0 0.0
        %2524 = vmatpush1.msra.mxu0 0.0
        %2525 = vmatprep.subr.mxu0 0.0
        %2526 = vmatpush1.msra.mxu0 0.0
        %2527 = vmatprep.subr.mxu0 0.0
        %2528 = vmatpush1.msra.mxu0 0.0
        %2529 = vmatprep.subr.mxu0 0.0
        %2530 = vmatpush1.msra.mxu0 0.0
        %2531 = vmatprep.subr.mxu0 0.0
        %2532 = vmatpush1.msra.mxu0 0.0
        %2533 = vmatprep.subr.mxu0 0.0
        %2534 = vmatpush1.msra.mxu0 0.0
        %2535 = vmatprep.subr.mxu0 0.0
        %2536 = vmatpush1.msra.mxu0 0.0
        %2537 = vmatprep.subr.mxu0 0.0
        %2538 = vmatpush1.msra.mxu0 %v2434
        %2539 = vmatprep.subr.mxu0 0.0
        %2540 = vmatpush1.msra.mxu0 %v2433
        %2541 = vmatprep.subr.mxu0 0.0
        %2542 = vmatpush1.msra.mxu0 %v2432
        %2543 = vmatprep.subr.mxu0 0.0
        %2544 = vmatpush1.msra.mxu0 %v2431
        %2545 = vmatprep.subr.mxu0 0.0
        %2546 = vmatpush1.msra.mxu0 %v2430
        %2547 = vmatprep.subr.mxu0 0.0
        %2548 = vmatpush1.msra.mxu0 %v2429
        %2549 = vmatprep.subr.mxu0 0.0
        %2550 = vmatpush1.msra.mxu0 %v2428
        %2551 = vmatprep.subr.mxu0 0.0
        %2552 = vmatpush1.msra.mxu0 %v2427
        %2553 = vmatprep.subr.mxu0 0.0
        %2554 = vmatpush2.msra.mxu0 0.0
        %2555 = vmatprep.subr.mxu0 0.0
        %2556 = vmatpush2.msra.mxu0 0.0
        %2557 = vmatprep.subr.mxu0 0.0
        %2558 = vmatpush2.msra.mxu0 0.0
        %2559 = vmatprep.subr.mxu0 0.0
        %2560 = vmatpush2.msra.mxu0 0.0
        %2561 = vmatprep.subr.mxu0 0.0
        %2562 = vmatpush2.msra.mxu0 0.0
        %2563 = vmatprep.subr.mxu0 0.0
        %2564 = vmatpush2.msra.mxu0 0.0
        %2565 = vmatprep.subr.mxu0 0.0
        %2566 = vmatpush2.msra.mxu0 0.0
        %2567 = vmatprep.subr.mxu0 0.0
        %2568 = vmatpush2.msra.mxu0 0.0
        %2569 = vmatprep.subr.mxu0 0.0
        %2570 = vmatpush2.msra.mxu0 0.0
        %2571 = vmatprep.subr.mxu0 0.0
        %2572 = vmatpush2.msra.mxu0 0.0
        %2573 = vmatprep.subr.mxu0 0.0
        %2574 = vmatpush2.msra.mxu0 0.0
        %2575 = vmatprep.subr.mxu0 0.0
        %2576 = vmatpush2.msra.mxu0 0.0
        %2577 = vmatprep.subr.mxu0 0.0
        %2578 = vmatpush2.msra.mxu0 0.0
        %2579 = vmatprep.subr.mxu0 0.0
        %2580 = vmatpush2.msra.mxu0 0.0
        %2581 = vmatprep.subr.mxu0 0.0
        %2582 = vmatpush2.msra.mxu0 0.0
        %2583 = vmatprep.subr.mxu0 0.0
        %2584 = vmatpush2.msra.mxu0 0.0
        %2585 = vmatprep.mubr.f32.mxu0 0.0
        %2586 = vmatmul.mubr.f32.gmra.mxu0 %v2519
        %v2587 = vpop.f32.mrf.mxu0
        %v2588 = vadd.f32 %v2517, %v2587
        %v2589 = vpop.f32.mrf.mxu0
        %2590 = vdwg.mxu0
        %v2591 = vadd.f32 %v2421, %v2588
        %v2592 = vld [vmem:[#allocation2 + $0x240] sm:$0x1]
        %v2593 = vld [vmem:[#allocation2 + $0x248] sm:$0x1]
        %v2594 = vsel %vm480, %v2591, 0.0
        %2595 = vadd.xlane.f32.xlu0 %v2594
        %v2596 = vpop.xlane.xlu0 %2595
        %v2597 = vmul.f32 %v2596, %v1333
        %v2598 = vsub.f32 %v2591, %v2597
        %v2599 = vmul.f32 %v2598, %v2598
        %v2600 = vsel %vm480, %v2599, 0.0
        %2601 = vadd.xlane.f32.xlu0 %v2600
        %v2602 = vpop.xlane.xlu0 %2601
        %v2603 = vmul.f32 %v2602, %v1333
        %v2604 = vadd.f32 %v2603, 1e-05
        %v2605 = vrsqrt.pop %v2604
        %v2606 = vmul.f32 %v2598, %v2605
        %v2607 = vlaneseq
        %v2608 = vshrl.u32 %v2607, 7
        %v2609 = vsub.s32 0, %v2608
        %v2610 = vrot.slane %v2592, %v2609
        %v2611 = vmul.f32 %v2606, %v2610
        %v2612 = vlaneseq
        %v2613 = vshrl.u32 %v2612, 7
        %v2614 = vsub.s32 0, %v2613
        %v2615 = vrot.slane %v2593, %v2614
        %v2616 = vadd.f32 %v2611, %v2615
        %v2617 = vld [vmem:[#allocation2 + $0x520] sm:$0x1]
        %v2618 = vld [vmem:[#allocation2 + $0x528] sm:$0x1]
        %v2619 = vsel %vm480, %v2616, 0.0
        %2620 = vadd.xlane.f32.xlu0 %v2619
        %v2621 = vpop.xlane.xlu0 %2620
        %v2622 = vmul.f32 %v2621, %v1333
        %v2623 = vsub.f32 %v2616, %v2622
        %v2624 = vmul.f32 %v2623, %v2623
        %v2625 = vsel %vm480, %v2624, 0.0
        %2626 = vadd.xlane.f32.xlu0 %v2625
        %v2627 = vpop.xlane.xlu0 %2626
        %v2628 = vmul.f32 %v2627, %v1333
        %v2629 = vadd.f32 %v2628, 1e-05
        %v2630 = vrsqrt.pop %v2629
        %v2631 = vmul.f32 %v2623, %v2630
        %v2632 = vlaneseq
        %v2633 = vshrl.u32 %v2632, 7
        %v2634 = vsub.s32 0, %v2633
        %v2635 = vrot.slane %v2617, %v2634
        %v2636 = vmul.f32 %v2631, %v2635
        %v2637 = vlaneseq
        %v2638 = vshrl.u32 %v2637, 7
        %v2639 = vsub.s32 0, %v2638
        %v2640 = vrot.slane %v2618, %v2639
        %v2641 = vadd.f32 %v2636, %v2640
        %v2642 = vld [vmem:[#allocation2 + $0x250] sm:$0xff]
        %v2643 = vld [vmem:[#allocation2 + $0x258] sm:$0xff]
        %v2644 = vld [vmem:[#allocation2 + $0x260] sm:$0xff]
        %v2645 = vld [vmem:[#allocation2 + $0x268] sm:$0xff]
        %v2646 = vld [vmem:[#allocation2 + $0x270] sm:$0x1]
        %v2647 = vlaneseq
        %v2648 = vshrl.u32 %v2647, 7
        %v2649 = vsub.s32 0, %v2648
        %v2650 = vrot.slane %v2646, %v2649
        %v2652 = vsel %vm480, %v451, 0
        %2654 = vmatprep.subr.mxu0 0.0
        %2655 = vmatpush1.msra.mxu0 0.0
        %2656 = vmatprep.subr.mxu0 0.0
        %2657 = vmatpush1.msra.mxu0 0.0
        %2658 = vmatprep.subr.mxu0 0.0
        %2659 = vmatpush1.msra.mxu0 0.0
        %2660 = vmatprep.subr.mxu0 0.0
        %2661 = vmatpush1.msra.mxu0 0.0
        %2662 = vmatprep.subr.mxu0 0.0
        %2663 = vmatpush1.msra.mxu0 0.0
        %2664 = vmatprep.subr.mxu0 0.0
        %2665 = vmatpush1.msra.mxu0 0.0
        %2666 = vmatprep.subr.mxu0 0.0
        %2667 = vmatpush1.msra.mxu0 0.0
        %2668 = vmatprep.subr.mxu0 0.0
        %2669 = vmatpush1.msra.mxu0 0.0
        %2670 = vmatprep.subr.mxu0 0.0
        %2671 = vmatpush1.msra.mxu0 0.0
        %2672 = vmatprep.subr.mxu0 0.0
        %2673 = vmatpush1.msra.mxu0 0.0
        %2674 = vmatprep.subr.mxu0 0.0
        %2675 = vmatpush1.msra.mxu0 0.0
        %2676 = vmatprep.subr.mxu0 0.0
        %2677 = vmatpush1.msra.mxu0 0.0
        %2678 = vmatprep.subr.mxu0 0.0
        %2679 = vmatpush1.msra.mxu0 %v2645
        %2680 = vmatprep.subr.mxu0 0.0
        %2681 = vmatpush1.msra.mxu0 %v2644
        %2682 = vmatprep.subr.mxu0 0.0
        %2683 = vmatpush1.msra.mxu0 %v2643
        %2684 = vmatprep.subr.mxu0 0.0
        %2685 = vmatpush1.msra.mxu0 %v2642
        %2686 = vmatprep.subr.mxu0 0.0
        %2687 = vmatpush2.msra.mxu0 0.0
        %2688 = vmatprep.subr.mxu0 0.0
        %2689 = vmatpush2.msra.mxu0 0.0
        %2690 = vmatprep.subr.mxu0 0.0
        %2691 = vmatpush2.msra.mxu0 0.0
        %2692 = vmatprep.subr.mxu0 0.0
        %2693 = vmatpush2.msra.mxu0 0.0
        %2694 = vmatprep.subr.mxu0 0.0
        %2695 = vmatpush2.msra.mxu0 0.0
        %2696 = vmatprep.subr.mxu0 0.0
        %2697 = vmatpush2.msra.mxu0 0.0
        %2698 = vmatprep.subr.mxu0 0.0
        %2699 = vmatpush2.msra.mxu0 0.0
        %2700 = vmatprep.subr.mxu0 0.0
        %2701 = vmatpush2.msra.mxu0 0.0
        %2702 = vmatprep.subr.mxu0 0.0
        %2703 = vmatpush2.msra.mxu0 0.0
        %2704 = vmatprep.subr.mxu0 0.0
        %2705 = vmatpush2.msra.mxu0 0.0
        %2706 = vmatprep.subr.mxu0 0.0
        %2707 = vmatpush2.msra.mxu0 0.0
        %2708 = vmatprep.subr.mxu0 0.0
        %2709 = vmatpush2.msra.mxu0 0.0
        %2710 = vmatprep.subr.mxu0 0.0
        %2711 = vmatpush2.msra.mxu0 0.0
        %2712 = vmatprep.subr.mxu0 0.0
        %2713 = vmatpush2.msra.mxu0 0.0
        %2714 = vmatprep.subr.mxu0 0.0
        %2715 = vmatpush2.msra.mxu0 0.0
        %2716 = vmatprep.subr.mxu0 0.0
        %2717 = vmatpush2.msra.mxu0 0.0
        %2718 = vmatprep.mubr.f32.mxu0 0.0
        %2719 = vmatmul.mubr.f32.gmra.mxu0 %v2652
        %v2720 = vpop.f32.mrf.mxu0
        %v2721 = vadd.f32 %v2650, %v2720
        %v2722 = vpop.f32.mrf.mxu0
        %2723 = vdwg.mxu0
        %v2724 = vld [vmem:[#allocation2 + $0x278] sm:$0xff]
        %v2725 = vld [vmem:[#allocation2 + $0x280] sm:$0xff]
        %v2726 = vld [vmem:[#allocation2 + $0x288] sm:$0xff]
        %v2727 = vld [vmem:[#allocation2 + $0x290] sm:$0xff]
        %v2728 = vld [vmem:[#allocation2 + $0x298] sm:$0x1]
        %2730 = vrot.lane.b32.xlu0 %v2721, 96
        %v2731 = vpop.permute.xlu0 %2730
        %v2732 = vsel %vm562, %v2721, 0
        %v2734 = vsel %vm562, %v2731, 0
        %2736 = vmatprep.subr.mxu0 0.0
        %2737 = vmatpush1.xpose.msra.mxu0 0.0
        %2738 = vmatprep.subr.mxu0 0.0
        %2739 = vmatpush1.xpose.msra.mxu0 0.0
        %2740 = vmatprep.subr.mxu0 0.0
        %2741 = vmatpush1.xpose.msra.mxu0 0.0
        %2742 = vmatprep.subr.mxu0 0.0
        %2743 = vmatpush1.xpose.msra.mxu0 0.0
        %2744 = vmatprep.subr.mxu0 0.0
        %2745 = vmatpush1.xpose.msra.mxu0 0.0
        %2746 = vmatprep.subr.mxu0 0.0
        %2747 = vmatpush1.xpose.msra.mxu0 0.0
        %2748 = vmatprep.subr.mxu0 0.0
        %2749 = vmatpush1.xpose.msra.mxu0 0.0
        %2750 = vmatprep.subr.mxu0 0.0
        %2751 = vmatpush1.xpose.msra.mxu0 0.0
        %2752 = vmatprep.subr.mxu0 0.0
        %2753 = vmatpush1.xpose.msra.mxu0 0.0
        %2754 = vmatprep.subr.mxu0 0.0
        %2755 = vmatpush1.xpose.msra.mxu0 0.0
        %2756 = vmatprep.subr.mxu0 0.0
        %2757 = vmatpush1.xpose.msra.mxu0 0.0
        %2758 = vmatprep.subr.mxu0 0.0
        %2759 = vmatpush1.xpose.msra.mxu0 0.0
        %2760 = vmatprep.subr.mxu0 0.0
        %2761 = vmatpush1.xpose.msra.mxu0 0.0
        %2762 = vmatprep.subr.mxu0 0.0
        %2763 = vmatpush1.xpose.msra.mxu0 0.0
        %2764 = vmatprep.subr.mxu0 0.0
        %2765 = vmatpush1.xpose.msra.mxu0 0.0
        %2766 = vmatprep.subr.mxu0 0.0
        %2767 = vmatpush1.xpose.msra.mxu0 %v2734
        %2768 = vmatprep.subr.mxu0 0.0
        %2769 = vmatpush2.xpose.msra.mxu0 0.0
        %2770 = vmatprep.subr.mxu0 0.0
        %2771 = vmatpush2.xpose.msra.mxu0 0.0
        %2772 = vmatprep.subr.mxu0 0.0
        %2773 = vmatpush2.xpose.msra.mxu0 0.0
        %2774 = vmatprep.subr.mxu0 0.0
        %2775 = vmatpush2.xpose.msra.mxu0 0.0
        %2776 = vmatprep.subr.mxu0 0.0
        %2777 = vmatpush2.xpose.msra.mxu0 0.0
        %2778 = vmatprep.subr.mxu0 0.0
        %2779 = vmatpush2.xpose.msra.mxu0 0.0
        %2780 = vmatprep.subr.mxu0 0.0
        %2781 = vmatpush2.xpose.msra.mxu0 0.0
        %2782 = vmatprep.subr.mxu0 0.0
        %2783 = vmatpush2.xpose.msra.mxu0 0.0
        %2784 = vmatprep.subr.mxu0 0.0
        %2785 = vmatpush2.xpose.msra.mxu0 0.0
        %2786 = vmatprep.subr.mxu0 0.0
        %2787 = vmatpush2.xpose.msra.mxu0 0.0
        %2788 = vmatprep.subr.mxu0 0.0
        %2789 = vmatpush2.xpose.msra.mxu0 0.0
        %2790 = vmatprep.subr.mxu0 0.0
        %2791 = vmatpush2.xpose.msra.mxu0 0.0
        %2792 = vmatprep.subr.mxu0 0.0
        %2793 = vmatpush2.xpose.msra.mxu0 0.0
        %2794 = vmatprep.subr.mxu0 0.0
        %2795 = vmatpush2.xpose.msra.mxu0 0.0
        %2796 = vmatprep.subr.mxu0 0.0
        %2797 = vmatpush2.xpose.msra.mxu0 0.0
        %2798 = vmatprep.subr.mxu0 0.0
        %2799 = vmatpush2.xpose.msra.mxu0 0.0
        %2800 = vmatprep.mubr.f32.mxu0 0.0
        %2801 = vmatmul.mubr.f32.gmra.mxu0 %v2732
        %v2802 = vpop.f32.mrf.mxu0
        %v2803 = vadd.f32 0.0, %v2802
        %v2804 = vpop.f32.mrf.mxu0
        %2805 = vdwg.mxu0
        %v2806 = vmul.f32 %v2803, 0.35355338
        %v2807 = vadd.f32 %v2806, %v470
        %v2808 = vsel %vm562, %v2807, -inf
        %2809 = vmax.xlane.f32.xlu0 %v2808
        %v2810 = vpop.xlane.xlu0 %2809
        %v2811 = vsub.f32 %v2807, %v2810
        %v2812 = vmul.f32 %v2811, 1.442695
        %v2813 = vpow.pop %v2812
        %v2814 = vsel %vm562, %v2813, 0.0
        %2815 = vadd.xlane.f32.xlu0 %v2814
        %v2816 = vpop.xlane.xlu0 %2815
        %v2817 = vrcp.pop %v2816
        %v2818 = vmul.f32 %v2813, %v2817
        %2819 = vrot.lane.b32.xlu0 %v2721, 64
        %v2820 = vpop.permute.xlu0 %2819
        %v2823 = vsel %vm562, %v2818, 0
        %2825 = vmatprep.subr.mxu0 0.0
        %2826 = vmatpush1.msra.mxu0 0.0
        %2827 = vmatprep.subr.mxu0 0.0
        %2828 = vmatpush1.msra.mxu0 0.0
        %2829 = vmatprep.subr.mxu0 0.0
        %2830 = vmatpush1.msra.mxu0 0.0
        %2831 = vmatprep.subr.mxu0 0.0
        %2832 = vmatpush1.msra.mxu0 0.0
        %2833 = vmatprep.subr.mxu0 0.0
        %2834 = vmatpush1.msra.mxu0 0.0
        %2835 = vmatprep.subr.mxu0 0.0
        %2836 = vmatpush1.msra.mxu0 0.0
        %2837 = vmatprep.subr.mxu0 0.0
        %2838 = vmatpush1.msra.mxu0 0.0
        %2839 = vmatprep.subr.mxu0 0.0
        %2840 = vmatpush1.msra.mxu0 0.0
        %2841 = vmatprep.subr.mxu0 0.0
        %2842 = vmatpush1.msra.mxu0 0.0
        %2843 = vmatprep.subr.mxu0 0.0
        %2844 = vmatpush1.msra.mxu0 0.0
        %2845 = vmatprep.subr.mxu0 0.0
        %2846 = vmatpush1.msra.mxu0 0.0
        %2847 = vmatprep.subr.mxu0 0.0
        %2848 = vmatpush1.msra.mxu0 0.0
        %2849 = vmatprep.subr.mxu0 0.0
        %2850 = vmatpush1.msra.mxu0 0.0
        %2851 = vmatprep.subr.mxu0 0.0
        %2852 = vmatpush1.msra.mxu0 0.0
        %2853 = vmatprep.subr.mxu0 0.0
        %2854 = vmatpush1.msra.mxu0 0.0
        %2855 = vmatprep.subr.mxu0 0.0
        %2856 = vmatpush1.msra.mxu0 %v2820
        %2857 = vmatprep.subr.mxu0 0.0
        %2858 = vmatpush2.msra.mxu0 0.0
        %2859 = vmatprep.subr.mxu0 0.0
        %2860 = vmatpush2.msra.mxu0 0.0
        %2861 = vmatprep.subr.mxu0 0.0
        %2862 = vmatpush2.msra.mxu0 0.0
        %2863 = vmatprep.subr.mxu0 0.0
        %2864 = vmatpush2.msra.mxu0 0.0
        %2865 = vmatprep.subr.mxu0 0.0
        %2866 = vmatpush2.msra.mxu0 0.0
        %2867 = vmatprep.subr.mxu0 0.0
        %2868 = vmatpush2.msra.mxu0 0.0
        %2869 = vmatprep.subr.mxu0 0.0
        %2870 = vmatpush2.msra.mxu0 0.0
        %2871 = vmatprep.subr.mxu0 0.0
        %2872 = vmatpush2.msra.mxu0 0.0
        %2873 = vmatprep.subr.mxu0 0.0
        %2874 = vmatpush2.msra.mxu0 0.0
        %2875 = vmatprep.subr.mxu0 0.0
        %2876 = vmatpush2.msra.mxu0 0.0
        %2877 = vmatprep.subr.mxu0 0.0
        %2878 = vmatpush2.msra.mxu0 0.0
        %2879 = vmatprep.subr.mxu0 0.0
        %2880 = vmatpush2.msra.mxu0 0.0
        %2881 = vmatprep.subr.mxu0 0.0
        %2882 = vmatpush2.msra.mxu0 0.0
        %2883 = vmatprep.subr.mxu0 0.0
        %2884 = vmatpush2.msra.mxu0 0.0
        %2885 = vmatprep.subr.mxu0 0.0
        %2886 = vmatpush2.msra.mxu0 0.0
        %2887 = vmatprep.subr.mxu0 0.0
        %2888 = vmatpush2.msra.mxu0 0.0
        %2889 = vmatprep.mubr.f32.mxu0 0.0
        %2890 = vmatmul.mubr.f32.gmra.mxu0 %v2823
        %v2891 = vpop.f32.mrf.mxu0
        %v2892 = vadd.f32 0.0, %v2891
        %v2893 = vpop.f32.mrf.mxu0
        %2894 = vdwg.mxu0
        %2895 = vrot.lane.b32.xlu0 %v2721, 120
        %v2896 = vpop.permute.xlu0 %2895
        %2897 = vrot.lane.b32.xlu0 %v2721, 88
        %v2898 = vpop.permute.xlu0 %2897
        %v2899 = vsel %vm562, %v2896, 0
        %v2901 = vsel %vm562, %v2898, 0
        %2903 = vmatprep.subr.mxu0 0.0
        %2904 = vmatpush1.xpose.msra.mxu0 0.0
        %2905 = vmatprep.subr.mxu0 0.0
        %2906 = vmatpush1.xpose.msra.mxu0 0.0
        %2907 = vmatprep.subr.mxu0 0.0
        %2908 = vmatpush1.xpose.msra.mxu0 0.0
        %2909 = vmatprep.subr.mxu0 0.0
        %2910 = vmatpush1.xpose.msra.mxu0 0.0
        %2911 = vmatprep.subr.mxu0 0.0
        %2912 = vmatpush1.xpose.msra.mxu0 0.0
        %2913 = vmatprep.subr.mxu0 0.0
        %2914 = vmatpush1.xpose.msra.mxu0 0.0
        %2915 = vmatprep.subr.mxu0 0.0
        %2916 = vmatpush1.xpose.msra.mxu0 0.0
        %2917 = vmatprep.subr.mxu0 0.0
        %2918 = vmatpush1.xpose.msra.mxu0 0.0
        %2919 = vmatprep.subr.mxu0 0.0
        %2920 = vmatpush1.xpose.msra.mxu0 0.0
        %2921 = vmatprep.subr.mxu0 0.0
        %2922 = vmatpush1.xpose.msra.mxu0 0.0
        %2923 = vmatprep.subr.mxu0 0.0
        %2924 = vmatpush1.xpose.msra.mxu0 0.0
        %2925 = vmatprep.subr.mxu0 0.0
        %2926 = vmatpush1.xpose.msra.mxu0 0.0
        %2927 = vmatprep.subr.mxu0 0.0
        %2928 = vmatpush1.xpose.msra.mxu0 0.0
        %2929 = vmatprep.subr.mxu0 0.0
        %2930 = vmatpush1.xpose.msra.mxu0 0.0
        %2931 = vmatprep.subr.mxu0 0.0
        %2932 = vmatpush1.xpose.msra.mxu0 0.0
        %2933 = vmatprep.subr.mxu0 0.0
        %2934 = vmatpush1.xpose.msra.mxu0 %v2901
        %2935 = vmatprep.subr.mxu0 0.0
        %2936 = vmatpush2.xpose.msra.mxu0 0.0
        %2937 = vmatprep.subr.mxu0 0.0
        %2938 = vmatpush2.xpose.msra.mxu0 0.0
        %2939 = vmatprep.subr.mxu0 0.0
        %2940 = vmatpush2.xpose.msra.mxu0 0.0
        %2941 = vmatprep.subr.mxu0 0.0
        %2942 = vmatpush2.xpose.msra.mxu0 0.0
        %2943 = vmatprep.subr.mxu0 0.0
        %2944 = vmatpush2.xpose.msra.mxu0 0.0
        %2945 = vmatprep.subr.mxu0 0.0
        %2946 = vmatpush2.xpose.msra.mxu0 0.0
        %2947 = vmatprep.subr.mxu0 0.0
        %2948 = vmatpush2.xpose.msra.mxu0 0.0
        %2949 = vmatprep.subr.mxu0 0.0
        %2950 = vmatpush2.xpose.msra.mxu0 0.0
        %2951 = vmatprep.subr.mxu0 0.0
        %2952 = vmatpush2.xpose.msra.mxu0 0.0
        %2953 = vmatprep.subr.mxu0 0.0
        %2954 = vmatpush2.xpose.msra.mxu0 0.0
        %2955 = vmatprep.subr.mxu0 0.0
        %2956 = vmatpush2.xpose.msra.mxu0 0.0
        %2957 = vmatprep.subr.mxu0 0.0
        %2958 = vmatpush2.xpose.msra.mxu0 0.0
        %2959 = vmatprep.subr.mxu0 0.0
        %2960 = vmatpush2.xpose.msra.mxu0 0.0
        %2961 = vmatprep.subr.mxu0 0.0
        %2962 = vmatpush2.xpose.msra.mxu0 0.0
        %2963 = vmatprep.subr.mxu0 0.0
        %2964 = vmatpush2.xpose.msra.mxu0 0.0
        %2965 = vmatprep.subr.mxu0 0.0
        %2966 = vmatpush2.xpose.msra.mxu0 0.0
        %2967 = vmatprep.mubr.f32.mxu0 0.0
        %2968 = vmatmul.mubr.f32.gmra.mxu0 %v2899
        %v2969 = vpop.f32.mrf.mxu0
        %v2970 = vadd.f32 0.0, %v2969
        %v2971 = vpop.f32.mrf.mxu0
        %2972 = vdwg.mxu0
        %v2973 = vmul.f32 %v2970, 0.35355338
        %v2974 = vadd.f32 %v2973, %v470
        %v2975 = vsel %vm562, %v2974, -inf
        %2976 = vmax.xlane.f32.xlu0 %v2975
        %v2977 = vpop.xlane.xlu0 %2976
        %v2978 = vsub.f32 %v2974, %v2977
        %v2979 = vmul.f32 %v2978, 1.442695
        %v2980 = vpow.pop %v2979
        %v2981 = vsel %vm562, %v2980, 0.0
        %2982 = vadd.xlane.f32.xlu0 %v2981
        %v2983 = vpop.xlane.xlu0 %2982
        %v2984 = vrcp.pop %v2983
        %v2985 = vmul.f32 %v2980, %v2984
        %2986 = vrot.lane.b32.xlu0 %v2721, 56
        %v2987 = vpop.permute.xlu0 %2986
        %v2990 = vsel %vm562, %v2985, 0
        %2992 = vmatprep.subr.mxu0 0.0
        %2993 = vmatpush1.msra.mxu0 0.0
        %2994 = vmatprep.subr.mxu0 0.0
        %2995 = vmatpush1.msra.mxu0 0.0
        %2996 = vmatprep.subr.mxu0 0.0
        %2997 = vmatpush1.msra.mxu0 0.0
        %2998 = vmatprep.subr.mxu0 0.0
        %2999 = vmatpush1.msra.mxu0 0.0
        %3000 = vmatprep.subr.mxu0 0.0
        %3001 = vmatpush1.msra.mxu0 0.0
        %3002 = vmatprep.subr.mxu0 0.0
        %3003 = vmatpush1.msra.mxu0 0.0
        %3004 = vmatprep.subr.mxu0 0.0
        %3005 = vmatpush1.msra.mxu0 0.0
        %3006 = vmatprep.subr.mxu0 0.0
        %3007 = vmatpush1.msra.mxu0 0.0
        %3008 = vmatprep.subr.mxu0 0.0
        %3009 = vmatpush1.msra.mxu0 0.0
        %3010 = vmatprep.subr.mxu0 0.0
        %3011 = vmatpush1.msra.mxu0 0.0
        %3012 = vmatprep.subr.mxu0 0.0
        %3013 = vmatpush1.msra.mxu0 0.0
        %3014 = vmatprep.subr.mxu0 0.0
        %3015 = vmatpush1.msra.mxu0 0.0
        %3016 = vmatprep.subr.mxu0 0.0
        %3017 = vmatpush1.msra.mxu0 0.0
        %3018 = vmatprep.subr.mxu0 0.0
        %3019 = vmatpush1.msra.mxu0 0.0
        %3020 = vmatprep.subr.mxu0 0.0
        %3021 = vmatpush1.msra.mxu0 0.0
        %3022 = vmatprep.subr.mxu0 0.0
        %3023 = vmatpush1.msra.mxu0 %v2987
        %3024 = vmatprep.subr.mxu0 0.0
        %3025 = vmatpush2.msra.mxu0 0.0
        %3026 = vmatprep.subr.mxu0 0.0
        %3027 = vmatpush2.msra.mxu0 0.0
        %3028 = vmatprep.subr.mxu0 0.0
        %3029 = vmatpush2.msra.mxu0 0.0
        %3030 = vmatprep.subr.mxu0 0.0
        %3031 = vmatpush2.msra.mxu0 0.0
        %3032 = vmatprep.subr.mxu0 0.0
        %3033 = vmatpush2.msra.mxu0 0.0
        %3034 = vmatprep.subr.mxu0 0.0
        %3035 = vmatpush2.msra.mxu0 0.0
        %3036 = vmatprep.subr.mxu0 0.0
        %3037 = vmatpush2.msra.mxu0 0.0
        %3038 = vmatprep.subr.mxu0 0.0
        %3039 = vmatpush2.msra.mxu0 0.0
        %3040 = vmatprep.subr.mxu0 0.0
        %3041 = vmatpush2.msra.mxu0 0.0
        %3042 = vmatprep.subr.mxu0 0.0
        %3043 = vmatpush2.msra.mxu0 0.0
        %3044 = vmatprep.subr.mxu0 0.0
        %3045 = vmatpush2.msra.mxu0 0.0
        %3046 = vmatprep.subr.mxu0 0.0
        %3047 = vmatpush2.msra.mxu0 0.0
        %3048 = vmatprep.subr.mxu0 0.0
        %3049 = vmatpush2.msra.mxu0 0.0
        %3050 = vmatprep.subr.mxu0 0.0
        %3051 = vmatpush2.msra.mxu0 0.0
        %3052 = vmatprep.subr.mxu0 0.0
        %3053 = vmatpush2.msra.mxu0 0.0
        %3054 = vmatprep.subr.mxu0 0.0
        %3055 = vmatpush2.msra.mxu0 0.0
        %3056 = vmatprep.mubr.f32.mxu0 0.0
        %3057 = vmatmul.mubr.f32.gmra.mxu0 %v2990
        %v3058 = vpop.f32.mrf.mxu0
        %v3059 = vadd.f32 0.0, %v3058
        %v3060 = vpop.f32.mrf.mxu0
        %3061 = vdwg.mxu0
        %3062 = vrot.lane.b32.xlu0 %v2721, 112
        %v3063 = vpop.permute.xlu0 %3062
        %3064 = vrot.lane.b32.xlu0 %v2721, 80
        %v3065 = vpop.permute.xlu0 %3064
        %v3066 = vsel %vm562, %v3063, 0
        %v3068 = vsel %vm562, %v3065, 0
        %3070 = vmatprep.subr.mxu0 0.0
        %3071 = vmatpush1.xpose.msra.mxu0 0.0
        %3072 = vmatprep.subr.mxu0 0.0
        %3073 = vmatpush1.xpose.msra.mxu0 0.0
        %3074 = vmatprep.subr.mxu0 0.0
        %3075 = vmatpush1.xpose.msra.mxu0 0.0
        %3076 = vmatprep.subr.mxu0 0.0
        %3077 = vmatpush1.xpose.msra.mxu0 0.0
        %3078 = vmatprep.subr.mxu0 0.0
        %3079 = vmatpush1.xpose.msra.mxu0 0.0
        %3080 = vmatprep.subr.mxu0 0.0
        %3081 = vmatpush1.xpose.msra.mxu0 0.0
        %3082 = vmatprep.subr.mxu0 0.0
        %3083 = vmatpush1.xpose.msra.mxu0 0.0
        %3084 = vmatprep.subr.mxu0 0.0
        %3085 = vmatpush1.xpose.msra.mxu0 0.0
        %3086 = vmatprep.subr.mxu0 0.0
        %3087 = vmatpush1.xpose.msra.mxu0 0.0
        %3088 = vmatprep.subr.mxu0 0.0
        %3089 = vmatpush1.xpose.msra.mxu0 0.0
        %3090 = vmatprep.subr.mxu0 0.0
        %3091 = vmatpush1.xpose.msra.mxu0 0.0
        %3092 = vmatprep.subr.mxu0 0.0
        %3093 = vmatpush1.xpose.msra.mxu0 0.0
        %3094 = vmatprep.subr.mxu0 0.0
        %3095 = vmatpush1.xpose.msra.mxu0 0.0
        %3096 = vmatprep.subr.mxu0 0.0
        %3097 = vmatpush1.xpose.msra.mxu0 0.0
        %3098 = vmatprep.subr.mxu0 0.0
        %3099 = vmatpush1.xpose.msra.mxu0 0.0
        %3100 = vmatprep.subr.mxu0 0.0
        %3101 = vmatpush1.xpose.msra.mxu0 %v3068
        %3102 = vmatprep.subr.mxu0 0.0
        %3103 = vmatpush2.xpose.msra.mxu0 0.0
        %3104 = vmatprep.subr.mxu0 0.0
        %3105 = vmatpush2.xpose.msra.mxu0 0.0
        %3106 = vmatprep.subr.mxu0 0.0
        %3107 = vmatpush2.xpose.msra.mxu0 0.0
        %3108 = vmatprep.subr.mxu0 0.0
        %3109 = vmatpush2.xpose.msra.mxu0 0.0
        %3110 = vmatprep.subr.mxu0 0.0
        %3111 = vmatpush2.xpose.msra.mxu0 0.0
        %3112 = vmatprep.subr.mxu0 0.0
        %3113 = vmatpush2.xpose.msra.mxu0 0.0
        %3114 = vmatprep.subr.mxu0 0.0
        %3115 = vmatpush2.xpose.msra.mxu0 0.0
        %3116 = vmatprep.subr.mxu0 0.0
        %3117 = vmatpush2.xpose.msra.mxu0 0.0
        %3118 = vmatprep.subr.mxu0 0.0
        %3119 = vmatpush2.xpose.msra.mxu0 0.0
        %3120 = vmatprep.subr.mxu0 0.0
        %3121 = vmatpush2.xpose.msra.mxu0 0.0
        %3122 = vmatprep.subr.mxu0 0.0
        %3123 = vmatpush2.xpose.msra.mxu0 0.0
        %3124 = vmatprep.subr.mxu0 0.0
        %3125 = vmatpush2.xpose.msra.mxu0 0.0
        %3126 = vmatprep.subr.mxu0 0.0
        %3127 = vmatpush2.xpose.msra.mxu0 0.0
        %3128 = vmatprep.subr.mxu0 0.0
        %3129 = vmatpush2.xpose.msra.mxu0 0.0
        %3130 = vmatprep.subr.mxu0 0.0
        %3131 = vmatpush2.xpose.msra.mxu0 0.0
        %3132 = vmatprep.subr.mxu0 0.0
        %3133 = vmatpush2.xpose.msra.mxu0 0.0
        %3134 = vmatprep.mubr.f32.mxu0 0.0
        %3135 = vmatmul.mubr.f32.gmra.mxu0 %v3066
        %v3136 = vpop.f32.mrf.mxu0
        %v3137 = vadd.f32 0.0, %v3136
        %v3138 = vpop.f32.mrf.mxu0
        %3139 = vdwg.mxu0
        %v3140 = vmul.f32 %v3137, 0.35355338
        %v3141 = vadd.f32 %v3140, %v470
        %v3142 = vsel %vm562, %v3141, -inf
        %3143 = vmax.xlane.f32.xlu0 %v3142
        %v3144 = vpop.xlane.xlu0 %3143
        %v3145 = vsub.f32 %v3141, %v3144
        %v3146 = vmul.f32 %v3145, 1.442695
        %v3147 = vpow.pop %v3146
        %v3148 = vsel %vm562, %v3147, 0.0
        %3149 = vadd.xlane.f32.xlu0 %v3148
        %v3150 = vpop.xlane.xlu0 %3149
        %v3151 = vrcp.pop %v3150
        %v3152 = vmul.f32 %v3147, %v3151
        %3153 = vrot.lane.b32.xlu0 %v2721, 48
        %v3154 = vpop.permute.xlu0 %3153
        %v3157 = vsel %vm562, %v3152, 0
        %3159 = vmatprep.subr.mxu0 0.0
        %3160 = vmatpush1.msra.mxu0 0.0
        %3161 = vmatprep.subr.mxu0 0.0
        %3162 = vmatpush1.msra.mxu0 0.0
        %3163 = vmatprep.subr.mxu0 0.0
        %3164 = vmatpush1.msra.mxu0 0.0
        %3165 = vmatprep.subr.mxu0 0.0
        %3166 = vmatpush1.msra.mxu0 0.0
        %3167 = vmatprep.subr.mxu0 0.0
        %3168 = vmatpush1.msra.mxu0 0.0
        %3169 = vmatprep.subr.mxu0 0.0
        %3170 = vmatpush1.msra.mxu0 0.0
        %3171 = vmatprep.subr.mxu0 0.0
        %3172 = vmatpush1.msra.mxu0 0.0
        %3173 = vmatprep.subr.mxu0 0.0
        %3174 = vmatpush1.msra.mxu0 0.0
        %3175 = vmatprep.subr.mxu0 0.0
        %3176 = vmatpush1.msra.mxu0 0.0
        %3177 = vmatprep.subr.mxu0 0.0
        %3178 = vmatpush1.msra.mxu0 0.0
        %3179 = vmatprep.subr.mxu0 0.0
        %3180 = vmatpush1.msra.mxu0 0.0
        %3181 = vmatprep.subr.mxu0 0.0
        %3182 = vmatpush1.msra.mxu0 0.0
        %3183 = vmatprep.subr.mxu0 0.0
        %3184 = vmatpush1.msra.mxu0 0.0
        %3185 = vmatprep.subr.mxu0 0.0
        %3186 = vmatpush1.msra.mxu0 0.0
        %3187 = vmatprep.subr.mxu0 0.0
        %3188 = vmatpush1.msra.mxu0 0.0
        %3189 = vmatprep.subr.mxu0 0.0
        %3190 = vmatpush1.msra.mxu0 %v3154
        %3191 = vmatprep.subr.mxu0 0.0
        %3192 = vmatpush2.msra.mxu0 0.0
        %3193 = vmatprep.subr.mxu0 0.0
        %3194 = vmatpush2.msra.mxu0 0.0
        %3195 = vmatprep.subr.mxu0 0.0
        %3196 = vmatpush2.msra.mxu0 0.0
        %3197 = vmatprep.subr.mxu0 0.0
        %3198 = vmatpush2.msra.mxu0 0.0
        %3199 = vmatprep.subr.mxu0 0.0
        %3200 = vmatpush2.msra.mxu0 0.0
        %3201 = vmatprep.subr.mxu0 0.0
        %3202 = vmatpush2.msra.mxu0 0.0
        %3203 = vmatprep.subr.mxu0 0.0
        %3204 = vmatpush2.msra.mxu0 0.0
        %3205 = vmatprep.subr.mxu0 0.0
        %3206 = vmatpush2.msra.mxu0 0.0
        %3207 = vmatprep.subr.mxu0 0.0
        %3208 = vmatpush2.msra.mxu0 0.0
        %3209 = vmatprep.subr.mxu0 0.0
        %3210 = vmatpush2.msra.mxu0 0.0
        %3211 = vmatprep.subr.mxu0 0.0
        %3212 = vmatpush2.msra.mxu0 0.0
        %3213 = vmatprep.subr.mxu0 0.0
        %3214 = vmatpush2.msra.mxu0 0.0
        %3215 = vmatprep.subr.mxu0 0.0
        %3216 = vmatpush2.msra.mxu0 0.0
        %3217 = vmatprep.subr.mxu0 0.0
        %3218 = vmatpush2.msra.mxu0 0.0
        %3219 = vmatprep.subr.mxu0 0.0
        %3220 = vmatpush2.msra.mxu0 0.0
        %3221 = vmatprep.subr.mxu0 0.0
        %3222 = vmatpush2.msra.mxu0 0.0
        %3223 = vmatprep.mubr.f32.mxu0 0.0
        %3224 = vmatmul.mubr.f32.gmra.mxu0 %v3157
        %v3225 = vpop.f32.mrf.mxu0
        %v3226 = vadd.f32 0.0, %v3225
        %v3227 = vpop.f32.mrf.mxu0
        %3228 = vdwg.mxu0
        %3229 = vrot.lane.b32.xlu0 %v2721, 104
        %v3230 = vpop.permute.xlu0 %3229
        %3231 = vrot.lane.b32.xlu0 %v2721, 72
        %v3232 = vpop.permute.xlu0 %3231
        %v3233 = vsel %vm562, %v3230, 0
        %v3235 = vsel %vm562, %v3232, 0
        %3237 = vmatprep.subr.mxu0 0.0
        %3238 = vmatpush1.xpose.msra.mxu0 0.0
        %3239 = vmatprep.subr.mxu0 0.0
        %3240 = vmatpush1.xpose.msra.mxu0 0.0
        %3241 = vmatprep.subr.mxu0 0.0
        %3242 = vmatpush1.xpose.msra.mxu0 0.0
        %3243 = vmatprep.subr.mxu0 0.0
        %3244 = vmatpush1.xpose.msra.mxu0 0.0
        %3245 = vmatprep.subr.mxu0 0.0
        %3246 = vmatpush1.xpose.msra.mxu0 0.0
        %3247 = vmatprep.subr.mxu0 0.0
        %3248 = vmatpush1.xpose.msra.mxu0 0.0
        %3249 = vmatprep.subr.mxu0 0.0
        %3250 = vmatpush1.xpose.msra.mxu0 0.0
        %3251 = vmatprep.subr.mxu0 0.0
        %3252 = vmatpush1.xpose.msra.mxu0 0.0
        %3253 = vmatprep.subr.mxu0 0.0
        %3254 = vmatpush1.xpose.msra.mxu0 0.0
        %3255 = vmatprep.subr.mxu0 0.0
        %3256 = vmatpush1.xpose.msra.mxu0 0.0
        %3257 = vmatprep.subr.mxu0 0.0
        %3258 = vmatpush1.xpose.msra.mxu0 0.0
        %3259 = vmatprep.subr.mxu0 0.0
        %3260 = vmatpush1.xpose.msra.mxu0 0.0
        %3261 = vmatprep.subr.mxu0 0.0
        %3262 = vmatpush1.xpose.msra.mxu0 0.0
        %3263 = vmatprep.subr.mxu0 0.0
        %3264 = vmatpush1.xpose.msra.mxu0 0.0
        %3265 = vmatprep.subr.mxu0 0.0
        %3266 = vmatpush1.xpose.msra.mxu0 0.0
        %3267 = vmatprep.subr.mxu0 0.0
        %3268 = vmatpush1.xpose.msra.mxu0 %v3235
        %3269 = vmatprep.subr.mxu0 0.0
        %3270 = vmatpush2.xpose.msra.mxu0 0.0
        %3271 = vmatprep.subr.mxu0 0.0
        %3272 = vmatpush2.xpose.msra.mxu0 0.0
        %3273 = vmatprep.subr.mxu0 0.0
        %3274 = vmatpush2.xpose.msra.mxu0 0.0
        %3275 = vmatprep.subr.mxu0 0.0
        %3276 = vmatpush2.xpose.msra.mxu0 0.0
        %3277 = vmatprep.subr.mxu0 0.0
        %3278 = vmatpush2.xpose.msra.mxu0 0.0
        %3279 = vmatprep.subr.mxu0 0.0
        %3280 = vmatpush2.xpose.msra.mxu0 0.0
        %3281 = vmatprep.subr.mxu0 0.0
        %3282 = vmatpush2.xpose.msra.mxu0 0.0
        %3283 = vmatprep.subr.mxu0 0.0
        %3284 = vmatpush2.xpose.msra.mxu0 0.0
        %3285 = vmatprep.subr.mxu0 0.0
        %3286 = vmatpush2.xpose.msra.mxu0 0.0
        %3287 = vmatprep.subr.mxu0 0.0
        %3288 = vmatpush2.xpose.msra.mxu0 0.0
        %3289 = vmatprep.subr.mxu0 0.0
        %3290 = vmatpush2.xpose.msra.mxu0 0.0
        %3291 = vmatprep.subr.mxu0 0.0
        %3292 = vmatpush2.xpose.msra.mxu0 0.0
        %3293 = vmatprep.subr.mxu0 0.0
        %3294 = vmatpush2.xpose.msra.mxu0 0.0
        %3295 = vmatprep.subr.mxu0 0.0
        %3296 = vmatpush2.xpose.msra.mxu0 0.0
        %3297 = vmatprep.subr.mxu0 0.0
        %3298 = vmatpush2.xpose.msra.mxu0 0.0
        %3299 = vmatprep.subr.mxu0 0.0
        %3300 = vmatpush2.xpose.msra.mxu0 0.0
        %3301 = vmatprep.mubr.f32.mxu0 0.0
        %3302 = vmatmul.mubr.f32.gmra.mxu0 %v3233
        %v3303 = vpop.f32.mrf.mxu0
        %v3304 = vadd.f32 0.0, %v3303
        %v3305 = vpop.f32.mrf.mxu0
        %3306 = vdwg.mxu0
        %v3307 = vmul.f32 %v3304, 0.35355338
        %v3308 = vadd.f32 %v3307, %v470
        %v3309 = vsel %vm562, %v3308, -inf
        %3310 = vmax.xlane.f32.xlu0 %v3309
        %v3311 = vpop.xlane.xlu0 %3310
        %v3312 = vsub.f32 %v3308, %v3311
        %v3313 = vmul.f32 %v3312, 1.442695
        %v3314 = vpow.pop %v3313
        %v3315 = vsel %vm562, %v3314, 0.0
        %3316 = vadd.xlane.f32.xlu0 %v3315
        %v3317 = vpop.xlane.xlu0 %3316
        %v3318 = vrcp.pop %v3317
        %v3319 = vmul.f32 %v3314, %v3318
        %3320 = vrot.lane.b32.xlu0 %v2721, 40
        %v3321 = vpop.permute.xlu0 %3320
        %v3324 = vsel %vm562, %v3319, 0
        %3326 = vmatprep.subr.mxu0 0.0
        %3327 = vmatpush1.msra.mxu0 0.0
        %3328 = vmatprep.subr.mxu0 0.0
        %3329 = vmatpush1.msra.mxu0 0.0
        %3330 = vmatprep.subr.mxu0 0.0
        %3331 = vmatpush1.msra.mxu0 0.0
        %3332 = vmatprep.subr.mxu0 0.0
        %3333 = vmatpush1.msra.mxu0 0.0
        %3334 = vmatprep.subr.mxu0 0.0
        %3335 = vmatpush1.msra.mxu0 0.0
        %3336 = vmatprep.subr.mxu0 0.0
        %3337 = vmatpush1.msra.mxu0 0.0
        %3338 = vmatprep.subr.mxu0 0.0
        %3339 = vmatpush1.msra.mxu0 0.0
        %3340 = vmatprep.subr.mxu0 0.0
        %3341 = vmatpush1.msra.mxu0 0.0
        %3342 = vmatprep.subr.mxu0 0.0
        %3343 = vmatpush1.msra.mxu0 0.0
        %3344 = vmatprep.subr.mxu0 0.0
        %3345 = vmatpush1.msra.mxu0 0.0
        %3346 = vmatprep.subr.mxu0 0.0
        %3347 = vmatpush1.msra.mxu0 0.0
        %3348 = vmatprep.subr.mxu0 0.0
        %3349 = vmatpush1.msra.mxu0 0.0
        %3350 = vmatprep.subr.mxu0 0.0
        %3351 = vmatpush1.msra.mxu0 0.0
        %3352 = vmatprep.subr.mxu0 0.0
        %3353 = vmatpush1.msra.mxu0 0.0
        %3354 = vmatprep.subr.mxu0 0.0
        %3355 = vmatpush1.msra.mxu0 0.0
        %3356 = vmatprep.subr.mxu0 0.0
        %3357 = vmatpush1.msra.mxu0 %v3321
        %3358 = vmatprep.subr.mxu0 0.0
        %3359 = vmatpush2.msra.mxu0 0.0
        %3360 = vmatprep.subr.mxu0 0.0
        %3361 = vmatpush2.msra.mxu0 0.0
        %3362 = vmatprep.subr.mxu0 0.0
        %3363 = vmatpush2.msra.mxu0 0.0
        %3364 = vmatprep.subr.mxu0 0.0
        %3365 = vmatpush2.msra.mxu0 0.0
        %3366 = vmatprep.subr.mxu0 0.0
        %3367 = vmatpush2.msra.mxu0 0.0
        %3368 = vmatprep.subr.mxu0 0.0
        %3369 = vmatpush2.msra.mxu0 0.0
        %3370 = vmatprep.subr.mxu0 0.0
        %3371 = vmatpush2.msra.mxu0 0.0
        %3372 = vmatprep.subr.mxu0 0.0
        %3373 = vmatpush2.msra.mxu0 0.0
        %3374 = vmatprep.subr.mxu0 0.0
        %3375 = vmatpush2.msra.mxu0 0.0
        %3376 = vmatprep.subr.mxu0 0.0
        %3377 = vmatpush2.msra.mxu0 0.0
        %3378 = vmatprep.subr.mxu0 0.0
        %3379 = vmatpush2.msra.mxu0 0.0
        %3380 = vmatprep.subr.mxu0 0.0
        %3381 = vmatpush2.msra.mxu0 0.0
        %3382 = vmatprep.subr.mxu0 0.0
        %3383 = vmatpush2.msra.mxu0 0.0
        %3384 = vmatprep.subr.mxu0 0.0
        %3385 = vmatpush2.msra.mxu0 0.0
        %3386 = vmatprep.subr.mxu0 0.0
        %3387 = vmatpush2.msra.mxu0 0.0
        %3388 = vmatprep.subr.mxu0 0.0
        %3389 = vmatpush2.msra.mxu0 0.0
        %3390 = vmatprep.mubr.f32.mxu0 0.0
        %3391 = vmatmul.mubr.f32.gmra.mxu0 %v3324
        %v3392 = vpop.f32.mrf.mxu0
        %v3393 = vadd.f32 0.0, %v3392
        %v3394 = vpop.f32.mrf.mxu0
        %3395 = vdwg.mxu0
        %3397 = vrot.lane.b32.xlu0 %v3059, 8
        %v3398 = vpop.permute.xlu0 %3397
        %3401 = vrot.lane.b32.xlu0 %v3226, 16
        %v3402 = vpop.permute.xlu0 %3401
        %3405 = vrot.lane.b32.xlu0 %v3393, 24
        %v3406 = vpop.permute.xlu0 %3405
        %v3408 = vsel %vm562, %v2892, %v3398
        %v3409 = vsel %vm1246, %v3408, %v3402
        %v3410 = vsel %vm1248, %v3409, %v3406
        %v3411 = vlaneseq
        %v3412 = vshrl.u32 %v3411, 7
        %v3413 = vsub.s32 0, %v3412
        %v3414 = vrot.slane %v2728, %v3413
        %v3416 = vsel %vm480, %v3410, 0
        %3418 = vmatprep.subr.mxu0 0.0
        %3419 = vmatpush1.msra.mxu0 0.0
        %3420 = vmatprep.subr.mxu0 0.0
        %3421 = vmatpush1.msra.mxu0 0.0
        %3422 = vmatprep.subr.mxu0 0.0
        %3423 = vmatpush1.msra.mxu0 0.0
        %3424 = vmatprep.subr.mxu0 0.0
        %3425 = vmatpush1.msra.mxu0 0.0
        %3426 = vmatprep.subr.mxu0 0.0
        %3427 = vmatpush1.msra.mxu0 0.0
        %3428 = vmatprep.subr.mxu0 0.0
        %3429 = vmatpush1.msra.mxu0 0.0
        %3430 = vmatprep.subr.mxu0 0.0
        %3431 = vmatpush1.msra.mxu0 0.0
        %3432 = vmatprep.subr.mxu0 0.0
        %3433 = vmatpush1.msra.mxu0 0.0
        %3434 = vmatprep.subr.mxu0 0.0
        %3435 = vmatpush1.msra.mxu0 0.0
        %3436 = vmatprep.subr.mxu0 0.0
        %3437 = vmatpush1.msra.mxu0 0.0
        %3438 = vmatprep.subr.mxu0 0.0
        %3439 = vmatpush1.msra.mxu0 0.0
        %3440 = vmatprep.subr.mxu0 0.0
        %3441 = vmatpush1.msra.mxu0 0.0
        %3442 = vmatprep.subr.mxu0 0.0
        %3443 = vmatpush1.msra.mxu0 %v2727
        %3444 = vmatprep.subr.mxu0 0.0
        %3445 = vmatpush1.msra.mxu0 %v2726
        %3446 = vmatprep.subr.mxu0 0.0
        %3447 = vmatpush1.msra.mxu0 %v2725
        %3448 = vmatprep.subr.mxu0 0.0
        %3449 = vmatpush1.msra.mxu0 %v2724
        %3450 = vmatprep.subr.mxu0 0.0
        %3451 = vmatpush2.msra.mxu0 0.0
        %3452 = vmatprep.subr.mxu0 0.0
        %3453 = vmatpush2.msra.mxu0 0.0
        %3454 = vmatprep.subr.mxu0 0.0
        %3455 = vmatpush2.msra.mxu0 0.0
        %3456 = vmatprep.subr.mxu0 0.0
        %3457 = vmatpush2.msra.mxu0 0.0
        %3458 = vmatprep.subr.mxu0 0.0
        %3459 = vmatpush2.msra.mxu0 0.0
        %3460 = vmatprep.subr.mxu0 0.0
        %3461 = vmatpush2.msra.mxu0 0.0
        %3462 = vmatprep.subr.mxu0 0.0
        %3463 = vmatpush2.msra.mxu0 0.0
        %3464 = vmatprep.subr.mxu0 0.0
        %3465 = vmatpush2.msra.mxu0 0.0
        %3466 = vmatprep.subr.mxu0 0.0
        %3467 = vmatpush2.msra.mxu0 0.0
        %3468 = vmatprep.subr.mxu0 0.0
        %3469 = vmatpush2.msra.mxu0 0.0
        %3470 = vmatprep.subr.mxu0 0.0
        %3471 = vmatpush2.msra.mxu0 0.0
        %3472 = vmatprep.subr.mxu0 0.0
        %3473 = vmatpush2.msra.mxu0 0.0
        %3474 = vmatprep.subr.mxu0 0.0
        %3475 = vmatpush2.msra.mxu0 0.0
        %3476 = vmatprep.subr.mxu0 0.0
        %3477 = vmatpush2.msra.mxu0 0.0
        %3478 = vmatprep.subr.mxu0 0.0
        %3479 = vmatpush2.msra.mxu0 0.0
        %3480 = vmatprep.subr.mxu0 0.0
        %3481 = vmatpush2.msra.mxu0 0.0
        %3482 = vmatprep.mubr.f32.mxu0 0.0
        %3483 = vmatmul.mubr.f32.gmra.mxu0 %v3416
        %v3484 = vpop.f32.mrf.mxu0
        %v3485 = vadd.f32 %v3414, %v3484
        %v3486 = vpop.f32.mrf.mxu0
        %3487 = vdwg.mxu0
        %v3488 = vadd.f32 %v451, %v3485
        %v3489 = vld [vmem:[#allocation2 + $0x2a0] sm:$0x1]
        %v3490 = vld [vmem:[#allocation2 + $0x2a8] sm:$0x1]
        %v3491 = vsel %vm480, %v3488, 0.0
        %3492 = vadd.xlane.f32.xlu0 %v3491
        %v3493 = vpop.xlane.xlu0 %3492
        %v3494 = vmul.f32 %v3493, %v1333
        %v3495 = vsub.f32 %v3488, %v3494
        %v3496 = vmul.f32 %v3495, %v3495
        %v3497 = vsel %vm480, %v3496, 0.0
        %3498 = vadd.xlane.f32.xlu0 %v3497
        %v3499 = vpop.xlane.xlu0 %3498
        %v3500 = vmul.f32 %v3499, %v1333
        %v3501 = vadd.f32 %v3500, 1e-05
        %v3502 = vrsqrt.pop %v3501
        %v3503 = vmul.f32 %v3495, %v3502
        %v3504 = vlaneseq
        %v3505 = vshrl.u32 %v3504, 7
        %v3506 = vsub.s32 0, %v3505
        %v3507 = vrot.slane %v3489, %v3506
        %v3508 = vmul.f32 %v3503, %v3507
        %v3509 = vlaneseq
        %v3510 = vshrl.u32 %v3509, 7
        %v3511 = vsub.s32 0, %v3510
        %v3512 = vrot.slane %v3490, %v3511
        %v3513 = vadd.f32 %v3508, %v3512
        %v3514 = vld [vmem:[#allocation2 + $0x2b0] sm:$0xff]
        %v3515 = vld [vmem:[#allocation2 + $0x2b8] sm:$0xff]
        %v3516 = vld [vmem:[#allocation2 + $0x2c0] sm:$0xff]
        %v3517 = vld [vmem:[#allocation2 + $0x2c8] sm:$0xff]
        %v3518 = vld [vmem:[#allocation2 + $0x2d0] sm:$0x1]
        %v3519 = vlaneseq
        %v3520 = vshrl.u32 %v3519, 7
        %v3521 = vsub.s32 0, %v3520
        %v3522 = vrot.slane %v3518, %v3521
        %v3524 = vsel %vm480, %v3513, 0
        %3526 = vmatprep.subr.mxu0 0.0
        %3527 = vmatpush1.msra.mxu0 0.0
        %3528 = vmatprep.subr.mxu0 0.0
        %3529 = vmatpush1.msra.mxu0 0.0
        %3530 = vmatprep.subr.mxu0 0.0
        %3531 = vmatpush1.msra.mxu0 0.0
        %3532 = vmatprep.subr.mxu0 0.0
        %3533 = vmatpush1.msra.mxu0 0.0
        %3534 = vmatprep.subr.mxu0 0.0
        %3535 = vmatpush1.msra.mxu0 0.0
        %3536 = vmatprep.subr.mxu0 0.0
        %3537 = vmatpush1.msra.mxu0 0.0
        %3538 = vmatprep.subr.mxu0 0.0
        %3539 = vmatpush1.msra.mxu0 0.0
        %3540 = vmatprep.subr.mxu0 0.0
        %3541 = vmatpush1.msra.mxu0 0.0
        %3542 = vmatprep.subr.mxu0 0.0
        %3543 = vmatpush1.msra.mxu0 0.0
        %3544 = vmatprep.subr.mxu0 0.0
        %3545 = vmatpush1.msra.mxu0 0.0
        %3546 = vmatprep.subr.mxu0 0.0
        %3547 = vmatpush1.msra.mxu0 0.0
        %3548 = vmatprep.subr.mxu0 0.0
        %3549 = vmatpush1.msra.mxu0 0.0
        %3550 = vmatprep.subr.mxu0 0.0
        %3551 = vmatpush1.msra.mxu0 %v3517
        %3552 = vmatprep.subr.mxu0 0.0
        %3553 = vmatpush1.msra.mxu0 %v3516
        %3554 = vmatprep.subr.mxu0 0.0
        %3555 = vmatpush1.msra.mxu0 %v3515
        %3556 = vmatprep.subr.mxu0 0.0
        %3557 = vmatpush1.msra.mxu0 %v3514
        %3558 = vmatprep.subr.mxu0 0.0
        %3559 = vmatpush2.msra.mxu0 0.0
        %3560 = vmatprep.subr.mxu0 0.0
        %3561 = vmatpush2.msra.mxu0 0.0
        %3562 = vmatprep.subr.mxu0 0.0
        %3563 = vmatpush2.msra.mxu0 0.0
        %3564 = vmatprep.subr.mxu0 0.0
        %3565 = vmatpush2.msra.mxu0 0.0
        %3566 = vmatprep.subr.mxu0 0.0
        %3567 = vmatpush2.msra.mxu0 0.0
        %3568 = vmatprep.subr.mxu0 0.0
        %3569 = vmatpush2.msra.mxu0 0.0
        %3570 = vmatprep.subr.mxu0 0.0
        %3571 = vmatpush2.msra.mxu0 0.0
        %3572 = vmatprep.subr.mxu0 0.0
        %3573 = vmatpush2.msra.mxu0 0.0
        %3574 = vmatprep.subr.mxu0 0.0
        %3575 = vmatpush2.msra.mxu0 0.0
        %3576 = vmatprep.subr.mxu0 0.0
        %3577 = vmatpush2.msra.mxu0 0.0
        %3578 = vmatprep.subr.mxu0 0.0
        %3579 = vmatpush2.msra.mxu0 0.0
        %3580 = vmatprep.subr.mxu0 0.0
        %3581 = vmatpush2.msra.mxu0 0.0
        %3582 = vmatprep.subr.mxu0 0.0
        %3583 = vmatpush2.msra.mxu0 0.0
        %3584 = vmatprep.subr.mxu0 0.0
        %3585 = vmatpush2.msra.mxu0 0.0
        %3586 = vmatprep.subr.mxu0 0.0
        %3587 = vmatpush2.msra.mxu0 0.0
        %3588 = vmatprep.subr.mxu0 0.0
        %3589 = vmatpush2.msra.mxu0 0.0
        %3590 = vmatprep.mubr.f32.mxu0 0.0
        %3591 = vmatmul.mubr.f32.gmra.mxu0 %v3524
        %v3592 = vpop.f32.mrf.mxu0
        %v3593 = vadd.f32 %v3522, %v3592
        %v3594 = vpop.f32.mrf.mxu0
        %3595 = vdwg.mxu0
        %v3596 = vld [vmem:[#allocation2 + $0x2d8] sm:$0xff]
        %v3597 = vld [vmem:[#allocation2 + $0x2e0] sm:$0xff]
        %v3598 = vld [vmem:[#allocation2 + $0x2e8] sm:$0xff]
        %v3599 = vld [vmem:[#allocation2 + $0x2f0] sm:$0xff]
        %v3600 = vld [vmem:[#allocation2 + $0x2f8] sm:$0x1]
        %v3601 = vlaneseq
        %v3602 = vshrl.u32 %v3601, 7
        %v3603 = vsub.s32 0, %v3602
        %v3604 = vrot.slane %v3600, %v3603
        %v3606 = vsel %vm480, %v2641, 0
        %3608 = vmatprep.subr.mxu0 0.0
        %3609 = vmatpush1.msra.mxu0 0.0
        %3610 = vmatprep.subr.mxu0 0.0
        %3611 = vmatpush1.msra.mxu0 0.0
        %3612 = vmatprep.subr.mxu0 0.0
        %3613 = vmatpush1.msra.mxu0 0.0
        %3614 = vmatprep.subr.mxu0 0.0
        %3615 = vmatpush1.msra.mxu0 0.0
        %3616 = vmatprep.subr.mxu0 0.0
        %3617 = vmatpush1.msra.mxu0 0.0
        %3618 = vmatprep.subr.mxu0 0.0
        %3619 = vmatpush1.msra.mxu0 0.0
        %3620 = vmatprep.subr.mxu0 0.0
        %3621 = vmatpush1.msra.mxu0 0.0
        %3622 = vmatprep.subr.mxu0 0.0
        %3623 = vmatpush1.msra.mxu0 0.0
        %3624 = vmatprep.subr.mxu0 0.0
        %3625 = vmatpush1.msra.mxu0 0.0
        %3626 = vmatprep.subr.mxu0 0.0
        %3627 = vmatpush1.msra.mxu0 0.0
        %3628 = vmatprep.subr.mxu0 0.0
        %3629 = vmatpush1.msra.mxu0 0.0
        %3630 = vmatprep.subr.mxu0 0.0
        %3631 = vmatpush1.msra.mxu0 0.0
        %3632 = vmatprep.subr.mxu0 0.0
        %3633 = vmatpush1.msra.mxu0 %v3599
        %3634 = vmatprep.subr.mxu0 0.0
        %3635 = vmatpush1.msra.mxu0 %v3598
        %3636 = vmatprep.subr.mxu0 0.0
        %3637 = vmatpush1.msra.mxu0 %v3597
        %3638 = vmatprep.subr.mxu0 0.0
        %3639 = vmatpush1.msra.mxu0 %v3596
        %3640 = vmatprep.subr.mxu0 0.0
        %3641 = vmatpush2.msra.mxu0 0.0
        %3642 = vmatprep.subr.mxu0 0.0
        %3643 = vmatpush2.msra.mxu0 0.0
        %3644 = vmatprep.subr.mxu0 0.0
        %3645 = vmatpush2.msra.mxu0 0.0
        %3646 = vmatprep.subr.mxu0 0.0
        %3647 = vmatpush2.msra.mxu0 0.0
        %3648 = vmatprep.subr.mxu0 0.0
        %3649 = vmatpush2.msra.mxu0 0.0
        %3650 = vmatprep.subr.mxu0 0.0
        %3651 = vmatpush2.msra.mxu0 0.0
        %3652 = vmatprep.subr.mxu0 0.0
        %3653 = vmatpush2.msra.mxu0 0.0
        %3654 = vmatprep.subr.mxu0 0.0
        %3655 = vmatpush2.msra.mxu0 0.0
        %3656 = vmatprep.subr.mxu0 0.0
        %3657 = vmatpush2.msra.mxu0 0.0
        %3658 = vmatprep.subr.mxu0 0.0
        %3659 = vmatpush2.msra.mxu0 0.0
        %3660 = vmatprep.subr.mxu0 0.0
        %3661 = vmatpush2.msra.mxu0 0.0
        %3662 = vmatprep.subr.mxu0 0.0
        %3663 = vmatpush2.msra.mxu0 0.0
        %3664 = vmatprep.subr.mxu0 0.0
        %3665 = vmatpush2.msra.mxu0 0.0
        %3666 = vmatprep.subr.mxu0 0.0
        %3667 = vmatpush2.msra.mxu0 0.0
        %3668 = vmatprep.subr.mxu0 0.0
        %3669 = vmatpush2.msra.mxu0 0.0
        %3670 = vmatprep.subr.mxu0 0.0
        %3671 = vmatpush2.msra.mxu0 0.0
        %3672 = vmatprep.mubr.f32.mxu0 0.0
        %3673 = vmatmul.mubr.f32.gmra.mxu0 %v3606
        %v3674 = vpop.f32.mrf.mxu0
        %v3675 = vadd.f32 %v3604, %v3674
        %v3676 = vpop.f32.mrf.mxu0
        %3677 = vdwg.mxu0
        %v3678 = vld [vmem:[#allocation2 + $0x300] sm:$0xff]
        %v3679 = vld [vmem:[#allocation2 + $0x308] sm:$0xff]
        %v3680 = vld [vmem:[#allocation2 + $0x310] sm:$0xff]
        %v3681 = vld [vmem:[#allocation2 + $0x318] sm:$0xff]
        %v3682 = vld [vmem:[#allocation2 + $0x320] sm:$0x1]
        %v3684 = vsel %vm562, %v3593, 0
        %v3687 = vsel %vm562, %v3675, 0
        %3689 = vmatprep.subr.mxu0 0.0
        %3690 = vmatpush1.xpose.msra.mxu0 0.0
        %3691 = vmatprep.subr.mxu0 0.0
        %3692 = vmatpush1.xpose.msra.mxu0 0.0
        %3693 = vmatprep.subr.mxu0 0.0
        %3694 = vmatpush1.xpose.msra.mxu0 0.0
        %3695 = vmatprep.subr.mxu0 0.0
        %3696 = vmatpush1.xpose.msra.mxu0 0.0
        %3697 = vmatprep.subr.mxu0 0.0
        %3698 = vmatpush1.xpose.msra.mxu0 0.0
        %3699 = vmatprep.subr.mxu0 0.0
        %3700 = vmatpush1.xpose.msra.mxu0 0.0
        %3701 = vmatprep.subr.mxu0 0.0
        %3702 = vmatpush1.xpose.msra.mxu0 0.0
        %3703 = vmatprep.subr.mxu0 0.0
        %3704 = vmatpush1.xpose.msra.mxu0 0.0
        %3705 = vmatprep.subr.mxu0 0.0
        %3706 = vmatpush1.xpose.msra.mxu0 0.0
        %3707 = vmatprep.subr.mxu0 0.0
        %3708 = vmatpush1.xpose.msra.mxu0 0.0
        %3709 = vmatprep.subr.mxu0 0.0
        %3710 = vmatpush1.xpose.msra.mxu0 0.0
        %3711 = vmatprep.subr.mxu0 0.0
        %3712 = vmatpush1.xpose.msra.mxu0 0.0
        %3713 = vmatprep.subr.mxu0 0.0
        %3714 = vmatpush1.xpose.msra.mxu0 0.0
        %3715 = vmatprep.subr.mxu0 0.0
        %3716 = vmatpush1.xpose.msra.mxu0 0.0
        %3717 = vmatprep.subr.mxu0 0.0
        %3718 = vmatpush1.xpose.msra.mxu0 0.0
        %3719 = vmatprep.subr.mxu0 0.0
        %3720 = vmatpush1.xpose.msra.mxu0 %v3687
        %3721 = vmatprep.subr.mxu0 0.0
        %3722 = vmatpush2.xpose.msra.mxu0 0.0
        %3723 = vmatprep.subr.mxu0 0.0
        %3724 = vmatpush2.xpose.msra.mxu0 0.0
        %3725 = vmatprep.subr.mxu0 0.0
        %3726 = vmatpush2.xpose.msra.mxu0 0.0
        %3727 = vmatprep.subr.mxu0 0.0
        %3728 = vmatpush2.xpose.msra.mxu0 0.0
        %3729 = vmatprep.subr.mxu0 0.0
        %3730 = vmatpush2.xpose.msra.mxu0 0.0
        %3731 = vmatprep.subr.mxu0 0.0
        %3732 = vmatpush2.xpose.msra.mxu0 0.0
        %3733 = vmatprep.subr.mxu0 0.0
        %3734 = vmatpush2.xpose.msra.mxu0 0.0
        %3735 = vmatprep.subr.mxu0 0.0
        %3736 = vmatpush2.xpose.msra.mxu0 0.0
        %3737 = vmatprep.subr.mxu0 0.0
        %3738 = vmatpush2.xpose.msra.mxu0 0.0
        %3739 = vmatprep.subr.mxu0 0.0
        %3740 = vmatpush2.xpose.msra.mxu0 0.0
        %3741 = vmatprep.subr.mxu0 0.0
        %3742 = vmatpush2.xpose.msra.mxu0 0.0
        %3743 = vmatprep.subr.mxu0 0.0
        %3744 = vmatpush2.xpose.msra.mxu0 0.0
        %3745 = vmatprep.subr.mxu0 0.0
        %3746 = vmatpush2.xpose.msra.mxu0 0.0
        %3747 = vmatprep.subr.mxu0 0.0
        %3748 = vmatpush2.xpose.msra.mxu0 0.0
        %3749 = vmatprep.subr.mxu0 0.0
        %3750 = vmatpush2.xpose.msra.mxu0 0.0
        %3751 = vmatprep.subr.mxu0 0.0
        %3752 = vmatpush2.xpose.msra.mxu0 0.0
        %3753 = vmatprep.mubr.f32.mxu0 0.0
        %3754 = vmatmul.mubr.f32.gmra.mxu0 %v3684
        %v3755 = vpop.f32.mrf.mxu0
        %v3756 = vadd.f32 0.0, %v3755
        %v3757 = vpop.f32.mrf.mxu0
        %3758 = vdwg.mxu0
        %v3759 = vmul.f32 %v3756, 0.35355338
        %v3760 = vsel %vm562, %v3759, -inf
        %3761 = vmax.xlane.f32.xlu0 %v3760
        %v3762 = vpop.xlane.xlu0 %3761
        %v3763 = vsub.f32 %v3759, %v3762
        %v3764 = vmul.f32 %v3763, 1.442695
        %v3765 = vpow.pop %v3764
        %v3766 = vsel %vm562, %v3765, 0.0
        %3767 = vadd.xlane.f32.xlu0 %v3766
        %v3768 = vpop.xlane.xlu0 %3767
        %v3769 = vrcp.pop %v3768
        %v3770 = vmul.f32 %v3765, %v3769
        %3771 = vrot.lane.b32.xlu0 %v3675, 96
        %v3772 = vpop.permute.xlu0 %3771
        %v3775 = vsel %vm562, %v3770, 0
        %3777 = vmatprep.subr.mxu0 0.0
        %3778 = vmatpush1.msra.mxu0 0.0
        %3779 = vmatprep.subr.mxu0 0.0
        %3780 = vmatpush1.msra.mxu0 0.0
        %3781 = vmatprep.subr.mxu0 0.0
        %3782 = vmatpush1.msra.mxu0 0.0
        %3783 = vmatprep.subr.mxu0 0.0
        %3784 = vmatpush1.msra.mxu0 0.0
        %3785 = vmatprep.subr.mxu0 0.0
        %3786 = vmatpush1.msra.mxu0 0.0
        %3787 = vmatprep.subr.mxu0 0.0
        %3788 = vmatpush1.msra.mxu0 0.0
        %3789 = vmatprep.subr.mxu0 0.0
        %3790 = vmatpush1.msra.mxu0 0.0
        %3791 = vmatprep.subr.mxu0 0.0
        %3792 = vmatpush1.msra.mxu0 0.0
        %3793 = vmatprep.subr.mxu0 0.0
        %3794 = vmatpush1.msra.mxu0 0.0
        %3795 = vmatprep.subr.mxu0 0.0
        %3796 = vmatpush1.msra.mxu0 0.0
        %3797 = vmatprep.subr.mxu0 0.0
        %3798 = vmatpush1.msra.mxu0 0.0
        %3799 = vmatprep.subr.mxu0 0.0
        %3800 = vmatpush1.msra.mxu0 0.0
        %3801 = vmatprep.subr.mxu0 0.0
        %3802 = vmatpush1.msra.mxu0 0.0
        %3803 = vmatprep.subr.mxu0 0.0
        %3804 = vmatpush1.msra.mxu0 0.0
        %3805 = vmatprep.subr.mxu0 0.0
        %3806 = vmatpush1.msra.mxu0 0.0
        %3807 = vmatprep.subr.mxu0 0.0
        %3808 = vmatpush1.msra.mxu0 %v3772
        %3809 = vmatprep.subr.mxu0 0.0
        %3810 = vmatpush2.msra.mxu0 0.0
        %3811 = vmatprep.subr.mxu0 0.0
        %3812 = vmatpush2.msra.mxu0 0.0
        %3813 = vmatprep.subr.mxu0 0.0
        %3814 = vmatpush2.msra.mxu0 0.0
        %3815 = vmatprep.subr.mxu0 0.0
        %3816 = vmatpush2.msra.mxu0 0.0
        %3817 = vmatprep.subr.mxu0 0.0
        %3818 = vmatpush2.msra.mxu0 0.0
        %3819 = vmatprep.subr.mxu0 0.0
        %3820 = vmatpush2.msra.mxu0 0.0
        %3821 = vmatprep.subr.mxu0 0.0
        %3822 = vmatpush2.msra.mxu0 0.0
        %3823 = vmatprep.subr.mxu0 0.0
        %3824 = vmatpush2.msra.mxu0 0.0
        %3825 = vmatprep.subr.mxu0 0.0
        %3826 = vmatpush2.msra.mxu0 0.0
        %3827 = vmatprep.subr.mxu0 0.0
        %3828 = vmatpush2.msra.mxu0 0.0
        %3829 = vmatprep.subr.mxu0 0.0
        %3830 = vmatpush2.msra.mxu0 0.0
        %3831 = vmatprep.subr.mxu0 0.0
        %3832 = vmatpush2.msra.mxu0 0.0
        %3833 = vmatprep.subr.mxu0 0.0
        %3834 = vmatpush2.msra.mxu0 0.0
        %3835 = vmatprep.subr.mxu0 0.0
        %3836 = vmatpush2.msra.mxu0 0.0
        %3837 = vmatprep.subr.mxu0 0.0
        %3838 = vmatpush2.msra.mxu0 0.0
        %3839 = vmatprep.subr.mxu0 0.0
        %3840 = vmatpush2.msra.mxu0 0.0
        %3841 = vmatprep.mubr.f32.mxu0 0.0
        %3842 = vmatmul.mubr.f32.gmra.mxu0 %v3775
        %v3843 = vpop.f32.mrf.mxu0
        %v3844 = vadd.f32 0.0, %v3843
        %v3845 = vpop.f32.mrf.mxu0
        %3846 = vdwg.mxu0
        %3847 = vrot.lane.b32.xlu0 %v3593, 120
        %v3848 = vpop.permute.xlu0 %3847
        %3849 = vrot.lane.b32.xlu0 %v3675, 120
        %v3850 = vpop.permute.xlu0 %3849
        %v3851 = vsel %vm562, %v3848, 0
        %v3853 = vsel %vm562, %v3850, 0
        %3855 = vmatprep.subr.mxu0 0.0
        %3856 = vmatpush1.xpose.msra.mxu0 0.0
        %3857 = vmatprep.subr.mxu0 0.0
        %3858 = vmatpush1.xpose.msra.mxu0 0.0
        %3859 = vmatprep.subr.mxu0 0.0
        %3860 = vmatpush1.xpose.msra.mxu0 0.0
        %3861 = vmatprep.subr.mxu0 0.0
        %3862 = vmatpush1.xpose.msra.mxu0 0.0
        %3863 = vmatprep.subr.mxu0 0.0
        %3864 = vmatpush1.xpose.msra.mxu0 0.0
        %3865 = vmatprep.subr.mxu0 0.0
        %3866 = vmatpush1.xpose.msra.mxu0 0.0
        %3867 = vmatprep.subr.mxu0 0.0
        %3868 = vmatpush1.xpose.msra.mxu0 0.0
        %3869 = vmatprep.subr.mxu0 0.0
        %3870 = vmatpush1.xpose.msra.mxu0 0.0
        %3871 = vmatprep.subr.mxu0 0.0
        %3872 = vmatpush1.xpose.msra.mxu0 0.0
        %3873 = vmatprep.subr.mxu0 0.0
        %3874 = vmatpush1.xpose.msra.mxu0 0.0
        %3875 = vmatprep.subr.mxu0 0.0
        %3876 = vmatpush1.xpose.msra.mxu0 0.0
        %3877 = vmatprep.subr.mxu0 0.0
        %3878 = vmatpush1.xpose.msra.mxu0 0.0
        %3879 = vmatprep.subr.mxu0 0.0
        %3880 = vmatpush1.xpose.msra.mxu0 0.0
        %3881 = vmatprep.subr.mxu0 0.0
        %3882 = vmatpush1.xpose.msra.mxu0 0.0
        %3883 = vmatprep.subr.mxu0 0.0
        %3884 = vmatpush1.xpose.msra.mxu0 0.0
        %3885 = vmatprep.subr.mxu0 0.0
        %3886 = vmatpush1.xpose.msra.mxu0 %v3853
        %3887 = vmatprep.subr.mxu0 0.0
        %3888 = vmatpush2.xpose.msra.mxu0 0.0
        %3889 = vmatprep.subr.mxu0 0.0
        %3890 = vmatpush2.xpose.msra.mxu0 0.0
        %3891 = vmatprep.subr.mxu0 0.0
        %3892 = vmatpush2.xpose.msra.mxu0 0.0
        %3893 = vmatprep.subr.mxu0 0.0
        %3894 = vmatpush2.xpose.msra.mxu0 0.0
        %3895 = vmatprep.subr.mxu0 0.0
        %3896 = vmatpush2.xpose.msra.mxu0 0.0
        %3897 = vmatprep.subr.mxu0 0.0
        %3898 = vmatpush2.xpose.msra.mxu0 0.0
        %3899 = vmatprep.subr.mxu0 0.0
        %3900 = vmatpush2.xpose.msra.mxu0 0.0
        %3901 = vmatprep.subr.mxu0 0.0
        %3902 = vmatpush2.xpose.msra.mxu0 0.0
        %3903 = vmatprep.subr.mxu0 0.0
        %3904 = vmatpush2.xpose.msra.mxu0 0.0
        %3905 = vmatprep.subr.mxu0 0.0
        %3906 = vmatpush2.xpose.msra.mxu0 0.0
        %3907 = vmatprep.subr.mxu0 0.0
        %3908 = vmatpush2.xpose.msra.mxu0 0.0
        %3909 = vmatprep.subr.mxu0 0.0
        %3910 = vmatpush2.xpose.msra.mxu0 0.0
        %3911 = vmatprep.subr.mxu0 0.0
        %3912 = vmatpush2.xpose.msra.mxu0 0.0
        %3913 = vmatprep.subr.mxu0 0.0
        %3914 = vmatpush2.xpose.msra.mxu0 0.0
        %3915 = vmatprep.subr.mxu0 0.0
        %3916 = vmatpush2.xpose.msra.mxu0 0.0
        %3917 = vmatprep.subr.mxu0 0.0
        %3918 = vmatpush2.xpose.msra.mxu0 0.0
        %3919 = vmatprep.mubr.f32.mxu0 0.0
        %3920 = vmatmul.mubr.f32.gmra.mxu0 %v3851
        %v3921 = vpop.f32.mrf.mxu0
        %v3922 = vadd.f32 0.0, %v3921
        %v3923 = vpop.f32.mrf.mxu0
        %3924 = vdwg.mxu0
        %v3925 = vmul.f32 %v3922, 0.35355338
        %v3926 = vsel %vm562, %v3925, -inf
        %3927 = vmax.xlane.f32.xlu0 %v3926
        %v3928 = vpop.xlane.xlu0 %3927
        %v3929 = vsub.f32 %v3925, %v3928
        %v3930 = vmul.f32 %v3929, 1.442695
        %v3931 = vpow.pop %v3930
        %v3932 = vsel %vm562, %v3931, 0.0
        %3933 = vadd.xlane.f32.xlu0 %v3932
        %v3934 = vpop.xlane.xlu0 %3933
        %v3935 = vrcp.pop %v3934
        %v3936 = vmul.f32 %v3931, %v3935
        %3937 = vrot.lane.b32.xlu0 %v3675, 88
        %v3938 = vpop.permute.xlu0 %3937
        %v3941 = vsel %vm562, %v3936, 0
        %3943 = vmatprep.subr.mxu0 0.0
        %3944 = vmatpush1.msra.mxu0 0.0
        %3945 = vmatprep.subr.mxu0 0.0
        %3946 = vmatpush1.msra.mxu0 0.0
        %3947 = vmatprep.subr.mxu0 0.0
        %3948 = vmatpush1.msra.mxu0 0.0
        %3949 = vmatprep.subr.mxu0 0.0
        %3950 = vmatpush1.msra.mxu0 0.0
        %3951 = vmatprep.subr.mxu0 0.0
        %3952 = vmatpush1.msra.mxu0 0.0
        %3953 = vmatprep.subr.mxu0 0.0
        %3954 = vmatpush1.msra.mxu0 0.0
        %3955 = vmatprep.subr.mxu0 0.0
        %3956 = vmatpush1.msra.mxu0 0.0
        %3957 = vmatprep.subr.mxu0 0.0
        %3958 = vmatpush1.msra.mxu0 0.0
        %3959 = vmatprep.subr.mxu0 0.0
        %3960 = vmatpush1.msra.mxu0 0.0
        %3961 = vmatprep.subr.mxu0 0.0
        %3962 = vmatpush1.msra.mxu0 0.0
        %3963 = vmatprep.subr.mxu0 0.0
        %3964 = vmatpush1.msra.mxu0 0.0
        %3965 = vmatprep.subr.mxu0 0.0
        %3966 = vmatpush1.msra.mxu0 0.0
        %3967 = vmatprep.subr.mxu0 0.0
        %3968 = vmatpush1.msra.mxu0 0.0
        %3969 = vmatprep.subr.mxu0 0.0
        %3970 = vmatpush1.msra.mxu0 0.0
        %3971 = vmatprep.subr.mxu0 0.0
        %3972 = vmatpush1.msra.mxu0 0.0
        %3973 = vmatprep.subr.mxu0 0.0
        %3974 = vmatpush1.msra.mxu0 %v3938
        %3975 = vmatprep.subr.mxu0 0.0
        %3976 = vmatpush2.msra.mxu0 0.0
        %3977 = vmatprep.subr.mxu0 0.0
        %3978 = vmatpush2.msra.mxu0 0.0
        %3979 = vmatprep.subr.mxu0 0.0
        %3980 = vmatpush2.msra.mxu0 0.0
        %3981 = vmatprep.subr.mxu0 0.0
        %3982 = vmatpush2.msra.mxu0 0.0
        %3983 = vmatprep.subr.mxu0 0.0
        %3984 = vmatpush2.msra.mxu0 0.0
        %3985 = vmatprep.subr.mxu0 0.0
        %3986 = vmatpush2.msra.mxu0 0.0
        %3987 = vmatprep.subr.mxu0 0.0
        %3988 = vmatpush2.msra.mxu0 0.0
        %3989 = vmatprep.subr.mxu0 0.0
        %3990 = vmatpush2.msra.mxu0 0.0
        %3991 = vmatprep.subr.mxu0 0.0
        %3992 = vmatpush2.msra.mxu0 0.0
        %3993 = vmatprep.subr.mxu0 0.0
        %3994 = vmatpush2.msra.mxu0 0.0
        %3995 = vmatprep.subr.mxu0 0.0
        %3996 = vmatpush2.msra.mxu0 0.0
        %3997 = vmatprep.subr.mxu0 0.0
        %3998 = vmatpush2.msra.mxu0 0.0
        %3999 = vmatprep.subr.mxu0 0.0
        %4000 = vmatpush2.msra.mxu0 0.0
        %4001 = vmatprep.subr.mxu0 0.0
        %4002 = vmatpush2.msra.mxu0 0.0
        %4003 = vmatprep.subr.mxu0 0.0
        %4004 = vmatpush2.msra.mxu0 0.0
        %4005 = vmatprep.subr.mxu0 0.0
        %4006 = vmatpush2.msra.mxu0 0.0
        %4007 = vmatprep.mubr.f32.mxu0 0.0
        %4008 = vmatmul.mubr.f32.gmra.mxu0 %v3941
        %v4009 = vpop.f32.mrf.mxu0
        %v4010 = vadd.f32 0.0, %v4009
        %v4011 = vpop.f32.mrf.mxu0
        %4012 = vdwg.mxu0
        %4013 = vrot.lane.b32.xlu0 %v3593, 112
        %v4014 = vpop.permute.xlu0 %4013
        %4015 = vrot.lane.b32.xlu0 %v3675, 112
        %v4016 = vpop.permute.xlu0 %4015
        %v4017 = vsel %vm562, %v4014, 0
        %v4019 = vsel %vm562, %v4016, 0
        %4021 = vmatprep.subr.mxu0 0.0
        %4022 = vmatpush1.xpose.msra.mxu0 0.0
        %4023 = vmatprep.subr.mxu0 0.0
        %4024 = vmatpush1.xpose.msra.mxu0 0.0
        %4025 = vmatprep.subr.mxu0 0.0
        %4026 = vmatpush1.xpose.msra.mxu0 0.0
        %4027 = vmatprep.subr.mxu0 0.0
        %4028 = vmatpush1.xpose.msra.mxu0 0.0
        %4029 = vmatprep.subr.mxu0 0.0
        %4030 = vmatpush1.xpose.msra.mxu0 0.0
        %4031 = vmatprep.subr.mxu0 0.0
        %4032 = vmatpush1.xpose.msra.mxu0 0.0
        %4033 = vmatprep.subr.mxu0 0.0
        %4034 = vmatpush1.xpose.msra.mxu0 0.0
        %4035 = vmatprep.subr.mxu0 0.0
        %4036 = vmatpush1.xpose.msra.mxu0 0.0
        %4037 = vmatprep.subr.mxu0 0.0
        %4038 = vmatpush1.xpose.msra.mxu0 0.0
        %4039 = vmatprep.subr.mxu0 0.0
        %4040 = vmatpush1.xpose.msra.mxu0 0.0
        %4041 = vmatprep.subr.mxu0 0.0
        %4042 = vmatpush1.xpose.msra.mxu0 0.0
        %4043 = vmatprep.subr.mxu0 0.0
        %4044 = vmatpush1.xpose.msra.mxu0 0.0
        %4045 = vmatprep.subr.mxu0 0.0
        %4046 = vmatpush1.xpose.msra.mxu0 0.0
        %4047 = vmatprep.subr.mxu0 0.0
        %4048 = vmatpush1.xpose.msra.mxu0 0.0
        %4049 = vmatprep.subr.mxu0 0.0
        %4050 = vmatpush1.xpose.msra.mxu0 0.0
        %4051 = vmatprep.subr.mxu0 0.0
        %4052 = vmatpush1.xpose.msra.mxu0 %v4019
        %4053 = vmatprep.subr.mxu0 0.0
        %4054 = vmatpush2.xpose.msra.mxu0 0.0
        %4055 = vmatprep.subr.mxu0 0.0
        %4056 = vmatpush2.xpose.msra.mxu0 0.0
        %4057 = vmatprep.subr.mxu0 0.0
        %4058 = vmatpush2.xpose.msra.mxu0 0.0
        %4059 = vmatprep.subr.mxu0 0.0
        %4060 = vmatpush2.xpose.msra.mxu0 0.0
        %4061 = vmatprep.subr.mxu0 0.0
        %4062 = vmatpush2.xpose.msra.mxu0 0.0
        %4063 = vmatprep.subr.mxu0 0.0
        %4064 = vmatpush2.xpose.msra.mxu0 0.0
        %4065 = vmatprep.subr.mxu0 0.0
        %4066 = vmatpush2.xpose.msra.mxu0 0.0
        %4067 = vmatprep.subr.mxu0 0.0
        %4068 = vmatpush2.xpose.msra.mxu0 0.0
        %4069 = vmatprep.subr.mxu0 0.0
        %4070 = vmatpush2.xpose.msra.mxu0 0.0
        %4071 = vmatprep.subr.mxu0 0.0
        %4072 = vmatpush2.xpose.msra.mxu0 0.0
        %4073 = vmatprep.subr.mxu0 0.0
        %4074 = vmatpush2.xpose.msra.mxu0 0.0
        %4075 = vmatprep.subr.mxu0 0.0
        %4076 = vmatpush2.xpose.msra.mxu0 0.0
        %4077 = vmatprep.subr.mxu0 0.0
        %4078 = vmatpush2.xpose.msra.mxu0 0.0
        %4079 = vmatprep.subr.mxu0 0.0
        %4080 = vmatpush2.xpose.msra.mxu0 0.0
        %4081 = vmatprep.subr.mxu0 0.0
        %4082 = vmatpush2.xpose.msra.mxu0 0.0
        %4083 = vmatprep.subr.mxu0 0.0
        %4084 = vmatpush2.xpose.msra.mxu0 0.0
        %4085 = vmatprep.mubr.f32.mxu0 0.0
        %4086 = vmatmul.mubr.f32.gmra.mxu0 %v4017
        %v4087 = vpop.f32.mrf.mxu0
        %v4088 = vadd.f32 0.0, %v4087
        %v4089 = vpop.f32.mrf.mxu0
        %4090 = vdwg.mxu0
        %v4091 = vmul.f32 %v4088, 0.35355338
        %v4092 = vsel %vm562, %v4091, -inf
        %4093 = vmax.xlane.f32.xlu0 %v4092
        %v4094 = vpop.xlane.xlu0 %4093
        %v4095 = vsub.f32 %v4091, %v4094
        %v4096 = vmul.f32 %v4095, 1.442695
        %v4097 = vpow.pop %v4096
        %v4098 = vsel %vm562, %v4097, 0.0
        %4099 = vadd.xlane.f32.xlu0 %v4098
        %v4100 = vpop.xlane.xlu0 %4099
        %v4101 = vrcp.pop %v4100
        %v4102 = vmul.f32 %v4097, %v4101
        %4103 = vrot.lane.b32.xlu0 %v3675, 80
        %v4104 = vpop.permute.xlu0 %4103
        %v4107 = vsel %vm562, %v4102, 0
        %4109 = vmatprep.subr.mxu0 0.0
        %4110 = vmatpush1.msra.mxu0 0.0
        %4111 = vmatprep.subr.mxu0 0.0
        %4112 = vmatpush1.msra.mxu0 0.0
        %4113 = vmatprep.subr.mxu0 0.0
        %4114 = vmatpush1.msra.mxu0 0.0
        %4115 = vmatprep.subr.mxu0 0.0
        %4116 = vmatpush1.msra.mxu0 0.0
        %4117 = vmatprep.subr.mxu0 0.0
        %4118 = vmatpush1.msra.mxu0 0.0
        %4119 = vmatprep.subr.mxu0 0.0
        %4120 = vmatpush1.msra.mxu0 0.0
        %4121 = vmatprep.subr.mxu0 0.0
        %4122 = vmatpush1.msra.mxu0 0.0
        %4123 = vmatprep.subr.mxu0 0.0
        %4124 = vmatpush1.msra.mxu0 0.0
        %4125 = vmatprep.subr.mxu0 0.0
        %4126 = vmatpush1.msra.mxu0 0.0
        %4127 = vmatprep.subr.mxu0 0.0
        %4128 = vmatpush1.msra.mxu0 0.0
        %4129 = vmatprep.subr.mxu0 0.0
        %4130 = vmatpush1.msra.mxu0 0.0
        %4131 = vmatprep.subr.mxu0 0.0
        %4132 = vmatpush1.msra.mxu0 0.0
        %4133 = vmatprep.subr.mxu0 0.0
        %4134 = vmatpush1.msra.mxu0 0.0
        %4135 = vmatprep.subr.mxu0 0.0
        %4136 = vmatpush1.msra.mxu0 0.0
        %4137 = vmatprep.subr.mxu0 0.0
        %4138 = vmatpush1.msra.mxu0 0.0
        %4139 = vmatprep.subr.mxu0 0.0
        %4140 = vmatpush1.msra.mxu0 %v4104
        %4141 = vmatprep.subr.mxu0 0.0
        %4142 = vmatpush2.msra.mxu0 0.0
        %4143 = vmatprep.subr.mxu0 0.0
        %4144 = vmatpush2.msra.mxu0 0.0
        %4145 = vmatprep.subr.mxu0 0.0
        %4146 = vmatpush2.msra.mxu0 0.0
        %4147 = vmatprep.subr.mxu0 0.0
        %4148 = vmatpush2.msra.mxu0 0.0
        %4149 = vmatprep.subr.mxu0 0.0
        %4150 = vmatpush2.msra.mxu0 0.0
        %4151 = vmatprep.subr.mxu0 0.0
        %4152 = vmatpush2.msra.mxu0 0.0
        %4153 = vmatprep.subr.mxu0 0.0
        %4154 = vmatpush2.msra.mxu0 0.0
        %4155 = vmatprep.subr.mxu0 0.0
        %4156 = vmatpush2.msra.mxu0 0.0
        %4157 = vmatprep.subr.mxu0 0.0
        %4158 = vmatpush2.msra.mxu0 0.0
        %4159 = vmatprep.subr.mxu0 0.0
        %4160 = vmatpush2.msra.mxu0 0.0
        %4161 = vmatprep.subr.mxu0 0.0
        %4162 = vmatpush2.msra.mxu0 0.0
        %4163 = vmatprep.subr.mxu0 0.0
        %4164 = vmatpush2.msra.mxu0 0.0
        %4165 = vmatprep.subr.mxu0 0.0
        %4166 = vmatpush2.msra.mxu0 0.0
        %4167 = vmatprep.subr.mxu0 0.0
        %4168 = vmatpush2.msra.mxu0 0.0
        %4169 = vmatprep.subr.mxu0 0.0
        %4170 = vmatpush2.msra.mxu0 0.0
        %4171 = vmatprep.subr.mxu0 0.0
        %4172 = vmatpush2.msra.mxu0 0.0
        %4173 = vmatprep.mubr.f32.mxu0 0.0
        %4174 = vmatmul.mubr.f32.gmra.mxu0 %v4107
        %v4175 = vpop.f32.mrf.mxu0
        %v4176 = vadd.f32 0.0, %v4175
        %v4177 = vpop.f32.mrf.mxu0
        %4178 = vdwg.mxu0
        %4179 = vrot.lane.b32.xlu0 %v3593, 104
        %v4180 = vpop.permute.xlu0 %4179
        %4181 = vrot.lane.b32.xlu0 %v3675, 104
        %v4182 = vpop.permute.xlu0 %4181
        %v4183 = vsel %vm562, %v4180, 0
        %v4185 = vsel %vm562, %v4182, 0
        %4187 = vmatprep.subr.mxu0 0.0
        %4188 = vmatpush1.xpose.msra.mxu0 0.0
        %4189 = vmatprep.subr.mxu0 0.0
        %4190 = vmatpush1.xpose.msra.mxu0 0.0
        %4191 = vmatprep.subr.mxu0 0.0
        %4192 = vmatpush1.xpose.msra.mxu0 0.0
        %4193 = vmatprep.subr.mxu0 0.0
        %4194 = vmatpush1.xpose.msra.mxu0 0.0
        %4195 = vmatprep.subr.mxu0 0.0
        %4196 = vmatpush1.xpose.msra.mxu0 0.0
        %4197 = vmatprep.subr.mxu0 0.0
        %4198 = vmatpush1.xpose.msra.mxu0 0.0
        %4199 = vmatprep.subr.mxu0 0.0
        %4200 = vmatpush1.xpose.msra.mxu0 0.0
        %4201 = vmatprep.subr.mxu0 0.0
        %4202 = vmatpush1.xpose.msra.mxu0 0.0
        %4203 = vmatprep.subr.mxu0 0.0
        %4204 = vmatpush1.xpose.msra.mxu0 0.0
        %4205 = vmatprep.subr.mxu0 0.0
        %4206 = vmatpush1.xpose.msra.mxu0 0.0
        %4207 = vmatprep.subr.mxu0 0.0
        %4208 = vmatpush1.xpose.msra.mxu0 0.0
        %4209 = vmatprep.subr.mxu0 0.0
        %4210 = vmatpush1.xpose.msra.mxu0 0.0
        %4211 = vmatprep.subr.mxu0 0.0
        %4212 = vmatpush1.xpose.msra.mxu0 0.0
        %4213 = vmatprep.subr.mxu0 0.0
        %4214 = vmatpush1.xpose.msra.mxu0 0.0
        %4215 = vmatprep.subr.mxu0 0.0
        %4216 = vmatpush1.xpose.msra.mxu0 0.0
        %4217 = vmatprep.subr.mxu0 0.0
        %4218 = vmatpush1.xpose.msra.mxu0 %v4185
        %4219 = vmatprep.subr.mxu0 0.0
        %4220 = vmatpush2.xpose.msra.mxu0 0.0
        %4221 = vmatprep.subr.mxu0 0.0
        %4222 = vmatpush2.xpose.msra.mxu0 0.0
        %4223 = vmatprep.subr.mxu0 0.0
        %4224 = vmatpush2.xpose.msra.mxu0 0.0
        %4225 = vmatprep.subr.mxu0 0.0
        %4226 = vmatpush2.xpose.msra.mxu0 0.0
        %4227 = vmatprep.subr.mxu0 0.0
        %4228 = vmatpush2.xpose.msra.mxu0 0.0
        %4229 = vmatprep.subr.mxu0 0.0
        %4230 = vmatpush2.xpose.msra.mxu0 0.0
        %4231 = vmatprep.subr.mxu0 0.0
        %4232 = vmatpush2.xpose.msra.mxu0 0.0
        %4233 = vmatprep.subr.mxu0 0.0
        %4234 = vmatpush2.xpose.msra.mxu0 0.0
        %4235 = vmatprep.subr.mxu0 0.0
        %4236 = vmatpush2.xpose.msra.mxu0 0.0
        %4237 = vmatprep.subr.mxu0 0.0
        %4238 = vmatpush2.xpose.msra.mxu0 0.0
        %4239 = vmatprep.subr.mxu0 0.0
        %4240 = vmatpush2.xpose.msra.mxu0 0.0
        %4241 = vmatprep.subr.mxu0 0.0
        %4242 = vmatpush2.xpose.msra.mxu0 0.0
        %4243 = vmatprep.subr.mxu0 0.0
        %4244 = vmatpush2.xpose.msra.mxu0 0.0
        %4245 = vmatprep.subr.mxu0 0.0
        %4246 = vmatpush2.xpose.msra.mxu0 0.0
        %4247 = vmatprep.subr.mxu0 0.0
        %4248 = vmatpush2.xpose.msra.mxu0 0.0
        %4249 = vmatprep.subr.mxu0 0.0
        %4250 = vmatpush2.xpose.msra.mxu0 0.0
        %4251 = vmatprep.mubr.f32.mxu0 0.0
        %4252 = vmatmul.mubr.f32.gmra.mxu0 %v4183
        %v4253 = vpop.f32.mrf.mxu0
        %v4254 = vadd.f32 0.0, %v4253
        %v4255 = vpop.f32.mrf.mxu0
        %4256 = vdwg.mxu0
        %v4257 = vmul.f32 %v4254, 0.35355338
        %v4258 = vsel %vm562, %v4257, -inf
        %4259 = vmax.xlane.f32.xlu0 %v4258
        %v4260 = vpop.xlane.xlu0 %4259
        %v4261 = vsub.f32 %v4257, %v4260
        %v4262 = vmul.f32 %v4261, 1.442695
        %v4263 = vpow.pop %v4262
        %v4264 = vsel %vm562, %v4263, 0.0
        %4265 = vadd.xlane.f32.xlu0 %v4264
        %v4266 = vpop.xlane.xlu0 %4265
        %v4267 = vrcp.pop %v4266
        %v4268 = vmul.f32 %v4263, %v4267
        %4269 = vrot.lane.b32.xlu0 %v3675, 72
        %v4270 = vpop.permute.xlu0 %4269
        %v4273 = vsel %vm562, %v4268, 0
        %4275 = vmatprep.subr.mxu0 0.0
        %4276 = vmatpush1.msra.mxu0 0.0
        %4277 = vmatprep.subr.mxu0 0.0
        %4278 = vmatpush1.msra.mxu0 0.0
        %4279 = vmatprep.subr.mxu0 0.0
        %4280 = vmatpush1.msra.mxu0 0.0
        %4281 = vmatprep.subr.mxu0 0.0
        %4282 = vmatpush1.msra.mxu0 0.0
        %4283 = vmatprep.subr.mxu0 0.0
        %4284 = vmatpush1.msra.mxu0 0.0
        %4285 = vmatprep.subr.mxu0 0.0
        %4286 = vmatpush1.msra.mxu0 0.0
        %4287 = vmatprep.subr.mxu0 0.0
        %4288 = vmatpush1.msra.mxu0 0.0
        %4289 = vmatprep.subr.mxu0 0.0
        %4290 = vmatpush1.msra.mxu0 0.0
        %4291 = vmatprep.subr.mxu0 0.0
        %4292 = vmatpush1.msra.mxu0 0.0
        %4293 = vmatprep.subr.mxu0 0.0
        %4294 = vmatpush1.msra.mxu0 0.0
        %4295 = vmatprep.subr.mxu0 0.0
        %4296 = vmatpush1.msra.mxu0 0.0
        %4297 = vmatprep.subr.mxu0 0.0
        %4298 = vmatpush1.msra.mxu0 0.0
        %4299 = vmatprep.subr.mxu0 0.0
        %4300 = vmatpush1.msra.mxu0 0.0
        %4301 = vmatprep.subr.mxu0 0.0
        %4302 = vmatpush1.msra.mxu0 0.0
        %4303 = vmatprep.subr.mxu0 0.0
        %4304 = vmatpush1.msra.mxu0 0.0
        %4305 = vmatprep.subr.mxu0 0.0
        %4306 = vmatpush1.msra.mxu0 %v4270
        %4307 = vmatprep.subr.mxu0 0.0
        %4308 = vmatpush2.msra.mxu0 0.0
        %4309 = vmatprep.subr.mxu0 0.0
        %4310 = vmatpush2.msra.mxu0 0.0
        %4311 = vmatprep.subr.mxu0 0.0
        %4312 = vmatpush2.msra.mxu0 0.0
        %4313 = vmatprep.subr.mxu0 0.0
        %4314 = vmatpush2.msra.mxu0 0.0
        %4315 = vmatprep.subr.mxu0 0.0
        %4316 = vmatpush2.msra.mxu0 0.0
        %4317 = vmatprep.subr.mxu0 0.0
        %4318 = vmatpush2.msra.mxu0 0.0
        %4319 = vmatprep.subr.mxu0 0.0
        %4320 = vmatpush2.msra.mxu0 0.0
        %4321 = vmatprep.subr.mxu0 0.0
        %4322 = vmatpush2.msra.mxu0 0.0
        %4323 = vmatprep.subr.mxu0 0.0
        %4324 = vmatpush2.msra.mxu0 0.0
        %4325 = vmatprep.subr.mxu0 0.0
        %4326 = vmatpush2.msra.mxu0 0.0
        %4327 = vmatprep.subr.mxu0 0.0
        %4328 = vmatpush2.msra.mxu0 0.0
        %4329 = vmatprep.subr.mxu0 0.0
        %4330 = vmatpush2.msra.mxu0 0.0
        %4331 = vmatprep.subr.mxu0 0.0
        %4332 = vmatpush2.msra.mxu0 0.0
        %4333 = vmatprep.subr.mxu0 0.0
        %4334 = vmatpush2.msra.mxu0 0.0
        %4335 = vmatprep.subr.mxu0 0.0
        %4336 = vmatpush2.msra.mxu0 0.0
        %4337 = vmatprep.subr.mxu0 0.0
        %4338 = vmatpush2.msra.mxu0 0.0
        %4339 = vmatprep.mubr.f32.mxu0 0.0
        %4340 = vmatmul.mubr.f32.gmra.mxu0 %v4273
        %v4341 = vpop.f32.mrf.mxu0
        %v4342 = vadd.f32 0.0, %v4341
        %v4343 = vpop.f32.mrf.mxu0
        %4344 = vdwg.mxu0
        %4346 = vrot.lane.b32.xlu0 %v4010, 8
        %v4347 = vpop.permute.xlu0 %4346
        %4350 = vrot.lane.b32.xlu0 %v4176, 16
        %v4351 = vpop.permute.xlu0 %4350
        %4354 = vrot.lane.b32.xlu0 %v4342, 24
        %v4355 = vpop.permute.xlu0 %4354
        %v4357 = vsel %vm562, %v3844, %v4347
        %v4358 = vsel %vm1246, %v4357, %v4351
        %v4359 = vsel %vm1248, %v4358, %v4355
        %v4360 = vlaneseq
        %v4361 = vshrl.u32 %v4360, 7
        %v4362 = vsub.s32 0, %v4361
        %v4363 = vrot.slane %v3682, %v4362
        %v4365 = vsel %vm480, %v4359, 0
        %4367 = vmatprep.subr.mxu0 0.0
        %4368 = vmatpush1.msra.mxu0 0.0
        %4369 = vmatprep.subr.mxu0 0.0
        %4370 = vmatpush1.msra.mxu0 0.0
        %4371 = vmatprep.subr.mxu0 0.0
        %4372 = vmatpush1.msra.mxu0 0.0
        %4373 = vmatprep.subr.mxu0 0.0
        %4374 = vmatpush1.msra.mxu0 0.0
        %4375 = vmatprep.subr.mxu0 0.0
        %4376 = vmatpush1.msra.mxu0 0.0
        %4377 = vmatprep.subr.mxu0 0.0
        %4378 = vmatpush1.msra.mxu0 0.0
        %4379 = vmatprep.subr.mxu0 0.0
        %4380 = vmatpush1.msra.mxu0 0.0
        %4381 = vmatprep.subr.mxu0 0.0
        %4382 = vmatpush1.msra.mxu0 0.0
        %4383 = vmatprep.subr.mxu0 0.0
        %4384 = vmatpush1.msra.mxu0 0.0
        %4385 = vmatprep.subr.mxu0 0.0
        %4386 = vmatpush1.msra.mxu0 0.0
        %4387 = vmatprep.subr.mxu0 0.0
        %4388 = vmatpush1.msra.mxu0 0.0
        %4389 = vmatprep.subr.mxu0 0.0
        %4390 = vmatpush1.msra.mxu0 0.0
        %4391 = vmatprep.subr.mxu0 0.0
        %4392 = vmatpush1.msra.mxu0 %v3681
        %4393 = vmatprep.subr.mxu0 0.0
        %4394 = vmatpush1.msra.mxu0 %v3680
        %4395 = vmatprep.subr.mxu0 0.0
        %4396 = vmatpush1.msra.mxu0 %v3679
        %4397 = vmatprep.subr.mxu0 0.0
        %4398 = vmatpush1.msra.mxu0 %v3678
        %4399 = vmatprep.subr.mxu0 0.0
        %4400 = vmatpush2.msra.mxu0 0.0
        %4401 = vmatprep.subr.mxu0 0.0
        %4402 = vmatpush2.msra.mxu0 0.0
        %4403 = vmatprep.subr.mxu0 0.0
        %4404 = vmatpush2.msra.mxu0 0.0
        %4405 = vmatprep.subr.mxu0 0.0
        %4406 = vmatpush2.msra.mxu0 0.0
        %4407 = vmatprep.subr.mxu0 0.0
        %4408 = vmatpush2.msra.mxu0 0.0
        %4409 = vmatprep.subr.mxu0 0.0
        %4410 = vmatpush2.msra.mxu0 0.0
        %4411 = vmatprep.subr.mxu0 0.0
        %4412 = vmatpush2.msra.mxu0 0.0
        %4413 = vmatprep.subr.mxu0 0.0
        %4414 = vmatpush2.msra.mxu0 0.0
        %4415 = vmatprep.subr.mxu0 0.0
        %4416 = vmatpush2.msra.mxu0 0.0
        %4417 = vmatprep.subr.mxu0 0.0
        %4418 = vmatpush2.msra.mxu0 0.0
        %4419 = vmatprep.subr.mxu0 0.0
        %4420 = vmatpush2.msra.mxu0 0.0
        %4421 = vmatprep.subr.mxu0 0.0
        %4422 = vmatpush2.msra.mxu0 0.0
        %4423 = vmatprep.subr.mxu0 0.0
        %4424 = vmatpush2.msra.mxu0 0.0
        %4425 = vmatprep.subr.mxu0 0.0
        %4426 = vmatpush2.msra.mxu0 0.0
        %4427 = vmatprep.subr.mxu0 0.0
        %4428 = vmatpush2.msra.mxu0 0.0
        %4429 = vmatprep.subr.mxu0 0.0
        %4430 = vmatpush2.msra.mxu0 0.0
        %4431 = vmatprep.mubr.f32.mxu0 0.0
        %4432 = vmatmul.mubr.f32.gmra.mxu0 %v4365
        %v4433 = vpop.f32.mrf.mxu0
        %v4434 = vadd.f32 %v4363, %v4433
        %v4435 = vpop.f32.mrf.mxu0
        %4436 = vdwg.mxu0
        %v4437 = vadd.f32 %v3513, %v4434
        %v4438 = vld [vmem:[#allocation2 + $0x328] sm:$0x1]
        %v4439 = vld [vmem:[#allocation2 + $0x330] sm:$0x1]
        %v4440 = vsel %vm480, %v4437, 0.0
        %4441 = vadd.xlane.f32.xlu0 %v4440
        %v4442 = vpop.xlane.xlu0 %4441
        %v4443 = vmul.f32 %v4442, %v1333
        %v4444 = vsub.f32 %v4437, %v4443
        %v4445 = vmul.f32 %v4444, %v4444
        %v4446 = vsel %vm480, %v4445, 0.0
        %4447 = vadd.xlane.f32.xlu0 %v4446
        %v4448 = vpop.xlane.xlu0 %4447
        %v4449 = vmul.f32 %v4448, %v1333
        %v4450 = vadd.f32 %v4449, 1e-05
        %v4451 = vrsqrt.pop %v4450
        %v4452 = vmul.f32 %v4444, %v4451
        %v4453 = vlaneseq
        %v4454 = vshrl.u32 %v4453, 7
        %v4455 = vsub.s32 0, %v4454
        %v4456 = vrot.slane %v4438, %v4455
        %v4457 = vmul.f32 %v4452, %v4456
        %v4458 = vlaneseq
        %v4459 = vshrl.u32 %v4458, 7
        %v4460 = vsub.s32 0, %v4459
        %v4461 = vrot.slane %v4439, %v4460
        %v4462 = vadd.f32 %v4457, %v4461
        %v4463 = vld [vmem:[#allocation2 + $0x338] sm:$0xff]
        %v4464 = vld [vmem:[#allocation2 + $0x340] sm:$0xff]
        %v4465 = vld [vmem:[#allocation2 + $0x348] sm:$0xff]
        %v4466 = vld [vmem:[#allocation2 + $0x350] sm:$0xff]
        %v4467 = vld [vmem:[#allocation2 + $0x358] sm:$0x1]
        %v4468 = vld [vmem:[#allocation2 + $0x360] sm:$0xff]
        %v4469 = vld [vmem:[#allocation2 + $0x368] sm:$0xff]
        %v4470 = vld [vmem:[#allocation2 + $0x370] sm:$0xff]
        %v4471 = vld [vmem:[#allocation2 + $0x378] sm:$0xff]
        %v4472 = vld [vmem:[#allocation2 + $0x380] sm:$0xff]
        %v4473 = vld [vmem:[#allocation2 + $0x388] sm:$0xff]
        %v4474 = vld [vmem:[#allocation2 + $0x390] sm:$0xff]
        %v4475 = vld [vmem:[#allocation2 + $0x398] sm:$0xff]
        %v4476 = vld [vmem:[#allocation2 + $0x3a0] sm:$0x1]
        %v4477 = vlaneseq
        %v4478 = vshrl.u32 %v4477, 7
        %v4479 = vsub.s32 0, %v4478
        %v4480 = vrot.slane %v4467, %v4479
        %v4482 = vsel %vm480, %v4462, 0
        %4484 = vmatprep.subr.mxu0 0.0
        %4485 = vmatpush1.msra.mxu0 0.0
        %4486 = vmatprep.subr.mxu0 0.0
        %4487 = vmatpush1.msra.mxu0 0.0
        %4488 = vmatprep.subr.mxu0 0.0
        %4489 = vmatpush1.msra.mxu0 0.0
        %4490 = vmatprep.subr.mxu0 0.0
        %4491 = vmatpush1.msra.mxu0 0.0
        %4492 = vmatprep.subr.mxu0 0.0
        %4493 = vmatpush1.msra.mxu0 0.0
        %4494 = vmatprep.subr.mxu0 0.0
        %4495 = vmatpush1.msra.mxu0 0.0
        %4496 = vmatprep.subr.mxu0 0.0
        %4497 = vmatpush1.msra.mxu0 0.0
        %4498 = vmatprep.subr.mxu0 0.0
        %4499 = vmatpush1.msra.mxu0 0.0
        %4500 = vmatprep.subr.mxu0 0.0
        %4501 = vmatpush1.msra.mxu0 0.0
        %4502 = vmatprep.subr.mxu0 0.0
        %4503 = vmatpush1.msra.mxu0 0.0
        %4504 = vmatprep.subr.mxu0 0.0
        %4505 = vmatpush1.msra.mxu0 0.0
        %4506 = vmatprep.subr.mxu0 0.0
        %4507 = vmatpush1.msra.mxu0 0.0
        %4508 = vmatprep.subr.mxu0 0.0
        %4509 = vmatpush1.msra.mxu0 %v4466
        %4510 = vmatprep.subr.mxu0 0.0
        %4511 = vmatpush1.msra.mxu0 %v4465
        %4512 = vmatprep.subr.mxu0 0.0
        %4513 = vmatpush1.msra.mxu0 %v4464
        %4514 = vmatprep.subr.mxu0 0.0
        %4515 = vmatpush1.msra.mxu0 %v4463
        %4516 = vmatprep.subr.mxu0 0.0
        %4517 = vmatpush2.msra.mxu0 0.0
        %4518 = vmatprep.subr.mxu0 0.0
        %4519 = vmatpush2.msra.mxu0 0.0
        %4520 = vmatprep.subr.mxu0 0.0
        %4521 = vmatpush2.msra.mxu0 0.0
        %4522 = vmatprep.subr.mxu0 0.0
        %4523 = vmatpush2.msra.mxu0 0.0
        %4524 = vmatprep.subr.mxu0 0.0
        %4525 = vmatpush2.msra.mxu0 0.0
        %4526 = vmatprep.subr.mxu0 0.0
        %4527 = vmatpush2.msra.mxu0 0.0
        %4528 = vmatprep.subr.mxu0 0.0
        %4529 = vmatpush2.msra.mxu0 0.0
        %4530 = vmatprep.subr.mxu0 0.0
        %4531 = vmatpush2.msra.mxu0 0.0
        %4532 = vmatprep.subr.mxu0 0.0
        %4533 = vmatpush2.msra.mxu0 0.0
        %4534 = vmatprep.subr.mxu0 0.0
        %4535 = vmatpush2.msra.mxu0 0.0
        %4536 = vmatprep.subr.mxu0 0.0
        %4537 = vmatpush2.msra.mxu0 0.0
        %4538 = vmatprep.subr.mxu0 0.0
        %4539 = vmatpush2.msra.mxu0 0.0
        %4540 = vmatprep.subr.mxu0 0.0
        %4541 = vmatpush2.msra.mxu0 0.0
        %4542 = vmatprep.subr.mxu0 0.0
        %4543 = vmatpush2.msra.mxu0 0.0
        %4544 = vmatprep.subr.mxu0 0.0
        %4545 = vmatpush2.msra.mxu0 0.0
        %4546 = vmatprep.subr.mxu0 0.0
        %4547 = vmatpush2.msra.mxu0 0.0
        %4548 = vmatprep.mubr.f32.mxu0 0.0
        %4549 = vmatmul.mubr.f32.gmra.mxu0 %v4482
        %v4550 = vpop.f32.mrf.mxu0
        %v4551 = vadd.f32 %v4480, %v4550
        %v4552 = vpop.f32.mrf.mxu0
        %4553 = vdwg.mxu0
        %v4554 = vmax.f32 %v4551, 0.0
        %v4555 = vlaneseq
        %v4556 = vshrl.u32 %v4555, 7
        %v4557 = vsub.s32 0, %v4556
        %v4558 = vrot.slane %v4476, %v4557
        %v4560 = vsel %vm1450, %v4554, 0
        %4562 = vmatprep.subr.mxu0 0.0
        %4563 = vmatpush1.msra.mxu0 0.0
        %4564 = vmatprep.subr.mxu0 0.0
        %4565 = vmatpush1.msra.mxu0 0.0
        %4566 = vmatprep.subr.mxu0 0.0
        %4567 = vmatpush1.msra.mxu0 0.0
        %4568 = vmatprep.subr.mxu0 0.0
        %4569 = vmatpush1.msra.mxu0 0.0
        %4570 = vmatprep.subr.mxu0 0.0
        %4571 = vmatpush1.msra.mxu0 0.0
        %4572 = vmatprep.subr.mxu0 0.0
        %4573 = vmatpush1.msra.mxu0 0.0
        %4574 = vmatprep.subr.mxu0 0.0
        %4575 = vmatpush1.msra.mxu0 0.0
        %4576 = vmatprep.subr.mxu0 0.0
        %4577 = vmatpush1.msra.mxu0 0.0
        %4578 = vmatprep.subr.mxu0 0.0
        %4579 = vmatpush1.msra.mxu0 %v4475
        %4580 = vmatprep.subr.mxu0 0.0
        %4581 = vmatpush1.msra.mxu0 %v4474
        %4582 = vmatprep.subr.mxu0 0.0
        %4583 = vmatpush1.msra.mxu0 %v4473
        %4584 = vmatprep.subr.mxu0 0.0
        %4585 = vmatpush1.msra.mxu0 %v4472
        %4586 = vmatprep.subr.mxu0 0.0
        %4587 = vmatpush1.msra.mxu0 %v4471
        %4588 = vmatprep.subr.mxu0 0.0
        %4589 = vmatpush1.msra.mxu0 %v4470
        %4590 = vmatprep.subr.mxu0 0.0
        %4591 = vmatpush1.msra.mxu0 %v4469
        %4592 = vmatprep.subr.mxu0 0.0
        %4593 = vmatpush1.msra.mxu0 %v4468
        %4594 = vmatprep.subr.mxu0 0.0
        %4595 = vmatpush2.msra.mxu0 0.0
        %4596 = vmatprep.subr.mxu0 0.0
        %4597 = vmatpush2.msra.mxu0 0.0
        %4598 = vmatprep.subr.mxu0 0.0
        %4599 = vmatpush2.msra.mxu0 0.0
        %4600 = vmatprep.subr.mxu0 0.0
        %4601 = vmatpush2.msra.mxu0 0.0
        %4602 = vmatprep.subr.mxu0 0.0
        %4603 = vmatpush2.msra.mxu0 0.0
        %4604 = vmatprep.subr.mxu0 0.0
        %4605 = vmatpush2.msra.mxu0 0.0
        %4606 = vmatprep.subr.mxu0 0.0
        %4607 = vmatpush2.msra.mxu0 0.0
        %4608 = vmatprep.subr.mxu0 0.0
        %4609 = vmatpush2.msra.mxu0 0.0
        %4610 = vmatprep.subr.mxu0 0.0
        %4611 = vmatpush2.msra.mxu0 0.0
        %4612 = vmatprep.subr.mxu0 0.0
        %4613 = vmatpush2.msra.mxu0 0.0
        %4614 = vmatprep.subr.mxu0 0.0
        %4615 = vmatpush2.msra.mxu0 0.0
        %4616 = vmatprep.subr.mxu0 0.0
        %4617 = vmatpush2.msra.mxu0 0.0
        %4618 = vmatprep.subr.mxu0 0.0
        %4619 = vmatpush2.msra.mxu0 0.0
        %4620 = vmatprep.subr.mxu0 0.0
        %4621 = vmatpush2.msra.mxu0 0.0
        %4622 = vmatprep.subr.mxu0 0.0
        %4623 = vmatpush2.msra.mxu0 0.0
        %4624 = vmatprep.subr.mxu0 0.0
        %4625 = vmatpush2.msra.mxu0 0.0
        %4626 = vmatprep.mubr.f32.mxu0 0.0
        %4627 = vmatmul.mubr.f32.gmra.mxu0 %v4560
        %v4628 = vpop.f32.mrf.mxu0
        %v4629 = vadd.f32 %v4558, %v4628
        %v4630 = vpop.f32.mrf.mxu0
        %4631 = vdwg.mxu0
        %v4632 = vadd.f32 %v4462, %v4629
        %v4633 = vld [vmem:[#allocation2 + $0x3a8] sm:$0x1]
        %v4634 = vld [vmem:[#allocation2 + $0x3b0] sm:$0x1]
        %v4635 = vsel %vm480, %v4632, 0.0
        %4636 = vadd.xlane.f32.xlu0 %v4635
        %v4637 = vpop.xlane.xlu0 %4636
        %v4638 = vmul.f32 %v4637, %v1333
        %v4639 = vsub.f32 %v4632, %v4638
        %v4640 = vmul.f32 %v4639, %v4639
        %v4641 = vsel %vm480, %v4640, 0.0
        %4642 = vadd.xlane.f32.xlu0 %v4641
        %v4643 = vpop.xlane.xlu0 %4642
        %v4644 = vmul.f32 %v4643, %v1333
        %v4645 = vadd.f32 %v4644, 1e-05
        %v4646 = vrsqrt.pop %v4645
        %v4647 = vmul.f32 %v4639, %v4646
        %v4648 = vlaneseq
        %v4649 = vshrl.u32 %v4648, 7
        %v4650 = vsub.s32 0, %v4649
        %v4651 = vrot.slane %v4633, %v4650
        %v4652 = vmul.f32 %v4647, %v4651
        %v4653 = vlaneseq
        %v4654 = vshrl.u32 %v4653, 7
        %v4655 = vsub.s32 0, %v4654
        %v4656 = vrot.slane %v4634, %v4655
        %v4657 = vadd.f32 %v4652, %v4656
        %v4658 = vld [vmem:[#allocation2 + $0x3b8] sm:$0xff]
        %v4659 = vld [vmem:[#allocation2 + $0x3c0] sm:$0xff]
        %v4660 = vld [vmem:[#allocation2 + $0x3c8] sm:$0xff]
        %v4661 = vld [vmem:[#allocation2 + $0x3d0] sm:$0xff]
        %v4662 = vld [vmem:[#allocation2 + $0x3d8] sm:$0x1]
        %v4663 = vlaneseq
        %v4664 = vshrl.u32 %v4663, 7
        %v4665 = vsub.s32 0, %v4664
        %v4666 = vrot.slane %v4662, %v4665
        %v4668 = vsel %vm480, %v4657, 0
        %4670 = vmatprep.subr.mxu0 0.0
        %4671 = vmatpush1.msra.mxu0 0.0
        %4672 = vmatprep.subr.mxu0 0.0
        %4673 = vmatpush1.msra.mxu0 0.0
        %4674 = vmatprep.subr.mxu0 0.0
        %4675 = vmatpush1.msra.mxu0 0.0
        %4676 = vmatprep.subr.mxu0 0.0
        %4677 = vmatpush1.msra.mxu0 0.0
        %4678 = vmatprep.subr.mxu0 0.0
        %4679 = vmatpush1.msra.mxu0 0.0
        %4680 = vmatprep.subr.mxu0 0.0
        %4681 = vmatpush1.msra.mxu0 0.0
        %4682 = vmatprep.subr.mxu0 0.0
        %4683 = vmatpush1.msra.mxu0 0.0
        %4684 = vmatprep.subr.mxu0 0.0
        %4685 = vmatpush1.msra.mxu0 0.0
        %4686 = vmatprep.subr.mxu0 0.0
        %4687 = vmatpush1.msra.mxu0 0.0
        %4688 = vmatprep.subr.mxu0 0.0
        %4689 = vmatpush1.msra.mxu0 0.0
        %4690 = vmatprep.subr.mxu0 0.0
        %4691 = vmatpush1.msra.mxu0 0.0
        %4692 = vmatprep.subr.mxu0 0.0
        %4693 = vmatpush1.msra.mxu0 0.0
        %4694 = vmatprep.subr.mxu0 0.0
        %4695 = vmatpush1.msra.mxu0 %v4661
        %4696 = vmatprep.subr.mxu0 0.0
        %4697 = vmatpush1.msra.mxu0 %v4660
        %4698 = vmatprep.subr.mxu0 0.0
        %4699 = vmatpush1.msra.mxu0 %v4659
        %4700 = vmatprep.subr.mxu0 0.0
        %4701 = vmatpush1.msra.mxu0 %v4658
        %4702 = vmatprep.subr.mxu0 0.0
        %4703 = vmatpush2.msra.mxu0 0.0
        %4704 = vmatprep.subr.mxu0 0.0
        %4705 = vmatpush2.msra.mxu0 0.0
        %4706 = vmatprep.subr.mxu0 0.0
        %4707 = vmatpush2.msra.mxu0 0.0
        %4708 = vmatprep.subr.mxu0 0.0
        %4709 = vmatpush2.msra.mxu0 0.0
        %4710 = vmatprep.subr.mxu0 0.0
        %4711 = vmatpush2.msra.mxu0 0.0
        %4712 = vmatprep.subr.mxu0 0.0
        %4713 = vmatpush2.msra.mxu0 0.0
        %4714 = vmatprep.subr.mxu0 0.0
        %4715 = vmatpush2.msra.mxu0 0.0
        %4716 = vmatprep.subr.mxu0 0.0
        %4717 = vmatpush2.msra.mxu0 0.0
        %4718 = vmatprep.subr.mxu0 0.0
        %4719 = vmatpush2.msra.mxu0 0.0
        %4720 = vmatprep.subr.mxu0 0.0
        %4721 = vmatpush2.msra.mxu0 0.0
        %4722 = vmatprep.subr.mxu0 0.0
        %4723 = vmatpush2.msra.mxu0 0.0
        %4724 = vmatprep.subr.mxu0 0.0
        %4725 = vmatpush2.msra.mxu0 0.0
        %4726 = vmatprep.subr.mxu0 0.0
        %4727 = vmatpush2.msra.mxu0 0.0
        %4728 = vmatprep.subr.mxu0 0.0
        %4729 = vmatpush2.msra.mxu0 0.0
        %4730 = vmatprep.subr.mxu0 0.0
        %4731 = vmatpush2.msra.mxu0 0.0
        %4732 = vmatprep.subr.mxu0 0.0
        %4733 = vmatpush2.msra.mxu0 0.0
        %4734 = vmatprep.mubr.f32.mxu0 0.0
        %4735 = vmatmul.mubr.f32.gmra.mxu0 %v4668
        %v4736 = vpop.f32.mrf.mxu0
        %v4737 = vadd.f32 %v4666, %v4736
        %v4738 = vpop.f32.mrf.mxu0
        %4739 = vdwg.mxu0
        %v4740 = vld [vmem:[#allocation2 + $0x3e0] sm:$0xff]
        %v4741 = vld [vmem:[#allocation2 + $0x3e8] sm:$0xff]
        %v4742 = vld [vmem:[#allocation2 + $0x3f0] sm:$0xff]
        %v4743 = vld [vmem:[#allocation2 + $0x3f8] sm:$0xff]
        %v4744 = vld [vmem:[#allocation2 + $0x400] sm:$0x1]
        %4746 = vrot.lane.b32.xlu0 %v4737, 96
        %v4747 = vpop.permute.xlu0 %4746
        %v4748 = vsel %vm562, %v4737, 0
        %v4750 = vsel %vm562, %v4747, 0
        %4752 = vmatprep.subr.mxu0 0.0
        %4753 = vmatpush1.xpose.msra.mxu0 0.0
        %4754 = vmatprep.subr.mxu0 0.0
        %4755 = vmatpush1.xpose.msra.mxu0 0.0
        %4756 = vmatprep.subr.mxu0 0.0
        %4757 = vmatpush1.xpose.msra.mxu0 0.0
        %4758 = vmatprep.subr.mxu0 0.0
        %4759 = vmatpush1.xpose.msra.mxu0 0.0
        %4760 = vmatprep.subr.mxu0 0.0
        %4761 = vmatpush1.xpose.msra.mxu0 0.0
        %4762 = vmatprep.subr.mxu0 0.0
        %4763 = vmatpush1.xpose.msra.mxu0 0.0
        %4764 = vmatprep.subr.mxu0 0.0
        %4765 = vmatpush1.xpose.msra.mxu0 0.0
        %4766 = vmatprep.subr.mxu0 0.0
        %4767 = vmatpush1.xpose.msra.mxu0 0.0
        %4768 = vmatprep.subr.mxu0 0.0
        %4769 = vmatpush1.xpose.msra.mxu0 0.0
        %4770 = vmatprep.subr.mxu0 0.0
        %4771 = vmatpush1.xpose.msra.mxu0 0.0
        %4772 = vmatprep.subr.mxu0 0.0
        %4773 = vmatpush1.xpose.msra.mxu0 0.0
        %4774 = vmatprep.subr.mxu0 0.0
        %4775 = vmatpush1.xpose.msra.mxu0 0.0
        %4776 = vmatprep.subr.mxu0 0.0
        %4777 = vmatpush1.xpose.msra.mxu0 0.0
        %4778 = vmatprep.subr.mxu0 0.0
        %4779 = vmatpush1.xpose.msra.mxu0 0.0
        %4780 = vmatprep.subr.mxu0 0.0
        %4781 = vmatpush1.xpose.msra.mxu0 0.0
        %4782 = vmatprep.subr.mxu0 0.0
        %4783 = vmatpush1.xpose.msra.mxu0 %v4750
        %4784 = vmatprep.subr.mxu0 0.0
        %4785 = vmatpush2.xpose.msra.mxu0 0.0
        %4786 = vmatprep.subr.mxu0 0.0
        %4787 = vmatpush2.xpose.msra.mxu0 0.0
        %4788 = vmatprep.subr.mxu0 0.0
        %4789 = vmatpush2.xpose.msra.mxu0 0.0
        %4790 = vmatprep.subr.mxu0 0.0
        %4791 = vmatpush2.xpose.msra.mxu0 0.0
        %4792 = vmatprep.subr.mxu0 0.0
        %4793 = vmatpush2.xpose.msra.mxu0 0.0
        %4794 = vmatprep.subr.mxu0 0.0
        %4795 = vmatpush2.xpose.msra.mxu0 0.0
        %4796 = vmatprep.subr.mxu0 0.0
        %4797 = vmatpush2.xpose.msra.mxu0 0.0
        %4798 = vmatprep.subr.mxu0 0.0
        %4799 = vmatpush2.xpose.msra.mxu0 0.0
        %4800 = vmatprep.subr.mxu0 0.0
        %4801 = vmatpush2.xpose.msra.mxu0 0.0
        %4802 = vmatprep.subr.mxu0 0.0
        %4803 = vmatpush2.xpose.msra.mxu0 0.0
        %4804 = vmatprep.subr.mxu0 0.0
        %4805 = vmatpush2.xpose.msra.mxu0 0.0
        %4806 = vmatprep.subr.mxu0 0.0
        %4807 = vmatpush2.xpose.msra.mxu0 0.0
        %4808 = vmatprep.subr.mxu0 0.0
        %4809 = vmatpush2.xpose.msra.mxu0 0.0
        %4810 = vmatprep.subr.mxu0 0.0
        %4811 = vmatpush2.xpose.msra.mxu0 0.0
        %4812 = vmatprep.subr.mxu0 0.0
        %4813 = vmatpush2.xpose.msra.mxu0 0.0
        %4814 = vmatprep.subr.mxu0 0.0
        %4815 = vmatpush2.xpose.msra.mxu0 0.0
        %4816 = vmatprep.mubr.f32.mxu0 0.0
        %4817 = vmatmul.mubr.f32.gmra.mxu0 %v4748
        %v4818 = vpop.f32.mrf.mxu0
        %v4819 = vadd.f32 0.0, %v4818
        %v4820 = vpop.f32.mrf.mxu0
        %4821 = vdwg.mxu0
        %v4822 = vmul.f32 %v4819, 0.35355338
        %v4823 = vadd.f32 %v4822, %v470
        %v4824 = vsel %vm562, %v4823, -inf
        %4825 = vmax.xlane.f32.xlu0 %v4824
        %v4826 = vpop.xlane.xlu0 %4825
        %v4827 = vsub.f32 %v4823, %v4826
        %v4828 = vmul.f32 %v4827, 1.442695
        %v4829 = vpow.pop %v4828
        %v4830 = vsel %vm562, %v4829, 0.0
        %4831 = vadd.xlane.f32.xlu0 %v4830
        %v4832 = vpop.xlane.xlu0 %4831
        %v4833 = vrcp.pop %v4832
        %v4834 = vmul.f32 %v4829, %v4833
        %4835 = vrot.lane.b32.xlu0 %v4737, 64
        %v4836 = vpop.permute.xlu0 %4835
        %v4839 = vsel %vm562, %v4834, 0
        %4841 = vmatprep.subr.mxu0 0.0
        %4842 = vmatpush1.msra.mxu0 0.0
        %4843 = vmatprep.subr.mxu0 0.0
        %4844 = vmatpush1.msra.mxu0 0.0
        %4845 = vmatprep.subr.mxu0 0.0
        %4846 = vmatpush1.msra.mxu0 0.0
        %4847 = vmatprep.subr.mxu0 0.0
        %4848 = vmatpush1.msra.mxu0 0.0
        %4849 = vmatprep.subr.mxu0 0.0
        %4850 = vmatpush1.msra.mxu0 0.0
        %4851 = vmatprep.subr.mxu0 0.0
        %4852 = vmatpush1.msra.mxu0 0.0
        %4853 = vmatprep.subr.mxu0 0.0
        %4854 = vmatpush1.msra.mxu0 0.0
        %4855 = vmatprep.subr.mxu0 0.0
        %4856 = vmatpush1.msra.mxu0 0.0
        %4857 = vmatprep.subr.mxu0 0.0
        %4858 = vmatpush1.msra.mxu0 0.0
        %4859 = vmatprep.subr.mxu0 0.0
        %4860 = vmatpush1.msra.mxu0 0.0
        %4861 = vmatprep.subr.mxu0 0.0
        %4862 = vmatpush1.msra.mxu0 0.0
        %4863 = vmatprep.subr.mxu0 0.0
        %4864 = vmatpush1.msra.mxu0 0.0
        %4865 = vmatprep.subr.mxu0 0.0
        %4866 = vmatpush1.msra.mxu0 0.0
        %4867 = vmatprep.subr.mxu0 0.0
        %4868 = vmatpush1.msra.mxu0 0.0
        %4869 = vmatprep.subr.mxu0 0.0
        %4870 = vmatpush1.msra.mxu0 0.0
        %4871 = vmatprep.subr.mxu0 0.0
        %4872 = vmatpush1.msra.mxu0 %v4836
        %4873 = vmatprep.subr.mxu0 0.0
        %4874 = vmatpush2.msra.mxu0 0.0
        %4875 = vmatprep.subr.mxu0 0.0
        %4876 = vmatpush2.msra.mxu0 0.0
        %4877 = vmatprep.subr.mxu0 0.0
        %4878 = vmatpush2.msra.mxu0 0.0
        %4879 = vmatprep.subr.mxu0 0.0
        %4880 = vmatpush2.msra.mxu0 0.0
        %4881 = vmatprep.subr.mxu0 0.0
        %4882 = vmatpush2.msra.mxu0 0.0
        %4883 = vmatprep.subr.mxu0 0.0
        %4884 = vmatpush2.msra.mxu0 0.0
        %4885 = vmatprep.subr.mxu0 0.0
        %4886 = vmatpush2.msra.mxu0 0.0
        %4887 = vmatprep.subr.mxu0 0.0
        %4888 = vmatpush2.msra.mxu0 0.0
        %4889 = vmatprep.subr.mxu0 0.0
        %4890 = vmatpush2.msra.mxu0 0.0
        %4891 = vmatprep.subr.mxu0 0.0
        %4892 = vmatpush2.msra.mxu0 0.0
        %4893 = vmatprep.subr.mxu0 0.0
        %4894 = vmatpush2.msra.mxu0 0.0
        %4895 = vmatprep.subr.mxu0 0.0
        %4896 = vmatpush2.msra.mxu0 0.0
        %4897 = vmatprep.subr.mxu0 0.0
        %4898 = vmatpush2.msra.mxu0 0.0
        %4899 = vmatprep.subr.mxu0 0.0
        %4900 = vmatpush2.msra.mxu0 0.0
        %4901 = vmatprep.subr.mxu0 0.0
        %4902 = vmatpush2.msra.mxu0 0.0
        %4903 = vmatprep.subr.mxu0 0.0
        %4904 = vmatpush2.msra.mxu0 0.0
        %4905 = vmatprep.mubr.f32.mxu0 0.0
        %4906 = vmatmul.mubr.f32.gmra.mxu0 %v4839
        %v4907 = vpop.f32.mrf.mxu0
        %v4908 = vadd.f32 0.0, %v4907
        %v4909 = vpop.f32.mrf.mxu0
        %4910 = vdwg.mxu0
        %4911 = vrot.lane.b32.xlu0 %v4737, 120
        %v4912 = vpop.permute.xlu0 %4911
        %4913 = vrot.lane.b32.xlu0 %v4737, 88
        %v4914 = vpop.permute.xlu0 %4913
        %v4915 = vsel %vm562, %v4912, 0
        %v4917 = vsel %vm562, %v4914, 0
        %4919 = vmatprep.subr.mxu0 0.0
        %4920 = vmatpush1.xpose.msra.mxu0 0.0
        %4921 = vmatprep.subr.mxu0 0.0
        %4922 = vmatpush1.xpose.msra.mxu0 0.0
        %4923 = vmatprep.subr.mxu0 0.0
        %4924 = vmatpush1.xpose.msra.mxu0 0.0
        %4925 = vmatprep.subr.mxu0 0.0
        %4926 = vmatpush1.xpose.msra.mxu0 0.0
        %4927 = vmatprep.subr.mxu0 0.0
        %4928 = vmatpush1.xpose.msra.mxu0 0.0
        %4929 = vmatprep.subr.mxu0 0.0
        %4930 = vmatpush1.xpose.msra.mxu0 0.0
        %4931 = vmatprep.subr.mxu0 0.0
        %4932 = vmatpush1.xpose.msra.mxu0 0.0
        %4933 = vmatprep.subr.mxu0 0.0
        %4934 = vmatpush1.xpose.msra.mxu0 0.0
        %4935 = vmatprep.subr.mxu0 0.0
        %4936 = vmatpush1.xpose.msra.mxu0 0.0
        %4937 = vmatprep.subr.mxu0 0.0
        %4938 = vmatpush1.xpose.msra.mxu0 0.0
        %4939 = vmatprep.subr.mxu0 0.0
        %4940 = vmatpush1.xpose.msra.mxu0 0.0
        %4941 = vmatprep.subr.mxu0 0.0
        %4942 = vmatpush1.xpose.msra.mxu0 0.0
        %4943 = vmatprep.subr.mxu0 0.0
        %4944 = vmatpush1.xpose.msra.mxu0 0.0
        %4945 = vmatprep.subr.mxu0 0.0
        %4946 = vmatpush1.xpose.msra.mxu0 0.0
        %4947 = vmatprep.subr.mxu0 0.0
        %4948 = vmatpush1.xpose.msra.mxu0 0.0
        %4949 = vmatprep.subr.mxu0 0.0
        %4950 = vmatpush1.xpose.msra.mxu0 %v4917
        %4951 = vmatprep.subr.mxu0 0.0
        %4952 = vmatpush2.xpose.msra.mxu0 0.0
        %4953 = vmatprep.subr.mxu0 0.0
        %4954 = vmatpush2.xpose.msra.mxu0 0.0
        %4955 = vmatprep.subr.mxu0 0.0
        %4956 = vmatpush2.xpose.msra.mxu0 0.0
        %4957 = vmatprep.subr.mxu0 0.0
        %4958 = vmatpush2.xpose.msra.mxu0 0.0
        %4959 = vmatprep.subr.mxu0 0.0
        %4960 = vmatpush2.xpose.msra.mxu0 0.0
        %4961 = vmatprep.subr.mxu0 0.0
        %4962 = vmatpush2.xpose.msra.mxu0 0.0
        %4963 = vmatprep.subr.mxu0 0.0
        %4964 = vmatpush2.xpose.msra.mxu0 0.0
        %4965 = vmatprep.subr.mxu0 0.0
        %4966 = vmatpush2.xpose.msra.mxu0 0.0
        %4967 = vmatprep.subr.mxu0 0.0
        %4968 = vmatpush2.xpose.msra.mxu0 0.0
        %4969 = vmatprep.subr.mxu0 0.0
        %4970 = vmatpush2.xpose.msra.mxu0 0.0
        %4971 = vmatprep.subr.mxu0 0.0
        %4972 = vmatpush2.xpose.msra.mxu0 0.0
        %4973 = vmatprep.subr.mxu0 0.0
        %4974 = vmatpush2.xpose.msra.mxu0 0.0
        %4975 = vmatprep.subr.mxu0 0.0
        %4976 = vmatpush2.xpose.msra.mxu0 0.0
        %4977 = vmatprep.subr.mxu0 0.0
        %4978 = vmatpush2.xpose.msra.mxu0 0.0
        %4979 = vmatprep.subr.mxu0 0.0
        %4980 = vmatpush2.xpose.msra.mxu0 0.0
        %4981 = vmatprep.subr.mxu0 0.0
        %4982 = vmatpush2.xpose.msra.mxu0 0.0
        %4983 = vmatprep.mubr.f32.mxu0 0.0
        %4984 = vmatmul.mubr.f32.gmra.mxu0 %v4915
        %v4985 = vpop.f32.mrf.mxu0
        %v4986 = vadd.f32 0.0, %v4985
        %v4987 = vpop.f32.mrf.mxu0
        %4988 = vdwg.mxu0
        %v4989 = vmul.f32 %v4986, 0.35355338
        %v4990 = vadd.f32 %v4989, %v470
        %v4991 = vsel %vm562, %v4990, -inf
        %4992 = vmax.xlane.f32.xlu0 %v4991
        %v4993 = vpop.xlane.xlu0 %4992
        %v4994 = vsub.f32 %v4990, %v4993
        %v4995 = vmul.f32 %v4994, 1.442695
        %v4996 = vpow.pop %v4995
        %v4997 = vsel %vm562, %v4996, 0.0
        %4998 = vadd.xlane.f32.xlu0 %v4997
        %v4999 = vpop.xlane.xlu0 %4998
        %v5000 = vrcp.pop %v4999
        %v5001 = vmul.f32 %v4996, %v5000
        %5002 = vrot.lane.b32.xlu0 %v4737, 56
        %v5003 = vpop.permute.xlu0 %5002
        %v5006 = vsel %vm562, %v5001, 0
        %5008 = vmatprep.subr.mxu0 0.0
        %5009 = vmatpush1.msra.mxu0 0.0
        %5010 = vmatprep.subr.mxu0 0.0
        %5011 = vmatpush1.msra.mxu0 0.0
        %5012 = vmatprep.subr.mxu0 0.0
        %5013 = vmatpush1.msra.mxu0 0.0
        %5014 = vmatprep.subr.mxu0 0.0
        %5015 = vmatpush1.msra.mxu0 0.0
        %5016 = vmatprep.subr.mxu0 0.0
        %5017 = vmatpush1.msra.mxu0 0.0
        %5018 = vmatprep.subr.mxu0 0.0
        %5019 = vmatpush1.msra.mxu0 0.0
        %5020 = vmatprep.subr.mxu0 0.0
        %5021 = vmatpush1.msra.mxu0 0.0
        %5022 = vmatprep.subr.mxu0 0.0
        %5023 = vmatpush1.msra.mxu0 0.0
        %5024 = vmatprep.subr.mxu0 0.0
        %5025 = vmatpush1.msra.mxu0 0.0
        %5026 = vmatprep.subr.mxu0 0.0
        %5027 = vmatpush1.msra.mxu0 0.0
        %5028 = vmatprep.subr.mxu0 0.0
        %5029 = vmatpush1.msra.mxu0 0.0
        %5030 = vmatprep.subr.mxu0 0.0
        %5031 = vmatpush1.msra.mxu0 0.0
        %5032 = vmatprep.subr.mxu0 0.0
        %5033 = vmatpush1.msra.mxu0 0.0
        %5034 = vmatprep.subr.mxu0 0.0
        %5035 = vmatpush1.msra.mxu0 0.0
        %5036 = vmatprep.subr.mxu0 0.0
        %5037 = vmatpush1.msra.mxu0 0.0
        %5038 = vmatprep.subr.mxu0 0.0
        %5039 = vmatpush1.msra.mxu0 %v5003
        %5040 = vmatprep.subr.mxu0 0.0
        %5041 = vmatpush2.msra.mxu0 0.0
        %5042 = vmatprep.subr.mxu0 0.0
        %5043 = vmatpush2.msra.mxu0 0.0
        %5044 = vmatprep.subr.mxu0 0.0
        %5045 = vmatpush2.msra.mxu0 0.0
        %5046 = vmatprep.subr.mxu0 0.0
        %5047 = vmatpush2.msra.mxu0 0.0
        %5048 = vmatprep.subr.mxu0 0.0
        %5049 = vmatpush2.msra.mxu0 0.0
        %5050 = vmatprep.subr.mxu0 0.0
        %5051 = vmatpush2.msra.mxu0 0.0
        %5052 = vmatprep.subr.mxu0 0.0
        %5053 = vmatpush2.msra.mxu0 0.0
        %5054 = vmatprep.subr.mxu0 0.0
        %5055 = vmatpush2.msra.mxu0 0.0
        %5056 = vmatprep.subr.mxu0 0.0
        %5057 = vmatpush2.msra.mxu0 0.0
        %5058 = vmatprep.subr.mxu0 0.0
        %5059 = vmatpush2.msra.mxu0 0.0
        %5060 = vmatprep.subr.mxu0 0.0
        %5061 = vmatpush2.msra.mxu0 0.0
        %5062 = vmatprep.subr.mxu0 0.0
        %5063 = vmatpush2.msra.mxu0 0.0
        %5064 = vmatprep.subr.mxu0 0.0
        %5065 = vmatpush2.msra.mxu0 0.0
        %5066 = vmatprep.subr.mxu0 0.0
        %5067 = vmatpush2.msra.mxu0 0.0
        %5068 = vmatprep.subr.mxu0 0.0
        %5069 = vmatpush2.msra.mxu0 0.0
        %5070 = vmatprep.subr.mxu0 0.0
        %5071 = vmatpush2.msra.mxu0 0.0
        %5072 = vmatprep.mubr.f32.mxu0 0.0
        %5073 = vmatmul.mubr.f32.gmra.mxu0 %v5006
        %v5074 = vpop.f32.mrf.mxu0
        %v5075 = vadd.f32 0.0, %v5074
        %v5076 = vpop.f32.mrf.mxu0
        %5077 = vdwg.mxu0
        %5078 = vrot.lane.b32.xlu0 %v4737, 112
        %v5079 = vpop.permute.xlu0 %5078
        %5080 = vrot.lane.b32.xlu0 %v4737, 80
        %v5081 = vpop.permute.xlu0 %5080
        %v5082 = vsel %vm562, %v5079, 0
        %v5084 = vsel %vm562, %v5081, 0
        %5086 = vmatprep.subr.mxu0 0.0
        %5087 = vmatpush1.xpose.msra.mxu0 0.0
        %5088 = vmatprep.subr.mxu0 0.0
        %5089 = vmatpush1.xpose.msra.mxu0 0.0
        %5090 = vmatprep.subr.mxu0 0.0
        %5091 = vmatpush1.xpose.msra.mxu0 0.0
        %5092 = vmatprep.subr.mxu0 0.0
        %5093 = vmatpush1.xpose.msra.mxu0 0.0
        %5094 = vmatprep.subr.mxu0 0.0
        %5095 = vmatpush1.xpose.msra.mxu0 0.0
        %5096 = vmatprep.subr.mxu0 0.0
        %5097 = vmatpush1.xpose.msra.mxu0 0.0
        %5098 = vmatprep.subr.mxu0 0.0
        %5099 = vmatpush1.xpose.msra.mxu0 0.0
        %5100 = vmatprep.subr.mxu0 0.0
        %5101 = vmatpush1.xpose.msra.mxu0 0.0
        %5102 = vmatprep.subr.mxu0 0.0
        %5103 = vmatpush1.xpose.msra.mxu0 0.0
        %5104 = vmatprep.subr.mxu0 0.0
        %5105 = vmatpush1.xpose.msra.mxu0 0.0
        %5106 = vmatprep.subr.mxu0 0.0
        %5107 = vmatpush1.xpose.msra.mxu0 0.0
        %5108 = vmatprep.subr.mxu0 0.0
        %5109 = vmatpush1.xpose.msra.mxu0 0.0
        %5110 = vmatprep.subr.mxu0 0.0
        %5111 = vmatpush1.xpose.msra.mxu0 0.0
        %5112 = vmatprep.subr.mxu0 0.0
        %5113 = vmatpush1.xpose.msra.mxu0 0.0
        %5114 = vmatprep.subr.mxu0 0.0
        %5115 = vmatpush1.xpose.msra.mxu0 0.0
        %5116 = vmatprep.subr.mxu0 0.0
        %5117 = vmatpush1.xpose.msra.mxu0 %v5084
        %5118 = vmatprep.subr.mxu0 0.0
        %5119 = vmatpush2.xpose.msra.mxu0 0.0
        %5120 = vmatprep.subr.mxu0 0.0
        %5121 = vmatpush2.xpose.msra.mxu0 0.0
        %5122 = vmatprep.subr.mxu0 0.0
        %5123 = vmatpush2.xpose.msra.mxu0 0.0
        %5124 = vmatprep.subr.mxu0 0.0
        %5125 = vmatpush2.xpose.msra.mxu0 0.0
        %5126 = vmatprep.subr.mxu0 0.0
        %5127 = vmatpush2.xpose.msra.mxu0 0.0
        %5128 = vmatprep.subr.mxu0 0.0
        %5129 = vmatpush2.xpose.msra.mxu0 0.0
        %5130 = vmatprep.subr.mxu0 0.0
        %5131 = vmatpush2.xpose.msra.mxu0 0.0
        %5132 = vmatprep.subr.mxu0 0.0
        %5133 = vmatpush2.xpose.msra.mxu0 0.0
        %5134 = vmatprep.subr.mxu0 0.0
        %5135 = vmatpush2.xpose.msra.mxu0 0.0
        %5136 = vmatprep.subr.mxu0 0.0
        %5137 = vmatpush2.xpose.msra.mxu0 0.0
        %5138 = vmatprep.subr.mxu0 0.0
        %5139 = vmatpush2.xpose.msra.mxu0 0.0
        %5140 = vmatprep.subr.mxu0 0.0
        %5141 = vmatpush2.xpose.msra.mxu0 0.0
        %5142 = vmatprep.subr.mxu0 0.0
        %5143 = vmatpush2.xpose.msra.mxu0 0.0
        %5144 = vmatprep.subr.mxu0 0.0
        %5145 = vmatpush2.xpose.msra.mxu0 0.0
        %5146 = vmatprep.subr.mxu0 0.0
        %5147 = vmatpush2.xpose.msra.mxu0 0.0
        %5148 = vmatprep.subr.mxu0 0.0
        %5149 = vmatpush2.xpose.msra.mxu0 0.0
        %5150 = vmatprep.mubr.f32.mxu0 0.0
        %5151 = vmatmul.mubr.f32.gmra.mxu0 %v5082
        %v5152 = vpop.f32.mrf.mxu0
        %v5153 = vadd.f32 0.0, %v5152
        %v5154 = vpop.f32.mrf.mxu0
        %5155 = vdwg.mxu0
        %v5156 = vmul.f32 %v5153, 0.35355338
        %v5157 = vadd.f32 %v5156, %v470
        %v5158 = vsel %vm562, %v5157, -inf
        %5159 = vmax.xlane.f32.xlu0 %v5158
        %v5160 = vpop.xlane.xlu0 %5159
        %v5161 = vsub.f32 %v5157, %v5160
        %v5162 = vmul.f32 %v5161, 1.442695
        %v5163 = vpow.pop %v5162
        %v5164 = vsel %vm562, %v5163, 0.0
        %5165 = vadd.xlane.f32.xlu0 %v5164
        %v5166 = vpop.xlane.xlu0 %5165
        %v5167 = vrcp.pop %v5166
        %v5168 = vmul.f32 %v5163, %v5167
        %5169 = vrot.lane.b32.xlu0 %v4737, 48
        %v5170 = vpop.permute.xlu0 %5169
        %v5173 = vsel %vm562, %v5168, 0
        %5175 = vmatprep.subr.mxu0 0.0
        %5176 = vmatpush1.msra.mxu0 0.0
        %5177 = vmatprep.subr.mxu0 0.0
        %5178 = vmatpush1.msra.mxu0 0.0
        %5179 = vmatprep.subr.mxu0 0.0
        %5180 = vmatpush1.msra.mxu0 0.0
        %5181 = vmatprep.subr.mxu0 0.0
        %5182 = vmatpush1.msra.mxu0 0.0
        %5183 = vmatprep.subr.mxu0 0.0
        %5184 = vmatpush1.msra.mxu0 0.0
        %5185 = vmatprep.subr.mxu0 0.0
        %5186 = vmatpush1.msra.mxu0 0.0
        %5187 = vmatprep.subr.mxu0 0.0
        %5188 = vmatpush1.msra.mxu0 0.0
        %5189 = vmatprep.subr.mxu0 0.0
        %5190 = vmatpush1.msra.mxu0 0.0
        %5191 = vmatprep.subr.mxu0 0.0
        %5192 = vmatpush1.msra.mxu0 0.0
        %5193 = vmatprep.subr.mxu0 0.0
        %5194 = vmatpush1.msra.mxu0 0.0
        %5195 = vmatprep.subr.mxu0 0.0
        %5196 = vmatpush1.msra.mxu0 0.0
        %5197 = vmatprep.subr.mxu0 0.0
        %5198 = vmatpush1.msra.mxu0 0.0
        %5199 = vmatprep.subr.mxu0 0.0
        %5200 = vmatpush1.msra.mxu0 0.0
        %5201 = vmatprep.subr.mxu0 0.0
        %5202 = vmatpush1.msra.mxu0 0.0
        %5203 = vmatprep.subr.mxu0 0.0
        %5204 = vmatpush1.msra.mxu0 0.0
        %5205 = vmatprep.subr.mxu0 0.0
        %5206 = vmatpush1.msra.mxu0 %v5170
        %5207 = vmatprep.subr.mxu0 0.0
        %5208 = vmatpush2.msra.mxu0 0.0
        %5209 = vmatprep.subr.mxu0 0.0
        %5210 = vmatpush2.msra.mxu0 0.0
        %5211 = vmatprep.subr.mxu0 0.0
        %5212 = vmatpush2.msra.mxu0 0.0
        %5213 = vmatprep.subr.mxu0 0.0
        %5214 = vmatpush2.msra.mxu0 0.0
        %5215 = vmatprep.subr.mxu0 0.0
        %5216 = vmatpush2.msra.mxu0 0.0
        %5217 = vmatprep.subr.mxu0 0.0
        %5218 = vmatpush2.msra.mxu0 0.0
        %5219 = vmatprep.subr.mxu0 0.0
        %5220 = vmatpush2.msra.mxu0 0.0
        %5221 = vmatprep.subr.mxu0 0.0
        %5222 = vmatpush2.msra.mxu0 0.0
        %5223 = vmatprep.subr.mxu0 0.0
        %5224 = vmatpush2.msra.mxu0 0.0
        %5225 = vmatprep.subr.mxu0 0.0
        %5226 = vmatpush2.msra.mxu0 0.0
        %5227 = vmatprep.subr.mxu0 0.0
        %5228 = vmatpush2.msra.mxu0 0.0
        %5229 = vmatprep.subr.mxu0 0.0
        %5230 = vmatpush2.msra.mxu0 0.0
        %5231 = vmatprep.subr.mxu0 0.0
        %5232 = vmatpush2.msra.mxu0 0.0
        %5233 = vmatprep.subr.mxu0 0.0
        %5234 = vmatpush2.msra.mxu0 0.0
        %5235 = vmatprep.subr.mxu0 0.0
        %5236 = vmatpush2.msra.mxu0 0.0
        %5237 = vmatprep.subr.mxu0 0.0
        %5238 = vmatpush2.msra.mxu0 0.0
        %5239 = vmatprep.mubr.f32.mxu0 0.0
        %5240 = vmatmul.mubr.f32.gmra.mxu0 %v5173
        %v5241 = vpop.f32.mrf.mxu0
        %v5242 = vadd.f32 0.0, %v5241
        %v5243 = vpop.f32.mrf.mxu0
        %5244 = vdwg.mxu0
        %5245 = vrot.lane.b32.xlu0 %v4737, 104
        %v5246 = vpop.permute.xlu0 %5245
        %5247 = vrot.lane.b32.xlu0 %v4737, 72
        %v5248 = vpop.permute.xlu0 %5247
        %v5249 = vsel %vm562, %v5246, 0
        %v5251 = vsel %vm562, %v5248, 0
        %5253 = vmatprep.subr.mxu0 0.0
        %5254 = vmatpush1.xpose.msra.mxu0 0.0
        %5255 = vmatprep.subr.mxu0 0.0
        %5256 = vmatpush1.xpose.msra.mxu0 0.0
        %5257 = vmatprep.subr.mxu0 0.0
        %5258 = vmatpush1.xpose.msra.mxu0 0.0
        %5259 = vmatprep.subr.mxu0 0.0
        %5260 = vmatpush1.xpose.msra.mxu0 0.0
        %5261 = vmatprep.subr.mxu0 0.0
        %5262 = vmatpush1.xpose.msra.mxu0 0.0
        %5263 = vmatprep.subr.mxu0 0.0
        %5264 = vmatpush1.xpose.msra.mxu0 0.0
        %5265 = vmatprep.subr.mxu0 0.0
        %5266 = vmatpush1.xpose.msra.mxu0 0.0
        %5267 = vmatprep.subr.mxu0 0.0
        %5268 = vmatpush1.xpose.msra.mxu0 0.0
        %5269 = vmatprep.subr.mxu0 0.0
        %5270 = vmatpush1.xpose.msra.mxu0 0.0
        %5271 = vmatprep.subr.mxu0 0.0
        %5272 = vmatpush1.xpose.msra.mxu0 0.0
        %5273 = vmatprep.subr.mxu0 0.0
        %5274 = vmatpush1.xpose.msra.mxu0 0.0
        %5275 = vmatprep.subr.mxu0 0.0
        %5276 = vmatpush1.xpose.msra.mxu0 0.0
        %5277 = vmatprep.subr.mxu0 0.0
        %5278 = vmatpush1.xpose.msra.mxu0 0.0
        %5279 = vmatprep.subr.mxu0 0.0
        %5280 = vmatpush1.xpose.msra.mxu0 0.0
        %5281 = vmatprep.subr.mxu0 0.0
        %5282 = vmatpush1.xpose.msra.mxu0 0.0
        %5283 = vmatprep.subr.mxu0 0.0
        %5284 = vmatpush1.xpose.msra.mxu0 %v5251
        %5285 = vmatprep.subr.mxu0 0.0
        %5286 = vmatpush2.xpose.msra.mxu0 0.0
        %5287 = vmatprep.subr.mxu0 0.0
        %5288 = vmatpush2.xpose.msra.mxu0 0.0
        %5289 = vmatprep.subr.mxu0 0.0
        %5290 = vmatpush2.xpose.msra.mxu0 0.0
        %5291 = vmatprep.subr.mxu0 0.0
        %5292 = vmatpush2.xpose.msra.mxu0 0.0
        %5293 = vmatprep.subr.mxu0 0.0
        %5294 = vmatpush2.xpose.msra.mxu0 0.0
        %5295 = vmatprep.subr.mxu0 0.0
        %5296 = vmatpush2.xpose.msra.mxu0 0.0
        %5297 = vmatprep.subr.mxu0 0.0
        %5298 = vmatpush2.xpose.msra.mxu0 0.0
        %5299 = vmatprep.subr.mxu0 0.0
        %5300 = vmatpush2.xpose.msra.mxu0 0.0
        %5301 = vmatprep.subr.mxu0 0.0
        %5302 = vmatpush2.xpose.msra.mxu0 0.0
        %5303 = vmatprep.subr.mxu0 0.0
        %5304 = vmatpush2.xpose.msra.mxu0 0.0
        %5305 = vmatprep.subr.mxu0 0.0
        %5306 = vmatpush2.xpose.msra.mxu0 0.0
        %5307 = vmatprep.subr.mxu0 0.0
        %5308 = vmatpush2.xpose.msra.mxu0 0.0
        %5309 = vmatprep.subr.mxu0 0.0
        %5310 = vmatpush2.xpose.msra.mxu0 0.0
        %5311 = vmatprep.subr.mxu0 0.0
        %5312 = vmatpush2.xpose.msra.mxu0 0.0
        %5313 = vmatprep.subr.mxu0 0.0
        %5314 = vmatpush2.xpose.msra.mxu0 0.0
        %5315 = vmatprep.subr.mxu0 0.0
        %5316 = vmatpush2.xpose.msra.mxu0 0.0
        %5317 = vmatprep.mubr.f32.mxu0 0.0
        %5318 = vmatmul.mubr.f32.gmra.mxu0 %v5249
        %v5319 = vpop.f32.mrf.mxu0
        %v5320 = vadd.f32 0.0, %v5319
        %v5321 = vpop.f32.mrf.mxu0
        %5322 = vdwg.mxu0
        %v5323 = vmul.f32 %v5320, 0.35355338
        %v5324 = vadd.f32 %v5323, %v470
        %v5325 = vsel %vm562, %v5324, -inf
        %5326 = vmax.xlane.f32.xlu0 %v5325
        %v5327 = vpop.xlane.xlu0 %5326
        %v5328 = vsub.f32 %v5324, %v5327
        %v5329 = vmul.f32 %v5328, 1.442695
        %v5330 = vpow.pop %v5329
        %v5331 = vsel %vm562, %v5330, 0.0
        %5332 = vadd.xlane.f32.xlu0 %v5331
        %v5333 = vpop.xlane.xlu0 %5332
        %v5334 = vrcp.pop %v5333
        %v5335 = vmul.f32 %v5330, %v5334
        %5336 = vrot.lane.b32.xlu0 %v4737, 40
        %v5337 = vpop.permute.xlu0 %5336
        %v5340 = vsel %vm562, %v5335, 0
        %5342 = vmatprep.subr.mxu0 0.0
        %5343 = vmatpush1.msra.mxu0 0.0
        %5344 = vmatprep.subr.mxu0 0.0
        %5345 = vmatpush1.msra.mxu0 0.0
        %5346 = vmatprep.subr.mxu0 0.0
        %5347 = vmatpush1.msra.mxu0 0.0
        %5348 = vmatprep.subr.mxu0 0.0
        %5349 = vmatpush1.msra.mxu0 0.0
        %5350 = vmatprep.subr.mxu0 0.0
        %5351 = vmatpush1.msra.mxu0 0.0
        %5352 = vmatprep.subr.mxu0 0.0
        %5353 = vmatpush1.msra.mxu0 0.0
        %5354 = vmatprep.subr.mxu0 0.0
        %5355 = vmatpush1.msra.mxu0 0.0
        %5356 = vmatprep.subr.mxu0 0.0
        %5357 = vmatpush1.msra.mxu0 0.0
        %5358 = vmatprep.subr.mxu0 0.0
        %5359 = vmatpush1.msra.mxu0 0.0
        %5360 = vmatprep.subr.mxu0 0.0
        %5361 = vmatpush1.msra.mxu0 0.0
        %5362 = vmatprep.subr.mxu0 0.0
        %5363 = vmatpush1.msra.mxu0 0.0
        %5364 = vmatprep.subr.mxu0 0.0
        %5365 = vmatpush1.msra.mxu0 0.0
        %5366 = vmatprep.subr.mxu0 0.0
        %5367 = vmatpush1.msra.mxu0 0.0
        %5368 = vmatprep.subr.mxu0 0.0
        %5369 = vmatpush1.msra.mxu0 0.0
        %5370 = vmatprep.subr.mxu0 0.0
        %5371 = vmatpush1.msra.mxu0 0.0
        %5372 = vmatprep.subr.mxu0 0.0
        %5373 = vmatpush1.msra.mxu0 %v5337
        %5374 = vmatprep.subr.mxu0 0.0
        %5375 = vmatpush2.msra.mxu0 0.0
        %5376 = vmatprep.subr.mxu0 0.0
        %5377 = vmatpush2.msra.mxu0 0.0
        %5378 = vmatprep.subr.mxu0 0.0
        %5379 = vmatpush2.msra.mxu0 0.0
        %5380 = vmatprep.subr.mxu0 0.0
        %5381 = vmatpush2.msra.mxu0 0.0
        %5382 = vmatprep.subr.mxu0 0.0
        %5383 = vmatpush2.msra.mxu0 0.0
        %5384 = vmatprep.subr.mxu0 0.0
        %5385 = vmatpush2.msra.mxu0 0.0
        %5386 = vmatprep.subr.mxu0 0.0
        %5387 = vmatpush2.msra.mxu0 0.0
        %5388 = vmatprep.subr.mxu0 0.0
        %5389 = vmatpush2.msra.mxu0 0.0
        %5390 = vmatprep.subr.mxu0 0.0
        %5391 = vmatpush2.msra.mxu0 0.0
        %5392 = vmatprep.subr.mxu0 0.0
        %5393 = vmatpush2.msra.mxu0 0.0
        %5394 = vmatprep.subr.mxu0 0.0
        %5395 = vmatpush2.msra.mxu0 0.0
        %5396 = vmatprep.subr.mxu0 0.0
        %5397 = vmatpush2.msra.mxu0 0.0
        %5398 = vmatprep.subr.mxu0 0.0
        %5399 = vmatpush2.msra.mxu0 0.0
        %5400 = vmatprep.subr.mxu0 0.0
        %5401 = vmatpush2.msra.mxu0 0.0
        %5402 = vmatprep.subr.mxu0 0.0
        %5403 = vmatpush2.msra.mxu0 0.0
        %5404 = vmatprep.subr.mxu0 0.0
        %5405 = vmatpush2.msra.mxu0 0.0
        %5406 = vmatprep.mubr.f32.mxu0 0.0
        %5407 = vmatmul.mubr.f32.gmra.mxu0 %v5340
        %v5408 = vpop.f32.mrf.mxu0
        %v5409 = vadd.f32 0.0, %v5408
        %v5410 = vpop.f32.mrf.mxu0
        %5411 = vdwg.mxu0
        %5413 = vrot.lane.b32.xlu0 %v5075, 8
        %v5414 = vpop.permute.xlu0 %5413
        %5417 = vrot.lane.b32.xlu0 %v5242, 16
        %v5418 = vpop.permute.xlu0 %5417
        %5421 = vrot.lane.b32.xlu0 %v5409, 24
        %v5422 = vpop.permute.xlu0 %5421
        %v5424 = vsel %vm562, %v4908, %v5414
        %v5425 = vsel %vm1246, %v5424, %v5418
        %v5426 = vsel %vm1248, %v5425, %v5422
        %v5427 = vlaneseq
        %v5428 = vshrl.u32 %v5427, 7
        %v5429 = vsub.s32 0, %v5428
        %v5430 = vrot.slane %v4744, %v5429
        %v5432 = vsel %vm480, %v5426, 0
        %5434 = vmatprep.subr.mxu0 0.0
        %5435 = vmatpush1.msra.mxu0 0.0
        %5436 = vmatprep.subr.mxu0 0.0
        %5437 = vmatpush1.msra.mxu0 0.0
        %5438 = vmatprep.subr.mxu0 0.0
        %5439 = vmatpush1.msra.mxu0 0.0
        %5440 = vmatprep.subr.mxu0 0.0
        %5441 = vmatpush1.msra.mxu0 0.0
        %5442 = vmatprep.subr.mxu0 0.0
        %5443 = vmatpush1.msra.mxu0 0.0
        %5444 = vmatprep.subr.mxu0 0.0
        %5445 = vmatpush1.msra.mxu0 0.0
        %5446 = vmatprep.subr.mxu0 0.0
        %5447 = vmatpush1.msra.mxu0 0.0
        %5448 = vmatprep.subr.mxu0 0.0
        %5449 = vmatpush1.msra.mxu0 0.0
        %5450 = vmatprep.subr.mxu0 0.0
        %5451 = vmatpush1.msra.mxu0 0.0
        %5452 = vmatprep.subr.mxu0 0.0
        %5453 = vmatpush1.msra.mxu0 0.0
        %5454 = vmatprep.subr.mxu0 0.0
        %5455 = vmatpush1.msra.mxu0 0.0
        %5456 = vmatprep.subr.mxu0 0.0
        %5457 = vmatpush1.msra.mxu0 0.0
        %5458 = vmatprep.subr.mxu0 0.0
        %5459 = vmatpush1.msra.mxu0 %v4743
        %5460 = vmatprep.subr.mxu0 0.0
        %5461 = vmatpush1.msra.mxu0 %v4742
        %5462 = vmatprep.subr.mxu0 0.0
        %5463 = vmatpush1.msra.mxu0 %v4741
        %5464 = vmatprep.subr.mxu0 0.0
        %5465 = vmatpush1.msra.mxu0 %v4740
        %5466 = vmatprep.subr.mxu0 0.0
        %5467 = vmatpush2.msra.mxu0 0.0
        %5468 = vmatprep.subr.mxu0 0.0
        %5469 = vmatpush2.msra.mxu0 0.0
        %5470 = vmatprep.subr.mxu0 0.0
        %5471 = vmatpush2.msra.mxu0 0.0
        %5472 = vmatprep.subr.mxu0 0.0
        %5473 = vmatpush2.msra.mxu0 0.0
        %5474 = vmatprep.subr.mxu0 0.0
        %5475 = vmatpush2.msra.mxu0 0.0
        %5476 = vmatprep.subr.mxu0 0.0
        %5477 = vmatpush2.msra.mxu0 0.0
        %5478 = vmatprep.subr.mxu0 0.0
        %5479 = vmatpush2.msra.mxu0 0.0
        %5480 = vmatprep.subr.mxu0 0.0
        %5481 = vmatpush2.msra.mxu0 0.0
        %5482 = vmatprep.subr.mxu0 0.0
        %5483 = vmatpush2.msra.mxu0 0.0
        %5484 = vmatprep.subr.mxu0 0.0
        %5485 = vmatpush2.msra.mxu0 0.0
        %5486 = vmatprep.subr.mxu0 0.0
        %5487 = vmatpush2.msra.mxu0 0.0
        %5488 = vmatprep.subr.mxu0 0.0
        %5489 = vmatpush2.msra.mxu0 0.0
        %5490 = vmatprep.subr.mxu0 0.0
        %5491 = vmatpush2.msra.mxu0 0.0
        %5492 = vmatprep.subr.mxu0 0.0
        %5493 = vmatpush2.msra.mxu0 0.0
        %5494 = vmatprep.subr.mxu0 0.0
        %5495 = vmatpush2.msra.mxu0 0.0
        %5496 = vmatprep.subr.mxu0 0.0
        %5497 = vmatpush2.msra.mxu0 0.0
        %5498 = vmatprep.mubr.f32.mxu0 0.0
        %5499 = vmatmul.mubr.f32.gmra.mxu0 %v5432
        %v5500 = vpop.f32.mrf.mxu0
        %v5501 = vadd.f32 %v5430, %v5500
        %v5502 = vpop.f32.mrf.mxu0
        %5503 = vdwg.mxu0
        %v5504 = vadd.f32 %v4657, %v5501
        %v5505 = vld [vmem:[#allocation2 + $0x408] sm:$0x1]
        %v5506 = vld [vmem:[#allocation2 + $0x410] sm:$0x1]
        %v5507 = vsel %vm480, %v5504, 0.0
        %5508 = vadd.xlane.f32.xlu0 %v5507
        %v5509 = vpop.xlane.xlu0 %5508
        %v5510 = vmul.f32 %v5509, %v1333
        %v5511 = vsub.f32 %v5504, %v5510
        %v5512 = vmul.f32 %v5511, %v5511
        %v5513 = vsel %vm480, %v5512, 0.0
        %5514 = vadd.xlane.f32.xlu0 %v5513
        %v5515 = vpop.xlane.xlu0 %5514
        %v5516 = vmul.f32 %v5515, %v1333
        %v5517 = vadd.f32 %v5516, 1e-05
        %v5518 = vrsqrt.pop %v5517
        %v5519 = vmul.f32 %v5511, %v5518
        %v5520 = vlaneseq
        %v5521 = vshrl.u32 %v5520, 7
        %v5522 = vsub.s32 0, %v5521
        %v5523 = vrot.slane %v5505, %v5522
        %v5524 = vmul.f32 %v5519, %v5523
        %v5525 = vlaneseq
        %v5526 = vshrl.u32 %v5525, 7
        %v5527 = vsub.s32 0, %v5526
        %v5528 = vrot.slane %v5506, %v5527
        %v5529 = vadd.f32 %v5524, %v5528
        %v5530 = vld [vmem:[#allocation2 + $0x418] sm:$0xff]
        %v5531 = vld [vmem:[#allocation2 + $0x420] sm:$0xff]
        %v5532 = vld [vmem:[#allocation2 + $0x428] sm:$0xff]
        %v5533 = vld [vmem:[#allocation2 + $0x430] sm:$0xff]
        %v5534 = vld [vmem:[#allocation2 + $0x438] sm:$0x1]
        %v5535 = vlaneseq
        %v5536 = vshrl.u32 %v5535, 7
        %v5537 = vsub.s32 0, %v5536
        %v5538 = vrot.slane %v5534, %v5537
        %v5540 = vsel %vm480, %v5529, 0
        %5542 = vmatprep.subr.mxu0 0.0
        %5543 = vmatpush1.msra.mxu0 0.0
        %5544 = vmatprep.subr.mxu0 0.0
        %5545 = vmatpush1.msra.mxu0 0.0
        %5546 = vmatprep.subr.mxu0 0.0
        %5547 = vmatpush1.msra.mxu0 0.0
        %5548 = vmatprep.subr.mxu0 0.0
        %5549 = vmatpush1.msra.mxu0 0.0
        %5550 = vmatprep.subr.mxu0 0.0
        %5551 = vmatpush1.msra.mxu0 0.0
        %5552 = vmatprep.subr.mxu0 0.0
        %5553 = vmatpush1.msra.mxu0 0.0
        %5554 = vmatprep.subr.mxu0 0.0
        %5555 = vmatpush1.msra.mxu0 0.0
        %5556 = vmatprep.subr.mxu0 0.0
        %5557 = vmatpush1.msra.mxu0 0.0
        %5558 = vmatprep.subr.mxu0 0.0
        %5559 = vmatpush1.msra.mxu0 0.0
        %5560 = vmatprep.subr.mxu0 0.0
        %5561 = vmatpush1.msra.mxu0 0.0
        %5562 = vmatprep.subr.mxu0 0.0
        %5563 = vmatpush1.msra.mxu0 0.0
        %5564 = vmatprep.subr.mxu0 0.0
        %5565 = vmatpush1.msra.mxu0 0.0
        %5566 = vmatprep.subr.mxu0 0.0
        %5567 = vmatpush1.msra.mxu0 %v5533
        %5568 = vmatprep.subr.mxu0 0.0
        %5569 = vmatpush1.msra.mxu0 %v5532
        %5570 = vmatprep.subr.mxu0 0.0
        %5571 = vmatpush1.msra.mxu0 %v5531
        %5572 = vmatprep.subr.mxu0 0.0
        %5573 = vmatpush1.msra.mxu0 %v5530
        %5574 = vmatprep.subr.mxu0 0.0
        %5575 = vmatpush2.msra.mxu0 0.0
        %5576 = vmatprep.subr.mxu0 0.0
        %5577 = vmatpush2.msra.mxu0 0.0
        %5578 = vmatprep.subr.mxu0 0.0
        %5579 = vmatpush2.msra.mxu0 0.0
        %5580 = vmatprep.subr.mxu0 0.0
        %5581 = vmatpush2.msra.mxu0 0.0
        %5582 = vmatprep.subr.mxu0 0.0
        %5583 = vmatpush2.msra.mxu0 0.0
        %5584 = vmatprep.subr.mxu0 0.0
        %5585 = vmatpush2.msra.mxu0 0.0
        %5586 = vmatprep.subr.mxu0 0.0
        %5587 = vmatpush2.msra.mxu0 0.0
        %5588 = vmatprep.subr.mxu0 0.0
        %5589 = vmatpush2.msra.mxu0 0.0
        %5590 = vmatprep.subr.mxu0 0.0
        %5591 = vmatpush2.msra.mxu0 0.0
        %5592 = vmatprep.subr.mxu0 0.0
        %5593 = vmatpush2.msra.mxu0 0.0
        %5594 = vmatprep.subr.mxu0 0.0
        %5595 = vmatpush2.msra.mxu0 0.0
        %5596 = vmatprep.subr.mxu0 0.0
        %5597 = vmatpush2.msra.mxu0 0.0
        %5598 = vmatprep.subr.mxu0 0.0
        %5599 = vmatpush2.msra.mxu0 0.0
        %5600 = vmatprep.subr.mxu0 0.0
        %5601 = vmatpush2.msra.mxu0 0.0
        %5602 = vmatprep.subr.mxu0 0.0
        %5603 = vmatpush2.msra.mxu0 0.0
        %5604 = vmatprep.subr.mxu0 0.0
        %5605 = vmatpush2.msra.mxu0 0.0
        %5606 = vmatprep.mubr.f32.mxu0 0.0
        %5607 = vmatmul.mubr.f32.gmra.mxu0 %v5540
        %v5608 = vpop.f32.mrf.mxu0
        %v5609 = vadd.f32 %v5538, %v5608
        %v5610 = vpop.f32.mrf.mxu0
        %5611 = vdwg.mxu0
        %v5612 = vld [vmem:[#allocation2 + $0x440] sm:$0xff]
        %v5613 = vld [vmem:[#allocation2 + $0x448] sm:$0xff]
        %v5614 = vld [vmem:[#allocation2 + $0x450] sm:$0xff]
        %v5615 = vld [vmem:[#allocation2 + $0x458] sm:$0xff]
        %v5616 = vld [vmem:[#allocation2 + $0x460] sm:$0x1]
        %v5617 = vlaneseq
        %v5618 = vshrl.u32 %v5617, 7
        %v5619 = vsub.s32 0, %v5618
        %v5620 = vrot.slane %v5616, %v5619
        %5621 = vmatprep.subr.mxu0 0.0
        %5622 = vmatpush1.msra.mxu0 0.0
        %5623 = vmatprep.subr.mxu0 0.0
        %5624 = vmatpush1.msra.mxu0 0.0
        %5625 = vmatprep.subr.mxu0 0.0
        %5626 = vmatpush1.msra.mxu0 0.0
        %5627 = vmatprep.subr.mxu0 0.0
        %5628 = vmatpush1.msra.mxu0 0.0
        %5629 = vmatprep.subr.mxu0 0.0
        %5630 = vmatpush1.msra.mxu0 0.0
        %5631 = vmatprep.subr.mxu0 0.0
        %5632 = vmatpush1.msra.mxu0 0.0
        %5633 = vmatprep.subr.mxu0 0.0
        %5634 = vmatpush1.msra.mxu0 0.0
        %5635 = vmatprep.subr.mxu0 0.0
        %5636 = vmatpush1.msra.mxu0 0.0
        %5637 = vmatprep.subr.mxu0 0.0
        %5638 = vmatpush1.msra.mxu0 0.0
        %5639 = vmatprep.subr.mxu0 0.0
        %5640 = vmatpush1.msra.mxu0 0.0
        %5641 = vmatprep.subr.mxu0 0.0
        %5642 = vmatpush1.msra.mxu0 0.0
        %5643 = vmatprep.subr.mxu0 0.0
        %5644 = vmatpush1.msra.mxu0 0.0
        %5645 = vmatprep.subr.mxu0 0.0
        %5646 = vmatpush1.msra.mxu0 %v5615
        %5647 = vmatprep.subr.mxu0 0.0
        %5648 = vmatpush1.msra.mxu0 %v5614
        %5649 = vmatprep.subr.mxu0 0.0
        %5650 = vmatpush1.msra.mxu0 %v5613
        %5651 = vmatprep.subr.mxu0 0.0
        %5652 = vmatpush1.msra.mxu0 %v5612
        %5653 = vmatprep.subr.mxu0 0.0
        %5654 = vmatpush2.msra.mxu0 0.0
        %5655 = vmatprep.subr.mxu0 0.0
        %5656 = vmatpush2.msra.mxu0 0.0
        %5657 = vmatprep.subr.mxu0 0.0
        %5658 = vmatpush2.msra.mxu0 0.0
        %5659 = vmatprep.subr.mxu0 0.0
        %5660 = vmatpush2.msra.mxu0 0.0
        %5661 = vmatprep.subr.mxu0 0.0
        %5662 = vmatpush2.msra.mxu0 0.0
        %5663 = vmatprep.subr.mxu0 0.0
        %5664 = vmatpush2.msra.mxu0 0.0
        %5665 = vmatprep.subr.mxu0 0.0
        %5666 = vmatpush2.msra.mxu0 0.0
        %5667 = vmatprep.subr.mxu0 0.0
        %5668 = vmatpush2.msra.mxu0 0.0
        %5669 = vmatprep.subr.mxu0 0.0
        %5670 = vmatpush2.msra.mxu0 0.0
        %5671 = vmatprep.subr.mxu0 0.0
        %5672 = vmatpush2.msra.mxu0 0.0
        %5673 = vmatprep.subr.mxu0 0.0
        %5674 = vmatpush2.msra.mxu0 0.0
        %5675 = vmatprep.subr.mxu0 0.0
        %5676 = vmatpush2.msra.mxu0 0.0
        %5677 = vmatprep.subr.mxu0 0.0
        %5678 = vmatpush2.msra.mxu0 0.0
        %5679 = vmatprep.subr.mxu0 0.0
        %5680 = vmatpush2.msra.mxu0 0.0
        %5681 = vmatprep.subr.mxu0 0.0
        %5682 = vmatpush2.msra.mxu0 0.0
        %5683 = vmatprep.subr.mxu0 0.0
        %5684 = vmatpush2.msra.mxu0 0.0
        %5685 = vmatprep.mubr.f32.mxu0 0.0
        %5686 = vmatmul.mubr.f32.gmra.mxu0 %v3606
        %v5687 = vpop.f32.mrf.mxu0
        %v5688 = vadd.f32 %v5620, %v5687
        %v5689 = vpop.f32.mrf.mxu0
        %5690 = vdwg.mxu0
        %v5691 = vld [vmem:[#allocation2 + $0x468] sm:$0xff]
        %v5692 = vld [vmem:[#allocation2 + $0x470] sm:$0xff]
        %v5693 = vld [vmem:[#allocation2 + $0x478] sm:$0xff]
        %v5694 = vld [vmem:[#allocation2 + $0x480] sm:$0xff]
        %v5695 = vld [vmem:[#allocation2 + $0x488] sm:$0x1]
        %v5697 = vsel %vm562, %v5609, 0
        %v5700 = vsel %vm562, %v5688, 0
        %5702 = vmatprep.subr.mxu0 0.0
        %5703 = vmatpush1.xpose.msra.mxu0 0.0
        %5704 = vmatprep.subr.mxu0 0.0
        %5705 = vmatpush1.xpose.msra.mxu0 0.0
        %5706 = vmatprep.subr.mxu0 0.0
        %5707 = vmatpush1.xpose.msra.mxu0 0.0
        %5708 = vmatprep.subr.mxu0 0.0
        %5709 = vmatpush1.xpose.msra.mxu0 0.0
        %5710 = vmatprep.subr.mxu0 0.0
        %5711 = vmatpush1.xpose.msra.mxu0 0.0
        %5712 = vmatprep.subr.mxu0 0.0
        %5713 = vmatpush1.xpose.msra.mxu0 0.0
        %5714 = vmatprep.subr.mxu0 0.0
        %5715 = vmatpush1.xpose.msra.mxu0 0.0
        %5716 = vmatprep.subr.mxu0 0.0
        %5717 = vmatpush1.xpose.msra.mxu0 0.0
        %5718 = vmatprep.subr.mxu0 0.0
        %5719 = vmatpush1.xpose.msra.mxu0 0.0
        %5720 = vmatprep.subr.mxu0 0.0
        %5721 = vmatpush1.xpose.msra.mxu0 0.0
        %5722 = vmatprep.subr.mxu0 0.0
        %5723 = vmatpush1.xpose.msra.mxu0 0.0
        %5724 = vmatprep.subr.mxu0 0.0
        %5725 = vmatpush1.xpose.msra.mxu0 0.0
        %5726 = vmatprep.subr.mxu0 0.0
        %5727 = vmatpush1.xpose.msra.mxu0 0.0
        %5728 = vmatprep.subr.mxu0 0.0
        %5729 = vmatpush1.xpose.msra.mxu0 0.0
        %5730 = vmatprep.subr.mxu0 0.0
        %5731 = vmatpush1.xpose.msra.mxu0 0.0
        %5732 = vmatprep.subr.mxu0 0.0
        %5733 = vmatpush1.xpose.msra.mxu0 %v5700
        %5734 = vmatprep.subr.mxu0 0.0
        %5735 = vmatpush2.xpose.msra.mxu0 0.0
        %5736 = vmatprep.subr.mxu0 0.0
        %5737 = vmatpush2.xpose.msra.mxu0 0.0
        %5738 = vmatprep.subr.mxu0 0.0
        %5739 = vmatpush2.xpose.msra.mxu0 0.0
        %5740 = vmatprep.subr.mxu0 0.0
        %5741 = vmatpush2.xpose.msra.mxu0 0.0
        %5742 = vmatprep.subr.mxu0 0.0
        %5743 = vmatpush2.xpose.msra.mxu0 0.0
        %5744 = vmatprep.subr.mxu0 0.0
        %5745 = vmatpush2.xpose.msra.mxu0 0.0
        %5746 = vmatprep.subr.mxu0 0.0
        %5747 = vmatpush2.xpose.msra.mxu0 0.0
        %5748 = vmatprep.subr.mxu0 0.0
        %5749 = vmatpush2.xpose.msra.mxu0 0.0
        %5750 = vmatprep.subr.mxu0 0.0
        %5751 = vmatpush2.xpose.msra.mxu0 0.0
        %5752 = vmatprep.subr.mxu0 0.0
        %5753 = vmatpush2.xpose.msra.mxu0 0.0
        %5754 = vmatprep.subr.mxu0 0.0
        %5755 = vmatpush2.xpose.msra.mxu0 0.0
        %5756 = vmatprep.subr.mxu0 0.0
        %5757 = vmatpush2.xpose.msra.mxu0 0.0
        %5758 = vmatprep.subr.mxu0 0.0
        %5759 = vmatpush2.xpose.msra.mxu0 0.0
        %5760 = vmatprep.subr.mxu0 0.0
        %5761 = vmatpush2.xpose.msra.mxu0 0.0
        %5762 = vmatprep.subr.mxu0 0.0
        %5763 = vmatpush2.xpose.msra.mxu0 0.0
        %5764 = vmatprep.subr.mxu0 0.0
        %5765 = vmatpush2.xpose.msra.mxu0 0.0
        %5766 = vmatprep.mubr.f32.mxu0 0.0
        %5767 = vmatmul.mubr.f32.gmra.mxu0 %v5697
        %v5768 = vpop.f32.mrf.mxu0
        %v5769 = vadd.f32 0.0, %v5768
        %v5770 = vpop.f32.mrf.mxu0
        %5771 = vdwg.mxu0
        %v5772 = vmul.f32 %v5769, 0.35355338
        %v5773 = vsel %vm562, %v5772, -inf
        %5774 = vmax.xlane.f32.xlu0 %v5773
        %v5775 = vpop.xlane.xlu0 %5774
        %v5776 = vsub.f32 %v5772, %v5775
        %v5777 = vmul.f32 %v5776, 1.442695
        %v5778 = vpow.pop %v5777
        %v5779 = vsel %vm562, %v5778, 0.0
        %5780 = vadd.xlane.f32.xlu0 %v5779
        %v5781 = vpop.xlane.xlu0 %5780
        %v5782 = vrcp.pop %v5781
        %v5783 = vmul.f32 %v5778, %v5782
        %5784 = vrot.lane.b32.xlu0 %v5688, 96
        %v5785 = vpop.permute.xlu0 %5784
        %v5788 = vsel %vm562, %v5783, 0
        %5790 = vmatprep.subr.mxu0 0.0
        %5791 = vmatpush1.msra.mxu0 0.0
        %5792 = vmatprep.subr.mxu0 0.0
        %5793 = vmatpush1.msra.mxu0 0.0
        %5794 = vmatprep.subr.mxu0 0.0
        %5795 = vmatpush1.msra.mxu0 0.0
        %5796 = vmatprep.subr.mxu0 0.0
        %5797 = vmatpush1.msra.mxu0 0.0
        %5798 = vmatprep.subr.mxu0 0.0
        %5799 = vmatpush1.msra.mxu0 0.0
        %5800 = vmatprep.subr.mxu0 0.0
        %5801 = vmatpush1.msra.mxu0 0.0
        %5802 = vmatprep.subr.mxu0 0.0
        %5803 = vmatpush1.msra.mxu0 0.0
        %5804 = vmatprep.subr.mxu0 0.0
        %5805 = vmatpush1.msra.mxu0 0.0
        %5806 = vmatprep.subr.mxu0 0.0
        %5807 = vmatpush1.msra.mxu0 0.0
        %5808 = vmatprep.subr.mxu0 0.0
        %5809 = vmatpush1.msra.mxu0 0.0
        %5810 = vmatprep.subr.mxu0 0.0
        %5811 = vmatpush1.msra.mxu0 0.0
        %5812 = vmatprep.subr.mxu0 0.0
        %5813 = vmatpush1.msra.mxu0 0.0
        %5814 = vmatprep.subr.mxu0 0.0
        %5815 = vmatpush1.msra.mxu0 0.0
        %5816 = vmatprep.subr.mxu0 0.0
        %5817 = vmatpush1.msra.mxu0 0.0
        %5818 = vmatprep.subr.mxu0 0.0
        %5819 = vmatpush1.msra.mxu0 0.0
        %5820 = vmatprep.subr.mxu0 0.0
        %5821 = vmatpush1.msra.mxu0 %v5785
        %5822 = vmatprep.subr.mxu0 0.0
        %5823 = vmatpush2.msra.mxu0 0.0
        %5824 = vmatprep.subr.mxu0 0.0
        %5825 = vmatpush2.msra.mxu0 0.0
        %5826 = vmatprep.subr.mxu0 0.0
        %5827 = vmatpush2.msra.mxu0 0.0
        %5828 = vmatprep.subr.mxu0 0.0
        %5829 = vmatpush2.msra.mxu0 0.0
        %5830 = vmatprep.subr.mxu0 0.0
        %5831 = vmatpush2.msra.mxu0 0.0
        %5832 = vmatprep.subr.mxu0 0.0
        %5833 = vmatpush2.msra.mxu0 0.0
        %5834 = vmatprep.subr.mxu0 0.0
        %5835 = vmatpush2.msra.mxu0 0.0
        %5836 = vmatprep.subr.mxu0 0.0
        %5837 = vmatpush2.msra.mxu0 0.0
        %5838 = vmatprep.subr.mxu0 0.0
        %5839 = vmatpush2.msra.mxu0 0.0
        %5840 = vmatprep.subr.mxu0 0.0
        %5841 = vmatpush2.msra.mxu0 0.0
        %5842 = vmatprep.subr.mxu0 0.0
        %5843 = vmatpush2.msra.mxu0 0.0
        %5844 = vmatprep.subr.mxu0 0.0
        %5845 = vmatpush2.msra.mxu0 0.0
        %5846 = vmatprep.subr.mxu0 0.0
        %5847 = vmatpush2.msra.mxu0 0.0
        %5848 = vmatprep.subr.mxu0 0.0
        %5849 = vmatpush2.msra.mxu0 0.0
        %5850 = vmatprep.subr.mxu0 0.0
        %5851 = vmatpush2.msra.mxu0 0.0
        %5852 = vmatprep.subr.mxu0 0.0
        %5853 = vmatpush2.msra.mxu0 0.0
        %5854 = vmatprep.mubr.f32.mxu0 0.0
        %5855 = vmatmul.mubr.f32.gmra.mxu0 %v5788
        %v5856 = vpop.f32.mrf.mxu0
        %v5857 = vadd.f32 0.0, %v5856
        %v5858 = vpop.f32.mrf.mxu0
        %5859 = vdwg.mxu0
        %5860 = vrot.lane.b32.xlu0 %v5609, 120
        %v5861 = vpop.permute.xlu0 %5860
        %5862 = vrot.lane.b32.xlu0 %v5688, 120
        %v5863 = vpop.permute.xlu0 %5862
        %v5864 = vsel %vm562, %v5861, 0
        %v5866 = vsel %vm562, %v5863, 0
        %5868 = vmatprep.subr.mxu0 0.0
        %5869 = vmatpush1.xpose.msra.mxu0 0.0
        %5870 = vmatprep.subr.mxu0 0.0
        %5871 = vmatpush1.xpose.msra.mxu0 0.0
        %5872 = vmatprep.subr.mxu0 0.0
        %5873 = vmatpush1.xpose.msra.mxu0 0.0
        %5874 = vmatprep.subr.mxu0 0.0
        %5875 = vmatpush1.xpose.msra.mxu0 0.0
        %5876 = vmatprep.subr.mxu0 0.0
        %5877 = vmatpush1.xpose.msra.mxu0 0.0
        %5878 = vmatprep.subr.mxu0 0.0
        %5879 = vmatpush1.xpose.msra.mxu0 0.0
        %5880 = vmatprep.subr.mxu0 0.0
        %5881 = vmatpush1.xpose.msra.mxu0 0.0
        %5882 = vmatprep.subr.mxu0 0.0
        %5883 = vmatpush1.xpose.msra.mxu0 0.0
        %5884 = vmatprep.subr.mxu0 0.0
        %5885 = vmatpush1.xpose.msra.mxu0 0.0
        %5886 = vmatprep.subr.mxu0 0.0
        %5887 = vmatpush1.xpose.msra.mxu0 0.0
        %5888 = vmatprep.subr.mxu0 0.0
        %5889 = vmatpush1.xpose.msra.mxu0 0.0
        %5890 = vmatprep.subr.mxu0 0.0
        %5891 = vmatpush1.xpose.msra.mxu0 0.0
        %5892 = vmatprep.subr.mxu0 0.0
        %5893 = vmatpush1.xpose.msra.mxu0 0.0
        %5894 = vmatprep.subr.mxu0 0.0
        %5895 = vmatpush1.xpose.msra.mxu0 0.0
        %5896 = vmatprep.subr.mxu0 0.0
        %5897 = vmatpush1.xpose.msra.mxu0 0.0
        %5898 = vmatprep.subr.mxu0 0.0
        %5899 = vmatpush1.xpose.msra.mxu0 %v5866
        %5900 = vmatprep.subr.mxu0 0.0
        %5901 = vmatpush2.xpose.msra.mxu0 0.0
        %5902 = vmatprep.subr.mxu0 0.0
        %5903 = vmatpush2.xpose.msra.mxu0 0.0
        %5904 = vmatprep.subr.mxu0 0.0
        %5905 = vmatpush2.xpose.msra.mxu0 0.0
        %5906 = vmatprep.subr.mxu0 0.0
        %5907 = vmatpush2.xpose.msra.mxu0 0.0
        %5908 = vmatprep.subr.mxu0 0.0
        %5909 = vmatpush2.xpose.msra.mxu0 0.0
        %5910 = vmatprep.subr.mxu0 0.0
        %5911 = vmatpush2.xpose.msra.mxu0 0.0
        %5912 = vmatprep.subr.mxu0 0.0
        %5913 = vmatpush2.xpose.msra.mxu0 0.0
        %5914 = vmatprep.subr.mxu0 0.0
        %5915 = vmatpush2.xpose.msra.mxu0 0.0
        %5916 = vmatprep.subr.mxu0 0.0
        %5917 = vmatpush2.xpose.msra.mxu0 0.0
        %5918 = vmatprep.subr.mxu0 0.0
        %5919 = vmatpush2.xpose.msra.mxu0 0.0
        %5920 = vmatprep.subr.mxu0 0.0
        %5921 = vmatpush2.xpose.msra.mxu0 0.0
        %5922 = vmatprep.subr.mxu0 0.0
        %5923 = vmatpush2.xpose.msra.mxu0 0.0
        %5924 = vmatprep.subr.mxu0 0.0
        %5925 = vmatpush2.xpose.msra.mxu0 0.0
        %5926 = vmatprep.subr.mxu0 0.0
        %5927 = vmatpush2.xpose.msra.mxu0 0.0
        %5928 = vmatprep.subr.mxu0 0.0
        %5929 = vmatpush2.xpose.msra.mxu0 0.0
        %5930 = vmatprep.subr.mxu0 0.0
        %5931 = vmatpush2.xpose.msra.mxu0 0.0
        %5932 = vmatprep.mubr.f32.mxu0 0.0
        %5933 = vmatmul.mubr.f32.gmra.mxu0 %v5864
        %v5934 = vpop.f32.mrf.mxu0
        %v5935 = vadd.f32 0.0, %v5934
        %v5936 = vpop.f32.mrf.mxu0
        %5937 = vdwg.mxu0
        %v5938 = vmul.f32 %v5935, 0.35355338
        %v5939 = vsel %vm562, %v5938, -inf
        %5940 = vmax.xlane.f32.xlu0 %v5939
        %v5941 = vpop.xlane.xlu0 %5940
        %v5942 = vsub.f32 %v5938, %v5941
        %v5943 = vmul.f32 %v5942, 1.442695
        %v5944 = vpow.pop %v5943
        %v5945 = vsel %vm562, %v5944, 0.0
        %5946 = vadd.xlane.f32.xlu0 %v5945
        %v5947 = vpop.xlane.xlu0 %5946
        %v5948 = vrcp.pop %v5947
        %v5949 = vmul.f32 %v5944, %v5948
        %5950 = vrot.lane.b32.xlu0 %v5688, 88
        %v5951 = vpop.permute.xlu0 %5950
        %v5954 = vsel %vm562, %v5949, 0
        %5956 = vmatprep.subr.mxu0 0.0
        %5957 = vmatpush1.msra.mxu0 0.0
        %5958 = vmatprep.subr.mxu0 0.0
        %5959 = vmatpush1.msra.mxu0 0.0
        %5960 = vmatprep.subr.mxu0 0.0
        %5961 = vmatpush1.msra.mxu0 0.0
        %5962 = vmatprep.subr.mxu0 0.0
        %5963 = vmatpush1.msra.mxu0 0.0
        %5964 = vmatprep.subr.mxu0 0.0
        %5965 = vmatpush1.msra.mxu0 0.0
        %5966 = vmatprep.subr.mxu0 0.0
        %5967 = vmatpush1.msra.mxu0 0.0
        %5968 = vmatprep.subr.mxu0 0.0
        %5969 = vmatpush1.msra.mxu0 0.0
        %5970 = vmatprep.subr.mxu0 0.0
        %5971 = vmatpush1.msra.mxu0 0.0
        %5972 = vmatprep.subr.mxu0 0.0
        %5973 = vmatpush1.msra.mxu0 0.0
        %5974 = vmatprep.subr.mxu0 0.0
        %5975 = vmatpush1.msra.mxu0 0.0
        %5976 = vmatprep.subr.mxu0 0.0
        %5977 = vmatpush1.msra.mxu0 0.0
        %5978 = vmatprep.subr.mxu0 0.0
        %5979 = vmatpush1.msra.mxu0 0.0
        %5980 = vmatprep.subr.mxu0 0.0
        %5981 = vmatpush1.msra.mxu0 0.0
        %5982 = vmatprep.subr.mxu0 0.0
        %5983 = vmatpush1.msra.mxu0 0.0
        %5984 = vmatprep.subr.mxu0 0.0
        %5985 = vmatpush1.msra.mxu0 0.0
        %5986 = vmatprep.subr.mxu0 0.0
        %5987 = vmatpush1.msra.mxu0 %v5951
        %5988 = vmatprep.subr.mxu0 0.0
        %5989 = vmatpush2.msra.mxu0 0.0
        %5990 = vmatprep.subr.mxu0 0.0
        %5991 = vmatpush2.msra.mxu0 0.0
        %5992 = vmatprep.subr.mxu0 0.0
        %5993 = vmatpush2.msra.mxu0 0.0
        %5994 = vmatprep.subr.mxu0 0.0
        %5995 = vmatpush2.msra.mxu0 0.0
        %5996 = vmatprep.subr.mxu0 0.0
        %5997 = vmatpush2.msra.mxu0 0.0
        %5998 = vmatprep.subr.mxu0 0.0
        %5999 = vmatpush2.msra.mxu0 0.0
        %6000 = vmatprep.subr.mxu0 0.0
        %6001 = vmatpush2.msra.mxu0 0.0
        %6002 = vmatprep.subr.mxu0 0.0
        %6003 = vmatpush2.msra.mxu0 0.0
        %6004 = vmatprep.subr.mxu0 0.0
        %6005 = vmatpush2.msra.mxu0 0.0
        %6006 = vmatprep.subr.mxu0 0.0
        %6007 = vmatpush2.msra.mxu0 0.0
        %6008 = vmatprep.subr.mxu0 0.0
        %6009 = vmatpush2.msra.mxu0 0.0
        %6010 = vmatprep.subr.mxu0 0.0
        %6011 = vmatpush2.msra.mxu0 0.0
        %6012 = vmatprep.subr.mxu0 0.0
        %6013 = vmatpush2.msra.mxu0 0.0
        %6014 = vmatprep.subr.mxu0 0.0
        %6015 = vmatpush2.msra.mxu0 0.0
        %6016 = vmatprep.subr.mxu0 0.0
        %6017 = vmatpush2.msra.mxu0 0.0
        %6018 = vmatprep.subr.mxu0 0.0
        %6019 = vmatpush2.msra.mxu0 0.0
        %6020 = vmatprep.mubr.f32.mxu0 0.0
        %6021 = vmatmul.mubr.f32.gmra.mxu0 %v5954
        %v6022 = vpop.f32.mrf.mxu0
        %v6023 = vadd.f32 0.0, %v6022
        %v6024 = vpop.f32.mrf.mxu0
        %6025 = vdwg.mxu0
        %6026 = vrot.lane.b32.xlu0 %v5609, 112
        %v6027 = vpop.permute.xlu0 %6026
        %6028 = vrot.lane.b32.xlu0 %v5688, 112
        %v6029 = vpop.permute.xlu0 %6028
        %v6030 = vsel %vm562, %v6027, 0
        %v6032 = vsel %vm562, %v6029, 0
        %6034 = vmatprep.subr.mxu0 0.0
        %6035 = vmatpush1.xpose.msra.mxu0 0.0
        %6036 = vmatprep.subr.mxu0 0.0
        %6037 = vmatpush1.xpose.msra.mxu0 0.0
        %6038 = vmatprep.subr.mxu0 0.0
        %6039 = vmatpush1.xpose.msra.mxu0 0.0
        %6040 = vmatprep.subr.mxu0 0.0
        %6041 = vmatpush1.xpose.msra.mxu0 0.0
        %6042 = vmatprep.subr.mxu0 0.0
        %6043 = vmatpush1.xpose.msra.mxu0 0.0
        %6044 = vmatprep.subr.mxu0 0.0
        %6045 = vmatpush1.xpose.msra.mxu0 0.0
        %6046 = vmatprep.subr.mxu0 0.0
        %6047 = vmatpush1.xpose.msra.mxu0 0.0
        %6048 = vmatprep.subr.mxu0 0.0
        %6049 = vmatpush1.xpose.msra.mxu0 0.0
        %6050 = vmatprep.subr.mxu0 0.0
        %6051 = vmatpush1.xpose.msra.mxu0 0.0
        %6052 = vmatprep.subr.mxu0 0.0
        %6053 = vmatpush1.xpose.msra.mxu0 0.0
        %6054 = vmatprep.subr.mxu0 0.0
        %6055 = vmatpush1.xpose.msra.mxu0 0.0
        %6056 = vmatprep.subr.mxu0 0.0
        %6057 = vmatpush1.xpose.msra.mxu0 0.0
        %6058 = vmatprep.subr.mxu0 0.0
        %6059 = vmatpush1.xpose.msra.mxu0 0.0
        %6060 = vmatprep.subr.mxu0 0.0
        %6061 = vmatpush1.xpose.msra.mxu0 0.0
        %6062 = vmatprep.subr.mxu0 0.0
        %6063 = vmatpush1.xpose.msra.mxu0 0.0
        %6064 = vmatprep.subr.mxu0 0.0
        %6065 = vmatpush1.xpose.msra.mxu0 %v6032
        %6066 = vmatprep.subr.mxu0 0.0
        %6067 = vmatpush2.xpose.msra.mxu0 0.0
        %6068 = vmatprep.subr.mxu0 0.0
        %6069 = vmatpush2.xpose.msra.mxu0 0.0
        %6070 = vmatprep.subr.mxu0 0.0
        %6071 = vmatpush2.xpose.msra.mxu0 0.0
        %6072 = vmatprep.subr.mxu0 0.0
        %6073 = vmatpush2.xpose.msra.mxu0 0.0
        %6074 = vmatprep.subr.mxu0 0.0
        %6075 = vmatpush2.xpose.msra.mxu0 0.0
        %6076 = vmatprep.subr.mxu0 0.0
        %6077 = vmatpush2.xpose.msra.mxu0 0.0
        %6078 = vmatprep.subr.mxu0 0.0
        %6079 = vmatpush2.xpose.msra.mxu0 0.0
        %6080 = vmatprep.subr.mxu0 0.0
        %6081 = vmatpush2.xpose.msra.mxu0 0.0
        %6082 = vmatprep.subr.mxu0 0.0
        %6083 = vmatpush2.xpose.msra.mxu0 0.0
        %6084 = vmatprep.subr.mxu0 0.0
        %6085 = vmatpush2.xpose.msra.mxu0 0.0
        %6086 = vmatprep.subr.mxu0 0.0
        %6087 = vmatpush2.xpose.msra.mxu0 0.0
        %6088 = vmatprep.subr.mxu0 0.0
        %6089 = vmatpush2.xpose.msra.mxu0 0.0
        %6090 = vmatprep.subr.mxu0 0.0
        %6091 = vmatpush2.xpose.msra.mxu0 0.0
        %6092 = vmatprep.subr.mxu0 0.0
        %6093 = vmatpush2.xpose.msra.mxu0 0.0
        %6094 = vmatprep.subr.mxu0 0.0
        %6095 = vmatpush2.xpose.msra.mxu0 0.0
        %6096 = vmatprep.subr.mxu0 0.0
        %6097 = vmatpush2.xpose.msra.mxu0 0.0
        %6098 = vmatprep.mubr.f32.mxu0 0.0
        %6099 = vmatmul.mubr.f32.gmra.mxu0 %v6030
        %v6100 = vpop.f32.mrf.mxu0
        %v6101 = vadd.f32 0.0, %v6100
        %v6102 = vpop.f32.mrf.mxu0
        %6103 = vdwg.mxu0
        %v6104 = vmul.f32 %v6101, 0.35355338
        %v6105 = vsel %vm562, %v6104, -inf
        %6106 = vmax.xlane.f32.xlu0 %v6105
        %v6107 = vpop.xlane.xlu0 %6106
        %v6108 = vsub.f32 %v6104, %v6107
        %v6109 = vmul.f32 %v6108, 1.442695
        %v6110 = vpow.pop %v6109
        %v6111 = vsel %vm562, %v6110, 0.0
        %6112 = vadd.xlane.f32.xlu0 %v6111
        %v6113 = vpop.xlane.xlu0 %6112
        %v6114 = vrcp.pop %v6113
        %v6115 = vmul.f32 %v6110, %v6114
        %6116 = vrot.lane.b32.xlu0 %v5688, 80
        %v6117 = vpop.permute.xlu0 %6116
        %v6120 = vsel %vm562, %v6115, 0
        %6122 = vmatprep.subr.mxu0 0.0
        %6123 = vmatpush1.msra.mxu0 0.0
        %6124 = vmatprep.subr.mxu0 0.0
        %6125 = vmatpush1.msra.mxu0 0.0
        %6126 = vmatprep.subr.mxu0 0.0
        %6127 = vmatpush1.msra.mxu0 0.0
        %6128 = vmatprep.subr.mxu0 0.0
        %6129 = vmatpush1.msra.mxu0 0.0
        %6130 = vmatprep.subr.mxu0 0.0
        %6131 = vmatpush1.msra.mxu0 0.0
        %6132 = vmatprep.subr.mxu0 0.0
        %6133 = vmatpush1.msra.mxu0 0.0
        %6134 = vmatprep.subr.mxu0 0.0
        %6135 = vmatpush1.msra.mxu0 0.0
        %6136 = vmatprep.subr.mxu0 0.0
        %6137 = vmatpush1.msra.mxu0 0.0
        %6138 = vmatprep.subr.mxu0 0.0
        %6139 = vmatpush1.msra.mxu0 0.0
        %6140 = vmatprep.subr.mxu0 0.0
        %6141 = vmatpush1.msra.mxu0 0.0
        %6142 = vmatprep.subr.mxu0 0.0
        %6143 = vmatpush1.msra.mxu0 0.0
        %6144 = vmatprep.subr.mxu0 0.0
        %6145 = vmatpush1.msra.mxu0 0.0
        %6146 = vmatprep.subr.mxu0 0.0
        %6147 = vmatpush1.msra.mxu0 0.0
        %6148 = vmatprep.subr.mxu0 0.0
        %6149 = vmatpush1.msra.mxu0 0.0
        %6150 = vmatprep.subr.mxu0 0.0
        %6151 = vmatpush1.msra.mxu0 0.0
        %6152 = vmatprep.subr.mxu0 0.0
        %6153 = vmatpush1.msra.mxu0 %v6117
        %6154 = vmatprep.subr.mxu0 0.0
        %6155 = vmatpush2.msra.mxu0 0.0
        %6156 = vmatprep.subr.mxu0 0.0
        %6157 = vmatpush2.msra.mxu0 0.0
        %6158 = vmatprep.subr.mxu0 0.0
        %6159 = vmatpush2.msra.mxu0 0.0
        %6160 = vmatprep.subr.mxu0 0.0
        %6161 = vmatpush2.msra.mxu0 0.0
        %6162 = vmatprep.subr.mxu0 0.0
        %6163 = vmatpush2.msra.mxu0 0.0
        %6164 = vmatprep.subr.mxu0 0.0
        %6165 = vmatpush2.msra.mxu0 0.0
        %6166 = vmatprep.subr.mxu0 0.0
        %6167 = vmatpush2.msra.mxu0 0.0
        %6168 = vmatprep.subr.mxu0 0.0
        %6169 = vmatpush2.msra.mxu0 0.0
        %6170 = vmatprep.subr.mxu0 0.0
        %6171 = vmatpush2.msra.mxu0 0.0
        %6172 = vmatprep.subr.mxu0 0.0
        %6173 = vmatpush2.msra.mxu0 0.0
        %6174 = vmatprep.subr.mxu0 0.0
        %6175 = vmatpush2.msra.mxu0 0.0
        %6176 = vmatprep.subr.mxu0 0.0
        %6177 = vmatpush2.msra.mxu0 0.0
        %6178 = vmatprep.subr.mxu0 0.0
        %6179 = vmatpush2.msra.mxu0 0.0
        %6180 = vmatprep.subr.mxu0 0.0
        %6181 = vmatpush2.msra.mxu0 0.0
        %6182 = vmatprep.subr.mxu0 0.0
        %6183 = vmatpush2.msra.mxu0 0.0
        %6184 = vmatprep.subr.mxu0 0.0
        %6185 = vmatpush2.msra.mxu0 0.0
        %6186 = vmatprep.mubr.f32.mxu0 0.0
        %6187 = vmatmul.mubr.f32.gmra.mxu0 %v6120
        %v6188 = vpop.f32.mrf.mxu0
        %v6189 = vadd.f32 0.0, %v6188
        %v6190 = vpop.f32.mrf.mxu0
        %6191 = vdwg.mxu0
        %6192 = vrot.lane.b32.xlu0 %v5609, 104
        %v6193 = vpop.permute.xlu0 %6192
        %6194 = vrot.lane.b32.xlu0 %v5688, 104
        %v6195 = vpop.permute.xlu0 %6194
        %v6196 = vsel %vm562, %v6193, 0
        %v6198 = vsel %vm562, %v6195, 0
        %6200 = vmatprep.subr.mxu0 0.0
        %6201 = vmatpush1.xpose.msra.mxu0 0.0
        %6202 = vmatprep.subr.mxu0 0.0
        %6203 = vmatpush1.xpose.msra.mxu0 0.0
        %6204 = vmatprep.subr.mxu0 0.0
        %6205 = vmatpush1.xpose.msra.mxu0 0.0
        %6206 = vmatprep.subr.mxu0 0.0
        %6207 = vmatpush1.xpose.msra.mxu0 0.0
        %6208 = vmatprep.subr.mxu0 0.0
        %6209 = vmatpush1.xpose.msra.mxu0 0.0
        %6210 = vmatprep.subr.mxu0 0.0
        %6211 = vmatpush1.xpose.msra.mxu0 0.0
        %6212 = vmatprep.subr.mxu0 0.0
        %6213 = vmatpush1.xpose.msra.mxu0 0.0
        %6214 = vmatprep.subr.mxu0 0.0
        %6215 = vmatpush1.xpose.msra.mxu0 0.0
        %6216 = vmatprep.subr.mxu0 0.0
        %6217 = vmatpush1.xpose.msra.mxu0 0.0
        %6218 = vmatprep.subr.mxu0 0.0
        %6219 = vmatpush1.xpose.msra.mxu0 0.0
        %6220 = vmatprep.subr.mxu0 0.0
        %6221 = vmatpush1.xpose.msra.mxu0 0.0
        %6222 = vmatprep.subr.mxu0 0.0
        %6223 = vmatpush1.xpose.msra.mxu0 0.0
        %6224 = vmatprep.subr.mxu0 0.0
        %6225 = vmatpush1.xpose.msra.mxu0 0.0
        %6226 = vmatprep.subr.mxu0 0.0
        %6227 = vmatpush1.xpose.msra.mxu0 0.0
        %6228 = vmatprep.subr.mxu0 0.0
        %6229 = vmatpush1.xpose.msra.mxu0 0.0
        %6230 = vmatprep.subr.mxu0 0.0
        %6231 = vmatpush1.xpose.msra.mxu0 %v6198
        %6232 = vmatprep.subr.mxu0 0.0
        %6233 = vmatpush2.xpose.msra.mxu0 0.0
        %6234 = vmatprep.subr.mxu0 0.0
        %6235 = vmatpush2.xpose.msra.mxu0 0.0
        %6236 = vmatprep.subr.mxu0 0.0
        %6237 = vmatpush2.xpose.msra.mxu0 0.0
        %6238 = vmatprep.subr.mxu0 0.0
        %6239 = vmatpush2.xpose.msra.mxu0 0.0
        %6240 = vmatprep.subr.mxu0 0.0
        %6241 = vmatpush2.xpose.msra.mxu0 0.0
        %6242 = vmatprep.subr.mxu0 0.0
        %6243 = vmatpush2.xpose.msra.mxu0 0.0
        %6244 = vmatprep.subr.mxu0 0.0
        %6245 = vmatpush2.xpose.msra.mxu0 0.0
        %6246 = vmatprep.subr.mxu0 0.0
        %6247 = vmatpush2.xpose.msra.mxu0 0.0
        %6248 = vmatprep.subr.mxu0 0.0
        %6249 = vmatpush2.xpose.msra.mxu0 0.0
        %6250 = vmatprep.subr.mxu0 0.0
        %6251 = vmatpush2.xpose.msra.mxu0 0.0
        %6252 = vmatprep.subr.mxu0 0.0
        %6253 = vmatpush2.xpose.msra.mxu0 0.0
        %6254 = vmatprep.subr.mxu0 0.0
        %6255 = vmatpush2.xpose.msra.mxu0 0.0
        %6256 = vmatprep.subr.mxu0 0.0
        %6257 = vmatpush2.xpose.msra.mxu0 0.0
        %6258 = vmatprep.subr.mxu0 0.0
        %6259 = vmatpush2.xpose.msra.mxu0 0.0
        %6260 = vmatprep.subr.mxu0 0.0
        %6261 = vmatpush2.xpose.msra.mxu0 0.0
        %6262 = vmatprep.subr.mxu0 0.0
        %6263 = vmatpush2.xpose.msra.mxu0 0.0
        %6264 = vmatprep.mubr.f32.mxu0 0.0
        %6265 = vmatmul.mubr.f32.gmra.mxu0 %v6196
        %v6266 = vpop.f32.mrf.mxu0
        %v6267 = vadd.f32 0.0, %v6266
        %v6268 = vpop.f32.mrf.mxu0
        %6269 = vdwg.mxu0
        %v6270 = vmul.f32 %v6267, 0.35355338
        %v6271 = vsel %vm562, %v6270, -inf
        %6272 = vmax.xlane.f32.xlu0 %v6271
        %v6273 = vpop.xlane.xlu0 %6272
        %v6274 = vsub.f32 %v6270, %v6273
        %v6275 = vmul.f32 %v6274, 1.442695
        %v6276 = vpow.pop %v6275
        %v6277 = vsel %vm562, %v6276, 0.0
        %6278 = vadd.xlane.f32.xlu0 %v6277
        %v6279 = vpop.xlane.xlu0 %6278
        %v6280 = vrcp.pop %v6279
        %v6281 = vmul.f32 %v6276, %v6280
        %6282 = vrot.lane.b32.xlu0 %v5688, 72
        %v6283 = vpop.permute.xlu0 %6282
        %v6286 = vsel %vm562, %v6281, 0
        %6288 = vmatprep.subr.mxu0 0.0
        %6289 = vmatpush1.msra.mxu0 0.0
        %6290 = vmatprep.subr.mxu0 0.0
        %6291 = vmatpush1.msra.mxu0 0.0
        %6292 = vmatprep.subr.mxu0 0.0
        %6293 = vmatpush1.msra.mxu0 0.0
        %6294 = vmatprep.subr.mxu0 0.0
        %6295 = vmatpush1.msra.mxu0 0.0
        %6296 = vmatprep.subr.mxu0 0.0
        %6297 = vmatpush1.msra.mxu0 0.0
        %6298 = vmatprep.subr.mxu0 0.0
        %6299 = vmatpush1.msra.mxu0 0.0
        %6300 = vmatprep.subr.mxu0 0.0
        %6301 = vmatpush1.msra.mxu0 0.0
        %6302 = vmatprep.subr.mxu0 0.0
        %6303 = vmatpush1.msra.mxu0 0.0
        %6304 = vmatprep.subr.mxu0 0.0
        %6305 = vmatpush1.msra.mxu0 0.0
        %6306 = vmatprep.subr.mxu0 0.0
        %6307 = vmatpush1.msra.mxu0 0.0
        %6308 = vmatprep.subr.mxu0 0.0
        %6309 = vmatpush1.msra.mxu0 0.0
        %6310 = vmatprep.subr.mxu0 0.0
        %6311 = vmatpush1.msra.mxu0 0.0
        %6312 = vmatprep.subr.mxu0 0.0
        %6313 = vmatpush1.msra.mxu0 0.0
        %6314 = vmatprep.subr.mxu0 0.0
        %6315 = vmatpush1.msra.mxu0 0.0
        %6316 = vmatprep.subr.mxu0 0.0
        %6317 = vmatpush1.msra.mxu0 0.0
        %6318 = vmatprep.subr.mxu0 0.0
        %6319 = vmatpush1.msra.mxu0 %v6283
        %6320 = vmatprep.subr.mxu0 0.0
        %6321 = vmatpush2.msra.mxu0 0.0
        %6322 = vmatprep.subr.mxu0 0.0
        %6323 = vmatpush2.msra.mxu0 0.0
        %6324 = vmatprep.subr.mxu0 0.0
        %6325 = vmatpush2.msra.mxu0 0.0
        %6326 = vmatprep.subr.mxu0 0.0
        %6327 = vmatpush2.msra.mxu0 0.0
        %6328 = vmatprep.subr.mxu0 0.0
        %6329 = vmatpush2.msra.mxu0 0.0
        %6330 = vmatprep.subr.mxu0 0.0
        %6331 = vmatpush2.msra.mxu0 0.0
        %6332 = vmatprep.subr.mxu0 0.0
        %6333 = vmatpush2.msra.mxu0 0.0
        %6334 = vmatprep.subr.mxu0 0.0
        %6335 = vmatpush2.msra.mxu0 0.0
        %6336 = vmatprep.subr.mxu0 0.0
        %6337 = vmatpush2.msra.mxu0 0.0
        %6338 = vmatprep.subr.mxu0 0.0
        %6339 = vmatpush2.msra.mxu0 0.0
        %6340 = vmatprep.subr.mxu0 0.0
        %6341 = vmatpush2.msra.mxu0 0.0
        %6342 = vmatprep.subr.mxu0 0.0
        %6343 = vmatpush2.msra.mxu0 0.0
        %6344 = vmatprep.subr.mxu0 0.0
        %6345 = vmatpush2.msra.mxu0 0.0
        %6346 = vmatprep.subr.mxu0 0.0
        %6347 = vmatpush2.msra.mxu0 0.0
        %6348 = vmatprep.subr.mxu0 0.0
        %6349 = vmatpush2.msra.mxu0 0.0
        %6350 = vmatprep.subr.mxu0 0.0
        %6351 = vmatpush2.msra.mxu0 0.0
        %6352 = vmatprep.mubr.f32.mxu0 0.0
        %6353 = vmatmul.mubr.f32.gmra.mxu0 %v6286
        %v6354 = vpop.f32.mrf.mxu0
        %v6355 = vadd.f32 0.0, %v6354
        %v6356 = vpop.f32.mrf.mxu0
        %6357 = vdwg.mxu0
        %6359 = vrot.lane.b32.xlu0 %v6023, 8
        %v6360 = vpop.permute.xlu0 %6359
        %6363 = vrot.lane.b32.xlu0 %v6189, 16
        %v6364 = vpop.permute.xlu0 %6363
        %6367 = vrot.lane.b32.xlu0 %v6355, 24
        %v6368 = vpop.permute.xlu0 %6367
        %v6370 = vsel %vm562, %v5857, %v6360
        %v6371 = vsel %vm1246, %v6370, %v6364
        %v6372 = vsel %vm1248, %v6371, %v6368
        %v6373 = vlaneseq
        %v6374 = vshrl.u32 %v6373, 7
        %v6375 = vsub.s32 0, %v6374
        %v6376 = vrot.slane %v5695, %v6375
        %v6378 = vsel %vm480, %v6372, 0
        %6380 = vmatprep.subr.mxu0 0.0
        %6381 = vmatpush1.msra.mxu0 0.0
        %6382 = vmatprep.subr.mxu0 0.0
        %6383 = vmatpush1.msra.mxu0 0.0
        %6384 = vmatprep.subr.mxu0 0.0
        %6385 = vmatpush1.msra.mxu0 0.0
        %6386 = vmatprep.subr.mxu0 0.0
        %6387 = vmatpush1.msra.mxu0 0.0
        %6388 = vmatprep.subr.mxu0 0.0
        %6389 = vmatpush1.msra.mxu0 0.0
        %6390 = vmatprep.subr.mxu0 0.0
        %6391 = vmatpush1.msra.mxu0 0.0
        %6392 = vmatprep.subr.mxu0 0.0
        %6393 = vmatpush1.msra.mxu0 0.0
        %6394 = vmatprep.subr.mxu0 0.0
        %6395 = vmatpush1.msra.mxu0 0.0
        %6396 = vmatprep.subr.mxu0 0.0
        %6397 = vmatpush1.msra.mxu0 0.0
        %6398 = vmatprep.subr.mxu0 0.0
        %6399 = vmatpush1.msra.mxu0 0.0
        %6400 = vmatprep.subr.mxu0 0.0
        %6401 = vmatpush1.msra.mxu0 0.0
        %6402 = vmatprep.subr.mxu0 0.0
        %6403 = vmatpush1.msra.mxu0 0.0
        %6404 = vmatprep.subr.mxu0 0.0
        %6405 = vmatpush1.msra.mxu0 %v5694
        %6406 = vmatprep.subr.mxu0 0.0
        %6407 = vmatpush1.msra.mxu0 %v5693
        %6408 = vmatprep.subr.mxu0 0.0
        %6409 = vmatpush1.msra.mxu0 %v5692
        %6410 = vmatprep.subr.mxu0 0.0
        %6411 = vmatpush1.msra.mxu0 %v5691
        %6412 = vmatprep.subr.mxu0 0.0
        %6413 = vmatpush2.msra.mxu0 0.0
        %6414 = vmatprep.subr.mxu0 0.0
        %6415 = vmatpush2.msra.mxu0 0.0
        %6416 = vmatprep.subr.mxu0 0.0
        %6417 = vmatpush2.msra.mxu0 0.0
        %6418 = vmatprep.subr.mxu0 0.0
        %6419 = vmatpush2.msra.mxu0 0.0
        %6420 = vmatprep.subr.mxu0 0.0
        %6421 = vmatpush2.msra.mxu0 0.0
        %6422 = vmatprep.subr.mxu0 0.0
        %6423 = vmatpush2.msra.mxu0 0.0
        %6424 = vmatprep.subr.mxu0 0.0
        %6425 = vmatpush2.msra.mxu0 0.0
        %6426 = vmatprep.subr.mxu0 0.0
        %6427 = vmatpush2.msra.mxu0 0.0
        %6428 = vmatprep.subr.mxu0 0.0
        %6429 = vmatpush2.msra.mxu0 0.0
        %6430 = vmatprep.subr.mxu0 0.0
        %6431 = vmatpush2.msra.mxu0 0.0
        %6432 = vmatprep.subr.mxu0 0.0
        %6433 = vmatpush2.msra.mxu0 0.0
        %6434 = vmatprep.subr.mxu0 0.0
        %6435 = vmatpush2.msra.mxu0 0.0
        %6436 = vmatprep.subr.mxu0 0.0
        %6437 = vmatpush2.msra.mxu0 0.0
        %6438 = vmatprep.subr.mxu0 0.0
        %6439 = vmatpush2.msra.mxu0 0.0
        %6440 = vmatprep.subr.mxu0 0.0
        %6441 = vmatpush2.msra.mxu0 0.0
        %6442 = vmatprep.subr.mxu0 0.0
        %6443 = vmatpush2.msra.mxu0 0.0
        %6444 = vmatprep.mubr.f32.mxu0 0.0
        %6445 = vmatmul.mubr.f32.gmra.mxu0 %v6378
        %v6446 = vpop.f32.mrf.mxu0
        %v6447 = vadd.f32 %v6376, %v6446
        %v6448 = vpop.f32.mrf.mxu0
        %6449 = vdwg.mxu0
        %v6450 = vadd.f32 %v5529, %v6447
        %v6451 = vld [vmem:[#allocation2 + $0x490] sm:$0x1]
        %v6452 = vld [vmem:[#allocation2 + $0x498] sm:$0x1]
        %v6453 = vsel %vm480, %v6450, 0.0
        %6454 = vadd.xlane.f32.xlu0 %v6453
        %v6455 = vpop.xlane.xlu0 %6454
        %v6456 = vmul.f32 %v6455, %v1333
        %v6457 = vsub.f32 %v6450, %v6456
        %v6458 = vmul.f32 %v6457, %v6457
        %v6459 = vsel %vm480, %v6458, 0.0
        %6460 = vadd.xlane.f32.xlu0 %v6459
        %v6461 = vpop.xlane.xlu0 %6460
        %v6462 = vmul.f32 %v6461, %v1333
        %v6463 = vadd.f32 %v6462, 1e-05
        %v6464 = vrsqrt.pop %v6463
        %v6465 = vmul.f32 %v6457, %v6464
        %v6466 = vlaneseq
        %v6467 = vshrl.u32 %v6466, 7
        %v6468 = vsub.s32 0, %v6467
        %v6469 = vrot.slane %v6451, %v6468
        %v6470 = vmul.f32 %v6465, %v6469
        %v6471 = vlaneseq
        %v6472 = vshrl.u32 %v6471, 7
        %v6473 = vsub.s32 0, %v6472
        %v6474 = vrot.slane %v6452, %v6473
        %v6475 = vadd.f32 %v6470, %v6474
        %v6476 = vld [vmem:[#allocation2 + $0x4a0] sm:$0xff]
        %v6477 = vld [vmem:[#allocation2 + $0x4a8] sm:$0xff]
        %v6478 = vld [vmem:[#allocation2 + $0x4b0] sm:$0xff]
        %v6479 = vld [vmem:[#allocation2 + $0x4b8] sm:$0xff]
        %v6480 = vld [vmem:[#allocation2 + $0x4c0] sm:$0x1]
        %v6481 = vld [vmem:[#allocation2 + $0x4c8] sm:$0xff]
        %v6482 = vld [vmem:[#allocation2 + $0x4d0] sm:$0xff]
        %v6483 = vld [vmem:[#allocation2 + $0x4d8] sm:$0xff]
        %v6484 = vld [vmem:[#allocation2 + $0x4e0] sm:$0xff]
        %v6485 = vld [vmem:[#allocation2 + $0x4e8] sm:$0xff]
        %v6486 = vld [vmem:[#allocation2 + $0x4f0] sm:$0xff]
        %v6487 = vld [vmem:[#allocation2 + $0x4f8] sm:$0xff]
        %v6488 = vld [vmem:[#allocation2 + $0x500] sm:$0xff]
        %v6489 = vld [vmem:[#allocation2 + $0x508] sm:$0x1]
        %v6490 = vlaneseq
        %v6491 = vshrl.u32 %v6490, 7
        %v6492 = vsub.s32 0, %v6491
        %v6493 = vrot.slane %v6480, %v6492
        %v6495 = vsel %vm480, %v6475, 0
        %6497 = vmatprep.subr.mxu0 0.0
        %6498 = vmatpush1.msra.mxu0 0.0
        %6499 = vmatprep.subr.mxu0 0.0
        %6500 = vmatpush1.msra.mxu0 0.0
        %6501 = vmatprep.subr.mxu0 0.0
        %6502 = vmatpush1.msra.mxu0 0.0
        %6503 = vmatprep.subr.mxu0 0.0
        %6504 = vmatpush1.msra.mxu0 0.0
        %6505 = vmatprep.subr.mxu0 0.0
        %6506 = vmatpush1.msra.mxu0 0.0
        %6507 = vmatprep.subr.mxu0 0.0
        %6508 = vmatpush1.msra.mxu0 0.0
        %6509 = vmatprep.subr.mxu0 0.0
        %6510 = vmatpush1.msra.mxu0 0.0
        %6511 = vmatprep.subr.mxu0 0.0
        %6512 = vmatpush1.msra.mxu0 0.0
        %6513 = vmatprep.subr.mxu0 0.0
        %6514 = vmatpush1.msra.mxu0 0.0
        %6515 = vmatprep.subr.mxu0 0.0
        %6516 = vmatpush1.msra.mxu0 0.0
        %6517 = vmatprep.subr.mxu0 0.0
        %6518 = vmatpush1.msra.mxu0 0.0
        %6519 = vmatprep.subr.mxu0 0.0
        %6520 = vmatpush1.msra.mxu0 0.0
        %6521 = vmatprep.subr.mxu0 0.0
        %6522 = vmatpush1.msra.mxu0 %v6479
        %6523 = vmatprep.subr.mxu0 0.0
        %6524 = vmatpush1.msra.mxu0 %v6478
        %6525 = vmatprep.subr.mxu0 0.0
        %6526 = vmatpush1.msra.mxu0 %v6477
        %6527 = vmatprep.subr.mxu0 0.0
        %6528 = vmatpush1.msra.mxu0 %v6476
        %6529 = vmatprep.subr.mxu0 0.0
        %6530 = vmatpush2.msra.mxu0 0.0
        %6531 = vmatprep.subr.mxu0 0.0
        %6532 = vmatpush2.msra.mxu0 0.0
        %6533 = vmatprep.subr.mxu0 0.0
        %6534 = vmatpush2.msra.mxu0 0.0
        %6535 = vmatprep.subr.mxu0 0.0
        %6536 = vmatpush2.msra.mxu0 0.0
        %6537 = vmatprep.subr.mxu0 0.0
        %6538 = vmatpush2.msra.mxu0 0.0
        %6539 = vmatprep.subr.mxu0 0.0
        %6540 = vmatpush2.msra.mxu0 0.0
        %6541 = vmatprep.subr.mxu0 0.0
        %6542 = vmatpush2.msra.mxu0 0.0
        %6543 = vmatprep.subr.mxu0 0.0
        %6544 = vmatpush2.msra.mxu0 0.0
        %6545 = vmatprep.subr.mxu0 0.0
        %6546 = vmatpush2.msra.mxu0 0.0
        %6547 = vmatprep.subr.mxu0 0.0
        %6548 = vmatpush2.msra.mxu0 0.0
        %6549 = vmatprep.subr.mxu0 0.0
        %6550 = vmatpush2.msra.mxu0 0.0
        %6551 = vmatprep.subr.mxu0 0.0
        %6552 = vmatpush2.msra.mxu0 0.0
        %6553 = vmatprep.subr.mxu0 0.0
        %6554 = vmatpush2.msra.mxu0 0.0
        %6555 = vmatprep.subr.mxu0 0.0
        %6556 = vmatpush2.msra.mxu0 0.0
        %6557 = vmatprep.subr.mxu0 0.0
        %6558 = vmatpush2.msra.mxu0 0.0
        %6559 = vmatprep.subr.mxu0 0.0
        %6560 = vmatpush2.msra.mxu0 0.0
        %6561 = vmatprep.mubr.f32.mxu0 0.0
        %6562 = vmatmul.mubr.f32.gmra.mxu0 %v6495
        %v6563 = vpop.f32.mrf.mxu0
        %v6564 = vadd.f32 %v6493, %v6563
        %v6565 = vpop.f32.mrf.mxu0
        %6566 = vdwg.mxu0
        %v6567 = vmax.f32 %v6564, 0.0
        %v6568 = vlaneseq
        %v6569 = vshrl.u32 %v6568, 7
        %v6570 = vsub.s32 0, %v6569
        %v6571 = vrot.slane %v6489, %v6570
        %v6573 = vsel %vm1450, %v6567, 0
        %6575 = vmatprep.subr.mxu0 0.0
        %6576 = vmatpush1.msra.mxu0 0.0
        %6577 = vmatprep.subr.mxu0 0.0
        %6578 = vmatpush1.msra.mxu0 0.0
        %6579 = vmatprep.subr.mxu0 0.0
        %6580 = vmatpush1.msra.mxu0 0.0
        %6581 = vmatprep.subr.mxu0 0.0
        %6582 = vmatpush1.msra.mxu0 0.0
        %6583 = vmatprep.subr.mxu0 0.0
        %6584 = vmatpush1.msra.mxu0 0.0
        %6585 = vmatprep.subr.mxu0 0.0
        %6586 = vmatpush1.msra.mxu0 0.0
        %6587 = vmatprep.subr.mxu0 0.0
        %6588 = vmatpush1.msra.mxu0 0.0
        %6589 = vmatprep.subr.mxu0 0.0
        %6590 = vmatpush1.msra.mxu0 0.0
        %6591 = vmatprep.subr.mxu0 0.0
        %6592 = vmatpush1.msra.mxu0 %v6488
        %6593 = vmatprep.subr.mxu0 0.0
        %6594 = vmatpush1.msra.mxu0 %v6487
        %6595 = vmatprep.subr.mxu0 0.0
        %6596 = vmatpush1.msra.mxu0 %v6486
        %6597 = vmatprep.subr.mxu0 0.0
        %6598 = vmatpush1.msra.mxu0 %v6485
        %6599 = vmatprep.subr.mxu0 0.0
        %6600 = vmatpush1.msra.mxu0 %v6484
        %6601 = vmatprep.subr.mxu0 0.0
        %6602 = vmatpush1.msra.mxu0 %v6483
        %6603 = vmatprep.subr.mxu0 0.0
        %6604 = vmatpush1.msra.mxu0 %v6482
        %6605 = vmatprep.subr.mxu0 0.0
        %6606 = vmatpush1.msra.mxu0 %v6481
        %6607 = vmatprep.subr.mxu0 0.0
        %6608 = vmatpush2.msra.mxu0 0.0
        %6609 = vmatprep.subr.mxu0 0.0
        %6610 = vmatpush2.msra.mxu0 0.0
        %6611 = vmatprep.subr.mxu0 0.0
        %6612 = vmatpush2.msra.mxu0 0.0
        %6613 = vmatprep.subr.mxu0 0.0
        %6614 = vmatpush2.msra.mxu0 0.0
        %6615 = vmatprep.subr.mxu0 0.0
        %6616 = vmatpush2.msra.mxu0 0.0
        %6617 = vmatprep.subr.mxu0 0.0
        %6618 = vmatpush2.msra.mxu0 0.0
        %6619 = vmatprep.subr.mxu0 0.0
        %6620 = vmatpush2.msra.mxu0 0.0
        %6621 = vmatprep.subr.mxu0 0.0
        %6622 = vmatpush2.msra.mxu0 0.0
        %6623 = vmatprep.subr.mxu0 0.0
        %6624 = vmatpush2.msra.mxu0 0.0
        %6625 = vmatprep.subr.mxu0 0.0
        %6626 = vmatpush2.msra.mxu0 0.0
        %6627 = vmatprep.subr.mxu0 0.0
        %6628 = vmatpush2.msra.mxu0 0.0
        %6629 = vmatprep.subr.mxu0 0.0
        %6630 = vmatpush2.msra.mxu0 0.0
        %6631 = vmatprep.subr.mxu0 0.0
        %6632 = vmatpush2.msra.mxu0 0.0
        %6633 = vmatprep.subr.mxu0 0.0
        %6634 = vmatpush2.msra.mxu0 0.0
        %6635 = vmatprep.subr.mxu0 0.0
        %6636 = vmatpush2.msra.mxu0 0.0
        %6637 = vmatprep.subr.mxu0 0.0
        %6638 = vmatpush2.msra.mxu0 0.0
        %6639 = vmatprep.mubr.f32.mxu0 0.0
        %6640 = vmatmul.mubr.f32.gmra.mxu0 %v6573
        %v6641 = vpop.f32.mrf.mxu0
        %v6642 = vadd.f32 %v6571, %v6641
        %v6643 = vpop.f32.mrf.mxu0
        %6644 = vdwg.mxu0
        %v6645 = vadd.f32 %v6475, %v6642
        %v6646 = vld [vmem:[#allocation2 + $0x510] sm:$0x1]
        %v6647 = vld [vmem:[#allocation2 + $0x518] sm:$0x1]
        %v6648 = vsel %vm480, %v6645, 0.0
        %6649 = vadd.xlane.f32.xlu0 %v6648
        %v6650 = vpop.xlane.xlu0 %6649
        %v6651 = vmul.f32 %v6650, %v1333
        %v6652 = vsub.f32 %v6645, %v6651
        %v6653 = vmul.f32 %v6652, %v6652
        %v6654 = vsel %vm480, %v6653, 0.0
        %6655 = vadd.xlane.f32.xlu0 %v6654
        %v6656 = vpop.xlane.xlu0 %6655
        %v6657 = vmul.f32 %v6656, %v1333
        %v6658 = vadd.f32 %v6657, 1e-05
        %v6659 = vrsqrt.pop %v6658
        %v6660 = vmul.f32 %v6652, %v6659
        %v6661 = vlaneseq
        %v6662 = vshrl.u32 %v6661, 7
        %v6663 = vsub.s32 0, %v6662
        %v6664 = vrot.slane %v6646, %v6663
        %v6665 = vmul.f32 %v6660, %v6664
        %v6666 = vlaneseq
        %v6667 = vshrl.u32 %v6666, 7
        %v6668 = vsub.s32 0, %v6667
        %v6669 = vrot.slane %v6647, %v6668
        %v6670 = vadd.f32 %v6665, %v6669
        %v6671 = vld [vmem:[#allocation2 + $0x530] sm:$0x1]
        %v6672 = vld [vmem:[#allocation2 + $0x538] sm:$0x1]
        %v6673 = vsel %vm480, %v6670, 0.0
        %6674 = vadd.xlane.f32.xlu0 %v6673
        %v6675 = vpop.xlane.xlu0 %6674
        %v6676 = vmul.f32 %v6675, %v1333
        %v6677 = vsub.f32 %v6670, %v6676
        %v6678 = vmul.f32 %v6677, %v6677
        %v6679 = vsel %vm480, %v6678, 0.0
        %6680 = vadd.xlane.f32.xlu0 %v6679
        %v6681 = vpop.xlane.xlu0 %6680
        %v6682 = vmul.f32 %v6681, %v1333
        %v6683 = vadd.f32 %v6682, 1e-05
        %v6684 = vrsqrt.pop %v6683
        %v6685 = vmul.f32 %v6677, %v6684
        %v6686 = vlaneseq
        %v6687 = vshrl.u32 %v6686, 7
        %v6688 = vsub.s32 0, %v6687
        %v6689 = vrot.slane %v6671, %v6688
        %v6690 = vmul.f32 %v6685, %v6689
        %v6691 = vlaneseq
        %v6692 = vshrl.u32 %v6691, 7
        %v6693 = vsub.s32 0, %v6692
        %v6694 = vrot.slane %v6672, %v6693
        %v6695 = vadd.f32 %v6690, %v6694
        %v6696 = vld [vmem:[#allocation2 + $0x540] sm:$0xff]
        %v6697 = vld [vmem:[#allocation2 + $0x548] sm:$0xff]
        %v6698 = vld [vmem:[#allocation2 + $0x550] sm:$0xff]
        %v6699 = vld [vmem:[#allocation2 + $0x558] sm:$0xff]
        %v6700 = vld [vmem:[#allocation2 + $0x560] sm:$0x1]
        %v6701 = vlaneseq
        %v6702 = vshrl.u32 %v6701, 7
        %v6703 = vsub.s32 0, %v6702
        %v6704 = vrot.slane %v6700, %v6703
        %v6706 = vsel %vm480, %v6695, 0
        %6708 = vmatprep.subr.mxu0 0.0
        %6709 = vmatpush1.msra.mxu0 0.0
        %6710 = vmatprep.subr.mxu0 0.0
        %6711 = vmatpush1.msra.mxu0 0.0
        %6712 = vmatprep.subr.mxu0 0.0
        %6713 = vmatpush1.msra.mxu0 0.0
        %6714 = vmatprep.subr.mxu0 0.0
        %6715 = vmatpush1.msra.mxu0 0.0
        %6716 = vmatprep.subr.mxu0 0.0
        %6717 = vmatpush1.msra.mxu0 0.0
        %6718 = vmatprep.subr.mxu0 0.0
        %6719 = vmatpush1.msra.mxu0 0.0
        %6720 = vmatprep.subr.mxu0 0.0
        %6721 = vmatpush1.msra.mxu0 0.0
        %6722 = vmatprep.subr.mxu0 0.0
        %6723 = vmatpush1.msra.mxu0 0.0
        %6724 = vmatprep.subr.mxu0 0.0
        %6725 = vmatpush1.msra.mxu0 0.0
        %6726 = vmatprep.subr.mxu0 0.0
        %6727 = vmatpush1.msra.mxu0 0.0
        %6728 = vmatprep.subr.mxu0 0.0
        %6729 = vmatpush1.msra.mxu0 0.0
        %6730 = vmatprep.subr.mxu0 0.0
        %6731 = vmatpush1.msra.mxu0 0.0
        %6732 = vmatprep.subr.mxu0 0.0
        %6733 = vmatpush1.msra.mxu0 %v6699
        %6734 = vmatprep.subr.mxu0 0.0
        %6735 = vmatpush1.msra.mxu0 %v6698
        %6736 = vmatprep.subr.mxu0 0.0
        %6737 = vmatpush1.msra.mxu0 %v6697
        %6738 = vmatprep.subr.mxu0 0.0
        %6739 = vmatpush1.msra.mxu0 %v6696
        %6740 = vmatprep.subr.mxu0 0.0
        %6741 = vmatpush2.msra.mxu0 0.0
        %6742 = vmatprep.subr.mxu0 0.0
        %6743 = vmatpush2.msra.mxu0 0.0
        %6744 = vmatprep.subr.mxu0 0.0
        %6745 = vmatpush2.msra.mxu0 0.0
        %6746 = vmatprep.subr.mxu0 0.0
        %6747 = vmatpush2.msra.mxu0 0.0
        %6748 = vmatprep.subr.mxu0 0.0
        %6749 = vmatpush2.msra.mxu0 0.0
        %6750 = vmatprep.subr.mxu0 0.0
        %6751 = vmatpush2.msra.mxu0 0.0
        %6752 = vmatprep.subr.mxu0 0.0
        %6753 = vmatpush2.msra.mxu0 0.0
        %6754 = vmatprep.subr.mxu0 0.0
        %6755 = vmatpush2.msra.mxu0 0.0
        %6756 = vmatprep.subr.mxu0 0.0
        %6757 = vmatpush2.msra.mxu0 0.0
        %6758 = vmatprep.subr.mxu0 0.0
        %6759 = vmatpush2.msra.mxu0 0.0
        %6760 = vmatprep.subr.mxu0 0.0
        %6761 = vmatpush2.msra.mxu0 0.0
        %6762 = vmatprep.subr.mxu0 0.0
        %6763 = vmatpush2.msra.mxu0 0.0
        %6764 = vmatprep.subr.mxu0 0.0
        %6765 = vmatpush2.msra.mxu0 0.0
        %6766 = vmatprep.subr.mxu0 0.0
        %6767 = vmatpush2.msra.mxu0 0.0
        %6768 = vmatprep.subr.mxu0 0.0
        %6769 = vmatpush2.msra.mxu0 0.0
        %6770 = vmatprep.subr.mxu0 0.0
        %6771 = vmatpush2.msra.mxu0 0.0
        %6772 = vmatprep.mubr.f32.mxu0 0.0
        %6773 = vmatmul.mubr.f32.gmra.mxu0 %v6706
        %v6774 = vpop.f32.mrf.mxu0
        %v6775 = vadd.f32 %v6704, %v6774
        %v6776 = vpop.f32.mrf.mxu0
        %6777 = vdwg.mxu0
        %6778 = vst [vmem:[%s265] sm:$0xff] %v6775
        %s6779 = sand.u32 %s153, 1
        %s6780 = scalar_lea.sflag [#allocation4], %s6779
        %s6781 = sand.u32 %s153, 1
        %s6782 = smul.addr %s6781, 8
        %s6783 = scalar_lea.vmem [#allocation5], %s6782
        // Predicated region
        $region45: #{forward.1} parent=39 // pred_check
          %p6784 = pneg %p163
        $region46: #{forward.1} parent=39 // pred_check_branch
          %6786 = sbr.rel (%p6784) target = $region48
        $region47: #{forward.1} parent=39 // pred_region
          %s6788 = ssub.s32 128, 128
          %6789 = vsyncadd %s6780, %s6788
          %s6790 = smul.addr %s20, 128
          %s6791 = scalar_lea.hbm %s5, %s6790
          %s6793 = sshll.u32 %s6783, 4
          %s6794 = int_to_ptr.vmem [resolvable:$true] %s6793
          %6796 = dma.vmem_to_hbm [thread:$0]  %s6794, 128, %s6791, %s6780
        $region48: #{forward.1} parent=39 // pred_fallthru
          _
      $region40: #{forward.1} parent=5 // pred_fallthru
        _
      %p6797 = scmp.le.s32.totalorder 2, %s15
      // Predicated region
      $region49: #{forward.1} parent=5 // pred_check
        %p6798 = pneg %p6797
      $region50: #{forward.1} parent=5 // pred_check_branch
        %6800 = sbr.rel (%p6798) target = $region52
      $region51: #{forward.1} parent=5 // pred_region
        %s6801 = ssub.s32 %s15, 2
        // Predicated region
        $region53: #{forward.1} parent=51 // pred_check
          %p6802 = pneg %p169
        $region54: #{forward.1} parent=51 // pred_check_branch
          %6804 = sbr.rel (%p6802) target = $region56
        $region55: #{forward.1} parent=51 // pred_region
          %s6805 = sand.u32 %s154, 1
          %s6806 = scalar_lea.sflag [#allocation4], %s6805
          %s6807 = sand.u32 %s154, 1
          %s6808 = smul.addr %s6807, 8
          %s6809 = scalar_lea.vmem [#allocation5], %s6808
          %6810 = dma.done %s6806, 128
        $region56: #{forward.1} parent=51 // pred_fallthru
          _
      $region52: #{forward.1} parent=5 // pred_fallthru
        _
    $region6: #{forward.1} parent=1 // loop_footer
      %s19 = sadd.s32 1, %s15
    $region7: #{forward.1} parent=1 // loop_footer_branch
      %14 = sbr.rel target = $region3
    $region8: #{forward.1} parent=1 // loop_exit
      _
    %6811 = vsyncpa [#allocation3], 1
    %s6812 = scalar_lea.sflag [#allocation3], 1
    %6813 = vsyncpa %s6812, 1
    %6814 = vsyncpa [#allocation4], 1
    %s6815 = scalar_lea.sflag [#allocation4], 1
    %6816 = vsyncpa %s6815, 1

</llo_original>
